<compile_context>
chip_gen: v7x
topology: tpu7x:2x2x1
jax: 0.10.0
libtpu: 0.0.40
codegen_flags: <defaults>
</compile_context>

<pallas_src>
import jax
import jax.numpy as jnp
from jax import lax
from jax.experimental import pallas as pl
from jax.experimental.pallas import tpu as pltpu

_BN_EPS = 1e-5
_VMEM_LIMIT = 32 * 1024 * 1024  # explicit scoped-VMEM budget (safe on v5e..v7x)


# ---------------------------------------------------------------------------
# Shared in-kernel helpers
# ---------------------------------------------------------------------------
def _window(ref, y0, x0, ny, nx, stride):
    """ref[y0 : y0+ny*s : s, x0 : x0+nx*s : s, :] with static offsets."""
    if stride == 1:
        return ref[y0:y0 + ny, x0:x0 + nx, :]
    ys = pl.ds(y0, ny, stride=stride) if ny > 1 else pl.ds(y0, 1)
    xs = pl.ds(x0, nx, stride=stride) if nx > 1 else pl.ds(x0, 1)
    return ref[ys, xs, :]


def _conv_from_padded(xp_ref, w_ref, bias_ref, *,
                      ksize, stride, h_out, w_out, cin):
    """conv(k x k, stride) with BN pre-folded into w; ONE MXU matmul.

    xp_ref : (h_in + 2*pad, w_in + 2*pad, cin) f32 VMEM scratch (zero halo)
    w_ref  : (k*k*cin, cout) bf16 weight slab, tap-major, BN-scale folded
    bias_ref: (1, cout) f32 folded BN bias
    returns: (h_out*w_out, cout) f32
    """
    taps = []
    for ky in range(ksize):
        for kx in range(ksize):
            taps.append(_window(xp_ref, ky, kx, h_out, w_out, stride))
    patches = jnp.concatenate(taps, axis=-1)                 # lane-axis im2col
    patches = patches.reshape(h_out * w_out, ksize * ksize * cin)
    acc = jnp.dot(patches.astype(jnp.bfloat16), w_ref[...],
                  preferred_element_type=jnp.float32)        # single MXU push
    return acc + bias_ref[...]                               # folded BN bias


# ---------------------------------------------------------------------------
# Parameter plumbing (weight slabs with folded BN)
# ---------------------------------------------------------------------------
def _conv_slab_bn(w_oihw, bn):
    """(Cout, Cin, kh, kw) + BN -> ((kh*kw*Cin, Cout) bf16 slab, (1,Cout) f32 bias)."""
    gamma, beta, mean, var = bn
    scale = gamma / jnp.sqrt(var + _BN_EPS)                  # (Cout,)
    bias = beta - mean * scale
    cout, cin, kh, kw = w_oihw.shape
    slab = jnp.transpose(w_oihw, (2, 3, 1, 0)).reshape(kh * kw * cin, cout)
    slab = (slab * scale[None, :]).astype(jnp.bfloat16)      # fold BN scale
    return slab, bias.reshape(1, cout).astype(jnp.float32)


# ---------------------------------------------------------------------------
# Stem: conv7x7/s2/p3 + BN + ReLU + MaxPool3x3/s2/p1   (one pallas_call)
# ---------------------------------------------------------------------------
def _make_stem_kernel(h, w, cout):
    h1 = (h + 6 - 7) // 2 + 1
    w1 = (w + 6 - 7) // 2 + 1
    h2 = (h1 + 2 - 3) // 2 + 1
    w2 = (w1 + 2 - 3) // 2 + 1

    def kernel(x_ref, w_ref, b_ref, o_ref, xp, mid):
        # In-kernel zero halo for the 7x7/s2/p3 conv (no wrapper jnp.pad).
        xp[...] = jnp.zeros_like(xp)
        xp[3:3 + h, 3:3 + w, :] = x_ref[...].astype(jnp.float32)

        c = _conv_from_padded(xp, w_ref, b_ref,
                              ksize=7, stride=2, h_out=h1, w_out=w1, cin=1)
        c = jnp.maximum(c, 0.0)                              # ReLU

        # MaxPool 3x3 / stride 2 / pad 1.  A zero halo is equivalent to the
        # -inf halo here because the pooled values are post-ReLU (>= 0) and
        # every window contains at least one real element.
        mid[...] = jnp.zeros_like(mid)
        mid[1:1 + h1, 1:1 + w1, :] = c.reshape(h1, w1, cout)
        pooled = _window(mid, 0, 0, h2, w2, 2)
        for ky in range(3):
            for kx in range(3):
                if ky == 0 and kx == 0:
                    continue
                pooled = jnp.maximum(pooled, _window(mid, ky, kx, h2, w2, 2))
        o_ref[...] = pooled.astype(o_ref.dtype)

    return kernel, (h1, w1, h2, w2)


def stem_forward(x, conv1_w, bn1):
    """x: (N, H, W, 1) bf16 -> (N, ~H/4, ~W/4, 64) bf16."""
    n, h, w, cin = x.shape
    cout = conv1_w.shape[0]
    kernel, (h1, w1, h2, w2) = _make_stem_kernel(h, w, cout)

    w_slab, bias = _conv_slab_bn(conv1_w, bn1)               # (49*cin, 64) bf16

    return pl.pallas_call(
        kernel,
        out_shape=jax.ShapeDtypeStruct((n, h2, w2, cout), jnp.bfloat16),
        grid=(n,),
        in_specs=[
            pl.BlockSpec((None, h, w, cin), lambda i: (i, 0, 0, 0)),
            pl.BlockSpec((7 * 7 * cin, cout), lambda i: (0, 0)),
            pl.BlockSpec((1, cout), lambda i: (0, 0)),
        ],
        out_specs=pl.BlockSpec((None, h2, w2, cout), lambda i: (i, 0, 0, 0)),
        scratch_shapes=[pltpu.VMEM((h + 6, w + 6, cin), jnp.float32),
                        pltpu.VMEM((h1 + 2, w1 + 2, cout), jnp.float32)],
        compiler_params=pltpu.CompilerParams(
            dimension_semantics=("parallel",),
            vmem_limit_bytes=_VMEM_LIMIT),
    )(x, w_slab, bias)


# ---------------------------------------------------------------------------
# Fused BasicBlock: conv1+bn1+relu -> (shortcut) -> conv2+bn2+add+relu
# Optionally also fuses the head (global avg-pool + FC) for the final block.
# ---------------------------------------------------------------------------
def _make_block_kernel(h, w, cin, cout, stride, has_proj, num_classes):
    h1 = (h + 2 - 3) // stride + 1
    w1 = (w + 2 - 3) // stride + 1

    def kernel(*refs):
        it = iter(refs)
        x_ref = next(it)
        w1_ref = next(it); b1_ref = next(it)
        w2_ref = next(it); b2_ref = next(it)
        if has_proj:
            ws_ref = next(it); bs_ref = next(it)
        if num_classes is not None:
            fw_ref = next(it); fb_ref = next(it)
        o_ref = next(it)
        xp = next(it); mid = next(it)

        # Zero halo for conv1 (replaces wrapper-side jnp.pad).
        xp[...] = jnp.zeros_like(xp)
        xp[1:1 + h, 1:1 + w, :] = x_ref[...].astype(jnp.float32)

        # conv1 (3x3/stride) + bn1 + relu, result kept in VMEM padded for conv2.
        c1 = _conv_from_padded(xp, w1_ref, b1_ref,
                               ksize=3, stride=stride,
                               h_out=h1, w_out=w1, cin=cin)
        c1 = jnp.maximum(c1, 0.0)
        mid[...] = jnp.zeros_like(mid)
        mid[1:1 + h1, 1:1 + w1, :] = c1.reshape(h1, w1, cout)

        # Shortcut branch (1x1 projection conv + bn, or identity).
        if has_proj:
            xs = _window(xp, 1, 1, h1, w1, stride)            # strided x view
            sc = jnp.dot(xs.reshape(h1 * w1, cin).astype(jnp.bfloat16),
                         ws_ref[...], preferred_element_type=jnp.float32)
            sc = sc + bs_ref[...]
        else:
            # identity: read the f32 interior of the already-built halo buffer
            sc = _window(xp, 1, 1, h1, w1, 1).reshape(h1 * w1, cout)

        # conv2 (3x3/1) + bn2 + shortcut add + relu.
        c2 = _conv_from_padded(mid, w2_ref, b2_ref,
                               ksize=3, stride=1,
                               h_out=h1, w_out=w1, cin=cout)
        out = jnp.maximum(c2 + sc, 0.0)                       # (h1*w1, cout)

        if num_classes is None:
            o_ref[...] = out.reshape(h1, w1, cout).astype(o_ref.dtype)
        else:
            # Fused head: global average pool over spatial, then FC.
            feat = jnp.mean(out, axis=0, keepdims=True)        # (1, cout) f32
            o_ref[...] = jnp.dot(feat, fw_ref[...],
                                 preferred_element_type=jnp.float32) + fb_ref[...]

    return kernel, (h1, w1)


def basic_block_forward(x, blk, head=None):
    """Fused BasicBlock (one pallas_call per block).

    x: (N, H, W, Cin) bf16.
    head: optional (fc_w, fc_b) -> fuse global-avg-pool + FC; returns logits.
    """
    n, h, w, cin = x.shape
    cout = blk["conv1_w"].shape[0]
    stride = blk["stride"]
    has_proj = (stride != 1) or (cin != cout)

    w1, b1 = _conv_slab_bn(blk["conv1_w"], blk["bn1"])
    w2, b2 = _conv_slab_bn(blk["conv2_w"], blk["bn2"])

    args = [x, w1, b1, w2, b2]
    in_specs = [
        pl.BlockSpec((None, h, w, cin), lambda i: (i, 0, 0, 0)),
        pl.BlockSpec((9 * cin, cout), lambda i: (0, 0)),
        pl.BlockSpec((1, cout), lambda i: (0, 0)),
        pl.BlockSpec((9 * cout, cout), lambda i: (0, 0)),
        pl.BlockSpec((1, cout), lambda i: (0, 0)),
    ]
    if has_proj:
        ws, bs = _conv_slab_bn(blk["convs_w"], blk["bns"])
        args += [ws, bs]
        in_specs += [
            pl.BlockSpec((cin, cout), lambda i: (0, 0)),
            pl.BlockSpec((1, cout), lambda i: (0, 0)),
        ]

    num_classes = None
    if head is not None:
        fc_w, fc_b = head
        num_classes = fc_w.shape[0]
        fwt = jnp.transpose(fc_w, (1, 0)).astype(jnp.float32)   # (cout, classes)
        fbt = fc_b.reshape(1, num_classes).astype(jnp.float32)
        args += [fwt, fbt]
        in_specs += [
            pl.BlockSpec((cout, num_classes), lambda i: (0, 0)),
            pl.BlockSpec((1, num_classes), lambda i: (0, 0)),
        ]

    kernel, (h1, w1_out) = _make_block_kernel(h, w, cin, cout, stride,
                                              has_proj, num_classes)

    if head is None:
        out_shape = jax.ShapeDtypeStruct((n, h1, w1_out, cout), jnp.bfloat16)
        out_specs = pl.BlockSpec((None, h1, w1_out, cout),
                                 lambda i: (i, 0, 0, 0))
    else:
        out_shape = jax.ShapeDtypeStruct((n, 1, num_classes), jnp.float32)
        out_specs = pl.BlockSpec((None, 1, num_classes), lambda i: (i, 0, 0))

    out = pl.pallas_call(
        kernel,
        out_shape=out_shape,
        grid=(n,),
        in_specs=in_specs,
        out_specs=out_specs,
        scratch_shapes=[pltpu.VMEM((h + 2, w + 2, cin), jnp.float32),
                        pltpu.VMEM((h1 + 2, w1_out + 2, cout), jnp.float32)],
        compiler_params=pltpu.CompilerParams(
            dimension_semantics=("parallel",),
            vmem_limit_bytes=_VMEM_LIMIT),
    )(*args)

    if head is not None:
        out = out.reshape(n, num_classes)
    return out


# ---------------------------------------------------------------------------
# Full ResNet forward (NCHW in, logits out)
# ---------------------------------------------------------------------------
def resnet_forward(x_nchw, params):
    x = jnp.transpose(x_nchw, (0, 2, 3, 1)).astype(jnp.bfloat16)  # NHWC bf16
    x = stem_forward(x, params["conv1_w"], params["bn1"])
    blocks = [blk for layer in params["layers"] for blk in layer]
    for blk in blocks[:-1]:
        x = basic_block_forward(x, blk)
    # Final block fuses global-avg-pool + FC head (no extra pallas_call).
    return basic_block_forward(x, blocks[-1],
                               head=(params["fc_w"], params["fc_b"]))


# ---------------------------------------------------------------------------
# Pure-JAX reference (f32) for correctness checking
# ---------------------------------------------------------------------------
def _conv_ref(x, w, stride, pad):
    return lax.conv_general_dilated(
        x, w, (stride, stride), [(pad, pad), (pad, pad)],
        dimension_numbers=("NCHW", "OIHW", "NCHW"))


def _bn_ref(x, bn):
    gamma, beta, mean, var = bn
    inv = gamma / jnp.sqrt(var + _BN_EPS)
    return (x - mean[None, :, None, None]) * inv[None, :, None, None] \
        + beta[None, :, None, None]


def resnet_ref(x, params):
    out = jax.nn.relu(_bn_ref(_conv_ref(x, params["conv1_w"], 2, 3),
                              params["bn1"]))
    out = lax.reduce_window(out, -jnp.inf, lax.max, (1, 1, 3, 3),
                            (1, 1, 2, 2), [(0, 0), (0, 0), (1, 1), (1, 1)])
    for layer in params["layers"]:
        for blk in layer:
            s = blk["stride"]
            o = jax.nn.relu(_bn_ref(_conv_ref(out, blk["conv1_w"], s, 1),
                                    blk["bn1"]))
            o = _bn_ref(_conv_ref(o, blk["conv2_w"], 1, 1), blk["bn2"])
            if "convs_w" in blk:
                sc = _bn_ref(_conv_ref(out, blk["convs_w"], s, 0), blk["bns"])
            else:
                sc = out
            out = jax.nn.relu(o + sc)
    feat = jnp.mean(out, axis=(2, 3))
    return feat @ params["fc_w"].T + params["fc_b"]


# ---------------------------------------------------------------------------
# Deterministic parameter init
# ---------------------------------------------------------------------------
def _init_bn(key, c):
    k1, k2, k3, k4 = jax.random.split(key, 4)
    gamma = 1.0 + 0.1 * jax.random.normal(k1, (c,), jnp.float32)
    beta = 0.1 * jax.random.normal(k2, (c,), jnp.float32)
    mean = 0.1 * jax.random.normal(k3, (c,), jnp.float32)
    var = jnp.abs(jax.random.normal(k4, (c,), jnp.float32)) + 0.5
    return gamma, beta, mean, var


def _he_conv(key, cout, cin, k):
    std = (2.0 / (cin * k * k)) ** 0.5
    return std * jax.random.normal(key, (cout, cin, k, k), jnp.float32)


def init_resnet_params(key, num_blocks=(1, 1, 1, 1), num_classes=2):
    keys = iter(jax.random.split(key, 256))
    nk = lambda: next(keys)

    params = {"conv1_w": _he_conv(nk(), 64, 1, 7),
              "bn1": _init_bn(nk(), 64),
              "layers": []}
    in_c = 64
    for out_c, nblk, first_stride in zip((64, 128, 256, 512), num_blocks,
                                         (1, 2, 2, 2)):
        layer = []
        for bi in range(nblk):
            stride = first_stride if bi == 0 else 1
            blk = {"stride": stride,
                   "conv1_w": _he_conv(nk(), out_c, in_c, 3),
                   "bn1": _init_bn(nk(), out_c),
                   "conv2_w": _he_conv(nk(), out_c, out_c, 3),
                   "bn2": _init_bn(nk(), out_c)}
            if stride != 1 or in_c != out_c:
                blk["convs_w"] = _he_conv(nk(), out_c, in_c, 1)
                blk["bns"] = _init_bn(nk(), out_c)
            layer.append(blk)
            in_c = out_c
        params["layers"].append(layer)
    params["fc_w"] = (1.0 / 512 ** 0.5) * jax.random.normal(
        nk(), (num_classes, 512), jnp.float32)
    params["fc_b"] = 0.1 * jax.random.normal(nk(), (num_classes,), jnp.float32)
    return params


if __name__ == "__main__":
    key = jax.random.PRNGKey(0)
    kx, kp = jax.random.split(key)

    # Small ResNet (BasicBlock, num_blocks=[1,1,1,1], num_classes=2); input
    # (N=2, C=1, H=W=32) as implied by conv1 = Conv2d(1, 64, 7, stride=2).
    N, H, W = 2, 32, 32
    x = jax.random.normal(kx, (N, 1, H, W), jnp.float32)
    params = init_resnet_params(kp, num_blocks=(1, 1, 1, 1), num_classes=2)

    out = jax.block_until_ready(resnet_forward(x, params))
    assert out.shape == (N, 2), out.shape

    ref = resnet_ref(x, params)
    rel_err = jnp.linalg.norm(out - ref) / (jnp.linalg.norm(ref) + 1e-6)
    assert float(rel_err) < 0.1, float(rel_err)   # bf16 pipeline vs f32 ref

    print("KERNEL_OK")
</pallas_src>

<mosaic_0001>
module attributes {stable_mosaic.version = 11 : i64} {
  func.func @kernel(%arg0: i32, %arg1: memref<1x32x32x1xbf16, #tpu.memory_space<vmem>>, %arg2: memref<49x64xbf16, #tpu.memory_space<vmem>>, %arg3: memref<1x64xf32, #tpu.memory_space<vmem>>, %arg4: memref<1x8x8x64xbf16, #tpu.memory_space<vmem>>, %arg5: memref<38x38x1xf32, #tpu.memory_space<vmem>>, %arg6: memref<18x18x64xf32, #tpu.memory_space<vmem>>) attributes {dimension_semantics = [#tpu.dimension_semantics<parallel>], iteration_bounds = array<i64: 2>, scalar_prefetch = 0 : i64, scratch_operands = 2 : i64, tpu.core_type = #tpu.core_type<tc>, window_params = [{transform_indices = @transform_0, window_bounds = array<i64: 1, 32, 32, 1>}, {pipeline_mode = #tpu.pipeline_mode<synchronous>, transform_indices = @transform_1, window_bounds = array<i64: 49, 64>}, {pipeline_mode = #tpu.pipeline_mode<synchronous>, transform_indices = @transform_2, window_bounds = array<i64: 1, 64>}, {transform_indices = @transform_3, window_bounds = array<i64: 1, 8, 8, 64>}]} {
    %cst = arith.constant 0.000000e+00 : f32
    %0 = vector.broadcast %cst : f32 to vector<38x38x1xf32>
    %c0 = arith.constant 0 : index
    %c0_0 = arith.constant 0 : index
    %c0_1 = arith.constant 0 : index
    %1 = vector.load %arg5[%c0, %c0_0, %c0_1] : memref<38x38x1xf32, #tpu.memory_space<vmem>>, vector<38x38x1xf32>
    tpu.vector_store %arg5[%c0, %c0_0, %c0_1], %0 {strides = array<i32>} : memref<38x38x1xf32, #tpu.memory_space<vmem>>, vector<38x38x1xf32>,
    %c0_2 = arith.constant 0 : index
    %c0_3 = arith.constant 0 : index
    %c0_4 = arith.constant 0 : index
    %c0_5 = arith.constant 0 : index
    %2 = vector.load %arg1[%c0_2, %c0_3, %c0_4, %c0_5] : memref<1x32x32x1xbf16, #tpu.memory_space<vmem>>, vector<1x32x32x1xbf16>
    %3 = vector.shape_cast %2 : vector<1x32x32x1xbf16> to vector<32x32x1xbf16>
    %4 = arith.extf %3 : vector<32x32x1xbf16> to vector<32x32x1xf32>
    %c3 = arith.constant 3 : index
    %c3_6 = arith.constant 3 : index
    %c0_7 = arith.constant 0 : index
    %5 = vector.load %arg5[%c3, %c3_6, %c0_7] : memref<38x38x1xf32, #tpu.memory_space<vmem>>, vector<32x32x1xf32>
    tpu.vector_store %arg5[%c3, %c3_6, %c0_7], %4 {strides = array<i32>} : memref<38x38x1xf32, #tpu.memory_space<vmem>>, vector<32x32x1xf32>,
    %c0_8 = arith.constant 0 : index
    %c0_9 = arith.constant 0 : index
    %c0_10 = arith.constant 0 : index
    %6 = tpu.strided_load %arg5[%c0_8, %c0_9, %c0_10] {strides = array<i32: 2, 2, 1>} : memref<38x38x1xf32, #tpu.memory_space<vmem>>, vector<16x16x1xf32>
    %c0_11 = arith.constant 0 : index
    %c1 = arith.constant 1 : index
    %c0_12 = arith.constant 0 : index
    %7 = tpu.strided_load %arg5[%c0_11, %c1, %c0_12] {strides = array<i32: 2, 2, 1>} : memref<38x38x1xf32, #tpu.memory_space<vmem>>, vector<16x16x1xf32>
    %c0_13 = arith.constant 0 : index
    %c2 = arith.constant 2 : index
    %c0_14 = arith.constant 0 : index
    %8 = tpu.strided_load %arg5[%c0_13, %c2, %c0_14] {strides = array<i32: 2, 2, 1>} : memref<38x38x1xf32, #tpu.memory_space<vmem>>, vector<16x16x1xf32>
    %c0_15 = arith.constant 0 : index
    %c3_16 = arith.constant 3 : index
    %c0_17 = arith.constant 0 : index
    %9 = tpu.strided_load %arg5[%c0_15, %c3_16, %c0_17] {strides = array<i32: 2, 2, 1>} : memref<38x38x1xf32, #tpu.memory_space<vmem>>, vector<16x16x1xf32>
    %c0_18 = arith.constant 0 : index
    %c4 = arith.constant 4 : index
    %c0_19 = arith.constant 0 : index
    %10 = tpu.strided_load %arg5[%c0_18, %c4, %c0_19] {strides = array<i32: 2, 2, 1>} : memref<38x38x1xf32, #tpu.memory_space<vmem>>, vector<16x16x1xf32>
    %c0_20 = arith.constant 0 : index
    %c5 = arith.constant 5 : index
    %c0_21 = arith.constant 0 : index
    %11 = tpu.strided_load %arg5[%c0_20, %c5, %c0_21] {strides = array<i32: 2, 2, 1>} : memref<38x38x1xf32, #tpu.memory_space<vmem>>, vector<16x16x1xf32>
    %c0_22 = arith.constant 0 : index
    %c6 = arith.constant 6 : index
    %c0_23 = arith.constant 0 : index
    %12 = tpu.strided_load %arg5[%c0_22, %c6, %c0_23] {strides = array<i32: 2, 2, 1>} : memref<38x38x1xf32, #tpu.memory_space<vmem>>, vector<16x16x1xf32>
    %c1_24 = arith.constant 1 : index
    %c0_25 = arith.constant 0 : index
    %c0_26 = arith.constant 0 : index
    %13 = tpu.strided_load %arg5[%c1_24, %c0_25, %c0_26] {strides = array<i32: 2, 2, 1>} : memref<38x38x1xf32, #tpu.memory_space<vmem>>, vector<16x16x1xf32>
    %c1_27 = arith.constant 1 : index
    %c1_28 = arith.constant 1 : index
    %c0_29 = arith.constant 0 : index
    %14 = tpu.strided_load %arg5[%c1_27, %c1_28, %c0_29] {strides = array<i32: 2, 2, 1>} : memref<38x38x1xf32, #tpu.memory_space<vmem>>, vector<16x16x1xf32>
    %c1_30 = arith.constant 1 : index
    %c2_31 = arith.constant 2 : index
    %c0_32 = arith.constant 0 : index
    %15 = tpu.strided_load %arg5[%c1_30, %c2_31, %c0_32] {strides = array<i32: 2, 2, 1>} : memref<38x38x1xf32, #tpu.memory_space<vmem>>, vector<16x16x1xf32>
    %c1_33 = arith.constant 1 : index
    %c3_34 = arith.constant 3 : index
    %c0_35 = arith.constant 0 : index
    %16 = tpu.strided_load %arg5[%c1_33, %c3_34, %c0_35] {strides = array<i32: 2, 2, 1>} : memref<38x38x1xf32, #tpu.memory_space<vmem>>, vector<16x16x1xf32>
    %c1_36 = arith.constant 1 : index
    %c4_37 = arith.constant 4 : index
    %c0_38 = arith.constant 0 : index
    %17 = tpu.strided_load %arg5[%c1_36, %c4_37, %c0_38] {strides = array<i32: 2, 2, 1>} : memref<38x38x1xf32, #tpu.memory_space<vmem>>, vector<16x16x1xf32>
    %c1_39 = arith.constant 1 : index
    %c5_40 = arith.constant 5 : index
    %c0_41 = arith.constant 0 : index
    %18 = tpu.strided_load %arg5[%c1_39, %c5_40, %c0_41] {strides = array<i32: 2, 2, 1>} : memref<38x38x1xf32, #tpu.memory_space<vmem>>, vector<16x16x1xf32>
    %c1_42 = arith.constant 1 : index
    %c6_43 = arith.constant 6 : index
    %c0_44 = arith.constant 0 : index
    %19 = tpu.strided_load %arg5[%c1_42, %c6_43, %c0_44] {strides = array<i32: 2, 2, 1>} : memref<38x38x1xf32, #tpu.memory_space<vmem>>, vector<16x16x1xf32>
    %c2_45 = arith.constant 2 : index
    %c0_46 = arith.constant 0 : index
    %c0_47 = arith.constant 0 : index
    %20 = tpu.strided_load %arg5[%c2_45, %c0_46, %c0_47] {strides = array<i32: 2, 2, 1>} : memref<38x38x1xf32, #tpu.memory_space<vmem>>, vector<16x16x1xf32>
    %c2_48 = arith.constant 2 : index
    %c1_49 = arith.constant 1 : index
    %c0_50 = arith.constant 0 : index
    %21 = tpu.strided_load %arg5[%c2_48, %c1_49, %c0_50] {strides = array<i32: 2, 2, 1>} : memref<38x38x1xf32, #tpu.memory_space<vmem>>, vector<16x16x1xf32>
    %c2_51 = arith.constant 2 : index
    %c2_52 = arith.constant 2 : index
    %c0_53 = arith.constant 0 : index
    %22 = tpu.strided_load %arg5[%c2_51, %c2_52, %c0_53] {strides = array<i32: 2, 2, 1>} : memref<38x38x1xf32, #tpu.memory_space<vmem>>, vector<16x16x1xf32>
    %c2_54 = arith.constant 2 : index
    %c3_55 = arith.constant 3 : index
    %c0_56 = arith.constant 0 : index
    %23 = tpu.strided_load %arg5[%c2_54, %c3_55, %c0_56] {strides = array<i32: 2, 2, 1>} : memref<38x38x1xf32, #tpu.memory_space<vmem>>, vector<16x16x1xf32>
    %c2_57 = arith.constant 2 : index
    %c4_58 = arith.constant 4 : index
    %c0_59 = arith.constant 0 : index
    %24 = tpu.strided_load %arg5[%c2_57, %c4_58, %c0_59] {strides = array<i32: 2, 2, 1>} : memref<38x38x1xf32, #tpu.memory_space<vmem>>, vector<16x16x1xf32>
    %c2_60 = arith.constant 2 : index
    %c5_61 = arith.constant 5 : index
    %c0_62 = arith.constant 0 : index
    %25 = tpu.strided_load %arg5[%c2_60, %c5_61, %c0_62] {strides = array<i32: 2, 2, 1>} : memref<38x38x1xf32, #tpu.memory_space<vmem>>, vector<16x16x1xf32>
    %c2_63 = arith.constant 2 : index
    %c6_64 = arith.constant 6 : index
    %c0_65 = arith.constant 0 : index
    %26 = tpu.strided_load %arg5[%c2_63, %c6_64, %c0_65] {strides = array<i32: 2, 2, 1>} : memref<38x38x1xf32, #tpu.memory_space<vmem>>, vector<16x16x1xf32>
    %c3_66 = arith.constant 3 : index
    %c0_67 = arith.constant 0 : index
    %c0_68 = arith.constant 0 : index
    %27 = tpu.strided_load %arg5[%c3_66, %c0_67, %c0_68] {strides = array<i32: 2, 2, 1>} : memref<38x38x1xf32, #tpu.memory_space<vmem>>, vector<16x16x1xf32>
    %c3_69 = arith.constant 3 : index
    %c1_70 = arith.constant 1 : index
    %c0_71 = arith.constant 0 : index
    %28 = tpu.strided_load %arg5[%c3_69, %c1_70, %c0_71] {strides = array<i32: 2, 2, 1>} : memref<38x38x1xf32, #tpu.memory_space<vmem>>, vector<16x16x1xf32>
    %c3_72 = arith.constant 3 : index
    %c2_73 = arith.constant 2 : index
    %c0_74 = arith.constant 0 : index
    %29 = tpu.strided_load %arg5[%c3_72, %c2_73, %c0_74] {strides = array<i32: 2, 2, 1>} : memref<38x38x1xf32, #tpu.memory_space<vmem>>, vector<16x16x1xf32>
    %c3_75 = arith.constant 3 : index
    %c3_76 = arith.constant 3 : index
    %c0_77 = arith.constant 0 : index
    %30 = tpu.strided_load %arg5[%c3_75, %c3_76, %c0_77] {strides = array<i32: 2, 2, 1>} : memref<38x38x1xf32, #tpu.memory_space<vmem>>, vector<16x16x1xf32>
    %c3_78 = arith.constant 3 : index
    %c4_79 = arith.constant 4 : index
    %c0_80 = arith.constant 0 : index
    %31 = tpu.strided_load %arg5[%c3_78, %c4_79, %c0_80] {strides = array<i32: 2, 2, 1>} : memref<38x38x1xf32, #tpu.memory_space<vmem>>, vector<16x16x1xf32>
    %c3_81 = arith.constant 3 : index
    %c5_82 = arith.constant 5 : index
    %c0_83 = arith.constant 0 : index
    %32 = tpu.strided_load %arg5[%c3_81, %c5_82, %c0_83] {strides = array<i32: 2, 2, 1>} : memref<38x38x1xf32, #tpu.memory_space<vmem>>, vector<16x16x1xf32>
    %c3_84 = arith.constant 3 : index
    %c6_85 = arith.constant 6 : index
    %c0_86 = arith.constant 0 : index
    %33 = tpu.strided_load %arg5[%c3_84, %c6_85, %c0_86] {strides = array<i32: 2, 2, 1>} : memref<38x38x1xf32, #tpu.memory_space<vmem>>, vector<16x16x1xf32>
    %c4_87 = arith.constant 4 : index
    %c0_88 = arith.constant 0 : index
    %c0_89 = arith.constant 0 : index
    %34 = tpu.strided_load %arg5[%c4_87, %c0_88, %c0_89] {strides = array<i32: 2, 2, 1>} : memref<38x38x1xf32, #tpu.memory_space<vmem>>, vector<16x16x1xf32>
    %c4_90 = arith.constant 4 : index
    %c1_91 = arith.constant 1 : index
    %c0_92 = arith.constant 0 : index
    %35 = tpu.strided_load %arg5[%c4_90, %c1_91, %c0_92] {strides = array<i32: 2, 2, 1>} : memref<38x38x1xf32, #tpu.memory_space<vmem>>, vector<16x16x1xf32>
    %c4_93 = arith.constant 4 : index
    %c2_94 = arith.constant 2 : index
    %c0_95 = arith.constant 0 : index
    %36 = tpu.strided_load %arg5[%c4_93, %c2_94, %c0_95] {strides = array<i32: 2, 2, 1>} : memref<38x38x1xf32, #tpu.memory_space<vmem>>, vector<16x16x1xf32>
    %c4_96 = arith.constant 4 : index
    %c3_97 = arith.constant 3 : index
    %c0_98 = arith.constant 0 : index
    %37 = tpu.strided_load %arg5[%c4_96, %c3_97, %c0_98] {strides = array<i32: 2, 2, 1>} : memref<38x38x1xf32, #tpu.memory_space<vmem>>, vector<16x16x1xf32>
    %c4_99 = arith.constant 4 : index
    %c4_100 = arith.constant 4 : index
    %c0_101 = arith.constant 0 : index
    %38 = tpu.strided_load %arg5[%c4_99, %c4_100, %c0_101] {strides = array<i32: 2, 2, 1>} : memref<38x38x1xf32, #tpu.memory_space<vmem>>, vector<16x16x1xf32>
    %c4_102 = arith.constant 4 : index
    %c5_103 = arith.constant 5 : index
    %c0_104 = arith.constant 0 : index
    %39 = tpu.strided_load %arg5[%c4_102, %c5_103, %c0_104] {strides = array<i32: 2, 2, 1>} : memref<38x38x1xf32, #tpu.memory_space<vmem>>, vector<16x16x1xf32>
    %c4_105 = arith.constant 4 : index
    %c6_106 = arith.constant 6 : index
    %c0_107 = arith.constant 0 : index
    %40 = tpu.strided_load %arg5[%c4_105, %c6_106, %c0_107] {strides = array<i32: 2, 2, 1>} : memref<38x38x1xf32, #tpu.memory_space<vmem>>, vector<16x16x1xf32>
    %c5_108 = arith.constant 5 : index
    %c0_109 = arith.constant 0 : index
    %c0_110 = arith.constant 0 : index
    %41 = tpu.strided_load %arg5[%c5_108, %c0_109, %c0_110] {strides = array<i32: 2, 2, 1>} : memref<38x38x1xf32, #tpu.memory_space<vmem>>, vector<16x16x1xf32>
    %c5_111 = arith.constant 5 : index
    %c1_112 = arith.constant 1 : index
    %c0_113 = arith.constant 0 : index
    %42 = tpu.strided_load %arg5[%c5_111, %c1_112, %c0_113] {strides = array<i32: 2, 2, 1>} : memref<38x38x1xf32, #tpu.memory_space<vmem>>, vector<16x16x1xf32>
    %c5_114 = arith.constant 5 : index
    %c2_115 = arith.constant 2 : index
    %c0_116 = arith.constant 0 : index
    %43 = tpu.strided_load %arg5[%c5_114, %c2_115, %c0_116] {strides = array<i32: 2, 2, 1>} : memref<38x38x1xf32, #tpu.memory_space<vmem>>, vector<16x16x1xf32>
    %c5_117 = arith.constant 5 : index
    %c3_118 = arith.constant 3 : index
    %c0_119 = arith.constant 0 : index
    %44 = tpu.strided_load %arg5[%c5_117, %c3_118, %c0_119] {strides = array<i32: 2, 2, 1>} : memref<38x38x1xf32, #tpu.memory_space<vmem>>, vector<16x16x1xf32>
    %c5_120 = arith.constant 5 : index
    %c4_121 = arith.constant 4 : index
    %c0_122 = arith.constant 0 : index
    %45 = tpu.strided_load %arg5[%c5_120, %c4_121, %c0_122] {strides = array<i32: 2, 2, 1>} : memref<38x38x1xf32, #tpu.memory_space<vmem>>, vector<16x16x1xf32>
    %c5_123 = arith.constant 5 : index
    %c5_124 = arith.constant 5 : index
    %c0_125 = arith.constant 0 : index
    %46 = tpu.strided_load %arg5[%c5_123, %c5_124, %c0_125] {strides = array<i32: 2, 2, 1>} : memref<38x38x1xf32, #tpu.memory_space<vmem>>, vector<16x16x1xf32>
    %c5_126 = arith.constant 5 : index
    %c6_127 = arith.constant 6 : index
    %c0_128 = arith.constant 0 : index
    %47 = tpu.strided_load %arg5[%c5_126, %c6_127, %c0_128] {strides = array<i32: 2, 2, 1>} : memref<38x38x1xf32, #tpu.memory_space<vmem>>, vector<16x16x1xf32>
    %c6_129 = arith.constant 6 : index
    %c0_130 = arith.constant 0 : index
    %c0_131 = arith.constant 0 : index
    %48 = tpu.strided_load %arg5[%c6_129, %c0_130, %c0_131] {strides = array<i32: 2, 2, 1>} : memref<38x38x1xf32, #tpu.memory_space<vmem>>, vector<16x16x1xf32>
    %c6_132 = arith.constant 6 : index
    %c1_133 = arith.constant 1 : index
    %c0_134 = arith.constant 0 : index
    %49 = tpu.strided_load %arg5[%c6_132, %c1_133, %c0_134] {strides = array<i32: 2, 2, 1>} : memref<38x38x1xf32, #tpu.memory_space<vmem>>, vector<16x16x1xf32>
    %c6_135 = arith.constant 6 : index
    %c2_136 = arith.constant 2 : index
    %c0_137 = arith.constant 0 : index
    %50 = tpu.strided_load %arg5[%c6_135, %c2_136, %c0_137] {strides = array<i32: 2, 2, 1>} : memref<38x38x1xf32, #tpu.memory_space<vmem>>, vector<16x16x1xf32>
    %c6_138 = arith.constant 6 : index
    %c3_139 = arith.constant 3 : index
    %c0_140 = arith.constant 0 : index
    %51 = tpu.strided_load %arg5[%c6_138, %c3_139, %c0_140] {strides = array<i32: 2, 2, 1>} : memref<38x38x1xf32, #tpu.memory_space<vmem>>, vector<16x16x1xf32>
    %c6_141 = arith.constant 6 : index
    %c4_142 = arith.constant 4 : index
    %c0_143 = arith.constant 0 : index
    %52 = tpu.strided_load %arg5[%c6_141, %c4_142, %c0_143] {strides = array<i32: 2, 2, 1>} : memref<38x38x1xf32, #tpu.memory_space<vmem>>, vector<16x16x1xf32>
    %c6_144 = arith.constant 6 : index
    %c5_145 = arith.constant 5 : index
    %c0_146 = arith.constant 0 : index
    %53 = tpu.strided_load %arg5[%c6_144, %c5_145, %c0_146] {strides = array<i32: 2, 2, 1>} : memref<38x38x1xf32, #tpu.memory_space<vmem>>, vector<16x16x1xf32>
    %c6_147 = arith.constant 6 : index
    %c6_148 = arith.constant 6 : index
    %c0_149 = arith.constant 0 : index
    %54 = tpu.strided_load %arg5[%c6_147, %c6_148, %c0_149] {strides = array<i32: 2, 2, 1>} : memref<38x38x1xf32, #tpu.memory_space<vmem>>, vector<16x16x1xf32>
    %55 = tpu.concatenate %6, %7, %8, %9, %10, %11, %12, %13, %14, %15, %16, %17, %18, %19, %20, %21 in 2 : vector<16x16x1xf32>, vector<16x16x1xf32>, vector<16x16x1xf32>, vector<16x16x1xf32>, vector<16x16x1xf32>, vector<16x16x1xf32>, vector<16x16x1xf32>, vector<16x16x1xf32>, vector<16x16x1xf32>, vector<16x16x1xf32>, vector<16x16x1xf32>, vector<16x16x1xf32>, vector<16x16x1xf32>, vector<16x16x1xf32>, vector<16x16x1xf32>, vector<16x16x1xf32> -> vector<16x16x16xf32>
    %56 = tpu.concatenate %22, %23, %24, %25, %26, %27, %28, %29, %30, %31, %32, %33, %34, %35, %36, %37 in 2 : vector<16x16x1xf32>, vector<16x16x1xf32>, vector<16x16x1xf32>, vector<16x16x1xf32>, vector<16x16x1xf32>, vector<16x16x1xf32>, vector<16x16x1xf32>, vector<16x16x1xf32>, vector<16x16x1xf32>, vector<16x16x1xf32>, vector<16x16x1xf32>, vector<16x16x1xf32>, vector<16x16x1xf32>, vector<16x16x1xf32>, vector<16x16x1xf32>, vector<16x16x1xf32> -> vector<16x16x16xf32>
    %57 = tpu.concatenate %38, %39, %40, %41, %42, %43, %44, %45, %46, %47, %48, %49, %50, %51, %52, %53 in 2 : vector<16x16x1xf32>, vector<16x16x1xf32>, vector<16x16x1xf32>, vector<16x16x1xf32>, vector<16x16x1xf32>, vector<16x16x1xf32>, vector<16x16x1xf32>, vector<16x16x1xf32>, vector<16x16x1xf32>, vector<16x16x1xf32>, vector<16x16x1xf32>, vector<16x16x1xf32>, vector<16x16x1xf32>, vector<16x16x1xf32>, vector<16x16x1xf32>, vector<16x16x1xf32> -> vector<16x16x16xf32>
    %58 = tpu.concatenate %55, %56, %57, %54 in 2 : vector<16x16x16xf32>, vector<16x16x16xf32>, vector<16x16x16xf32>, vector<16x16x1xf32> -> vector<16x16x49xf32>
    %59 = vector.shape_cast %58 : vector<16x16x49xf32> to vector<256x49xf32>
    %60 = arith.truncf %59 : vector<256x49xf32> to vector<256x49xbf16>
    %c0_150 = arith.constant 0 : index
    %c0_151 = arith.constant 0 : index
    %61 = vector.load %arg2[%c0_150, %c0_151] : memref<49x64xbf16, #tpu.memory_space<vmem>>, vector<49x64xbf16>
    %cst_152 = arith.constant dense<0.000000e+00> : vector<256x64xf32>
    %62 = tpu.matmul %60, %61, %cst_152 {dimension_numbers = #tpu.dot_dimension_numbers<[1], [0], [0], [1], [0, 0, 1, 1], [], []>} : vector<256x49xbf16>, vector<49x64xbf16>, vector<256x64xf32> -> vector<256x64xf32>
    %c0_153 = arith.constant 0 : index
    %c0_154 = arith.constant 0 : index
    %63 = vector.load %arg3[%c0_153, %c0_154] : memref<1x64xf32, #tpu.memory_space<vmem>>, vector<1x64xf32>
    %64 = vector.broadcast %63 : vector<1x64xf32> to vector<256x64xf32>
    %65 = arith.addf %62, %64 : vector<256x64xf32>
    %cst_155 = arith.constant 0.000000e+00 : f32
    %66 = vector.broadcast %cst_155 : f32 to vector<256x64xf32>
    %67 = arith.maximumf %65, %66 : vector<256x64xf32>
    %cst_156 = arith.constant 0.000000e+00 : f32
    %68 = vector.broadcast %cst_156 : f32 to vector<18x18x64xf32>
    %c0_157 = arith.constant 0 : index
    %c0_158 = arith.constant 0 : index
    %c0_159 = arith.constant 0 : index
    %69 = vector.load %arg6[%c0_157, %c0_158, %c0_159] : memref<18x18x64xf32, #tpu.memory_space<vmem>>, vector<18x18x64xf32>
    tpu.vector_store %arg6[%c0_157, %c0_158, %c0_159], %68 {strides = array<i32>} : memref<18x18x64xf32, #tpu.memory_space<vmem>>, vector<18x18x64xf32>,
    %70 = vector.shape_cast %67 : vector<256x64xf32> to vector<16x16x64xf32>
    %c1_160 = arith.constant 1 : index
    %c1_161 = arith.constant 1 : index
    %c0_162 = arith.constant 0 : index
    %71 = vector.load %arg6[%c1_160, %c1_161, %c0_162] : memref<18x18x64xf32, #tpu.memory_space<vmem>>, vector<16x16x64xf32>
    tpu.vector_store %arg6[%c1_160, %c1_161, %c0_162], %70 {strides = array<i32>} : memref<18x18x64xf32, #tpu.memory_space<vmem>>, vector<16x16x64xf32>,
    %c0_163 = arith.constant 0 : index
    %c0_164 = arith.constant 0 : index
    %c0_165 = arith.constant 0 : index
    %72 = tpu.strided_load %arg6[%c0_163, %c0_164, %c0_165] {strides = array<i32: 2, 2, 1>} : memref<18x18x64xf32, #tpu.memory_space<vmem>>, vector<8x8x64xf32>
    %c0_166 = arith.constant 0 : index
    %c1_167 = arith.constant 1 : index
    %c0_168 = arith.constant 0 : index
    %73 = tpu.strided_load %arg6[%c0_166, %c1_167, %c0_168] {strides = array<i32: 2, 2, 1>} : memref<18x18x64xf32, #tpu.memory_space<vmem>>, vector<8x8x64xf32>
    %74 = arith.maximumf %72, %73 : vector<8x8x64xf32>
    %c0_169 = arith.constant 0 : index
    %c2_170 = arith.constant 2 : index
    %c0_171 = arith.constant 0 : index
    %75 = tpu.strided_load %arg6[%c0_169, %c2_170, %c0_171] {strides = array<i32: 2, 2, 1>} : memref<18x18x64xf32, #tpu.memory_space<vmem>>, vector<8x8x64xf32>
    %76 = arith.maximumf %74, %75 : vector<8x8x64xf32>
    %c1_172 = arith.constant 1 : index
    %c0_173 = arith.constant 0 : index
    %c0_174 = arith.constant 0 : index
    %77 = tpu.strided_load %arg6[%c1_172, %c0_173, %c0_174] {strides = array<i32: 2, 2, 1>} : memref<18x18x64xf32, #tpu.memory_space<vmem>>, vector<8x8x64xf32>
    %78 = arith.maximumf %76, %77 : vector<8x8x64xf32>
    %c1_175 = arith.constant 1 : index
    %c1_176 = arith.constant 1 : index
    %c0_177 = arith.constant 0 : index
    %79 = tpu.strided_load %arg6[%c1_175, %c1_176, %c0_177] {strides = array<i32: 2, 2, 1>} : memref<18x18x64xf32, #tpu.memory_space<vmem>>, vector<8x8x64xf32>
    %80 = arith.maximumf %78, %79 : vector<8x8x64xf32>
    %c1_178 = arith.constant 1 : index
    %c2_179 = arith.constant 2 : index
    %c0_180 = arith.constant 0 : index
    %81 = tpu.strided_load %arg6[%c1_178, %c2_179, %c0_180] {strides = array<i32: 2, 2, 1>} : memref<18x18x64xf32, #tpu.memory_space<vmem>>, vector<8x8x64xf32>
    %82 = arith.maximumf %80, %81 : vector<8x8x64xf32>
    %c2_181 = arith.constant 2 : index
    %c0_182 = arith.constant 0 : index
    %c0_183 = arith.constant 0 : index
    %83 = tpu.strided_load %arg6[%c2_181, %c0_182, %c0_183] {strides = array<i32: 2, 2, 1>} : memref<18x18x64xf32, #tpu.memory_space<vmem>>, vector<8x8x64xf32>
    %84 = arith.maximumf %82, %83 : vector<8x8x64xf32>
    %c2_184 = arith.constant 2 : index
    %c1_185 = arith.constant 1 : index
    %c0_186 = arith.constant 0 : index
    %85 = tpu.strided_load %arg6[%c2_184, %c1_185, %c0_186] {strides = array<i32: 2, 2, 1>} : memref<18x18x64xf32, #tpu.memory_space<vmem>>, vector<8x8x64xf32>
    %86 = arith.maximumf %84, %85 : vector<8x8x64xf32>
    %c2_187 = arith.constant 2 : index
    %c2_188 = arith.constant 2 : index
    %c0_189 = arith.constant 0 : index
    %87 = tpu.strided_load %arg6[%c2_187, %c2_188, %c0_189] {strides = array<i32: 2, 2, 1>} : memref<18x18x64xf32, #tpu.memory_space<vmem>>, vector<8x8x64xf32>
    %88 = arith.maximumf %86, %87 : vector<8x8x64xf32>
    %89 = arith.truncf %88 : vector<8x8x64xf32> to vector<8x8x64xbf16>
    %c0_190 = arith.constant 0 : index
    %c0_191 = arith.constant 0 : index
    %c0_192 = arith.constant 0 : index
    %c0_193 = arith.constant 0 : index
    %90 = vector.load %arg4[%c0_190, %c0_191, %c0_192, %c0_193] : memref<1x8x8x64xbf16, #tpu.memory_space<vmem>>, vector<1x8x8x64xbf16>
    %91 = vector.shape_cast %90 : vector<1x8x8x64xbf16> to vector<8x8x64xbf16>
    %92 = vector.shape_cast %89 : vector<8x8x64xbf16> to vector<1x8x8x64xbf16>
    tpu.vector_store %arg4[%c0_190, %c0_191, %c0_192, %c0_193], %92 {strides = array<i32>} : memref<1x8x8x64xbf16, #tpu.memory_space<vmem>>, vector<1x8x8x64xbf16>,
    return
  }
  func.func @transform_0(%arg0: i32) -> (i32, i32, i32, i32) {
    %c0_i32 = arith.constant 0 : i32
    %c0_i32_0 = arith.constant 0 : i32
    %c0_i32_1 = arith.constant 0 : i32
    %c0_i32_2 = arith.constant 0 : i32
    return %arg0, %c0_i32, %c0_i32_0, %c0_i32_1 : i32, i32, i32, i32
  }
  func.func @transform_1(%arg0: i32) -> (i32, i32) {
    %c0_i32 = arith.constant 0 : i32
    %c0_i32_0 = arith.constant 0 : i32
    %c0_i32_1 = arith.constant 0 : i32
    return %c0_i32, %c0_i32_0 : i32, i32
  }
  func.func @transform_2(%arg0: i32) -> (i32, i32) {
    %c0_i32 = arith.constant 0 : i32
    %c0_i32_0 = arith.constant 0 : i32
    %c0_i32_1 = arith.constant 0 : i32
    return %c0_i32, %c0_i32_0 : i32, i32
  }
  func.func @transform_3(%arg0: i32) -> (i32, i32, i32, i32) {
    %c0_i32 = arith.constant 0 : i32
    %c0_i32_0 = arith.constant 0 : i32
    %c0_i32_1 = arith.constant 0 : i32
    %c0_i32_2 = arith.constant 0 : i32
    return %arg0, %c0_i32, %c0_i32_0, %c0_i32_1 : i32, i32, i32, i32
  }
}

</mosaic_0001>

<llo_original>
// kernel: tpu_custom_call.1
$region0: #{tpu_custom_call.1}
  #allocation0 [shape = 'u32[]', space=smem, size = 0x4, offset = 0x4, fixed_abs, tag = 'smem constant byte address 0x4 - core index']
  #allocation1 [shape = 'u32[144,128]{1,0:T(1,128)}', space=vmem, size = 0x12000, scoped, tag = 'internal scratch']
  #allocation2 [shape = 'f32[38,38,1]{2,1,0:T(8,128)}', space=vmem, size = 0xbe000, scoped, tag = 'scratch operand']
  #allocation3 [shape = 'f32[18,18,64]{2,1,0:T(8,128)}', space=vmem, size = 0x36000, scoped, tag = 'scratch operand']
  %s0 = inlined_call_operand.vmem [shape: bf16[2,32,32,1], index: 0, kind: input, shape index: {}]
  %s1 = inlined_call_operand.vmem [shape: bf16[49,64], index: 1, kind: input, shape index: {}]
  %s2 = inlined_call_operand.vmem [shape: f32[1,64], index: 2, kind: input, shape index: {}]
  %s3 = inlined_call_operand.hbm [shape: bf16[2,8,8,64], index: 3, kind: output, shape index: {}]
  %s4 = sld [smem:[#allocation0]]
  $region45: #{tpu_custom_call.1} parent=0
    _
  %s6 = ssub.s32 1, %s4
  %s7 = scalar_select 0, %s6, %s4
  $region1: #{tpu_custom_call.1} parent=0
    #allocation4 [shape = 'u8[32768]{0}', space=vmem, size = 0x8000, scoped, tag = 'output window, operand 0']
    #allocation5 [shape = 's32[2]{0}', space=sflag, size = 0x8, scoped, tag = 'scoped memory for tpu_custom_call.1']
    %8 = vsyncpa [#allocation5], 0
    %s9 = scalar_lea.sflag [#allocation5], 1
    %10 = vsyncpa %s9, 0
    loop: start=0, step=1, limit=4
    $region2: #{tpu_custom_call.1} parent=1 // loop_pre_header
      _
    $region3: #{tpu_custom_call.1} parent=1 // loop_header
      %s12 = sphi 0, %s16
      %p13 = scmp.ge.s32.totalorder %s12, 4
      %s22 = sphi 0, %s24
      %s25 = sphi 0, %s22
      %s26 = sphi 0, %s25
      %s42 = sphi 0, %s26
      %s46 = sphi 0, %s46
      %s48 = sphi 0, %s46
      %s49 = sphi 0, %s48
      %s63 = sphi 0, %s49
      %s67 = sphi 0, %s67
      %s69 = sphi 0, %s67
      %s70 = sphi 0, %s69
      %s84 = sphi 0, %s70
      %s90 = sphi 0, %s92
      %s93 = sphi 0, %s90
      %s94 = sphi 0, %s93
      %s110 = sphi 0, %s94
    $region4: #{tpu_custom_call.1} parent=1 // loop_header_branch
      %15 = sbr.rel (%p13) target = $region8
    $region5: #{tpu_custom_call.1} parent=1 // loop_body
      %s17 = ssub.s32 %s12, 1
      %s18 = ssub.s32 %s12, 2
      %s19 = sadd.s32 %s12, 1
      %s20 = ssub.s32 %s12, %s19
      %p21 = scmp.eq.s32.totalorder %s20, 0
      %s23 = sadd.s32 %s22, 1
      %s24 = scalar_select %p21, %s22, %s23
      %p27 = pneg %p21
      %p28 = scmp.eq.s32.totalorder %s12, 1
      %p29 = por %p27, %p28
      %p30 = scmp.ne.s32.totalorder %s22, %s25
      %p31 = scmp.eq.s32.totalorder %s12, 0
      %p32 = por %p30, %p31
      %p33 = scmp.ne.s32.totalorder %s22, %s25
      %p34 = scmp.eq.s32.totalorder %s17, 1
      %p35 = por %p33, %p34
      %p36 = scmp.ne.s32.totalorder %s25, %s26
      %p37 = scmp.eq.s32.totalorder %s17, 0
      %p38 = por %p36, %p37
      %p39 = scmp.ne.s32.totalorder %s25, %s26
      %p40 = scmp.eq.s32.totalorder %s18, 1
      %p41 = por %p39, %p40
      %p43 = scmp.ne.s32.totalorder %s26, %s42
      %p44 = scmp.eq.s32.totalorder %s18, 0
      %p45 = por %p43, %p44
      %s47 = sadd.s32 %s46, 1
      %p50 = scmp.eq.s32.totalorder %s12, 1
      %p51 = scmp.ne.s32.totalorder %s46, %s48
      %p52 = scmp.eq.s32.totalorder %s12, 0
      %p53 = por %p51, %p52
      %p54 = scmp.ne.s32.totalorder %s46, %s48
      %p55 = scmp.eq.s32.totalorder %s17, 1
      %p56 = por %p54, %p55
      %p57 = scmp.ne.s32.totalorder %s48, %s49
      %p58 = scmp.eq.s32.totalorder %s17, 0
      %p59 = por %p57, %p58
      %p60 = scmp.ne.s32.totalorder %s48, %s49
      %p61 = scmp.eq.s32.totalorder %s18, 1
      %p62 = por %p60, %p61
      %p64 = scmp.ne.s32.totalorder %s49, %s63
      %p65 = scmp.eq.s32.totalorder %s18, 0
      %p66 = por %p64, %p65
      %s68 = sadd.s32 %s67, 1
      %p71 = scmp.eq.s32.totalorder %s12, 1
      %p72 = scmp.ne.s32.totalorder %s67, %s69
      %p73 = scmp.eq.s32.totalorder %s12, 0
      %p74 = por %p72, %p73
      %p75 = scmp.ne.s32.totalorder %s67, %s69
      %p76 = scmp.eq.s32.totalorder %s17, 1
      %p77 = por %p75, %p76
      %p78 = scmp.ne.s32.totalorder %s69, %s70
      %p79 = scmp.eq.s32.totalorder %s17, 0
      %p80 = por %p78, %p79
      %p81 = scmp.ne.s32.totalorder %s69, %s70
      %p82 = scmp.eq.s32.totalorder %s18, 1
      %p83 = por %p81, %p82
      %p85 = scmp.ne.s32.totalorder %s70, %s84
      %p86 = scmp.eq.s32.totalorder %s18, 0
      %p87 = por %p85, %p86
      %s88 = ssub.s32 %s12, %s19
      %p89 = scmp.eq.s32.totalorder %s88, 0
      %s91 = sadd.s32 %s90, 1
      %s92 = scalar_select %p89, %s90, %s91
      %p95 = pneg %p89
      %p96 = scmp.eq.s32.totalorder %s12, 1
      %p97 = por %p95, %p96
      %p98 = scmp.ne.s32.totalorder %s90, %s93
      %p99 = scmp.eq.s32.totalorder %s12, 0
      %p100 = por %p98, %p99
      %p101 = scmp.ne.s32.totalorder %s90, %s93
      %p102 = scmp.eq.s32.totalorder %s17, 1
      %p103 = por %p101, %p102
      %p104 = scmp.ne.s32.totalorder %s93, %s94
      %p105 = scmp.eq.s32.totalorder %s17, 0
      %p106 = por %p104, %p105
      %p107 = scmp.ne.s32.totalorder %s93, %s94
      %p108 = scmp.eq.s32.totalorder %s18, 1
      %p109 = por %p107, %p108
      %p111 = scmp.ne.s32.totalorder %s94, %s110
      %p112 = scmp.eq.s32.totalorder %s18, 0
      %p113 = por %p111, %p112
      %p114 = scmp.le.s32.totalorder 1, %s12
      %p115 = scmp.lt.s32.totalorder %s12, 3
      %p116 = pnand %p114, %p115
      %p117 = pneg %p116
      // Predicated region
      $region9: #{tpu_custom_call.1} parent=5 // pred_check
        _
      $region10: #{tpu_custom_call.1} parent=5 // pred_check_branch
        %119 = sbr.rel (%p116) target = $region12
      $region11: #{tpu_custom_call.1} parent=5 // pred_region
        %s120 = ssub.s32 %s12, 1
        // Predicated region
        $region13: #{tpu_custom_call.1} parent=11 // pred_check
          %p121 = pneg %p59
        $region14: #{tpu_custom_call.1} parent=11 // pred_check_branch
          %123 = sbr.rel (%p121) target = $region16
        $region15: #{tpu_custom_call.1} parent=11 // pred_region
          _
        $region16: #{tpu_custom_call.1} parent=11 // pred_fallthru
          _
        // Predicated region
        $region17: #{tpu_custom_call.1} parent=11 // pred_check
          %p124 = pneg %p80
        $region18: #{tpu_custom_call.1} parent=11 // pred_check_branch
          %126 = sbr.rel (%p124) target = $region20
        $region19: #{tpu_custom_call.1} parent=11 // pred_region
          _
        $region20: #{tpu_custom_call.1} parent=11 // pred_fallthru
          _
      $region12: #{tpu_custom_call.1} parent=5 // pred_fallthru
        _
      %p127 = scmp.lt.s32.totalorder %s12, 2
      // Predicated region
      $region21: #{tpu_custom_call.1} parent=5 // pred_check
        %p128 = pneg %p127
      $region22: #{tpu_custom_call.1} parent=5 // pred_check_branch
        %130 = sbr.rel (%p128) target = $region24
      $region23: #{tpu_custom_call.1} parent=5 // pred_region
        // Predicated region
        $region25: #{tpu_custom_call.1} parent=23 // pred_check
          %p131 = pneg %p32
        $region26: #{tpu_custom_call.1} parent=23 // pred_check_branch
          %133 = sbr.rel (%p131) target = $region28
        $region27: #{tpu_custom_call.1} parent=23 // pred_region
          %p134 = scmp.lt.s32.totalorder %s12, 1
          %s135 = scalar_select %p134, %s12, 1
          %s136 = smul.addr %s135, 128
          %s137 = smul.addr %s136, 4
          %s138 = scalar_lea.vmem %s0, %s137
        $region28: #{tpu_custom_call.1} parent=23 // pred_fallthru
          _
      $region24: #{tpu_custom_call.1} parent=5 // pred_fallthru
        _
      %p139 = scmp.le.s32.totalorder 1, %s12
      %p140 = scmp.lt.s32.totalorder %s12, 3
      %p141 = pnand %p139, %p140
      %p142 = pneg %p141
      // Predicated region
      $region29: #{tpu_custom_call.1} parent=5 // pred_check
        _
      $region30: #{tpu_custom_call.1} parent=5 // pred_check_branch
        %144 = sbr.rel (%p141) target = $region32
      $region31: #{tpu_custom_call.1} parent=5 // pred_region
        %s145 = ssub.s32 %s12, 1
        %p146 = scmp.lt.s32.totalorder %s17, 1
        %s147 = scalar_select %p146, %s17, 1
        %s148 = smul.addr %s147, 128
        %s149 = smul.addr %s148, 4
        %s150 = scalar_lea.vmem %s0, %s149
        %p151 = pneg %p38
        %p152 = pneg %p35
        %p153 = pneg %p59
        %p154 = pneg %p56
        %p155 = pneg %p80
        %p156 = pneg %p77
        %p157 = pneg %p106
        %p158 = pneg %p103
        %s159 = sand.u32 %s93, 1
        %s160 = scalar_lea.sflag [#allocation5], %s159
        %s161 = sand.u32 %s93, 1
        %s162 = smul.addr %s161, 32
        %s163 = scalar_lea.vmem [#allocation4], %s162
        %p164 = scmp.lt.s32.totalorder %s17, 1
        %s165 = scalar_select %p164, %s17, 1
        %s166 = smul.addr %s165, 128
        %s167 = smul.addr %s166, 4
        %s168 = scalar_lea.vmem %s0, %s167
        %vm170 = vcmask 7168
        %171 = vst.msk [vmem:[#allocation2] sm:$0xff] %vm170, 0.0
        %172 = vst.msk [vmem:[#allocation2 + $0x8] sm:$0xff] %vm170, 0.0
        %173 = vst.msk [vmem:[#allocation2 + $0x10] sm:$0xff] %vm170, 0.0
        %174 = vst.msk [vmem:[#allocation2 + $0x18] sm:$0xff] %vm170, 0.0
        %vm175 = vcmask 5120
        %176 = vst.msk [vmem:[#allocation2 + $0x20] sm:$0x3f] %vm175, 0.0
        %177 = vst.msk [vmem:[#allocation2 + $0x28] sm:$0xff] %vm170, 0.0
        %178 = vst.msk [vmem:[#allocation2 + $0x30] sm:$0xff] %vm170, 0.0
        %179 = vst.msk [vmem:[#allocation2 + $0x38] sm:$0xff] %vm170, 0.0
        %180 = vst.msk [vmem:[#allocation2 + $0x40] sm:$0xff] %vm170, 0.0
        %181 = vst.msk [vmem:[#allocation2 + $0x48] sm:$0x3f] %vm175, 0.0
        %182 = vst.msk [vmem:[#allocation2 + $0x50] sm:$0xff] %vm170, 0.0
        %183 = vst.msk [vmem:[#allocation2 + $0x58] sm:$0xff] %vm170, 0.0
        %184 = vst.msk [vmem:[#allocation2 + $0x60] sm:$0xff] %vm170, 0.0
        %185 = vst.msk [vmem:[#allocation2 + $0x68] sm:$0xff] %vm170, 0.0
        %186 = vst.msk [vmem:[#allocation2 + $0x70] sm:$0x3f] %vm175, 0.0
        %187 = vst.msk [vmem:[#allocation2 + $0x78] sm:$0xff] %vm170, 0.0
        %188 = vst.msk [vmem:[#allocation2 + $0x80] sm:$0xff] %vm170, 0.0
        %189 = vst.msk [vmem:[#allocation2 + $0x88] sm:$0xff] %vm170, 0.0
        %190 = vst.msk [vmem:[#allocation2 + $0x90] sm:$0xff] %vm170, 0.0
        %191 = vst.msk [vmem:[#allocation2 + $0x98] sm:$0x3f] %vm175, 0.0
        %192 = vst.msk [vmem:[#allocation2 + $0xa0] sm:$0xff] %vm170, 0.0
        %193 = vst.msk [vmem:[#allocation2 + $0xa8] sm:$0xff] %vm170, 0.0
        %194 = vst.msk [vmem:[#allocation2 + $0xb0] sm:$0xff] %vm170, 0.0
        %195 = vst.msk [vmem:[#allocation2 + $0xb8] sm:$0xff] %vm170, 0.0
        %196 = vst.msk [vmem:[#allocation2 + $0xc0] sm:$0x3f] %vm175, 0.0
        %197 = vst.msk [vmem:[#allocation2 + $0xc8] sm:$0xff] %vm170, 0.0
        %198 = vst.msk [vmem:[#allocation2 + $0xd0] sm:$0xff] %vm170, 0.0
        %199 = vst.msk [vmem:[#allocation2 + $0xd8] sm:$0xff] %vm170, 0.0
        %200 = vst.msk [vmem:[#allocation2 + $0xe0] sm:$0xff] %vm170, 0.0
        %201 = vst.msk [vmem:[#allocation2 + $0xe8] sm:$0x3f] %vm175, 0.0
        %202 = vst.msk [vmem:[#allocation2 + $0xf0] sm:$0xff] %vm170, 0.0
        %203 = vst.msk [vmem:[#allocation2 + $0xf8] sm:$0xff] %vm170, 0.0
        %204 = vst.msk [vmem:[#allocation2 + $0x100] sm:$0xff] %vm170, 0.0
        %205 = vst.msk [vmem:[#allocation2 + $0x108] sm:$0xff] %vm170, 0.0
        %206 = vst.msk [vmem:[#allocation2 + $0x110] sm:$0x3f] %vm175, 0.0
        %207 = vst.msk [vmem:[#allocation2 + $0x118] sm:$0xff] %vm170, 0.0
        %208 = vst.msk [vmem:[#allocation2 + $0x120] sm:$0xff] %vm170, 0.0
        %209 = vst.msk [vmem:[#allocation2 + $0x128] sm:$0xff] %vm170, 0.0
        %210 = vst.msk [vmem:[#allocation2 + $0x130] sm:$0xff] %vm170, 0.0
        %211 = vst.msk [vmem:[#allocation2 + $0x138] sm:$0x3f] %vm175, 0.0
        %212 = vst.msk [vmem:[#allocation2 + $0x140] sm:$0xff] %vm170, 0.0
        %213 = vst.msk [vmem:[#allocation2 + $0x148] sm:$0xff] %vm170, 0.0
        %214 = vst.msk [vmem:[#allocation2 + $0x150] sm:$0xff] %vm170, 0.0
        %215 = vst.msk [vmem:[#allocation2 + $0x158] sm:$0xff] %vm170, 0.0
        %216 = vst.msk [vmem:[#allocation2 + $0x160] sm:$0x3f] %vm175, 0.0
        %217 = vst.msk [vmem:[#allocation2 + $0x168] sm:$0xff] %vm170, 0.0
        %218 = vst.msk [vmem:[#allocation2 + $0x170] sm:$0xff] %vm170, 0.0
        %219 = vst.msk [vmem:[#allocation2 + $0x178] sm:$0xff] %vm170, 0.0
        %220 = vst.msk [vmem:[#allocation2 + $0x180] sm:$0xff] %vm170, 0.0
        %221 = vst.msk [vmem:[#allocation2 + $0x188] sm:$0x3f] %vm175, 0.0
        %222 = vst.msk [vmem:[#allocation2 + $0x190] sm:$0xff] %vm170, 0.0
        %223 = vst.msk [vmem:[#allocation2 + $0x198] sm:$0xff] %vm170, 0.0
        %224 = vst.msk [vmem:[#allocation2 + $0x1a0] sm:$0xff] %vm170, 0.0
        %225 = vst.msk [vmem:[#allocation2 + $0x1a8] sm:$0xff] %vm170, 0.0
        %226 = vst.msk [vmem:[#allocation2 + $0x1b0] sm:$0x3f] %vm175, 0.0
        %227 = vst.msk [vmem:[#allocation2 + $0x1b8] sm:$0xff] %vm170, 0.0
        %228 = vst.msk [vmem:[#allocation2 + $0x1c0] sm:$0xff] %vm170, 0.0
        %229 = vst.msk [vmem:[#allocation2 + $0x1c8] sm:$0xff] %vm170, 0.0
        %230 = vst.msk [vmem:[#allocation2 + $0x1d0] sm:$0xff] %vm170, 0.0
        %231 = vst.msk [vmem:[#allocation2 + $0x1d8] sm:$0x3f] %vm175, 0.0
        %232 = vst.msk [vmem:[#allocation2 + $0x1e0] sm:$0xff] %vm170, 0.0
        %233 = vst.msk [vmem:[#allocation2 + $0x1e8] sm:$0xff] %vm170, 0.0
        %234 = vst.msk [vmem:[#allocation2 + $0x1f0] sm:$0xff] %vm170, 0.0
        %235 = vst.msk [vmem:[#allocation2 + $0x1f8] sm:$0xff] %vm170, 0.0
        %236 = vst.msk [vmem:[#allocation2 + $0x200] sm:$0x3f] %vm175, 0.0
        %237 = vst.msk [vmem:[#allocation2 + $0x208] sm:$0xff] %vm170, 0.0
        %238 = vst.msk [vmem:[#allocation2 + $0x210] sm:$0xff] %vm170, 0.0
        %239 = vst.msk [vmem:[#allocation2 + $0x218] sm:$0xff] %vm170, 0.0
        %240 = vst.msk [vmem:[#allocation2 + $0x220] sm:$0xff] %vm170, 0.0
        %241 = vst.msk [vmem:[#allocation2 + $0x228] sm:$0x3f] %vm175, 0.0
        %242 = vst.msk [vmem:[#allocation2 + $0x230] sm:$0xff] %vm170, 0.0
        %243 = vst.msk [vmem:[#allocation2 + $0x238] sm:$0xff] %vm170, 0.0
        %244 = vst.msk [vmem:[#allocation2 + $0x240] sm:$0xff] %vm170, 0.0
        %245 = vst.msk [vmem:[#allocation2 + $0x248] sm:$0xff] %vm170, 0.0
        %246 = vst.msk [vmem:[#allocation2 + $0x250] sm:$0x3f] %vm175, 0.0
        %247 = vst.msk [vmem:[#allocation2 + $0x258] sm:$0xff] %vm170, 0.0
        %248 = vst.msk [vmem:[#allocation2 + $0x260] sm:$0xff] %vm170, 0.0
        %249 = vst.msk [vmem:[#allocation2 + $0x268] sm:$0xff] %vm170, 0.0
        %250 = vst.msk [vmem:[#allocation2 + $0x270] sm:$0xff] %vm170, 0.0
        %251 = vst.msk [vmem:[#allocation2 + $0x278] sm:$0x3f] %vm175, 0.0
        %252 = vst.msk [vmem:[#allocation2 + $0x280] sm:$0xff] %vm170, 0.0
        %253 = vst.msk [vmem:[#allocation2 + $0x288] sm:$0xff] %vm170, 0.0
        %254 = vst.msk [vmem:[#allocation2 + $0x290] sm:$0xff] %vm170, 0.0
        %255 = vst.msk [vmem:[#allocation2 + $0x298] sm:$0xff] %vm170, 0.0
        %256 = vst.msk [vmem:[#allocation2 + $0x2a0] sm:$0x3f] %vm175, 0.0
        %257 = vst.msk [vmem:[#allocation2 + $0x2a8] sm:$0xff] %vm170, 0.0
        %258 = vst.msk [vmem:[#allocation2 + $0x2b0] sm:$0xff] %vm170, 0.0
        %259 = vst.msk [vmem:[#allocation2 + $0x2b8] sm:$0xff] %vm170, 0.0
        %260 = vst.msk [vmem:[#allocation2 + $0x2c0] sm:$0xff] %vm170, 0.0
        %261 = vst.msk [vmem:[#allocation2 + $0x2c8] sm:$0x3f] %vm175, 0.0
        %262 = vst.msk [vmem:[#allocation2 + $0x2d0] sm:$0xff] %vm170, 0.0
        %263 = vst.msk [vmem:[#allocation2 + $0x2d8] sm:$0xff] %vm170, 0.0
        %264 = vst.msk [vmem:[#allocation2 + $0x2e0] sm:$0xff] %vm170, 0.0
        %265 = vst.msk [vmem:[#allocation2 + $0x2e8] sm:$0xff] %vm170, 0.0
        %266 = vst.msk [vmem:[#allocation2 + $0x2f0] sm:$0x3f] %vm175, 0.0
        %267 = vst.msk [vmem:[#allocation2 + $0x2f8] sm:$0xff] %vm170, 0.0
        %268 = vst.msk [vmem:[#allocation2 + $0x300] sm:$0xff] %vm170, 0.0
        %269 = vst.msk [vmem:[#allocation2 + $0x308] sm:$0xff] %vm170, 0.0
        %270 = vst.msk [vmem:[#allocation2 + $0x310] sm:$0xff] %vm170, 0.0
        %271 = vst.msk [vmem:[#allocation2 + $0x318] sm:$0x3f] %vm175, 0.0
        %272 = vst.msk [vmem:[#allocation2 + $0x320] sm:$0xff] %vm170, 0.0
        %273 = vst.msk [vmem:[#allocation2 + $0x328] sm:$0xff] %vm170, 0.0
        %274 = vst.msk [vmem:[#allocation2 + $0x330] sm:$0xff] %vm170, 0.0
        %275 = vst.msk [vmem:[#allocation2 + $0x338] sm:$0xff] %vm170, 0.0
        %276 = vst.msk [vmem:[#allocation2 + $0x340] sm:$0x3f] %vm175, 0.0
        %277 = vst.msk [vmem:[#allocation2 + $0x348] sm:$0xff] %vm170, 0.0
        %278 = vst.msk [vmem:[#allocation2 + $0x350] sm:$0xff] %vm170, 0.0
        %279 = vst.msk [vmem:[#allocation2 + $0x358] sm:$0xff] %vm170, 0.0
        %280 = vst.msk [vmem:[#allocation2 + $0x360] sm:$0xff] %vm170, 0.0
        %281 = vst.msk [vmem:[#allocation2 + $0x368] sm:$0x3f] %vm175, 0.0
        %282 = vst.msk [vmem:[#allocation2 + $0x370] sm:$0xff] %vm170, 0.0
        %283 = vst.msk [vmem:[#allocation2 + $0x378] sm:$0xff] %vm170, 0.0
        %284 = vst.msk [vmem:[#allocation2 + $0x380] sm:$0xff] %vm170, 0.0
        %285 = vst.msk [vmem:[#allocation2 + $0x388] sm:$0xff] %vm170, 0.0
        %286 = vst.msk [vmem:[#allocation2 + $0x390] sm:$0x3f] %vm175, 0.0
        %287 = vst.msk [vmem:[#allocation2 + $0x398] sm:$0xff] %vm170, 0.0
        %288 = vst.msk [vmem:[#allocation2 + $0x3a0] sm:$0xff] %vm170, 0.0
        %289 = vst.msk [vmem:[#allocation2 + $0x3a8] sm:$0xff] %vm170, 0.0
        %290 = vst.msk [vmem:[#allocation2 + $0x3b0] sm:$0xff] %vm170, 0.0
        %291 = vst.msk [vmem:[#allocation2 + $0x3b8] sm:$0x3f] %vm175, 0.0
        %292 = vst.msk [vmem:[#allocation2 + $0x3c0] sm:$0xff] %vm170, 0.0
        %293 = vst.msk [vmem:[#allocation2 + $0x3c8] sm:$0xff] %vm170, 0.0
        %294 = vst.msk [vmem:[#allocation2 + $0x3d0] sm:$0xff] %vm170, 0.0
        %295 = vst.msk [vmem:[#allocation2 + $0x3d8] sm:$0xff] %vm170, 0.0
        %296 = vst.msk [vmem:[#allocation2 + $0x3e0] sm:$0x3f] %vm175, 0.0
        %297 = vst.msk [vmem:[#allocation2 + $0x3e8] sm:$0xff] %vm170, 0.0
        %298 = vst.msk [vmem:[#allocation2 + $0x3f0] sm:$0xff] %vm170, 0.0
        %299 = vst.msk [vmem:[#allocation2 + $0x3f8] sm:$0xff] %vm170, 0.0
        %300 = vst.msk [vmem:[#allocation2 + $0x400] sm:$0xff] %vm170, 0.0
        %301 = vst.msk [vmem:[#allocation2 + $0x408] sm:$0x3f] %vm175, 0.0
        %302 = vst.msk [vmem:[#allocation2 + $0x410] sm:$0xff] %vm170, 0.0
        %303 = vst.msk [vmem:[#allocation2 + $0x418] sm:$0xff] %vm170, 0.0
        %304 = vst.msk [vmem:[#allocation2 + $0x420] sm:$0xff] %vm170, 0.0
        %305 = vst.msk [vmem:[#allocation2 + $0x428] sm:$0xff] %vm170, 0.0
        %306 = vst.msk [vmem:[#allocation2 + $0x430] sm:$0x3f] %vm175, 0.0
        %307 = vst.msk [vmem:[#allocation2 + $0x438] sm:$0xff] %vm170, 0.0
        %308 = vst.msk [vmem:[#allocation2 + $0x440] sm:$0xff] %vm170, 0.0
        %309 = vst.msk [vmem:[#allocation2 + $0x448] sm:$0xff] %vm170, 0.0
        %310 = vst.msk [vmem:[#allocation2 + $0x450] sm:$0xff] %vm170, 0.0
        %311 = vst.msk [vmem:[#allocation2 + $0x458] sm:$0x3f] %vm175, 0.0
        %312 = vst.msk [vmem:[#allocation2 + $0x460] sm:$0xff] %vm170, 0.0
        %313 = vst.msk [vmem:[#allocation2 + $0x468] sm:$0xff] %vm170, 0.0
        %314 = vst.msk [vmem:[#allocation2 + $0x470] sm:$0xff] %vm170, 0.0
        %315 = vst.msk [vmem:[#allocation2 + $0x478] sm:$0xff] %vm170, 0.0
        %316 = vst.msk [vmem:[#allocation2 + $0x480] sm:$0x3f] %vm175, 0.0
        %317 = vst.msk [vmem:[#allocation2 + $0x488] sm:$0xff] %vm170, 0.0
        %318 = vst.msk [vmem:[#allocation2 + $0x490] sm:$0xff] %vm170, 0.0
        %319 = vst.msk [vmem:[#allocation2 + $0x498] sm:$0xff] %vm170, 0.0
        %320 = vst.msk [vmem:[#allocation2 + $0x4a0] sm:$0xff] %vm170, 0.0
        %321 = vst.msk [vmem:[#allocation2 + $0x4a8] sm:$0x3f] %vm175, 0.0
        %322 = vst.msk [vmem:[#allocation2 + $0x4b0] sm:$0xff] %vm170, 0.0
        %323 = vst.msk [vmem:[#allocation2 + $0x4b8] sm:$0xff] %vm170, 0.0
        %324 = vst.msk [vmem:[#allocation2 + $0x4c0] sm:$0xff] %vm170, 0.0
        %325 = vst.msk [vmem:[#allocation2 + $0x4c8] sm:$0xff] %vm170, 0.0
        %326 = vst.msk [vmem:[#allocation2 + $0x4d0] sm:$0x3f] %vm175, 0.0
        %327 = vst.msk [vmem:[#allocation2 + $0x4d8] sm:$0xff] %vm170, 0.0
        %328 = vst.msk [vmem:[#allocation2 + $0x4e0] sm:$0xff] %vm170, 0.0
        %329 = vst.msk [vmem:[#allocation2 + $0x4e8] sm:$0xff] %vm170, 0.0
        %330 = vst.msk [vmem:[#allocation2 + $0x4f0] sm:$0xff] %vm170, 0.0
        %331 = vst.msk [vmem:[#allocation2 + $0x4f8] sm:$0x3f] %vm175, 0.0
        %332 = vst.msk [vmem:[#allocation2 + $0x500] sm:$0xff] %vm170, 0.0
        %333 = vst.msk [vmem:[#allocation2 + $0x508] sm:$0xff] %vm170, 0.0
        %334 = vst.msk [vmem:[#allocation2 + $0x510] sm:$0xff] %vm170, 0.0
        %335 = vst.msk [vmem:[#allocation2 + $0x518] sm:$0xff] %vm170, 0.0
        %336 = vst.msk [vmem:[#allocation2 + $0x520] sm:$0x3f] %vm175, 0.0
        %337 = vst.msk [vmem:[#allocation2 + $0x528] sm:$0xff] %vm170, 0.0
        %338 = vst.msk [vmem:[#allocation2 + $0x530] sm:$0xff] %vm170, 0.0
        %339 = vst.msk [vmem:[#allocation2 + $0x538] sm:$0xff] %vm170, 0.0
        %340 = vst.msk [vmem:[#allocation2 + $0x540] sm:$0xff] %vm170, 0.0
        %341 = vst.msk [vmem:[#allocation2 + $0x548] sm:$0x3f] %vm175, 0.0
        %342 = vst.msk [vmem:[#allocation2 + $0x550] sm:$0xff] %vm170, 0.0
        %343 = vst.msk [vmem:[#allocation2 + $0x558] sm:$0xff] %vm170, 0.0
        %344 = vst.msk [vmem:[#allocation2 + $0x560] sm:$0xff] %vm170, 0.0
        %345 = vst.msk [vmem:[#allocation2 + $0x568] sm:$0xff] %vm170, 0.0
        %346 = vst.msk [vmem:[#allocation2 + $0x570] sm:$0x3f] %vm175, 0.0
        %347 = vst.msk [vmem:[#allocation2 + $0x578] sm:$0xff] %vm170, 0.0
        %348 = vst.msk [vmem:[#allocation2 + $0x580] sm:$0xff] %vm170, 0.0
        %349 = vst.msk [vmem:[#allocation2 + $0x588] sm:$0xff] %vm170, 0.0
        %350 = vst.msk [vmem:[#allocation2 + $0x590] sm:$0xff] %vm170, 0.0
        %351 = vst.msk [vmem:[#allocation2 + $0x598] sm:$0x3f] %vm175, 0.0
        %352 = vst.msk [vmem:[#allocation2 + $0x5a0] sm:$0xff] %vm170, 0.0
        %353 = vst.msk [vmem:[#allocation2 + $0x5a8] sm:$0xff] %vm170, 0.0
        %354 = vst.msk [vmem:[#allocation2 + $0x5b0] sm:$0xff] %vm170, 0.0
        %355 = vst.msk [vmem:[#allocation2 + $0x5b8] sm:$0xff] %vm170, 0.0
        %356 = vst.msk [vmem:[#allocation2 + $0x5c0] sm:$0x3f] %vm175, 0.0
        %357 = vst.msk [vmem:[#allocation2 + $0x5c8] sm:$0xff] %vm170, 0.0
        %358 = vst.msk [vmem:[#allocation2 + $0x5d0] sm:$0xff] %vm170, 0.0
        %359 = vst.msk [vmem:[#allocation2 + $0x5d8] sm:$0xff] %vm170, 0.0
        %360 = vst.msk [vmem:[#allocation2 + $0x5e0] sm:$0xff] %vm170, 0.0
        %361 = vst.msk [vmem:[#allocation2 + $0x5e8] sm:$0x3f] %vm175, 0.0
        %v362 = vld [vmem:[%s168] sm:$0xf]
        %v363 = vld [vmem:[%s168 + $0x4] sm:$0xf]
        %v364 = vld [vmem:[%s168 + $0x8] sm:$0xf]
        %v365 = vld [vmem:[%s168 + $0xc] sm:$0xf]
        %v366 = vld [vmem:[%s168 + $0x10] sm:$0xf]
        %v367 = vld [vmem:[%s168 + $0x14] sm:$0xf]
        %v368 = vld [vmem:[%s168 + $0x18] sm:$0xf]
        %v369 = vld [vmem:[%s168 + $0x1c] sm:$0xf]
        %v370 = vld [vmem:[%s168 + $0x20] sm:$0xf]
        %v371 = vld [vmem:[%s168 + $0x24] sm:$0xf]
        %v372 = vld [vmem:[%s168 + $0x28] sm:$0xf]
        %v373 = vld [vmem:[%s168 + $0x2c] sm:$0xf]
        %v374 = vld [vmem:[%s168 + $0x30] sm:$0xf]
        %v375 = vld [vmem:[%s168 + $0x34] sm:$0xf]
        %v376 = vld [vmem:[%s168 + $0x38] sm:$0xf]
        %v377 = vld [vmem:[%s168 + $0x3c] sm:$0xf]
        %v378 = vld [vmem:[%s168 + $0x40] sm:$0xf]
        %v379 = vld [vmem:[%s168 + $0x44] sm:$0xf]
        %v380 = vld [vmem:[%s168 + $0x48] sm:$0xf]
        %v381 = vld [vmem:[%s168 + $0x4c] sm:$0xf]
        %v382 = vld [vmem:[%s168 + $0x50] sm:$0xf]
        %v383 = vld [vmem:[%s168 + $0x54] sm:$0xf]
        %v384 = vld [vmem:[%s168 + $0x58] sm:$0xf]
        %v385 = vld [vmem:[%s168 + $0x5c] sm:$0xf]
        %v386 = vld [vmem:[%s168 + $0x60] sm:$0xf]
        %v387 = vld [vmem:[%s168 + $0x64] sm:$0xf]
        %v388 = vld [vmem:[%s168 + $0x68] sm:$0xf]
        %v389 = vld [vmem:[%s168 + $0x6c] sm:$0xf]
        %v390 = vld [vmem:[%s168 + $0x70] sm:$0xf]
        %v391 = vld [vmem:[%s168 + $0x74] sm:$0xf]
        %v392 = vld [vmem:[%s168 + $0x78] sm:$0xf]
        %v393 = vld [vmem:[%s168 + $0x7c] sm:$0xf]
        %v394 = vld [vmem:[%s168 + $0x80] sm:$0xf]
        %v395 = vld [vmem:[%s168 + $0x84] sm:$0xf]
        %v396 = vld [vmem:[%s168 + $0x88] sm:$0xf]
        %v397 = vld [vmem:[%s168 + $0x8c] sm:$0xf]
        %v398 = vld [vmem:[%s168 + $0x90] sm:$0xf]
        %v399 = vld [vmem:[%s168 + $0x94] sm:$0xf]
        %v400 = vld [vmem:[%s168 + $0x98] sm:$0xf]
        %v401 = vld [vmem:[%s168 + $0x9c] sm:$0xf]
        %v402 = vld [vmem:[%s168 + $0xa0] sm:$0xf]
        %v403 = vld [vmem:[%s168 + $0xa4] sm:$0xf]
        %v404 = vld [vmem:[%s168 + $0xa8] sm:$0xf]
        %v405 = vld [vmem:[%s168 + $0xac] sm:$0xf]
        %v406 = vld [vmem:[%s168 + $0xb0] sm:$0xf]
        %v407 = vld [vmem:[%s168 + $0xb4] sm:$0xf]
        %v408 = vld [vmem:[%s168 + $0xb8] sm:$0xf]
        %v409 = vld [vmem:[%s168 + $0xbc] sm:$0xf]
        %v410 = vld [vmem:[%s168 + $0xc0] sm:$0xf]
        %v411 = vld [vmem:[%s168 + $0xc4] sm:$0xf]
        %v412 = vld [vmem:[%s168 + $0xc8] sm:$0xf]
        %v413 = vld [vmem:[%s168 + $0xcc] sm:$0xf]
        %v414 = vld [vmem:[%s168 + $0xd0] sm:$0xf]
        %v415 = vld [vmem:[%s168 + $0xd4] sm:$0xf]
        %v416 = vld [vmem:[%s168 + $0xd8] sm:$0xf]
        %v417 = vld [vmem:[%s168 + $0xdc] sm:$0xf]
        %v418 = vld [vmem:[%s168 + $0xe0] sm:$0xf]
        %v419 = vld [vmem:[%s168 + $0xe4] sm:$0xf]
        %v420 = vld [vmem:[%s168 + $0xe8] sm:$0xf]
        %v421 = vld [vmem:[%s168 + $0xec] sm:$0xf]
        %v422 = vld [vmem:[%s168 + $0xf0] sm:$0xf]
        %v423 = vld [vmem:[%s168 + $0xf4] sm:$0xf]
        %v424 = vld [vmem:[%s168 + $0xf8] sm:$0xf]
        %v425 = vld [vmem:[%s168 + $0xfc] sm:$0xf]
        %v426 = vld [vmem:[%s168 + $0x100] sm:$0xf]
        %v427 = vld [vmem:[%s168 + $0x104] sm:$0xf]
        %v428 = vld [vmem:[%s168 + $0x108] sm:$0xf]
        %v429 = vld [vmem:[%s168 + $0x10c] sm:$0xf]
        %v430 = vld [vmem:[%s168 + $0x110] sm:$0xf]
        %v431 = vld [vmem:[%s168 + $0x114] sm:$0xf]
        %v432 = vld [vmem:[%s168 + $0x118] sm:$0xf]
        %v433 = vld [vmem:[%s168 + $0x11c] sm:$0xf]
        %v434 = vld [vmem:[%s168 + $0x120] sm:$0xf]
        %v435 = vld [vmem:[%s168 + $0x124] sm:$0xf]
        %v436 = vld [vmem:[%s168 + $0x128] sm:$0xf]
        %v437 = vld [vmem:[%s168 + $0x12c] sm:$0xf]
        %v438 = vld [vmem:[%s168 + $0x130] sm:$0xf]
        %v439 = vld [vmem:[%s168 + $0x134] sm:$0xf]
        %v440 = vld [vmem:[%s168 + $0x138] sm:$0xf]
        %v441 = vld [vmem:[%s168 + $0x13c] sm:$0xf]
        %v442 = vld [vmem:[%s168 + $0x140] sm:$0xf]
        %v443 = vld [vmem:[%s168 + $0x144] sm:$0xf]
        %v444 = vld [vmem:[%s168 + $0x148] sm:$0xf]
        %v445 = vld [vmem:[%s168 + $0x14c] sm:$0xf]
        %v446 = vld [vmem:[%s168 + $0x150] sm:$0xf]
        %v447 = vld [vmem:[%s168 + $0x154] sm:$0xf]
        %v448 = vld [vmem:[%s168 + $0x158] sm:$0xf]
        %v449 = vld [vmem:[%s168 + $0x15c] sm:$0xf]
        %v450 = vld [vmem:[%s168 + $0x160] sm:$0xf]
        %v451 = vld [vmem:[%s168 + $0x164] sm:$0xf]
        %v452 = vld [vmem:[%s168 + $0x168] sm:$0xf]
        %v453 = vld [vmem:[%s168 + $0x16c] sm:$0xf]
        %v454 = vld [vmem:[%s168 + $0x170] sm:$0xf]
        %v455 = vld [vmem:[%s168 + $0x174] sm:$0xf]
        %v456 = vld [vmem:[%s168 + $0x178] sm:$0xf]
        %v457 = vld [vmem:[%s168 + $0x17c] sm:$0xf]
        %v458 = vld [vmem:[%s168 + $0x180] sm:$0xf]
        %v459 = vld [vmem:[%s168 + $0x184] sm:$0xf]
        %v460 = vld [vmem:[%s168 + $0x188] sm:$0xf]
        %v461 = vld [vmem:[%s168 + $0x18c] sm:$0xf]
        %v462 = vld [vmem:[%s168 + $0x190] sm:$0xf]
        %v463 = vld [vmem:[%s168 + $0x194] sm:$0xf]
        %v464 = vld [vmem:[%s168 + $0x198] sm:$0xf]
        %v465 = vld [vmem:[%s168 + $0x19c] sm:$0xf]
        %v466 = vld [vmem:[%s168 + $0x1a0] sm:$0xf]
        %v467 = vld [vmem:[%s168 + $0x1a4] sm:$0xf]
        %v468 = vld [vmem:[%s168 + $0x1a8] sm:$0xf]
        %v469 = vld [vmem:[%s168 + $0x1ac] sm:$0xf]
        %v470 = vld [vmem:[%s168 + $0x1b0] sm:$0xf]
        %v471 = vld [vmem:[%s168 + $0x1b4] sm:$0xf]
        %v472 = vld [vmem:[%s168 + $0x1b8] sm:$0xf]
        %v473 = vld [vmem:[%s168 + $0x1bc] sm:$0xf]
        %v474 = vld [vmem:[%s168 + $0x1c0] sm:$0xf]
        %v475 = vld [vmem:[%s168 + $0x1c4] sm:$0xf]
        %v476 = vld [vmem:[%s168 + $0x1c8] sm:$0xf]
        %v477 = vld [vmem:[%s168 + $0x1cc] sm:$0xf]
        %v478 = vld [vmem:[%s168 + $0x1d0] sm:$0xf]
        %v479 = vld [vmem:[%s168 + $0x1d4] sm:$0xf]
        %v480 = vld [vmem:[%s168 + $0x1d8] sm:$0xf]
        %v481 = vld [vmem:[%s168 + $0x1dc] sm:$0xf]
        %v482 = vld [vmem:[%s168 + $0x1e0] sm:$0xf]
        %v483 = vld [vmem:[%s168 + $0x1e4] sm:$0xf]
        %v484 = vld [vmem:[%s168 + $0x1e8] sm:$0xf]
        %v485 = vld [vmem:[%s168 + $0x1ec] sm:$0xf]
        %v486 = vld [vmem:[%s168 + $0x1f0] sm:$0xf]
        %v487 = vld [vmem:[%s168 + $0x1f4] sm:$0xf]
        %v488 = vld [vmem:[%s168 + $0x1f8] sm:$0xf]
        %v489 = vld [vmem:[%s168 + $0x1fc] sm:$0xf]
        %v490 = vunpack.c.l.bf16 %v362
        %v491 = vunpack.c.l.bf16 %v363
        %v492 = vunpack.c.l.bf16 %v364
        %v493 = vunpack.c.l.bf16 %v365
        %v494 = vunpack.c.l.bf16 %v366
        %v495 = vunpack.c.l.bf16 %v367
        %v496 = vunpack.c.l.bf16 %v368
        %v497 = vunpack.c.l.bf16 %v369
        %v498 = vunpack.c.l.bf16 %v370
        %v499 = vunpack.c.l.bf16 %v371
        %v500 = vunpack.c.l.bf16 %v372
        %v501 = vunpack.c.l.bf16 %v373
        %v502 = vunpack.c.l.bf16 %v374
        %v503 = vunpack.c.l.bf16 %v375
        %v504 = vunpack.c.l.bf16 %v376
        %v505 = vunpack.c.l.bf16 %v377
        %v506 = vunpack.c.l.bf16 %v378
        %v507 = vunpack.c.l.bf16 %v379
        %v508 = vunpack.c.l.bf16 %v380
        %v509 = vunpack.c.l.bf16 %v381
        %v510 = vunpack.c.l.bf16 %v382
        %v511 = vunpack.c.l.bf16 %v383
        %v512 = vunpack.c.l.bf16 %v384
        %v513 = vunpack.c.l.bf16 %v385
        %v514 = vunpack.c.l.bf16 %v386
        %v515 = vunpack.c.l.bf16 %v387
        %v516 = vunpack.c.l.bf16 %v388
        %v517 = vunpack.c.l.bf16 %v389
        %v518 = vunpack.c.l.bf16 %v390
        %v519 = vunpack.c.l.bf16 %v391
        %v520 = vunpack.c.l.bf16 %v392
        %v521 = vunpack.c.l.bf16 %v393
        %v522 = vunpack.c.l.bf16 %v394
        %v523 = vunpack.c.l.bf16 %v395
        %v524 = vunpack.c.l.bf16 %v396
        %v525 = vunpack.c.l.bf16 %v397
        %v526 = vunpack.c.l.bf16 %v398
        %v527 = vunpack.c.l.bf16 %v399
        %v528 = vunpack.c.l.bf16 %v400
        %v529 = vunpack.c.l.bf16 %v401
        %v530 = vunpack.c.l.bf16 %v402
        %v531 = vunpack.c.l.bf16 %v403
        %v532 = vunpack.c.l.bf16 %v404
        %v533 = vunpack.c.l.bf16 %v405
        %v534 = vunpack.c.l.bf16 %v406
        %v535 = vunpack.c.l.bf16 %v407
        %v536 = vunpack.c.l.bf16 %v408
        %v537 = vunpack.c.l.bf16 %v409
        %v538 = vunpack.c.l.bf16 %v410
        %v539 = vunpack.c.l.bf16 %v411
        %v540 = vunpack.c.l.bf16 %v412
        %v541 = vunpack.c.l.bf16 %v413
        %v542 = vunpack.c.l.bf16 %v414
        %v543 = vunpack.c.l.bf16 %v415
        %v544 = vunpack.c.l.bf16 %v416
        %v545 = vunpack.c.l.bf16 %v417
        %v546 = vunpack.c.l.bf16 %v418
        %v547 = vunpack.c.l.bf16 %v419
        %v548 = vunpack.c.l.bf16 %v420
        %v549 = vunpack.c.l.bf16 %v421
        %v550 = vunpack.c.l.bf16 %v422
        %v551 = vunpack.c.l.bf16 %v423
        %v552 = vunpack.c.l.bf16 %v424
        %v553 = vunpack.c.l.bf16 %v425
        %v554 = vunpack.c.l.bf16 %v426
        %v555 = vunpack.c.l.bf16 %v427
        %v556 = vunpack.c.l.bf16 %v428
        %v557 = vunpack.c.l.bf16 %v429
        %v558 = vunpack.c.l.bf16 %v430
        %v559 = vunpack.c.l.bf16 %v431
        %v560 = vunpack.c.l.bf16 %v432
        %v561 = vunpack.c.l.bf16 %v433
        %v562 = vunpack.c.l.bf16 %v434
        %v563 = vunpack.c.l.bf16 %v435
        %v564 = vunpack.c.l.bf16 %v436
        %v565 = vunpack.c.l.bf16 %v437
        %v566 = vunpack.c.l.bf16 %v438
        %v567 = vunpack.c.l.bf16 %v439
        %v568 = vunpack.c.l.bf16 %v440
        %v569 = vunpack.c.l.bf16 %v441
        %v570 = vunpack.c.l.bf16 %v442
        %v571 = vunpack.c.l.bf16 %v443
        %v572 = vunpack.c.l.bf16 %v444
        %v573 = vunpack.c.l.bf16 %v445
        %v574 = vunpack.c.l.bf16 %v446
        %v575 = vunpack.c.l.bf16 %v447
        %v576 = vunpack.c.l.bf16 %v448
        %v577 = vunpack.c.l.bf16 %v449
        %v578 = vunpack.c.l.bf16 %v450
        %v579 = vunpack.c.l.bf16 %v451
        %v580 = vunpack.c.l.bf16 %v452
        %v581 = vunpack.c.l.bf16 %v453
        %v582 = vunpack.c.l.bf16 %v454
        %v583 = vunpack.c.l.bf16 %v455
        %v584 = vunpack.c.l.bf16 %v456
        %v585 = vunpack.c.l.bf16 %v457
        %v586 = vunpack.c.l.bf16 %v458
        %v587 = vunpack.c.l.bf16 %v459
        %v588 = vunpack.c.l.bf16 %v460
        %v589 = vunpack.c.l.bf16 %v461
        %v590 = vunpack.c.l.bf16 %v462
        %v591 = vunpack.c.l.bf16 %v463
        %v592 = vunpack.c.l.bf16 %v464
        %v593 = vunpack.c.l.bf16 %v465
        %v594 = vunpack.c.l.bf16 %v466
        %v595 = vunpack.c.l.bf16 %v467
        %v596 = vunpack.c.l.bf16 %v468
        %v597 = vunpack.c.l.bf16 %v469
        %v598 = vunpack.c.l.bf16 %v470
        %v599 = vunpack.c.l.bf16 %v471
        %v600 = vunpack.c.l.bf16 %v472
        %v601 = vunpack.c.l.bf16 %v473
        %v602 = vunpack.c.l.bf16 %v474
        %v603 = vunpack.c.l.bf16 %v475
        %v604 = vunpack.c.l.bf16 %v476
        %v605 = vunpack.c.l.bf16 %v477
        %v606 = vunpack.c.l.bf16 %v478
        %v607 = vunpack.c.l.bf16 %v479
        %v608 = vunpack.c.l.bf16 %v480
        %v609 = vunpack.c.l.bf16 %v481
        %v610 = vunpack.c.l.bf16 %v482
        %v611 = vunpack.c.l.bf16 %v483
        %v612 = vunpack.c.l.bf16 %v484
        %v613 = vunpack.c.l.bf16 %v485
        %v614 = vunpack.c.l.bf16 %v486
        %v615 = vunpack.c.l.bf16 %v487
        %v616 = vunpack.c.l.bf16 %v488
        %v617 = vunpack.c.l.bf16 %v489
        %s618 = scalar_lea.vmem [#allocation2], 120
        %619 = vst.msk [vmem:[%s618 + $0x3] sm:$0xff] %vm170, %v490
        %620 = vst.msk [vmem:[%s618 + $0xb] sm:$0xff] %vm170, %v491
        %621 = vst.msk [vmem:[%s618 + $0x13] sm:$0xff] %vm170, %v492
        %622 = vst.msk [vmem:[%s618 + $0x1b] sm:$0xff] %vm170, %v493
        %623 = vst.msk [vmem:[%s618 + $0x2b] sm:$0xff] %vm170, %v494
        %624 = vst.msk [vmem:[%s618 + $0x33] sm:$0xff] %vm170, %v495
        %625 = vst.msk [vmem:[%s618 + $0x3b] sm:$0xff] %vm170, %v496
        %626 = vst.msk [vmem:[%s618 + $0x43] sm:$0xff] %vm170, %v497
        %627 = vst.msk [vmem:[%s618 + $0x53] sm:$0xff] %vm170, %v498
        %628 = vst.msk [vmem:[%s618 + $0x5b] sm:$0xff] %vm170, %v499
        %629 = vst.msk [vmem:[%s618 + $0x63] sm:$0xff] %vm170, %v500
        %630 = vst.msk [vmem:[%s618 + $0x6b] sm:$0xff] %vm170, %v501
        %631 = vst.msk [vmem:[%s618 + $0x7b] sm:$0xff] %vm170, %v502
        %632 = vst.msk [vmem:[%s618 + $0x83] sm:$0xff] %vm170, %v503
        %633 = vst.msk [vmem:[%s618 + $0x8b] sm:$0xff] %vm170, %v504
        %634 = vst.msk [vmem:[%s618 + $0x93] sm:$0xff] %vm170, %v505
        %635 = vst.msk [vmem:[%s618 + $0xa3] sm:$0xff] %vm170, %v506
        %636 = vst.msk [vmem:[%s618 + $0xab] sm:$0xff] %vm170, %v507
        %637 = vst.msk [vmem:[%s618 + $0xb3] sm:$0xff] %vm170, %v508
        %638 = vst.msk [vmem:[%s618 + $0xbb] sm:$0xff] %vm170, %v509
        %639 = vst.msk [vmem:[%s618 + $0xcb] sm:$0xff] %vm170, %v510
        %640 = vst.msk [vmem:[%s618 + $0xd3] sm:$0xff] %vm170, %v511
        %641 = vst.msk [vmem:[%s618 + $0xdb] sm:$0xff] %vm170, %v512
        %642 = vst.msk [vmem:[%s618 + $0xe3] sm:$0xff] %vm170, %v513
        %643 = vst.msk [vmem:[%s618 + $0xf3] sm:$0xff] %vm170, %v514
        %644 = vst.msk [vmem:[%s618 + $0xfb] sm:$0xff] %vm170, %v515
        %645 = vst.msk [vmem:[%s618 + $0x103] sm:$0xff] %vm170, %v516
        %646 = vst.msk [vmem:[%s618 + $0x10b] sm:$0xff] %vm170, %v517
        %647 = vst.msk [vmem:[%s618 + $0x11b] sm:$0xff] %vm170, %v518
        %648 = vst.msk [vmem:[%s618 + $0x123] sm:$0xff] %vm170, %v519
        %649 = vst.msk [vmem:[%s618 + $0x12b] sm:$0xff] %vm170, %v520
        %650 = vst.msk [vmem:[%s618 + $0x133] sm:$0xff] %vm170, %v521
        %651 = vst.msk [vmem:[%s618 + $0x143] sm:$0xff] %vm170, %v522
        %652 = vst.msk [vmem:[%s618 + $0x14b] sm:$0xff] %vm170, %v523
        %653 = vst.msk [vmem:[%s618 + $0x153] sm:$0xff] %vm170, %v524
        %654 = vst.msk [vmem:[%s618 + $0x15b] sm:$0xff] %vm170, %v525
        %655 = vst.msk [vmem:[%s618 + $0x16b] sm:$0xff] %vm170, %v526
        %656 = vst.msk [vmem:[%s618 + $0x173] sm:$0xff] %vm170, %v527
        %657 = vst.msk [vmem:[%s618 + $0x17b] sm:$0xff] %vm170, %v528
        %658 = vst.msk [vmem:[%s618 + $0x183] sm:$0xff] %vm170, %v529
        %659 = vst.msk [vmem:[%s618 + $0x193] sm:$0xff] %vm170, %v530
        %660 = vst.msk [vmem:[%s618 + $0x19b] sm:$0xff] %vm170, %v531
        %661 = vst.msk [vmem:[%s618 + $0x1a3] sm:$0xff] %vm170, %v532
        %662 = vst.msk [vmem:[%s618 + $0x1ab] sm:$0xff] %vm170, %v533
        %663 = vst.msk [vmem:[%s618 + $0x1bb] sm:$0xff] %vm170, %v534
        %664 = vst.msk [vmem:[%s618 + $0x1c3] sm:$0xff] %vm170, %v535
        %665 = vst.msk [vmem:[%s618 + $0x1cb] sm:$0xff] %vm170, %v536
        %666 = vst.msk [vmem:[%s618 + $0x1d3] sm:$0xff] %vm170, %v537
        %667 = vst.msk [vmem:[%s618 + $0x1e3] sm:$0xff] %vm170, %v538
        %668 = vst.msk [vmem:[%s618 + $0x1eb] sm:$0xff] %vm170, %v539
        %669 = vst.msk [vmem:[%s618 + $0x1f3] sm:$0xff] %vm170, %v540
        %670 = vst.msk [vmem:[%s618 + $0x1fb] sm:$0xff] %vm170, %v541
        %671 = vst.msk [vmem:[%s618 + $0x20b] sm:$0xff] %vm170, %v542
        %672 = vst.msk [vmem:[%s618 + $0x213] sm:$0xff] %vm170, %v543
        %673 = vst.msk [vmem:[%s618 + $0x21b] sm:$0xff] %vm170, %v544
        %674 = vst.msk [vmem:[%s618 + $0x223] sm:$0xff] %vm170, %v545
        %675 = vst.msk [vmem:[%s618 + $0x233] sm:$0xff] %vm170, %v546
        %676 = vst.msk [vmem:[%s618 + $0x23b] sm:$0xff] %vm170, %v547
        %677 = vst.msk [vmem:[%s618 + $0x243] sm:$0xff] %vm170, %v548
        %678 = vst.msk [vmem:[%s618 + $0x24b] sm:$0xff] %vm170, %v549
        %679 = vst.msk [vmem:[%s618 + $0x25b] sm:$0xff] %vm170, %v550
        %680 = vst.msk [vmem:[%s618 + $0x263] sm:$0xff] %vm170, %v551
        %681 = vst.msk [vmem:[%s618 + $0x26b] sm:$0xff] %vm170, %v552
        %682 = vst.msk [vmem:[%s618 + $0x273] sm:$0xff] %vm170, %v553
        %683 = vst.msk [vmem:[%s618 + $0x283] sm:$0xff] %vm170, %v554
        %684 = vst.msk [vmem:[%s618 + $0x28b] sm:$0xff] %vm170, %v555
        %685 = vst.msk [vmem:[%s618 + $0x293] sm:$0xff] %vm170, %v556
        %686 = vst.msk [vmem:[%s618 + $0x29b] sm:$0xff] %vm170, %v557
        %687 = vst.msk [vmem:[%s618 + $0x2ab] sm:$0xff] %vm170, %v558
        %688 = vst.msk [vmem:[%s618 + $0x2b3] sm:$0xff] %vm170, %v559
        %689 = vst.msk [vmem:[%s618 + $0x2bb] sm:$0xff] %vm170, %v560
        %690 = vst.msk [vmem:[%s618 + $0x2c3] sm:$0xff] %vm170, %v561
        %691 = vst.msk [vmem:[%s618 + $0x2d3] sm:$0xff] %vm170, %v562
        %692 = vst.msk [vmem:[%s618 + $0x2db] sm:$0xff] %vm170, %v563
        %693 = vst.msk [vmem:[%s618 + $0x2e3] sm:$0xff] %vm170, %v564
        %694 = vst.msk [vmem:[%s618 + $0x2eb] sm:$0xff] %vm170, %v565
        %695 = vst.msk [vmem:[%s618 + $0x2fb] sm:$0xff] %vm170, %v566
        %696 = vst.msk [vmem:[%s618 + $0x303] sm:$0xff] %vm170, %v567
        %697 = vst.msk [vmem:[%s618 + $0x30b] sm:$0xff] %vm170, %v568
        %698 = vst.msk [vmem:[%s618 + $0x313] sm:$0xff] %vm170, %v569
        %699 = vst.msk [vmem:[%s618 + $0x323] sm:$0xff] %vm170, %v570
        %700 = vst.msk [vmem:[%s618 + $0x32b] sm:$0xff] %vm170, %v571
        %701 = vst.msk [vmem:[%s618 + $0x333] sm:$0xff] %vm170, %v572
        %702 = vst.msk [vmem:[%s618 + $0x33b] sm:$0xff] %vm170, %v573
        %703 = vst.msk [vmem:[%s618 + $0x34b] sm:$0xff] %vm170, %v574
        %704 = vst.msk [vmem:[%s618 + $0x353] sm:$0xff] %vm170, %v575
        %705 = vst.msk [vmem:[%s618 + $0x35b] sm:$0xff] %vm170, %v576
        %706 = vst.msk [vmem:[%s618 + $0x363] sm:$0xff] %vm170, %v577
        %707 = vst.msk [vmem:[%s618 + $0x373] sm:$0xff] %vm170, %v578
        %708 = vst.msk [vmem:[%s618 + $0x37b] sm:$0xff] %vm170, %v579
        %709 = vst.msk [vmem:[%s618 + $0x383] sm:$0xff] %vm170, %v580
        %710 = vst.msk [vmem:[%s618 + $0x38b] sm:$0xff] %vm170, %v581
        %711 = vst.msk [vmem:[%s618 + $0x39b] sm:$0xff] %vm170, %v582
        %712 = vst.msk [vmem:[%s618 + $0x3a3] sm:$0xff] %vm170, %v583
        %713 = vst.msk [vmem:[%s618 + $0x3ab] sm:$0xff] %vm170, %v584
        %714 = vst.msk [vmem:[%s618 + $0x3b3] sm:$0xff] %vm170, %v585
        %715 = vst.msk [vmem:[%s618 + $0x3c3] sm:$0xff] %vm170, %v586
        %716 = vst.msk [vmem:[%s618 + $0x3cb] sm:$0xff] %vm170, %v587
        %717 = vst.msk [vmem:[%s618 + $0x3d3] sm:$0xff] %vm170, %v588
        %718 = vst.msk [vmem:[%s618 + $0x3db] sm:$0xff] %vm170, %v589
        %719 = vst.msk [vmem:[%s618 + $0x3eb] sm:$0xff] %vm170, %v590
        %720 = vst.msk [vmem:[%s618 + $0x3f3] sm:$0xff] %vm170, %v591
        %721 = vst.msk [vmem:[%s618 + $0x3fb] sm:$0xff] %vm170, %v592
        %722 = vst.msk [vmem:[%s618 + $0x403] sm:$0xff] %vm170, %v593
        %723 = vst.msk [vmem:[%s618 + $0x413] sm:$0xff] %vm170, %v594
        %724 = vst.msk [vmem:[%s618 + $0x41b] sm:$0xff] %vm170, %v595
        %725 = vst.msk [vmem:[%s618 + $0x423] sm:$0xff] %vm170, %v596
        %726 = vst.msk [vmem:[%s618 + $0x42b] sm:$0xff] %vm170, %v597
        %727 = vst.msk [vmem:[%s618 + $0x43b] sm:$0xff] %vm170, %v598
        %728 = vst.msk [vmem:[%s618 + $0x443] sm:$0xff] %vm170, %v599
        %729 = vst.msk [vmem:[%s618 + $0x44b] sm:$0xff] %vm170, %v600
        %730 = vst.msk [vmem:[%s618 + $0x453] sm:$0xff] %vm170, %v601
        %731 = vst.msk [vmem:[%s618 + $0x463] sm:$0xff] %vm170, %v602
        %732 = vst.msk [vmem:[%s618 + $0x46b] sm:$0xff] %vm170, %v603
        %733 = vst.msk [vmem:[%s618 + $0x473] sm:$0xff] %vm170, %v604
        %734 = vst.msk [vmem:[%s618 + $0x47b] sm:$0xff] %vm170, %v605
        %735 = vst.msk [vmem:[%s618 + $0x48b] sm:$0xff] %vm170, %v606
        %736 = vst.msk [vmem:[%s618 + $0x493] sm:$0xff] %vm170, %v607
        %737 = vst.msk [vmem:[%s618 + $0x49b] sm:$0xff] %vm170, %v608
        %738 = vst.msk [vmem:[%s618 + $0x4a3] sm:$0xff] %vm170, %v609
        %739 = vst.msk [vmem:[%s618 + $0x4b3] sm:$0xff] %vm170, %v610
        %740 = vst.msk [vmem:[%s618 + $0x4bb] sm:$0xff] %vm170, %v611
        %741 = vst.msk [vmem:[%s618 + $0x4c3] sm:$0xff] %vm170, %v612
        %742 = vst.msk [vmem:[%s618 + $0x4cb] sm:$0xff] %vm170, %v613
        %743 = vst.msk [vmem:[%s618 + $0x4db] sm:$0xff] %vm170, %v614
        %744 = vst.msk [vmem:[%s618 + $0x4e3] sm:$0xff] %vm170, %v615
        %745 = vst.msk [vmem:[%s618 + $0x4eb] sm:$0xff] %vm170, %v616
        %746 = vst.msk [vmem:[%s618 + $0x4f3] sm:$0xff] %vm170, %v617
        %v747 = vld [vmem:[#allocation2] ss:$2 sm:$0xff]
        %s748 = scalar_lea.vmem [#allocation2], 16
        %v749 = vld [vmem:[%s748] ss:$2 sm:$0xff]
        %s750 = scalar_lea.vmem [#allocation2], 80
        %v751 = vld [vmem:[%s750] ss:$2 sm:$0xff]
        %s752 = scalar_lea.vmem [#allocation2], 96
        %v753 = vld [vmem:[%s752] ss:$2 sm:$0xff]
        %s754 = scalar_lea.vmem [#allocation2], 160
        %v755 = vld [vmem:[%s754] ss:$2 sm:$0xff]
        %s756 = scalar_lea.vmem [#allocation2], 176
        %v757 = vld [vmem:[%s756] ss:$2 sm:$0xff]
        %s758 = scalar_lea.vmem [#allocation2], 240
        %v759 = vld [vmem:[%s758] ss:$2 sm:$0xff]
        %s760 = scalar_lea.vmem [#allocation2], 256
        %v761 = vld [vmem:[%s760] ss:$2 sm:$0xff]
        %s762 = scalar_lea.vmem [#allocation2], 320
        %v763 = vld [vmem:[%s762] ss:$2 sm:$0xff]
        %s764 = scalar_lea.vmem [#allocation2], 336
        %v765 = vld [vmem:[%s764] ss:$2 sm:$0xff]
        %s766 = scalar_lea.vmem [#allocation2], 400
        %v767 = vld [vmem:[%s766] ss:$2 sm:$0xff]
        %s768 = scalar_lea.vmem [#allocation2], 416
        %v769 = vld [vmem:[%s768] ss:$2 sm:$0xff]
        %s770 = scalar_lea.vmem [#allocation2], 480
        %v771 = vld [vmem:[%s770] ss:$2 sm:$0xff]
        %s772 = scalar_lea.vmem [#allocation2], 496
        %v773 = vld [vmem:[%s772] ss:$2 sm:$0xff]
        %s774 = scalar_lea.vmem [#allocation2], 560
        %v775 = vld [vmem:[%s774] ss:$2 sm:$0xff]
        %s776 = scalar_lea.vmem [#allocation2], 576
        %v777 = vld [vmem:[%s776] ss:$2 sm:$0xff]
        %s778 = scalar_lea.vmem [#allocation2], 640
        %v779 = vld [vmem:[%s778] ss:$2 sm:$0xff]
        %s780 = scalar_lea.vmem [#allocation2], 656
        %v781 = vld [vmem:[%s780] ss:$2 sm:$0xff]
        %s782 = scalar_lea.vmem [#allocation2], 720
        %v783 = vld [vmem:[%s782] ss:$2 sm:$0xff]
        %s784 = scalar_lea.vmem [#allocation2], 736
        %v785 = vld [vmem:[%s784] ss:$2 sm:$0xff]
        %s786 = scalar_lea.vmem [#allocation2], 800
        %v787 = vld [vmem:[%s786] ss:$2 sm:$0xff]
        %s788 = scalar_lea.vmem [#allocation2], 816
        %v789 = vld [vmem:[%s788] ss:$2 sm:$0xff]
        %s790 = scalar_lea.vmem [#allocation2], 880
        %v791 = vld [vmem:[%s790] ss:$2 sm:$0xff]
        %s792 = scalar_lea.vmem [#allocation2], 896
        %v793 = vld [vmem:[%s792] ss:$2 sm:$0xff]
        %s794 = scalar_lea.vmem [#allocation2], 960
        %v795 = vld [vmem:[%s794] ss:$2 sm:$0xff]
        %s796 = scalar_lea.vmem [#allocation2], 976
        %v797 = vld [vmem:[%s796] ss:$2 sm:$0xff]
        %s798 = scalar_lea.vmem [#allocation2], 1040
        %v799 = vld [vmem:[%s798] ss:$2 sm:$0xff]
        %s800 = scalar_lea.vmem [#allocation2], 1056
        %v801 = vld [vmem:[%s800] ss:$2 sm:$0xff]
        %s802 = scalar_lea.vmem [#allocation2], 1120
        %v803 = vld [vmem:[%s802] ss:$2 sm:$0xff]
        %s804 = scalar_lea.vmem [#allocation2], 1136
        %v805 = vld [vmem:[%s804] ss:$2 sm:$0xff]
        %s806 = scalar_lea.vmem [#allocation2], 1200
        %v807 = vld [vmem:[%s806] ss:$2 sm:$0xff]
        %s808 = scalar_lea.vmem [#allocation2], 1216
        %v809 = vld [vmem:[%s808] ss:$2 sm:$0xff]
        %s810 = scalar_lea.vmem [#allocation2], 1
        %v811 = vld [vmem:[%s810] ss:$2 sm:$0xff]
        %s812 = scalar_lea.vmem [#allocation2], 17
        %v813 = vld [vmem:[%s812] ss:$2 sm:$0xff]
        %s814 = scalar_lea.vmem [#allocation2], 81
        %v815 = vld [vmem:[%s814] ss:$2 sm:$0xff]
        %s816 = scalar_lea.vmem [#allocation2], 97
        %v817 = vld [vmem:[%s816] ss:$2 sm:$0xff]
        %s818 = scalar_lea.vmem [#allocation2], 161
        %v819 = vld [vmem:[%s818] ss:$2 sm:$0xff]
        %s820 = scalar_lea.vmem [#allocation2], 177
        %v821 = vld [vmem:[%s820] ss:$2 sm:$0xff]
        %s822 = scalar_lea.vmem [#allocation2], 241
        %v823 = vld [vmem:[%s822] ss:$2 sm:$0xff]
        %s824 = scalar_lea.vmem [#allocation2], 257
        %v825 = vld [vmem:[%s824] ss:$2 sm:$0xff]
        %s826 = scalar_lea.vmem [#allocation2], 321
        %v827 = vld [vmem:[%s826] ss:$2 sm:$0xff]
        %s828 = scalar_lea.vmem [#allocation2], 337
        %v829 = vld [vmem:[%s828] ss:$2 sm:$0xff]
        %s830 = scalar_lea.vmem [#allocation2], 401
        %v831 = vld [vmem:[%s830] ss:$2 sm:$0xff]
        %s832 = scalar_lea.vmem [#allocation2], 417
        %v833 = vld [vmem:[%s832] ss:$2 sm:$0xff]
        %s834 = scalar_lea.vmem [#allocation2], 481
        %v835 = vld [vmem:[%s834] ss:$2 sm:$0xff]
        %s836 = scalar_lea.vmem [#allocation2], 497
        %v837 = vld [vmem:[%s836] ss:$2 sm:$0xff]
        %s838 = scalar_lea.vmem [#allocation2], 561
        %v839 = vld [vmem:[%s838] ss:$2 sm:$0xff]
        %s840 = scalar_lea.vmem [#allocation2], 577
        %v841 = vld [vmem:[%s840] ss:$2 sm:$0xff]
        %s842 = scalar_lea.vmem [#allocation2], 641
        %v843 = vld [vmem:[%s842] ss:$2 sm:$0xff]
        %s844 = scalar_lea.vmem [#allocation2], 657
        %v845 = vld [vmem:[%s844] ss:$2 sm:$0xff]
        %s846 = scalar_lea.vmem [#allocation2], 721
        %v847 = vld [vmem:[%s846] ss:$2 sm:$0xff]
        %s848 = scalar_lea.vmem [#allocation2], 737
        %v849 = vld [vmem:[%s848] ss:$2 sm:$0xff]
        %s850 = scalar_lea.vmem [#allocation2], 801
        %v851 = vld [vmem:[%s850] ss:$2 sm:$0xff]
        %s852 = scalar_lea.vmem [#allocation2], 817
        %v853 = vld [vmem:[%s852] ss:$2 sm:$0xff]
        %s854 = scalar_lea.vmem [#allocation2], 881
        %v855 = vld [vmem:[%s854] ss:$2 sm:$0xff]
        %s856 = scalar_lea.vmem [#allocation2], 897
        %v857 = vld [vmem:[%s856] ss:$2 sm:$0xff]
        %s858 = scalar_lea.vmem [#allocation2], 961
        %v859 = vld [vmem:[%s858] ss:$2 sm:$0xff]
        %s860 = scalar_lea.vmem [#allocation2], 977
        %v861 = vld [vmem:[%s860] ss:$2 sm:$0xff]
        %s862 = scalar_lea.vmem [#allocation2], 1041
        %v863 = vld [vmem:[%s862] ss:$2 sm:$0xff]
        %s864 = scalar_lea.vmem [#allocation2], 1057
        %v865 = vld [vmem:[%s864] ss:$2 sm:$0xff]
        %s866 = scalar_lea.vmem [#allocation2], 1121
        %v867 = vld [vmem:[%s866] ss:$2 sm:$0xff]
        %s868 = scalar_lea.vmem [#allocation2], 1137
        %v869 = vld [vmem:[%s868] ss:$2 sm:$0xff]
        %s870 = scalar_lea.vmem [#allocation2], 1201
        %v871 = vld [vmem:[%s870] ss:$2 sm:$0xff]
        %s872 = scalar_lea.vmem [#allocation2], 1217
        %v873 = vld [vmem:[%s872] ss:$2 sm:$0xff]
        %s874 = scalar_lea.vmem [#allocation2], 2
        %v875 = vld [vmem:[%s874] ss:$2 sm:$0xff]
        %s876 = scalar_lea.vmem [#allocation2], 18
        %v877 = vld [vmem:[%s876] ss:$2 sm:$0xff]
        %s878 = scalar_lea.vmem [#allocation2], 82
        %v879 = vld [vmem:[%s878] ss:$2 sm:$0xff]
        %s880 = scalar_lea.vmem [#allocation2], 98
        %v881 = vld [vmem:[%s880] ss:$2 sm:$0xff]
        %s882 = scalar_lea.vmem [#allocation2], 162
        %v883 = vld [vmem:[%s882] ss:$2 sm:$0xff]
        %s884 = scalar_lea.vmem [#allocation2], 178
        %v885 = vld [vmem:[%s884] ss:$2 sm:$0xff]
        %s886 = scalar_lea.vmem [#allocation2], 242
        %v887 = vld [vmem:[%s886] ss:$2 sm:$0xff]
        %s888 = scalar_lea.vmem [#allocation2], 258
        %v889 = vld [vmem:[%s888] ss:$2 sm:$0xff]
        %s890 = scalar_lea.vmem [#allocation2], 322
        %v891 = vld [vmem:[%s890] ss:$2 sm:$0xff]
        %s892 = scalar_lea.vmem [#allocation2], 338
        %v893 = vld [vmem:[%s892] ss:$2 sm:$0xff]
        %s894 = scalar_lea.vmem [#allocation2], 402
        %v895 = vld [vmem:[%s894] ss:$2 sm:$0xff]
        %s896 = scalar_lea.vmem [#allocation2], 418
        %v897 = vld [vmem:[%s896] ss:$2 sm:$0xff]
        %s898 = scalar_lea.vmem [#allocation2], 482
        %v899 = vld [vmem:[%s898] ss:$2 sm:$0xff]
        %s900 = scalar_lea.vmem [#allocation2], 498
        %v901 = vld [vmem:[%s900] ss:$2 sm:$0xff]
        %s902 = scalar_lea.vmem [#allocation2], 562
        %v903 = vld [vmem:[%s902] ss:$2 sm:$0xff]
        %s904 = scalar_lea.vmem [#allocation2], 578
        %v905 = vld [vmem:[%s904] ss:$2 sm:$0xff]
        %s906 = scalar_lea.vmem [#allocation2], 642
        %v907 = vld [vmem:[%s906] ss:$2 sm:$0xff]
        %s908 = scalar_lea.vmem [#allocation2], 658
        %v909 = vld [vmem:[%s908] ss:$2 sm:$0xff]
        %s910 = scalar_lea.vmem [#allocation2], 722
        %v911 = vld [vmem:[%s910] ss:$2 sm:$0xff]
        %s912 = scalar_lea.vmem [#allocation2], 738
        %v913 = vld [vmem:[%s912] ss:$2 sm:$0xff]
        %s914 = scalar_lea.vmem [#allocation2], 802
        %v915 = vld [vmem:[%s914] ss:$2 sm:$0xff]
        %s916 = scalar_lea.vmem [#allocation2], 818
        %v917 = vld [vmem:[%s916] ss:$2 sm:$0xff]
        %s918 = scalar_lea.vmem [#allocation2], 882
        %v919 = vld [vmem:[%s918] ss:$2 sm:$0xff]
        %s920 = scalar_lea.vmem [#allocation2], 898
        %v921 = vld [vmem:[%s920] ss:$2 sm:$0xff]
        %s922 = scalar_lea.vmem [#allocation2], 962
        %v923 = vld [vmem:[%s922] ss:$2 sm:$0xff]
        %s924 = scalar_lea.vmem [#allocation2], 978
        %v925 = vld [vmem:[%s924] ss:$2 sm:$0xff]
        %s926 = scalar_lea.vmem [#allocation2], 1042
        %v927 = vld [vmem:[%s926] ss:$2 sm:$0xff]
        %s928 = scalar_lea.vmem [#allocation2], 1058
        %v929 = vld [vmem:[%s928] ss:$2 sm:$0xff]
        %s930 = scalar_lea.vmem [#allocation2], 1122
        %v931 = vld [vmem:[%s930] ss:$2 sm:$0xff]
        %s932 = scalar_lea.vmem [#allocation2], 1138
        %v933 = vld [vmem:[%s932] ss:$2 sm:$0xff]
        %s934 = scalar_lea.vmem [#allocation2], 1202
        %v935 = vld [vmem:[%s934] ss:$2 sm:$0xff]
        %s936 = scalar_lea.vmem [#allocation2], 1218
        %v937 = vld [vmem:[%s936] ss:$2 sm:$0xff]
        %s938 = scalar_lea.vmem [#allocation2], 3
        %v939 = vld [vmem:[%s938] ss:$2 sm:$0xff]
        %s940 = scalar_lea.vmem [#allocation2], 19
        %v941 = vld [vmem:[%s940] ss:$2 sm:$0xff]
        %s942 = scalar_lea.vmem [#allocation2], 83
        %v943 = vld [vmem:[%s942] ss:$2 sm:$0xff]
        %s944 = scalar_lea.vmem [#allocation2], 99
        %v945 = vld [vmem:[%s944] ss:$2 sm:$0xff]
        %s946 = scalar_lea.vmem [#allocation2], 163
        %v947 = vld [vmem:[%s946] ss:$2 sm:$0xff]
        %s948 = scalar_lea.vmem [#allocation2], 179
        %v949 = vld [vmem:[%s948] ss:$2 sm:$0xff]
        %s950 = scalar_lea.vmem [#allocation2], 243
        %v951 = vld [vmem:[%s950] ss:$2 sm:$0xff]
        %s952 = scalar_lea.vmem [#allocation2], 259
        %v953 = vld [vmem:[%s952] ss:$2 sm:$0xff]
        %s954 = scalar_lea.vmem [#allocation2], 323
        %v955 = vld [vmem:[%s954] ss:$2 sm:$0xff]
        %s956 = scalar_lea.vmem [#allocation2], 339
        %v957 = vld [vmem:[%s956] ss:$2 sm:$0xff]
        %s958 = scalar_lea.vmem [#allocation2], 403
        %v959 = vld [vmem:[%s958] ss:$2 sm:$0xff]
        %s960 = scalar_lea.vmem [#allocation2], 419
        %v961 = vld [vmem:[%s960] ss:$2 sm:$0xff]
        %s962 = scalar_lea.vmem [#allocation2], 483
        %v963 = vld [vmem:[%s962] ss:$2 sm:$0xff]
        %s964 = scalar_lea.vmem [#allocation2], 499
        %v965 = vld [vmem:[%s964] ss:$2 sm:$0xff]
        %s966 = scalar_lea.vmem [#allocation2], 563
        %v967 = vld [vmem:[%s966] ss:$2 sm:$0xff]
        %s968 = scalar_lea.vmem [#allocation2], 579
        %v969 = vld [vmem:[%s968] ss:$2 sm:$0xff]
        %s970 = scalar_lea.vmem [#allocation2], 643
        %v971 = vld [vmem:[%s970] ss:$2 sm:$0xff]
        %s972 = scalar_lea.vmem [#allocation2], 659
        %v973 = vld [vmem:[%s972] ss:$2 sm:$0xff]
        %s974 = scalar_lea.vmem [#allocation2], 723
        %v975 = vld [vmem:[%s974] ss:$2 sm:$0xff]
        %s976 = scalar_lea.vmem [#allocation2], 739
        %v977 = vld [vmem:[%s976] ss:$2 sm:$0xff]
        %s978 = scalar_lea.vmem [#allocation2], 803
        %v979 = vld [vmem:[%s978] ss:$2 sm:$0xff]
        %s980 = scalar_lea.vmem [#allocation2], 819
        %v981 = vld [vmem:[%s980] ss:$2 sm:$0xff]
        %s982 = scalar_lea.vmem [#allocation2], 883
        %v983 = vld [vmem:[%s982] ss:$2 sm:$0xff]
        %s984 = scalar_lea.vmem [#allocation2], 899
        %v985 = vld [vmem:[%s984] ss:$2 sm:$0xff]
        %s986 = scalar_lea.vmem [#allocation2], 963
        %v987 = vld [vmem:[%s986] ss:$2 sm:$0xff]
        %s988 = scalar_lea.vmem [#allocation2], 979
        %v989 = vld [vmem:[%s988] ss:$2 sm:$0xff]
        %s990 = scalar_lea.vmem [#allocation2], 1043
        %v991 = vld [vmem:[%s990] ss:$2 sm:$0xff]
        %s992 = scalar_lea.vmem [#allocation2], 1059
        %v993 = vld [vmem:[%s992] ss:$2 sm:$0xff]
        %s994 = scalar_lea.vmem [#allocation2], 1123
        %v995 = vld [vmem:[%s994] ss:$2 sm:$0xff]
        %s996 = scalar_lea.vmem [#allocation2], 1139
        %v997 = vld [vmem:[%s996] ss:$2 sm:$0xff]
        %s998 = scalar_lea.vmem [#allocation2], 1203
        %v999 = vld [vmem:[%s998] ss:$2 sm:$0xff]
        %s1000 = scalar_lea.vmem [#allocation2], 1219
        %v1001 = vld [vmem:[%s1000] ss:$2 sm:$0xff]
        %s1002 = scalar_lea.vmem [#allocation2], 4
        %v1003 = vld [vmem:[%s1002] ss:$2 sm:$0xff]
        %s1004 = scalar_lea.vmem [#allocation2], 20
        %v1005 = vld [vmem:[%s1004] ss:$2 sm:$0xff]
        %s1006 = scalar_lea.vmem [#allocation2], 84
        %v1007 = vld [vmem:[%s1006] ss:$2 sm:$0xff]
        %s1008 = scalar_lea.vmem [#allocation2], 100
        %v1009 = vld [vmem:[%s1008] ss:$2 sm:$0xff]
        %s1010 = scalar_lea.vmem [#allocation2], 164
        %v1011 = vld [vmem:[%s1010] ss:$2 sm:$0xff]
        %s1012 = scalar_lea.vmem [#allocation2], 180
        %v1013 = vld [vmem:[%s1012] ss:$2 sm:$0xff]
        %s1014 = scalar_lea.vmem [#allocation2], 244
        %v1015 = vld [vmem:[%s1014] ss:$2 sm:$0xff]
        %s1016 = scalar_lea.vmem [#allocation2], 260
        %v1017 = vld [vmem:[%s1016] ss:$2 sm:$0xff]
        %s1018 = scalar_lea.vmem [#allocation2], 324
        %v1019 = vld [vmem:[%s1018] ss:$2 sm:$0xff]
        %s1020 = scalar_lea.vmem [#allocation2], 340
        %v1021 = vld [vmem:[%s1020] ss:$2 sm:$0xff]
        %s1022 = scalar_lea.vmem [#allocation2], 404
        %v1023 = vld [vmem:[%s1022] ss:$2 sm:$0xff]
        %s1024 = scalar_lea.vmem [#allocation2], 420
        %v1025 = vld [vmem:[%s1024] ss:$2 sm:$0xff]
        %s1026 = scalar_lea.vmem [#allocation2], 484
        %v1027 = vld [vmem:[%s1026] ss:$2 sm:$0xff]
        %s1028 = scalar_lea.vmem [#allocation2], 500
        %v1029 = vld [vmem:[%s1028] ss:$2 sm:$0xff]
        %s1030 = scalar_lea.vmem [#allocation2], 564
        %v1031 = vld [vmem:[%s1030] ss:$2 sm:$0xff]
        %s1032 = scalar_lea.vmem [#allocation2], 580
        %v1033 = vld [vmem:[%s1032] ss:$2 sm:$0xff]
        %s1034 = scalar_lea.vmem [#allocation2], 644
        %v1035 = vld [vmem:[%s1034] ss:$2 sm:$0xff]
        %s1036 = scalar_lea.vmem [#allocation2], 660
        %v1037 = vld [vmem:[%s1036] ss:$2 sm:$0xff]
        %s1038 = scalar_lea.vmem [#allocation2], 724
        %v1039 = vld [vmem:[%s1038] ss:$2 sm:$0xff]
        %s1040 = scalar_lea.vmem [#allocation2], 740
        %v1041 = vld [vmem:[%s1040] ss:$2 sm:$0xff]
        %s1042 = scalar_lea.vmem [#allocation2], 804
        %v1043 = vld [vmem:[%s1042] ss:$2 sm:$0xff]
        %s1044 = scalar_lea.vmem [#allocation2], 820
        %v1045 = vld [vmem:[%s1044] ss:$2 sm:$0xff]
        %s1046 = scalar_lea.vmem [#allocation2], 884
        %v1047 = vld [vmem:[%s1046] ss:$2 sm:$0xff]
        %s1048 = scalar_lea.vmem [#allocation2], 900
        %v1049 = vld [vmem:[%s1048] ss:$2 sm:$0xff]
        %s1050 = scalar_lea.vmem [#allocation2], 964
        %v1051 = vld [vmem:[%s1050] ss:$2 sm:$0xff]
        %s1052 = scalar_lea.vmem [#allocation2], 980
        %v1053 = vld [vmem:[%s1052] ss:$2 sm:$0xff]
        %s1054 = scalar_lea.vmem [#allocation2], 1044
        %v1055 = vld [vmem:[%s1054] ss:$2 sm:$0xff]
        %s1056 = scalar_lea.vmem [#allocation2], 1060
        %v1057 = vld [vmem:[%s1056] ss:$2 sm:$0xff]
        %s1058 = scalar_lea.vmem [#allocation2], 1124
        %v1059 = vld [vmem:[%s1058] ss:$2 sm:$0xff]
        %s1060 = scalar_lea.vmem [#allocation2], 1140
        %v1061 = vld [vmem:[%s1060] ss:$2 sm:$0xff]
        %s1062 = scalar_lea.vmem [#allocation2], 1204
        %v1063 = vld [vmem:[%s1062] ss:$2 sm:$0xff]
        %s1064 = scalar_lea.vmem [#allocation2], 1220
        %v1065 = vld [vmem:[%s1064] ss:$2 sm:$0xff]
        %s1066 = scalar_lea.vmem [#allocation2], 5
        %v1067 = vld [vmem:[%s1066] ss:$2 sm:$0xff]
        %s1068 = scalar_lea.vmem [#allocation2], 21
        %v1069 = vld [vmem:[%s1068] ss:$2 sm:$0xff]
        %s1070 = scalar_lea.vmem [#allocation2], 85
        %v1071 = vld [vmem:[%s1070] ss:$2 sm:$0xff]
        %s1072 = scalar_lea.vmem [#allocation2], 101
        %v1073 = vld [vmem:[%s1072] ss:$2 sm:$0xff]
        %s1074 = scalar_lea.vmem [#allocation2], 165
        %v1075 = vld [vmem:[%s1074] ss:$2 sm:$0xff]
        %s1076 = scalar_lea.vmem [#allocation2], 181
        %v1077 = vld [vmem:[%s1076] ss:$2 sm:$0xff]
        %s1078 = scalar_lea.vmem [#allocation2], 245
        %v1079 = vld [vmem:[%s1078] ss:$2 sm:$0xff]
        %s1080 = scalar_lea.vmem [#allocation2], 261
        %v1081 = vld [vmem:[%s1080] ss:$2 sm:$0xff]
        %s1082 = scalar_lea.vmem [#allocation2], 325
        %v1083 = vld [vmem:[%s1082] ss:$2 sm:$0xff]
        %s1084 = scalar_lea.vmem [#allocation2], 341
        %v1085 = vld [vmem:[%s1084] ss:$2 sm:$0xff]
        %s1086 = scalar_lea.vmem [#allocation2], 405
        %v1087 = vld [vmem:[%s1086] ss:$2 sm:$0xff]
        %s1088 = scalar_lea.vmem [#allocation2], 421
        %v1089 = vld [vmem:[%s1088] ss:$2 sm:$0xff]
        %s1090 = scalar_lea.vmem [#allocation2], 485
        %v1091 = vld [vmem:[%s1090] ss:$2 sm:$0xff]
        %s1092 = scalar_lea.vmem [#allocation2], 501
        %v1093 = vld [vmem:[%s1092] ss:$2 sm:$0xff]
        %s1094 = scalar_lea.vmem [#allocation2], 565
        %v1095 = vld [vmem:[%s1094] ss:$2 sm:$0xff]
        %s1096 = scalar_lea.vmem [#allocation2], 581
        %v1097 = vld [vmem:[%s1096] ss:$2 sm:$0xff]
        %s1098 = scalar_lea.vmem [#allocation2], 645
        %v1099 = vld [vmem:[%s1098] ss:$2 sm:$0xff]
        %s1100 = scalar_lea.vmem [#allocation2], 661
        %v1101 = vld [vmem:[%s1100] ss:$2 sm:$0xff]
        %s1102 = scalar_lea.vmem [#allocation2], 725
        %v1103 = vld [vmem:[%s1102] ss:$2 sm:$0xff]
        %s1104 = scalar_lea.vmem [#allocation2], 741
        %v1105 = vld [vmem:[%s1104] ss:$2 sm:$0xff]
        %s1106 = scalar_lea.vmem [#allocation2], 805
        %v1107 = vld [vmem:[%s1106] ss:$2 sm:$0xff]
        %s1108 = scalar_lea.vmem [#allocation2], 821
        %v1109 = vld [vmem:[%s1108] ss:$2 sm:$0xff]
        %s1110 = scalar_lea.vmem [#allocation2], 885
        %v1111 = vld [vmem:[%s1110] ss:$2 sm:$0xff]
        %s1112 = scalar_lea.vmem [#allocation2], 901
        %v1113 = vld [vmem:[%s1112] ss:$2 sm:$0xff]
        %s1114 = scalar_lea.vmem [#allocation2], 965
        %v1115 = vld [vmem:[%s1114] ss:$2 sm:$0xff]
        %s1116 = scalar_lea.vmem [#allocation2], 981
        %v1117 = vld [vmem:[%s1116] ss:$2 sm:$0xff]
        %s1118 = scalar_lea.vmem [#allocation2], 1045
        %v1119 = vld [vmem:[%s1118] ss:$2 sm:$0xff]
        %s1120 = scalar_lea.vmem [#allocation2], 1061
        %v1121 = vld [vmem:[%s1120] ss:$2 sm:$0xff]
        %s1122 = scalar_lea.vmem [#allocation2], 1125
        %v1123 = vld [vmem:[%s1122] ss:$2 sm:$0xff]
        %s1124 = scalar_lea.vmem [#allocation2], 1141
        %v1125 = vld [vmem:[%s1124] ss:$2 sm:$0xff]
        %s1126 = scalar_lea.vmem [#allocation2], 1205
        %v1127 = vld [vmem:[%s1126] ss:$2 sm:$0xff]
        %s1128 = scalar_lea.vmem [#allocation2], 1221
        %v1129 = vld [vmem:[%s1128] ss:$2 sm:$0xff]
        %s1130 = scalar_lea.vmem [#allocation2], 6
        %v1131 = vld [vmem:[%s1130] ss:$2 sm:$0xff]
        %s1132 = scalar_lea.vmem [#allocation2], 22
        %v1133 = vld [vmem:[%s1132] ss:$2 sm:$0xff]
        %s1134 = scalar_lea.vmem [#allocation2], 86
        %v1135 = vld [vmem:[%s1134] ss:$2 sm:$0xff]
        %s1136 = scalar_lea.vmem [#allocation2], 102
        %v1137 = vld [vmem:[%s1136] ss:$2 sm:$0xff]
        %s1138 = scalar_lea.vmem [#allocation2], 166
        %v1139 = vld [vmem:[%s1138] ss:$2 sm:$0xff]
        %s1140 = scalar_lea.vmem [#allocation2], 182
        %v1141 = vld [vmem:[%s1140] ss:$2 sm:$0xff]
        %s1142 = scalar_lea.vmem [#allocation2], 246
        %v1143 = vld [vmem:[%s1142] ss:$2 sm:$0xff]
        %s1144 = scalar_lea.vmem [#allocation2], 262
        %v1145 = vld [vmem:[%s1144] ss:$2 sm:$0xff]
        %s1146 = scalar_lea.vmem [#allocation2], 326
        %v1147 = vld [vmem:[%s1146] ss:$2 sm:$0xff]
        %s1148 = scalar_lea.vmem [#allocation2], 342
        %v1149 = vld [vmem:[%s1148] ss:$2 sm:$0xff]
        %s1150 = scalar_lea.vmem [#allocation2], 406
        %v1151 = vld [vmem:[%s1150] ss:$2 sm:$0xff]
        %s1152 = scalar_lea.vmem [#allocation2], 422
        %v1153 = vld [vmem:[%s1152] ss:$2 sm:$0xff]
        %s1154 = scalar_lea.vmem [#allocation2], 486
        %v1155 = vld [vmem:[%s1154] ss:$2 sm:$0xff]
        %s1156 = scalar_lea.vmem [#allocation2], 502
        %v1157 = vld [vmem:[%s1156] ss:$2 sm:$0xff]
        %s1158 = scalar_lea.vmem [#allocation2], 566
        %v1159 = vld [vmem:[%s1158] ss:$2 sm:$0xff]
        %s1160 = scalar_lea.vmem [#allocation2], 582
        %v1161 = vld [vmem:[%s1160] ss:$2 sm:$0xff]
        %s1162 = scalar_lea.vmem [#allocation2], 646
        %v1163 = vld [vmem:[%s1162] ss:$2 sm:$0xff]
        %s1164 = scalar_lea.vmem [#allocation2], 662
        %v1165 = vld [vmem:[%s1164] ss:$2 sm:$0xff]
        %s1166 = scalar_lea.vmem [#allocation2], 726
        %v1167 = vld [vmem:[%s1166] ss:$2 sm:$0xff]
        %s1168 = scalar_lea.vmem [#allocation2], 742
        %v1169 = vld [vmem:[%s1168] ss:$2 sm:$0xff]
        %s1170 = scalar_lea.vmem [#allocation2], 806
        %v1171 = vld [vmem:[%s1170] ss:$2 sm:$0xff]
        %s1172 = scalar_lea.vmem [#allocation2], 822
        %v1173 = vld [vmem:[%s1172] ss:$2 sm:$0xff]
        %s1174 = scalar_lea.vmem [#allocation2], 886
        %v1175 = vld [vmem:[%s1174] ss:$2 sm:$0xff]
        %s1176 = scalar_lea.vmem [#allocation2], 902
        %v1177 = vld [vmem:[%s1176] ss:$2 sm:$0xff]
        %s1178 = scalar_lea.vmem [#allocation2], 966
        %v1179 = vld [vmem:[%s1178] ss:$2 sm:$0xff]
        %s1180 = scalar_lea.vmem [#allocation2], 982
        %v1181 = vld [vmem:[%s1180] ss:$2 sm:$0xff]
        %s1182 = scalar_lea.vmem [#allocation2], 1046
        %v1183 = vld [vmem:[%s1182] ss:$2 sm:$0xff]
        %s1184 = scalar_lea.vmem [#allocation2], 1062
        %v1185 = vld [vmem:[%s1184] ss:$2 sm:$0xff]
        %s1186 = scalar_lea.vmem [#allocation2], 1126
        %v1187 = vld [vmem:[%s1186] ss:$2 sm:$0xff]
        %s1188 = scalar_lea.vmem [#allocation2], 1142
        %v1189 = vld [vmem:[%s1188] ss:$2 sm:$0xff]
        %s1190 = scalar_lea.vmem [#allocation2], 1206
        %v1191 = vld [vmem:[%s1190] ss:$2 sm:$0xff]
        %s1192 = scalar_lea.vmem [#allocation2], 1222
        %v1193 = vld [vmem:[%s1192] ss:$2 sm:$0xff]
        %s1194 = scalar_lea.vmem [#allocation2], 40
        %v1195 = vld [vmem:[%s1194] ss:$2 sm:$0xff]
        %s1196 = scalar_lea.vmem %s1194, 16 [#allocation2]
        %v1197 = vld [vmem:[%s1196] ss:$2 sm:$0xff]
        %s1198 = scalar_lea.vmem %s1194, 80 [#allocation2]
        %v1199 = vld [vmem:[%s1198] ss:$2 sm:$0xff]
        %s1200 = scalar_lea.vmem %s1194, 96 [#allocation2]
        %v1201 = vld [vmem:[%s1200] ss:$2 sm:$0xff]
        %s1202 = scalar_lea.vmem %s1194, 160 [#allocation2]
        %v1203 = vld [vmem:[%s1202] ss:$2 sm:$0xff]
        %s1204 = scalar_lea.vmem %s1194, 176 [#allocation2]
        %v1205 = vld [vmem:[%s1204] ss:$2 sm:$0xff]
        %s1206 = scalar_lea.vmem %s1194, 240 [#allocation2]
        %v1207 = vld [vmem:[%s1206] ss:$2 sm:$0xff]
        %s1208 = scalar_lea.vmem %s1194, 256 [#allocation2]
        %v1209 = vld [vmem:[%s1208] ss:$2 sm:$0xff]
        %s1210 = scalar_lea.vmem %s1194, 320 [#allocation2]
        %v1211 = vld [vmem:[%s1210] ss:$2 sm:$0xff]
        %s1212 = scalar_lea.vmem %s1194, 336 [#allocation2]
        %v1213 = vld [vmem:[%s1212] ss:$2 sm:$0xff]
        %s1214 = scalar_lea.vmem %s1194, 400 [#allocation2]
        %v1215 = vld [vmem:[%s1214] ss:$2 sm:$0xff]
        %s1216 = scalar_lea.vmem %s1194, 416 [#allocation2]
        %v1217 = vld [vmem:[%s1216] ss:$2 sm:$0xff]
        %s1218 = scalar_lea.vmem %s1194, 480 [#allocation2]
        %v1219 = vld [vmem:[%s1218] ss:$2 sm:$0xff]
        %s1220 = scalar_lea.vmem %s1194, 496 [#allocation2]
        %v1221 = vld [vmem:[%s1220] ss:$2 sm:$0xff]
        %s1222 = scalar_lea.vmem %s1194, 560 [#allocation2]
        %v1223 = vld [vmem:[%s1222] ss:$2 sm:$0xff]
        %s1224 = scalar_lea.vmem %s1194, 576 [#allocation2]
        %v1225 = vld [vmem:[%s1224] ss:$2 sm:$0xff]
        %s1226 = scalar_lea.vmem %s1194, 640 [#allocation2]
        %v1227 = vld [vmem:[%s1226] ss:$2 sm:$0xff]
        %s1228 = scalar_lea.vmem %s1194, 656 [#allocation2]
        %v1229 = vld [vmem:[%s1228] ss:$2 sm:$0xff]
        %s1230 = scalar_lea.vmem %s1194, 720 [#allocation2]
        %v1231 = vld [vmem:[%s1230] ss:$2 sm:$0xff]
        %s1232 = scalar_lea.vmem %s1194, 736 [#allocation2]
        %v1233 = vld [vmem:[%s1232] ss:$2 sm:$0xff]
        %s1234 = scalar_lea.vmem %s1194, 800 [#allocation2]
        %v1235 = vld [vmem:[%s1234] ss:$2 sm:$0xff]
        %s1236 = scalar_lea.vmem %s1194, 816 [#allocation2]
        %v1237 = vld [vmem:[%s1236] ss:$2 sm:$0xff]
        %s1238 = scalar_lea.vmem %s1194, 880 [#allocation2]
        %v1239 = vld [vmem:[%s1238] ss:$2 sm:$0xff]
        %s1240 = scalar_lea.vmem %s1194, 896 [#allocation2]
        %v1241 = vld [vmem:[%s1240] ss:$2 sm:$0xff]
        %s1242 = scalar_lea.vmem %s1194, 960 [#allocation2]
        %v1243 = vld [vmem:[%s1242] ss:$2 sm:$0xff]
        %s1244 = scalar_lea.vmem %s1194, 976 [#allocation2]
        %v1245 = vld [vmem:[%s1244] ss:$2 sm:$0xff]
        %s1246 = scalar_lea.vmem %s1194, 1040 [#allocation2]
        %v1247 = vld [vmem:[%s1246] ss:$2 sm:$0xff]
        %s1248 = scalar_lea.vmem %s1194, 1056 [#allocation2]
        %v1249 = vld [vmem:[%s1248] ss:$2 sm:$0xff]
        %s1250 = scalar_lea.vmem %s1194, 1120 [#allocation2]
        %v1251 = vld [vmem:[%s1250] ss:$2 sm:$0xff]
        %s1252 = scalar_lea.vmem %s1194, 1136 [#allocation2]
        %v1253 = vld [vmem:[%s1252] ss:$2 sm:$0xff]
        %s1254 = scalar_lea.vmem %s1194, 1200 [#allocation2]
        %v1255 = vld [vmem:[%s1254] ss:$2 sm:$0xff]
        %s1256 = scalar_lea.vmem %s1194, 1216 [#allocation2]
        %v1257 = vld [vmem:[%s1256] ss:$2 sm:$0xff]
        %s1258 = scalar_lea.vmem %s1194, 1 [#allocation2]
        %v1259 = vld [vmem:[%s1258] ss:$2 sm:$0xff]
        %s1260 = scalar_lea.vmem %s1194, 17 [#allocation2]
        %v1261 = vld [vmem:[%s1260] ss:$2 sm:$0xff]
        %s1262 = scalar_lea.vmem %s1194, 81 [#allocation2]
        %v1263 = vld [vmem:[%s1262] ss:$2 sm:$0xff]
        %s1264 = scalar_lea.vmem %s1194, 97 [#allocation2]
        %v1265 = vld [vmem:[%s1264] ss:$2 sm:$0xff]
        %s1266 = scalar_lea.vmem %s1194, 161 [#allocation2]
        %v1267 = vld [vmem:[%s1266] ss:$2 sm:$0xff]
        %s1268 = scalar_lea.vmem %s1194, 177 [#allocation2]
        %v1269 = vld [vmem:[%s1268] ss:$2 sm:$0xff]
        %s1270 = scalar_lea.vmem %s1194, 241 [#allocation2]
        %v1271 = vld [vmem:[%s1270] ss:$2 sm:$0xff]
        %s1272 = scalar_lea.vmem %s1194, 257 [#allocation2]
        %v1273 = vld [vmem:[%s1272] ss:$2 sm:$0xff]
        %s1274 = scalar_lea.vmem %s1194, 321 [#allocation2]
        %v1275 = vld [vmem:[%s1274] ss:$2 sm:$0xff]
        %s1276 = scalar_lea.vmem %s1194, 337 [#allocation2]
        %v1277 = vld [vmem:[%s1276] ss:$2 sm:$0xff]
        %s1278 = scalar_lea.vmem %s1194, 401 [#allocation2]
        %v1279 = vld [vmem:[%s1278] ss:$2 sm:$0xff]
        %s1280 = scalar_lea.vmem %s1194, 417 [#allocation2]
        %v1281 = vld [vmem:[%s1280] ss:$2 sm:$0xff]
        %s1282 = scalar_lea.vmem %s1194, 481 [#allocation2]
        %v1283 = vld [vmem:[%s1282] ss:$2 sm:$0xff]
        %s1284 = scalar_lea.vmem %s1194, 497 [#allocation2]
        %v1285 = vld [vmem:[%s1284] ss:$2 sm:$0xff]
        %s1286 = scalar_lea.vmem %s1194, 561 [#allocation2]
        %v1287 = vld [vmem:[%s1286] ss:$2 sm:$0xff]
        %s1288 = scalar_lea.vmem %s1194, 577 [#allocation2]
        %v1289 = vld [vmem:[%s1288] ss:$2 sm:$0xff]
        %s1290 = scalar_lea.vmem %s1194, 641 [#allocation2]
        %v1291 = vld [vmem:[%s1290] ss:$2 sm:$0xff]
        %s1292 = scalar_lea.vmem %s1194, 657 [#allocation2]
        %v1293 = vld [vmem:[%s1292] ss:$2 sm:$0xff]
        %s1294 = scalar_lea.vmem %s1194, 721 [#allocation2]
        %v1295 = vld [vmem:[%s1294] ss:$2 sm:$0xff]
        %s1296 = scalar_lea.vmem %s1194, 737 [#allocation2]
        %v1297 = vld [vmem:[%s1296] ss:$2 sm:$0xff]
        %s1298 = scalar_lea.vmem %s1194, 801 [#allocation2]
        %v1299 = vld [vmem:[%s1298] ss:$2 sm:$0xff]
        %s1300 = scalar_lea.vmem %s1194, 817 [#allocation2]
        %v1301 = vld [vmem:[%s1300] ss:$2 sm:$0xff]
        %s1302 = scalar_lea.vmem %s1194, 881 [#allocation2]
        %v1303 = vld [vmem:[%s1302] ss:$2 sm:$0xff]
        %s1304 = scalar_lea.vmem %s1194, 897 [#allocation2]
        %v1305 = vld [vmem:[%s1304] ss:$2 sm:$0xff]
        %s1306 = scalar_lea.vmem %s1194, 961 [#allocation2]
        %v1307 = vld [vmem:[%s1306] ss:$2 sm:$0xff]
        %s1308 = scalar_lea.vmem %s1194, 977 [#allocation2]
        %v1309 = vld [vmem:[%s1308] ss:$2 sm:$0xff]
        %s1310 = scalar_lea.vmem %s1194, 1041 [#allocation2]
        %v1311 = vld [vmem:[%s1310] ss:$2 sm:$0xff]
        %s1312 = scalar_lea.vmem %s1194, 1057 [#allocation2]
        %v1313 = vld [vmem:[%s1312] ss:$2 sm:$0xff]
        %s1314 = scalar_lea.vmem %s1194, 1121 [#allocation2]
        %v1315 = vld [vmem:[%s1314] ss:$2 sm:$0xff]
        %s1316 = scalar_lea.vmem %s1194, 1137 [#allocation2]
        %v1317 = vld [vmem:[%s1316] ss:$2 sm:$0xff]
        %s1318 = scalar_lea.vmem %s1194, 1201 [#allocation2]
        %v1319 = vld [vmem:[%s1318] ss:$2 sm:$0xff]
        %s1320 = scalar_lea.vmem %s1194, 1217 [#allocation2]
        %v1321 = vld [vmem:[%s1320] ss:$2 sm:$0xff]
        %s1322 = scalar_lea.vmem %s1194, 2 [#allocation2]
        %v1323 = vld [vmem:[%s1322] ss:$2 sm:$0xff]
        %s1324 = scalar_lea.vmem %s1194, 18 [#allocation2]
        %v1325 = vld [vmem:[%s1324] ss:$2 sm:$0xff]
        %s1326 = scalar_lea.vmem %s1194, 82 [#allocation2]
        %v1327 = vld [vmem:[%s1326] ss:$2 sm:$0xff]
        %s1328 = scalar_lea.vmem %s1194, 98 [#allocation2]
        %v1329 = vld [vmem:[%s1328] ss:$2 sm:$0xff]
        %s1330 = scalar_lea.vmem %s1194, 162 [#allocation2]
        %v1331 = vld [vmem:[%s1330] ss:$2 sm:$0xff]
        %s1332 = scalar_lea.vmem %s1194, 178 [#allocation2]
        %v1333 = vld [vmem:[%s1332] ss:$2 sm:$0xff]
        %s1334 = scalar_lea.vmem %s1194, 242 [#allocation2]
        %v1335 = vld [vmem:[%s1334] ss:$2 sm:$0xff]
        %s1336 = scalar_lea.vmem %s1194, 258 [#allocation2]
        %v1337 = vld [vmem:[%s1336] ss:$2 sm:$0xff]
        %s1338 = scalar_lea.vmem %s1194, 322 [#allocation2]
        %v1339 = vld [vmem:[%s1338] ss:$2 sm:$0xff]
        %s1340 = scalar_lea.vmem %s1194, 338 [#allocation2]
        %v1341 = vld [vmem:[%s1340] ss:$2 sm:$0xff]
        %s1342 = scalar_lea.vmem %s1194, 402 [#allocation2]
        %v1343 = vld [vmem:[%s1342] ss:$2 sm:$0xff]
        %s1344 = scalar_lea.vmem %s1194, 418 [#allocation2]
        %v1345 = vld [vmem:[%s1344] ss:$2 sm:$0xff]
        %s1346 = scalar_lea.vmem %s1194, 482 [#allocation2]
        %v1347 = vld [vmem:[%s1346] ss:$2 sm:$0xff]
        %s1348 = scalar_lea.vmem %s1194, 498 [#allocation2]
        %v1349 = vld [vmem:[%s1348] ss:$2 sm:$0xff]
        %s1350 = scalar_lea.vmem %s1194, 562 [#allocation2]
        %v1351 = vld [vmem:[%s1350] ss:$2 sm:$0xff]
        %s1352 = scalar_lea.vmem %s1194, 578 [#allocation2]
        %v1353 = vld [vmem:[%s1352] ss:$2 sm:$0xff]
        %s1354 = scalar_lea.vmem %s1194, 642 [#allocation2]
        %v1355 = vld [vmem:[%s1354] ss:$2 sm:$0xff]
        %s1356 = scalar_lea.vmem %s1194, 658 [#allocation2]
        %v1357 = vld [vmem:[%s1356] ss:$2 sm:$0xff]
        %s1358 = scalar_lea.vmem %s1194, 722 [#allocation2]
        %v1359 = vld [vmem:[%s1358] ss:$2 sm:$0xff]
        %s1360 = scalar_lea.vmem %s1194, 738 [#allocation2]
        %v1361 = vld [vmem:[%s1360] ss:$2 sm:$0xff]
        %s1362 = scalar_lea.vmem %s1194, 802 [#allocation2]
        %v1363 = vld [vmem:[%s1362] ss:$2 sm:$0xff]
        %s1364 = scalar_lea.vmem %s1194, 818 [#allocation2]
        %v1365 = vld [vmem:[%s1364] ss:$2 sm:$0xff]
        %s1366 = scalar_lea.vmem %s1194, 882 [#allocation2]
        %v1367 = vld [vmem:[%s1366] ss:$2 sm:$0xff]
        %s1368 = scalar_lea.vmem %s1194, 898 [#allocation2]
        %v1369 = vld [vmem:[%s1368] ss:$2 sm:$0xff]
        %s1370 = scalar_lea.vmem %s1194, 962 [#allocation2]
        %v1371 = vld [vmem:[%s1370] ss:$2 sm:$0xff]
        %s1372 = scalar_lea.vmem %s1194, 978 [#allocation2]
        %v1373 = vld [vmem:[%s1372] ss:$2 sm:$0xff]
        %s1374 = scalar_lea.vmem %s1194, 1042 [#allocation2]
        %v1375 = vld [vmem:[%s1374] ss:$2 sm:$0xff]
        %s1376 = scalar_lea.vmem %s1194, 1058 [#allocation2]
        %v1377 = vld [vmem:[%s1376] ss:$2 sm:$0xff]
        %s1378 = scalar_lea.vmem %s1194, 1122 [#allocation2]
        %v1379 = vld [vmem:[%s1378] ss:$2 sm:$0xff]
        %s1380 = scalar_lea.vmem %s1194, 1138 [#allocation2]
        %v1381 = vld [vmem:[%s1380] ss:$2 sm:$0xff]
        %s1382 = scalar_lea.vmem %s1194, 1202 [#allocation2]
        %v1383 = vld [vmem:[%s1382] ss:$2 sm:$0xff]
        %s1384 = scalar_lea.vmem %s1194, 1218 [#allocation2]
        %v1385 = vld [vmem:[%s1384] ss:$2 sm:$0xff]
        %s1386 = scalar_lea.vmem %s1194, 3 [#allocation2]
        %v1387 = vld [vmem:[%s1386] ss:$2 sm:$0xff]
        %s1388 = scalar_lea.vmem %s1194, 19 [#allocation2]
        %v1389 = vld [vmem:[%s1388] ss:$2 sm:$0xff]
        %s1390 = scalar_lea.vmem %s1194, 83 [#allocation2]
        %v1391 = vld [vmem:[%s1390] ss:$2 sm:$0xff]
        %s1392 = scalar_lea.vmem %s1194, 99 [#allocation2]
        %v1393 = vld [vmem:[%s1392] ss:$2 sm:$0xff]
        %s1394 = scalar_lea.vmem %s1194, 163 [#allocation2]
        %v1395 = vld [vmem:[%s1394] ss:$2 sm:$0xff]
        %s1396 = scalar_lea.vmem %s1194, 179 [#allocation2]
        %v1397 = vld [vmem:[%s1396] ss:$2 sm:$0xff]
        %s1398 = scalar_lea.vmem %s1194, 243 [#allocation2]
        %v1399 = vld [vmem:[%s1398] ss:$2 sm:$0xff]
        %s1400 = scalar_lea.vmem %s1194, 259 [#allocation2]
        %v1401 = vld [vmem:[%s1400] ss:$2 sm:$0xff]
        %s1402 = scalar_lea.vmem %s1194, 323 [#allocation2]
        %v1403 = vld [vmem:[%s1402] ss:$2 sm:$0xff]
        %s1404 = scalar_lea.vmem %s1194, 339 [#allocation2]
        %v1405 = vld [vmem:[%s1404] ss:$2 sm:$0xff]
        %s1406 = scalar_lea.vmem %s1194, 403 [#allocation2]
        %v1407 = vld [vmem:[%s1406] ss:$2 sm:$0xff]
        %s1408 = scalar_lea.vmem %s1194, 419 [#allocation2]
        %v1409 = vld [vmem:[%s1408] ss:$2 sm:$0xff]
        %s1410 = scalar_lea.vmem %s1194, 483 [#allocation2]
        %v1411 = vld [vmem:[%s1410] ss:$2 sm:$0xff]
        %s1412 = scalar_lea.vmem %s1194, 499 [#allocation2]
        %v1413 = vld [vmem:[%s1412] ss:$2 sm:$0xff]
        %s1414 = scalar_lea.vmem %s1194, 563 [#allocation2]
        %v1415 = vld [vmem:[%s1414] ss:$2 sm:$0xff]
        %s1416 = scalar_lea.vmem %s1194, 579 [#allocation2]
        %v1417 = vld [vmem:[%s1416] ss:$2 sm:$0xff]
        %s1418 = scalar_lea.vmem %s1194, 643 [#allocation2]
        %v1419 = vld [vmem:[%s1418] ss:$2 sm:$0xff]
        %s1420 = scalar_lea.vmem %s1194, 659 [#allocation2]
        %v1421 = vld [vmem:[%s1420] ss:$2 sm:$0xff]
        %s1422 = scalar_lea.vmem %s1194, 723 [#allocation2]
        %v1423 = vld [vmem:[%s1422] ss:$2 sm:$0xff]
        %s1424 = scalar_lea.vmem %s1194, 739 [#allocation2]
        %v1425 = vld [vmem:[%s1424] ss:$2 sm:$0xff]
        %s1426 = scalar_lea.vmem %s1194, 803 [#allocation2]
        %v1427 = vld [vmem:[%s1426] ss:$2 sm:$0xff]
        %s1428 = scalar_lea.vmem %s1194, 819 [#allocation2]
        %v1429 = vld [vmem:[%s1428] ss:$2 sm:$0xff]
        %s1430 = scalar_lea.vmem %s1194, 883 [#allocation2]
        %v1431 = vld [vmem:[%s1430] ss:$2 sm:$0xff]
        %s1432 = scalar_lea.vmem %s1194, 899 [#allocation2]
        %v1433 = vld [vmem:[%s1432] ss:$2 sm:$0xff]
        %s1434 = scalar_lea.vmem %s1194, 963 [#allocation2]
        %v1435 = vld [vmem:[%s1434] ss:$2 sm:$0xff]
        %s1436 = scalar_lea.vmem %s1194, 979 [#allocation2]
        %v1437 = vld [vmem:[%s1436] ss:$2 sm:$0xff]
        %s1438 = scalar_lea.vmem %s1194, 1043 [#allocation2]
        %v1439 = vld [vmem:[%s1438] ss:$2 sm:$0xff]
        %s1440 = scalar_lea.vmem %s1194, 1059 [#allocation2]
        %v1441 = vld [vmem:[%s1440] ss:$2 sm:$0xff]
        %s1442 = scalar_lea.vmem %s1194, 1123 [#allocation2]
        %v1443 = vld [vmem:[%s1442] ss:$2 sm:$0xff]
        %s1444 = scalar_lea.vmem %s1194, 1139 [#allocation2]
        %v1445 = vld [vmem:[%s1444] ss:$2 sm:$0xff]
        %s1446 = scalar_lea.vmem %s1194, 1203 [#allocation2]
        %v1447 = vld [vmem:[%s1446] ss:$2 sm:$0xff]
        %s1448 = scalar_lea.vmem %s1194, 1219 [#allocation2]
        %v1449 = vld [vmem:[%s1448] ss:$2 sm:$0xff]
        %s1450 = scalar_lea.vmem %s1194, 4 [#allocation2]
        %v1451 = vld [vmem:[%s1450] ss:$2 sm:$0xff]
        %s1452 = scalar_lea.vmem %s1194, 20 [#allocation2]
        %v1453 = vld [vmem:[%s1452] ss:$2 sm:$0xff]
        %s1454 = scalar_lea.vmem %s1194, 84 [#allocation2]
        %v1455 = vld [vmem:[%s1454] ss:$2 sm:$0xff]
        %s1456 = scalar_lea.vmem %s1194, 100 [#allocation2]
        %v1457 = vld [vmem:[%s1456] ss:$2 sm:$0xff]
        %s1458 = scalar_lea.vmem %s1194, 164 [#allocation2]
        %v1459 = vld [vmem:[%s1458] ss:$2 sm:$0xff]
        %s1460 = scalar_lea.vmem %s1194, 180 [#allocation2]
        %v1461 = vld [vmem:[%s1460] ss:$2 sm:$0xff]
        %s1462 = scalar_lea.vmem %s1194, 244 [#allocation2]
        %v1463 = vld [vmem:[%s1462] ss:$2 sm:$0xff]
        %s1464 = scalar_lea.vmem %s1194, 260 [#allocation2]
        %v1465 = vld [vmem:[%s1464] ss:$2 sm:$0xff]
        %s1466 = scalar_lea.vmem %s1194, 324 [#allocation2]
        %v1467 = vld [vmem:[%s1466] ss:$2 sm:$0xff]
        %s1468 = scalar_lea.vmem %s1194, 340 [#allocation2]
        %v1469 = vld [vmem:[%s1468] ss:$2 sm:$0xff]
        %s1470 = scalar_lea.vmem %s1194, 404 [#allocation2]
        %v1471 = vld [vmem:[%s1470] ss:$2 sm:$0xff]
        %s1472 = scalar_lea.vmem %s1194, 420 [#allocation2]
        %v1473 = vld [vmem:[%s1472] ss:$2 sm:$0xff]
        %s1474 = scalar_lea.vmem %s1194, 484 [#allocation2]
        %v1475 = vld [vmem:[%s1474] ss:$2 sm:$0xff]
        %s1476 = scalar_lea.vmem %s1194, 500 [#allocation2]
        %v1477 = vld [vmem:[%s1476] ss:$2 sm:$0xff]
        %s1478 = scalar_lea.vmem %s1194, 564 [#allocation2]
        %v1479 = vld [vmem:[%s1478] ss:$2 sm:$0xff]
        %s1480 = scalar_lea.vmem %s1194, 580 [#allocation2]
        %v1481 = vld [vmem:[%s1480] ss:$2 sm:$0xff]
        %s1482 = scalar_lea.vmem %s1194, 644 [#allocation2]
        %v1483 = vld [vmem:[%s1482] ss:$2 sm:$0xff]
        %s1484 = scalar_lea.vmem %s1194, 660 [#allocation2]
        %v1485 = vld [vmem:[%s1484] ss:$2 sm:$0xff]
        %s1486 = scalar_lea.vmem %s1194, 724 [#allocation2]
        %v1487 = vld [vmem:[%s1486] ss:$2 sm:$0xff]
        %s1488 = scalar_lea.vmem %s1194, 740 [#allocation2]
        %v1489 = vld [vmem:[%s1488] ss:$2 sm:$0xff]
        %s1490 = scalar_lea.vmem %s1194, 804 [#allocation2]
        %v1491 = vld [vmem:[%s1490] ss:$2 sm:$0xff]
        %s1492 = scalar_lea.vmem %s1194, 820 [#allocation2]
        %v1493 = vld [vmem:[%s1492] ss:$2 sm:$0xff]
        %s1494 = scalar_lea.vmem %s1194, 884 [#allocation2]
        %v1495 = vld [vmem:[%s1494] ss:$2 sm:$0xff]
        %s1496 = scalar_lea.vmem %s1194, 900 [#allocation2]
        %v1497 = vld [vmem:[%s1496] ss:$2 sm:$0xff]
        %s1498 = scalar_lea.vmem %s1194, 964 [#allocation2]
        %v1499 = vld [vmem:[%s1498] ss:$2 sm:$0xff]
        %s1500 = scalar_lea.vmem %s1194, 980 [#allocation2]
        %v1501 = vld [vmem:[%s1500] ss:$2 sm:$0xff]
        %s1502 = scalar_lea.vmem %s1194, 1044 [#allocation2]
        %v1503 = vld [vmem:[%s1502] ss:$2 sm:$0xff]
        %s1504 = scalar_lea.vmem %s1194, 1060 [#allocation2]
        %v1505 = vld [vmem:[%s1504] ss:$2 sm:$0xff]
        %s1506 = scalar_lea.vmem %s1194, 1124 [#allocation2]
        %v1507 = vld [vmem:[%s1506] ss:$2 sm:$0xff]
        %s1508 = scalar_lea.vmem %s1194, 1140 [#allocation2]
        %v1509 = vld [vmem:[%s1508] ss:$2 sm:$0xff]
        %s1510 = scalar_lea.vmem %s1194, 1204 [#allocation2]
        %v1511 = vld [vmem:[%s1510] ss:$2 sm:$0xff]
        %s1512 = scalar_lea.vmem %s1194, 1220 [#allocation2]
        %v1513 = vld [vmem:[%s1512] ss:$2 sm:$0xff]
        %s1514 = scalar_lea.vmem %s1194, 5 [#allocation2]
        %v1515 = vld [vmem:[%s1514] ss:$2 sm:$0xff]
        %s1516 = scalar_lea.vmem %s1194, 21 [#allocation2]
        %v1517 = vld [vmem:[%s1516] ss:$2 sm:$0xff]
        %s1518 = scalar_lea.vmem %s1194, 85 [#allocation2]
        %v1519 = vld [vmem:[%s1518] ss:$2 sm:$0xff]
        %s1520 = scalar_lea.vmem %s1194, 101 [#allocation2]
        %v1521 = vld [vmem:[%s1520] ss:$2 sm:$0xff]
        %s1522 = scalar_lea.vmem %s1194, 165 [#allocation2]
        %v1523 = vld [vmem:[%s1522] ss:$2 sm:$0xff]
        %s1524 = scalar_lea.vmem %s1194, 181 [#allocation2]
        %v1525 = vld [vmem:[%s1524] ss:$2 sm:$0xff]
        %s1526 = scalar_lea.vmem %s1194, 245 [#allocation2]
        %v1527 = vld [vmem:[%s1526] ss:$2 sm:$0xff]
        %s1528 = scalar_lea.vmem %s1194, 261 [#allocation2]
        %v1529 = vld [vmem:[%s1528] ss:$2 sm:$0xff]
        %s1530 = scalar_lea.vmem %s1194, 325 [#allocation2]
        %v1531 = vld [vmem:[%s1530] ss:$2 sm:$0xff]
        %s1532 = scalar_lea.vmem %s1194, 341 [#allocation2]
        %v1533 = vld [vmem:[%s1532] ss:$2 sm:$0xff]
        %s1534 = scalar_lea.vmem %s1194, 405 [#allocation2]
        %v1535 = vld [vmem:[%s1534] ss:$2 sm:$0xff]
        %s1536 = scalar_lea.vmem %s1194, 421 [#allocation2]
        %v1537 = vld [vmem:[%s1536] ss:$2 sm:$0xff]
        %s1538 = scalar_lea.vmem %s1194, 485 [#allocation2]
        %v1539 = vld [vmem:[%s1538] ss:$2 sm:$0xff]
        %s1540 = scalar_lea.vmem %s1194, 501 [#allocation2]
        %v1541 = vld [vmem:[%s1540] ss:$2 sm:$0xff]
        %s1542 = scalar_lea.vmem %s1194, 565 [#allocation2]
        %v1543 = vld [vmem:[%s1542] ss:$2 sm:$0xff]
        %s1544 = scalar_lea.vmem %s1194, 581 [#allocation2]
        %v1545 = vld [vmem:[%s1544] ss:$2 sm:$0xff]
        %s1546 = scalar_lea.vmem %s1194, 645 [#allocation2]
        %v1547 = vld [vmem:[%s1546] ss:$2 sm:$0xff]
        %s1548 = scalar_lea.vmem %s1194, 661 [#allocation2]
        %v1549 = vld [vmem:[%s1548] ss:$2 sm:$0xff]
        %s1550 = scalar_lea.vmem %s1194, 725 [#allocation2]
        %v1551 = vld [vmem:[%s1550] ss:$2 sm:$0xff]
        %s1552 = scalar_lea.vmem %s1194, 741 [#allocation2]
        %v1553 = vld [vmem:[%s1552] ss:$2 sm:$0xff]
        %s1554 = scalar_lea.vmem %s1194, 805 [#allocation2]
        %v1555 = vld [vmem:[%s1554] ss:$2 sm:$0xff]
        %s1556 = scalar_lea.vmem %s1194, 821 [#allocation2]
        %v1557 = vld [vmem:[%s1556] ss:$2 sm:$0xff]
        %s1558 = scalar_lea.vmem %s1194, 885 [#allocation2]
        %v1559 = vld [vmem:[%s1558] ss:$2 sm:$0xff]
        %s1560 = scalar_lea.vmem %s1194, 901 [#allocation2]
        %v1561 = vld [vmem:[%s1560] ss:$2 sm:$0xff]
        %s1562 = scalar_lea.vmem %s1194, 965 [#allocation2]
        %v1563 = vld [vmem:[%s1562] ss:$2 sm:$0xff]
        %s1564 = scalar_lea.vmem %s1194, 981 [#allocation2]
        %v1565 = vld [vmem:[%s1564] ss:$2 sm:$0xff]
        %s1566 = scalar_lea.vmem %s1194, 1045 [#allocation2]
        %v1567 = vld [vmem:[%s1566] ss:$2 sm:$0xff]
        %s1568 = scalar_lea.vmem %s1194, 1061 [#allocation2]
        %v1569 = vld [vmem:[%s1568] ss:$2 sm:$0xff]
        %s1570 = scalar_lea.vmem %s1194, 1125 [#allocation2]
        %v1571 = vld [vmem:[%s1570] ss:$2 sm:$0xff]
        %s1572 = scalar_lea.vmem %s1194, 1141 [#allocation2]
        %v1573 = vld [vmem:[%s1572] ss:$2 sm:$0xff]
        %s1574 = scalar_lea.vmem %s1194, 1205 [#allocation2]
        %v1575 = vld [vmem:[%s1574] ss:$2 sm:$0xff]
        %s1576 = scalar_lea.vmem %s1194, 1221 [#allocation2]
        %v1577 = vld [vmem:[%s1576] ss:$2 sm:$0xff]
        %s1578 = scalar_lea.vmem %s1194, 6 [#allocation2]
        %v1579 = vld [vmem:[%s1578] ss:$2 sm:$0xff]
        %s1580 = scalar_lea.vmem %s1194, 22 [#allocation2]
        %v1581 = vld [vmem:[%s1580] ss:$2 sm:$0xff]
        %s1582 = scalar_lea.vmem %s1194, 86 [#allocation2]
        %v1583 = vld [vmem:[%s1582] ss:$2 sm:$0xff]
        %s1584 = scalar_lea.vmem %s1194, 102 [#allocation2]
        %v1585 = vld [vmem:[%s1584] ss:$2 sm:$0xff]
        %s1586 = scalar_lea.vmem %s1194, 166 [#allocation2]
        %v1587 = vld [vmem:[%s1586] ss:$2 sm:$0xff]
        %s1588 = scalar_lea.vmem %s1194, 182 [#allocation2]
        %v1589 = vld [vmem:[%s1588] ss:$2 sm:$0xff]
        %s1590 = scalar_lea.vmem %s1194, 246 [#allocation2]
        %v1591 = vld [vmem:[%s1590] ss:$2 sm:$0xff]
        %s1592 = scalar_lea.vmem %s1194, 262 [#allocation2]
        %v1593 = vld [vmem:[%s1592] ss:$2 sm:$0xff]
        %s1594 = scalar_lea.vmem %s1194, 326 [#allocation2]
        %v1595 = vld [vmem:[%s1594] ss:$2 sm:$0xff]
        %s1596 = scalar_lea.vmem %s1194, 342 [#allocation2]
        %v1597 = vld [vmem:[%s1596] ss:$2 sm:$0xff]
        %s1598 = scalar_lea.vmem %s1194, 406 [#allocation2]
        %v1599 = vld [vmem:[%s1598] ss:$2 sm:$0xff]
        %s1600 = scalar_lea.vmem %s1194, 422 [#allocation2]
        %v1601 = vld [vmem:[%s1600] ss:$2 sm:$0xff]
        %s1602 = scalar_lea.vmem %s1194, 486 [#allocation2]
        %v1603 = vld [vmem:[%s1602] ss:$2 sm:$0xff]
        %s1604 = scalar_lea.vmem %s1194, 502 [#allocation2]
        %v1605 = vld [vmem:[%s1604] ss:$2 sm:$0xff]
        %s1606 = scalar_lea.vmem %s1194, 566 [#allocation2]
        %v1607 = vld [vmem:[%s1606] ss:$2 sm:$0xff]
        %s1608 = scalar_lea.vmem %s1194, 582 [#allocation2]
        %v1609 = vld [vmem:[%s1608] ss:$2 sm:$0xff]
        %s1610 = scalar_lea.vmem %s1194, 646 [#allocation2]
        %v1611 = vld [vmem:[%s1610] ss:$2 sm:$0xff]
        %s1612 = scalar_lea.vmem %s1194, 662 [#allocation2]
        %v1613 = vld [vmem:[%s1612] ss:$2 sm:$0xff]
        %s1614 = scalar_lea.vmem %s1194, 726 [#allocation2]
        %v1615 = vld [vmem:[%s1614] ss:$2 sm:$0xff]
        %s1616 = scalar_lea.vmem %s1194, 742 [#allocation2]
        %v1617 = vld [vmem:[%s1616] ss:$2 sm:$0xff]
        %s1618 = scalar_lea.vmem %s1194, 806 [#allocation2]
        %v1619 = vld [vmem:[%s1618] ss:$2 sm:$0xff]
        %s1620 = scalar_lea.vmem %s1194, 822 [#allocation2]
        %v1621 = vld [vmem:[%s1620] ss:$2 sm:$0xff]
        %s1622 = scalar_lea.vmem %s1194, 886 [#allocation2]
        %v1623 = vld [vmem:[%s1622] ss:$2 sm:$0xff]
        %s1624 = scalar_lea.vmem %s1194, 902 [#allocation2]
        %v1625 = vld [vmem:[%s1624] ss:$2 sm:$0xff]
        %s1626 = scalar_lea.vmem %s1194, 966 [#allocation2]
        %v1627 = vld [vmem:[%s1626] ss:$2 sm:$0xff]
        %s1628 = scalar_lea.vmem %s1194, 982 [#allocation2]
        %v1629 = vld [vmem:[%s1628] ss:$2 sm:$0xff]
        %s1630 = scalar_lea.vmem %s1194, 1046 [#allocation2]
        %v1631 = vld [vmem:[%s1630] ss:$2 sm:$0xff]
        %s1632 = scalar_lea.vmem %s1194, 1062 [#allocation2]
        %v1633 = vld [vmem:[%s1632] ss:$2 sm:$0xff]
        %s1634 = scalar_lea.vmem %s1194, 1126 [#allocation2]
        %v1635 = vld [vmem:[%s1634] ss:$2 sm:$0xff]
        %s1636 = scalar_lea.vmem %s1194, 1142 [#allocation2]
        %v1637 = vld [vmem:[%s1636] ss:$2 sm:$0xff]
        %s1638 = scalar_lea.vmem %s1194, 1206 [#allocation2]
        %v1639 = vld [vmem:[%s1638] ss:$2 sm:$0xff]
        %s1640 = scalar_lea.vmem %s1194, 1222 [#allocation2]
        %v1641 = vld [vmem:[%s1640] ss:$2 sm:$0xff]
        %s1642 = scalar_lea.vmem [#allocation2], 80
        %v1643 = vld [vmem:[%s1642] ss:$2 sm:$0xff]
        %s1644 = scalar_lea.vmem %s1642, 16 [#allocation2]
        %v1645 = vld [vmem:[%s1644] ss:$2 sm:$0xff]
        %s1646 = scalar_lea.vmem %s1642, 80 [#allocation2]
        %v1647 = vld [vmem:[%s1646] ss:$2 sm:$0xff]
        %s1648 = scalar_lea.vmem %s1642, 96 [#allocation2]
        %v1649 = vld [vmem:[%s1648] ss:$2 sm:$0xff]
        %s1650 = scalar_lea.vmem %s1642, 160 [#allocation2]
        %v1651 = vld [vmem:[%s1650] ss:$2 sm:$0xff]
        %s1652 = scalar_lea.vmem %s1642, 176 [#allocation2]
        %v1653 = vld [vmem:[%s1652] ss:$2 sm:$0xff]
        %s1654 = scalar_lea.vmem %s1642, 240 [#allocation2]
        %v1655 = vld [vmem:[%s1654] ss:$2 sm:$0xff]
        %s1656 = scalar_lea.vmem %s1642, 256 [#allocation2]
        %v1657 = vld [vmem:[%s1656] ss:$2 sm:$0xff]
        %s1658 = scalar_lea.vmem %s1642, 320 [#allocation2]
        %v1659 = vld [vmem:[%s1658] ss:$2 sm:$0xff]
        %s1660 = scalar_lea.vmem %s1642, 336 [#allocation2]
        %v1661 = vld [vmem:[%s1660] ss:$2 sm:$0xff]
        %s1662 = scalar_lea.vmem %s1642, 400 [#allocation2]
        %v1663 = vld [vmem:[%s1662] ss:$2 sm:$0xff]
        %s1664 = scalar_lea.vmem %s1642, 416 [#allocation2]
        %v1665 = vld [vmem:[%s1664] ss:$2 sm:$0xff]
        %s1666 = scalar_lea.vmem %s1642, 480 [#allocation2]
        %v1667 = vld [vmem:[%s1666] ss:$2 sm:$0xff]
        %s1668 = scalar_lea.vmem %s1642, 496 [#allocation2]
        %v1669 = vld [vmem:[%s1668] ss:$2 sm:$0xff]
        %s1670 = scalar_lea.vmem %s1642, 560 [#allocation2]
        %v1671 = vld [vmem:[%s1670] ss:$2 sm:$0xff]
        %s1672 = scalar_lea.vmem %s1642, 576 [#allocation2]
        %v1673 = vld [vmem:[%s1672] ss:$2 sm:$0xff]
        %s1674 = scalar_lea.vmem %s1642, 640 [#allocation2]
        %v1675 = vld [vmem:[%s1674] ss:$2 sm:$0xff]
        %s1676 = scalar_lea.vmem %s1642, 656 [#allocation2]
        %v1677 = vld [vmem:[%s1676] ss:$2 sm:$0xff]
        %s1678 = scalar_lea.vmem %s1642, 720 [#allocation2]
        %v1679 = vld [vmem:[%s1678] ss:$2 sm:$0xff]
        %s1680 = scalar_lea.vmem %s1642, 736 [#allocation2]
        %v1681 = vld [vmem:[%s1680] ss:$2 sm:$0xff]
        %s1682 = scalar_lea.vmem %s1642, 800 [#allocation2]
        %v1683 = vld [vmem:[%s1682] ss:$2 sm:$0xff]
        %s1684 = scalar_lea.vmem %s1642, 816 [#allocation2]
        %v1685 = vld [vmem:[%s1684] ss:$2 sm:$0xff]
        %s1686 = scalar_lea.vmem %s1642, 880 [#allocation2]
        %v1687 = vld [vmem:[%s1686] ss:$2 sm:$0xff]
        %s1688 = scalar_lea.vmem %s1642, 896 [#allocation2]
        %v1689 = vld [vmem:[%s1688] ss:$2 sm:$0xff]
        %s1690 = scalar_lea.vmem %s1642, 960 [#allocation2]
        %v1691 = vld [vmem:[%s1690] ss:$2 sm:$0xff]
        %s1692 = scalar_lea.vmem %s1642, 976 [#allocation2]
        %v1693 = vld [vmem:[%s1692] ss:$2 sm:$0xff]
        %s1694 = scalar_lea.vmem %s1642, 1040 [#allocation2]
        %v1695 = vld [vmem:[%s1694] ss:$2 sm:$0xff]
        %s1696 = scalar_lea.vmem %s1642, 1056 [#allocation2]
        %v1697 = vld [vmem:[%s1696] ss:$2 sm:$0xff]
        %s1698 = scalar_lea.vmem %s1642, 1120 [#allocation2]
        %v1699 = vld [vmem:[%s1698] ss:$2 sm:$0xff]
        %s1700 = scalar_lea.vmem %s1642, 1136 [#allocation2]
        %v1701 = vld [vmem:[%s1700] ss:$2 sm:$0xff]
        %s1702 = scalar_lea.vmem %s1642, 1200 [#allocation2]
        %v1703 = vld [vmem:[%s1702] ss:$2 sm:$0xff]
        %s1704 = scalar_lea.vmem %s1642, 1216 [#allocation2]
        %v1705 = vld [vmem:[%s1704] ss:$2 sm:$0xff]
        %s1706 = scalar_lea.vmem %s1642, 1 [#allocation2]
        %v1707 = vld [vmem:[%s1706] ss:$2 sm:$0xff]
        %s1708 = scalar_lea.vmem %s1642, 17 [#allocation2]
        %v1709 = vld [vmem:[%s1708] ss:$2 sm:$0xff]
        %s1710 = scalar_lea.vmem %s1642, 81 [#allocation2]
        %v1711 = vld [vmem:[%s1710] ss:$2 sm:$0xff]
        %s1712 = scalar_lea.vmem %s1642, 97 [#allocation2]
        %v1713 = vld [vmem:[%s1712] ss:$2 sm:$0xff]
        %s1714 = scalar_lea.vmem %s1642, 161 [#allocation2]
        %v1715 = vld [vmem:[%s1714] ss:$2 sm:$0xff]
        %s1716 = scalar_lea.vmem %s1642, 177 [#allocation2]
        %v1717 = vld [vmem:[%s1716] ss:$2 sm:$0xff]
        %s1718 = scalar_lea.vmem %s1642, 241 [#allocation2]
        %v1719 = vld [vmem:[%s1718] ss:$2 sm:$0xff]
        %s1720 = scalar_lea.vmem %s1642, 257 [#allocation2]
        %v1721 = vld [vmem:[%s1720] ss:$2 sm:$0xff]
        %s1722 = scalar_lea.vmem %s1642, 321 [#allocation2]
        %v1723 = vld [vmem:[%s1722] ss:$2 sm:$0xff]
        %s1724 = scalar_lea.vmem %s1642, 337 [#allocation2]
        %v1725 = vld [vmem:[%s1724] ss:$2 sm:$0xff]
        %s1726 = scalar_lea.vmem %s1642, 401 [#allocation2]
        %v1727 = vld [vmem:[%s1726] ss:$2 sm:$0xff]
        %s1728 = scalar_lea.vmem %s1642, 417 [#allocation2]
        %v1729 = vld [vmem:[%s1728] ss:$2 sm:$0xff]
        %s1730 = scalar_lea.vmem %s1642, 481 [#allocation2]
        %v1731 = vld [vmem:[%s1730] ss:$2 sm:$0xff]
        %s1732 = scalar_lea.vmem %s1642, 497 [#allocation2]
        %v1733 = vld [vmem:[%s1732] ss:$2 sm:$0xff]
        %s1734 = scalar_lea.vmem %s1642, 561 [#allocation2]
        %v1735 = vld [vmem:[%s1734] ss:$2 sm:$0xff]
        %s1736 = scalar_lea.vmem %s1642, 577 [#allocation2]
        %v1737 = vld [vmem:[%s1736] ss:$2 sm:$0xff]
        %s1738 = scalar_lea.vmem %s1642, 641 [#allocation2]
        %v1739 = vld [vmem:[%s1738] ss:$2 sm:$0xff]
        %s1740 = scalar_lea.vmem %s1642, 657 [#allocation2]
        %v1741 = vld [vmem:[%s1740] ss:$2 sm:$0xff]
        %s1742 = scalar_lea.vmem %s1642, 721 [#allocation2]
        %v1743 = vld [vmem:[%s1742] ss:$2 sm:$0xff]
        %s1744 = scalar_lea.vmem %s1642, 737 [#allocation2]
        %v1745 = vld [vmem:[%s1744] ss:$2 sm:$0xff]
        %s1746 = scalar_lea.vmem %s1642, 801 [#allocation2]
        %v1747 = vld [vmem:[%s1746] ss:$2 sm:$0xff]
        %s1748 = scalar_lea.vmem %s1642, 817 [#allocation2]
        %v1749 = vld [vmem:[%s1748] ss:$2 sm:$0xff]
        %s1750 = scalar_lea.vmem %s1642, 881 [#allocation2]
        %v1751 = vld [vmem:[%s1750] ss:$2 sm:$0xff]
        %s1752 = scalar_lea.vmem %s1642, 897 [#allocation2]
        %v1753 = vld [vmem:[%s1752] ss:$2 sm:$0xff]
        %s1754 = scalar_lea.vmem %s1642, 961 [#allocation2]
        %v1755 = vld [vmem:[%s1754] ss:$2 sm:$0xff]
        %s1756 = scalar_lea.vmem %s1642, 977 [#allocation2]
        %v1757 = vld [vmem:[%s1756] ss:$2 sm:$0xff]
        %s1758 = scalar_lea.vmem %s1642, 1041 [#allocation2]
        %v1759 = vld [vmem:[%s1758] ss:$2 sm:$0xff]
        %s1760 = scalar_lea.vmem %s1642, 1057 [#allocation2]
        %v1761 = vld [vmem:[%s1760] ss:$2 sm:$0xff]
        %s1762 = scalar_lea.vmem %s1642, 1121 [#allocation2]
        %v1763 = vld [vmem:[%s1762] ss:$2 sm:$0xff]
        %s1764 = scalar_lea.vmem %s1642, 1137 [#allocation2]
        %v1765 = vld [vmem:[%s1764] ss:$2 sm:$0xff]
        %s1766 = scalar_lea.vmem %s1642, 1201 [#allocation2]
        %v1767 = vld [vmem:[%s1766] ss:$2 sm:$0xff]
        %s1768 = scalar_lea.vmem %s1642, 1217 [#allocation2]
        %v1769 = vld [vmem:[%s1768] ss:$2 sm:$0xff]
        %s1770 = scalar_lea.vmem %s1642, 2 [#allocation2]
        %v1771 = vld [vmem:[%s1770] ss:$2 sm:$0xff]
        %s1772 = scalar_lea.vmem %s1642, 18 [#allocation2]
        %v1773 = vld [vmem:[%s1772] ss:$2 sm:$0xff]
        %s1774 = scalar_lea.vmem %s1642, 82 [#allocation2]
        %v1775 = vld [vmem:[%s1774] ss:$2 sm:$0xff]
        %s1776 = scalar_lea.vmem %s1642, 98 [#allocation2]
        %v1777 = vld [vmem:[%s1776] ss:$2 sm:$0xff]
        %s1778 = scalar_lea.vmem %s1642, 162 [#allocation2]
        %v1779 = vld [vmem:[%s1778] ss:$2 sm:$0xff]
        %s1780 = scalar_lea.vmem %s1642, 178 [#allocation2]
        %v1781 = vld [vmem:[%s1780] ss:$2 sm:$0xff]
        %s1782 = scalar_lea.vmem %s1642, 242 [#allocation2]
        %v1783 = vld [vmem:[%s1782] ss:$2 sm:$0xff]
        %s1784 = scalar_lea.vmem %s1642, 258 [#allocation2]
        %v1785 = vld [vmem:[%s1784] ss:$2 sm:$0xff]
        %s1786 = scalar_lea.vmem %s1642, 322 [#allocation2]
        %v1787 = vld [vmem:[%s1786] ss:$2 sm:$0xff]
        %s1788 = scalar_lea.vmem %s1642, 338 [#allocation2]
        %v1789 = vld [vmem:[%s1788] ss:$2 sm:$0xff]
        %s1790 = scalar_lea.vmem %s1642, 402 [#allocation2]
        %v1791 = vld [vmem:[%s1790] ss:$2 sm:$0xff]
        %s1792 = scalar_lea.vmem %s1642, 418 [#allocation2]
        %v1793 = vld [vmem:[%s1792] ss:$2 sm:$0xff]
        %s1794 = scalar_lea.vmem %s1642, 482 [#allocation2]
        %v1795 = vld [vmem:[%s1794] ss:$2 sm:$0xff]
        %s1796 = scalar_lea.vmem %s1642, 498 [#allocation2]
        %v1797 = vld [vmem:[%s1796] ss:$2 sm:$0xff]
        %s1798 = scalar_lea.vmem %s1642, 562 [#allocation2]
        %v1799 = vld [vmem:[%s1798] ss:$2 sm:$0xff]
        %s1800 = scalar_lea.vmem %s1642, 578 [#allocation2]
        %v1801 = vld [vmem:[%s1800] ss:$2 sm:$0xff]
        %s1802 = scalar_lea.vmem %s1642, 642 [#allocation2]
        %v1803 = vld [vmem:[%s1802] ss:$2 sm:$0xff]
        %s1804 = scalar_lea.vmem %s1642, 658 [#allocation2]
        %v1805 = vld [vmem:[%s1804] ss:$2 sm:$0xff]
        %s1806 = scalar_lea.vmem %s1642, 722 [#allocation2]
        %v1807 = vld [vmem:[%s1806] ss:$2 sm:$0xff]
        %s1808 = scalar_lea.vmem %s1642, 738 [#allocation2]
        %v1809 = vld [vmem:[%s1808] ss:$2 sm:$0xff]
        %s1810 = scalar_lea.vmem %s1642, 802 [#allocation2]
        %v1811 = vld [vmem:[%s1810] ss:$2 sm:$0xff]
        %s1812 = scalar_lea.vmem %s1642, 818 [#allocation2]
        %v1813 = vld [vmem:[%s1812] ss:$2 sm:$0xff]
        %s1814 = scalar_lea.vmem %s1642, 882 [#allocation2]
        %v1815 = vld [vmem:[%s1814] ss:$2 sm:$0xff]
        %s1816 = scalar_lea.vmem %s1642, 898 [#allocation2]
        %v1817 = vld [vmem:[%s1816] ss:$2 sm:$0xff]
        %s1818 = scalar_lea.vmem %s1642, 962 [#allocation2]
        %v1819 = vld [vmem:[%s1818] ss:$2 sm:$0xff]
        %s1820 = scalar_lea.vmem %s1642, 978 [#allocation2]
        %v1821 = vld [vmem:[%s1820] ss:$2 sm:$0xff]
        %s1822 = scalar_lea.vmem %s1642, 1042 [#allocation2]
        %v1823 = vld [vmem:[%s1822] ss:$2 sm:$0xff]
        %s1824 = scalar_lea.vmem %s1642, 1058 [#allocation2]
        %v1825 = vld [vmem:[%s1824] ss:$2 sm:$0xff]
        %s1826 = scalar_lea.vmem %s1642, 1122 [#allocation2]
        %v1827 = vld [vmem:[%s1826] ss:$2 sm:$0xff]
        %s1828 = scalar_lea.vmem %s1642, 1138 [#allocation2]
        %v1829 = vld [vmem:[%s1828] ss:$2 sm:$0xff]
        %s1830 = scalar_lea.vmem %s1642, 1202 [#allocation2]
        %v1831 = vld [vmem:[%s1830] ss:$2 sm:$0xff]
        %s1832 = scalar_lea.vmem %s1642, 1218 [#allocation2]
        %v1833 = vld [vmem:[%s1832] ss:$2 sm:$0xff]
        %s1834 = scalar_lea.vmem %s1642, 3 [#allocation2]
        %v1835 = vld [vmem:[%s1834] ss:$2 sm:$0xff]
        %s1836 = scalar_lea.vmem %s1642, 19 [#allocation2]
        %v1837 = vld [vmem:[%s1836] ss:$2 sm:$0xff]
        %s1838 = scalar_lea.vmem %s1642, 83 [#allocation2]
        %v1839 = vld [vmem:[%s1838] ss:$2 sm:$0xff]
        %s1840 = scalar_lea.vmem %s1642, 99 [#allocation2]
        %v1841 = vld [vmem:[%s1840] ss:$2 sm:$0xff]
        %s1842 = scalar_lea.vmem %s1642, 163 [#allocation2]
        %v1843 = vld [vmem:[%s1842] ss:$2 sm:$0xff]
        %s1844 = scalar_lea.vmem %s1642, 179 [#allocation2]
        %v1845 = vld [vmem:[%s1844] ss:$2 sm:$0xff]
        %s1846 = scalar_lea.vmem %s1642, 243 [#allocation2]
        %v1847 = vld [vmem:[%s1846] ss:$2 sm:$0xff]
        %s1848 = scalar_lea.vmem %s1642, 259 [#allocation2]
        %v1849 = vld [vmem:[%s1848] ss:$2 sm:$0xff]
        %s1850 = scalar_lea.vmem %s1642, 323 [#allocation2]
        %v1851 = vld [vmem:[%s1850] ss:$2 sm:$0xff]
        %s1852 = scalar_lea.vmem %s1642, 339 [#allocation2]
        %v1853 = vld [vmem:[%s1852] ss:$2 sm:$0xff]
        %s1854 = scalar_lea.vmem %s1642, 403 [#allocation2]
        %v1855 = vld [vmem:[%s1854] ss:$2 sm:$0xff]
        %s1856 = scalar_lea.vmem %s1642, 419 [#allocation2]
        %v1857 = vld [vmem:[%s1856] ss:$2 sm:$0xff]
        %s1858 = scalar_lea.vmem %s1642, 483 [#allocation2]
        %v1859 = vld [vmem:[%s1858] ss:$2 sm:$0xff]
        %s1860 = scalar_lea.vmem %s1642, 499 [#allocation2]
        %v1861 = vld [vmem:[%s1860] ss:$2 sm:$0xff]
        %s1862 = scalar_lea.vmem %s1642, 563 [#allocation2]
        %v1863 = vld [vmem:[%s1862] ss:$2 sm:$0xff]
        %s1864 = scalar_lea.vmem %s1642, 579 [#allocation2]
        %v1865 = vld [vmem:[%s1864] ss:$2 sm:$0xff]
        %s1866 = scalar_lea.vmem %s1642, 643 [#allocation2]
        %v1867 = vld [vmem:[%s1866] ss:$2 sm:$0xff]
        %s1868 = scalar_lea.vmem %s1642, 659 [#allocation2]
        %v1869 = vld [vmem:[%s1868] ss:$2 sm:$0xff]
        %s1870 = scalar_lea.vmem %s1642, 723 [#allocation2]
        %v1871 = vld [vmem:[%s1870] ss:$2 sm:$0xff]
        %s1872 = scalar_lea.vmem %s1642, 739 [#allocation2]
        %v1873 = vld [vmem:[%s1872] ss:$2 sm:$0xff]
        %s1874 = scalar_lea.vmem %s1642, 803 [#allocation2]
        %v1875 = vld [vmem:[%s1874] ss:$2 sm:$0xff]
        %s1876 = scalar_lea.vmem %s1642, 819 [#allocation2]
        %v1877 = vld [vmem:[%s1876] ss:$2 sm:$0xff]
        %s1878 = scalar_lea.vmem %s1642, 883 [#allocation2]
        %v1879 = vld [vmem:[%s1878] ss:$2 sm:$0xff]
        %s1880 = scalar_lea.vmem %s1642, 899 [#allocation2]
        %v1881 = vld [vmem:[%s1880] ss:$2 sm:$0xff]
        %s1882 = scalar_lea.vmem %s1642, 963 [#allocation2]
        %v1883 = vld [vmem:[%s1882] ss:$2 sm:$0xff]
        %s1884 = scalar_lea.vmem %s1642, 979 [#allocation2]
        %v1885 = vld [vmem:[%s1884] ss:$2 sm:$0xff]
        %s1886 = scalar_lea.vmem %s1642, 1043 [#allocation2]
        %v1887 = vld [vmem:[%s1886] ss:$2 sm:$0xff]
        %s1888 = scalar_lea.vmem %s1642, 1059 [#allocation2]
        %v1889 = vld [vmem:[%s1888] ss:$2 sm:$0xff]
        %s1890 = scalar_lea.vmem %s1642, 1123 [#allocation2]
        %v1891 = vld [vmem:[%s1890] ss:$2 sm:$0xff]
        %s1892 = scalar_lea.vmem %s1642, 1139 [#allocation2]
        %v1893 = vld [vmem:[%s1892] ss:$2 sm:$0xff]
        %s1894 = scalar_lea.vmem %s1642, 1203 [#allocation2]
        %v1895 = vld [vmem:[%s1894] ss:$2 sm:$0xff]
        %s1896 = scalar_lea.vmem %s1642, 1219 [#allocation2]
        %v1897 = vld [vmem:[%s1896] ss:$2 sm:$0xff]
        %s1898 = scalar_lea.vmem %s1642, 4 [#allocation2]
        %v1899 = vld [vmem:[%s1898] ss:$2 sm:$0xff]
        %s1900 = scalar_lea.vmem %s1642, 20 [#allocation2]
        %v1901 = vld [vmem:[%s1900] ss:$2 sm:$0xff]
        %s1902 = scalar_lea.vmem %s1642, 84 [#allocation2]
        %v1903 = vld [vmem:[%s1902] ss:$2 sm:$0xff]
        %s1904 = scalar_lea.vmem %s1642, 100 [#allocation2]
        %v1905 = vld [vmem:[%s1904] ss:$2 sm:$0xff]
        %s1906 = scalar_lea.vmem %s1642, 164 [#allocation2]
        %v1907 = vld [vmem:[%s1906] ss:$2 sm:$0xff]
        %s1908 = scalar_lea.vmem %s1642, 180 [#allocation2]
        %v1909 = vld [vmem:[%s1908] ss:$2 sm:$0xff]
        %s1910 = scalar_lea.vmem %s1642, 244 [#allocation2]
        %v1911 = vld [vmem:[%s1910] ss:$2 sm:$0xff]
        %s1912 = scalar_lea.vmem %s1642, 260 [#allocation2]
        %v1913 = vld [vmem:[%s1912] ss:$2 sm:$0xff]
        %s1914 = scalar_lea.vmem %s1642, 324 [#allocation2]
        %v1915 = vld [vmem:[%s1914] ss:$2 sm:$0xff]
        %s1916 = scalar_lea.vmem %s1642, 340 [#allocation2]
        %v1917 = vld [vmem:[%s1916] ss:$2 sm:$0xff]
        %s1918 = scalar_lea.vmem %s1642, 404 [#allocation2]
        %v1919 = vld [vmem:[%s1918] ss:$2 sm:$0xff]
        %s1920 = scalar_lea.vmem %s1642, 420 [#allocation2]
        %v1921 = vld [vmem:[%s1920] ss:$2 sm:$0xff]
        %s1922 = scalar_lea.vmem %s1642, 484 [#allocation2]
        %v1923 = vld [vmem:[%s1922] ss:$2 sm:$0xff]
        %s1924 = scalar_lea.vmem %s1642, 500 [#allocation2]
        %v1925 = vld [vmem:[%s1924] ss:$2 sm:$0xff]
        %s1926 = scalar_lea.vmem %s1642, 564 [#allocation2]
        %v1927 = vld [vmem:[%s1926] ss:$2 sm:$0xff]
        %s1928 = scalar_lea.vmem %s1642, 580 [#allocation2]
        %v1929 = vld [vmem:[%s1928] ss:$2 sm:$0xff]
        %s1930 = scalar_lea.vmem %s1642, 644 [#allocation2]
        %v1931 = vld [vmem:[%s1930] ss:$2 sm:$0xff]
        %s1932 = scalar_lea.vmem %s1642, 660 [#allocation2]
        %v1933 = vld [vmem:[%s1932] ss:$2 sm:$0xff]
        %s1934 = scalar_lea.vmem %s1642, 724 [#allocation2]
        %v1935 = vld [vmem:[%s1934] ss:$2 sm:$0xff]
        %s1936 = scalar_lea.vmem %s1642, 740 [#allocation2]
        %v1937 = vld [vmem:[%s1936] ss:$2 sm:$0xff]
        %s1938 = scalar_lea.vmem %s1642, 804 [#allocation2]
        %v1939 = vld [vmem:[%s1938] ss:$2 sm:$0xff]
        %s1940 = scalar_lea.vmem %s1642, 820 [#allocation2]
        %v1941 = vld [vmem:[%s1940] ss:$2 sm:$0xff]
        %s1942 = scalar_lea.vmem %s1642, 884 [#allocation2]
        %v1943 = vld [vmem:[%s1942] ss:$2 sm:$0xff]
        %s1944 = scalar_lea.vmem %s1642, 900 [#allocation2]
        %v1945 = vld [vmem:[%s1944] ss:$2 sm:$0xff]
        %s1946 = scalar_lea.vmem %s1642, 964 [#allocation2]
        %v1947 = vld [vmem:[%s1946] ss:$2 sm:$0xff]
        %s1948 = scalar_lea.vmem %s1642, 980 [#allocation2]
        %v1949 = vld [vmem:[%s1948] ss:$2 sm:$0xff]
        %s1950 = scalar_lea.vmem %s1642, 1044 [#allocation2]
        %v1951 = vld [vmem:[%s1950] ss:$2 sm:$0xff]
        %s1952 = scalar_lea.vmem %s1642, 1060 [#allocation2]
        %v1953 = vld [vmem:[%s1952] ss:$2 sm:$0xff]
        %s1954 = scalar_lea.vmem %s1642, 1124 [#allocation2]
        %v1955 = vld [vmem:[%s1954] ss:$2 sm:$0xff]
        %s1956 = scalar_lea.vmem %s1642, 1140 [#allocation2]
        %v1957 = vld [vmem:[%s1956] ss:$2 sm:$0xff]
        %s1958 = scalar_lea.vmem %s1642, 1204 [#allocation2]
        %v1959 = vld [vmem:[%s1958] ss:$2 sm:$0xff]
        %s1960 = scalar_lea.vmem %s1642, 1220 [#allocation2]
        %v1961 = vld [vmem:[%s1960] ss:$2 sm:$0xff]
        %s1962 = scalar_lea.vmem %s1642, 5 [#allocation2]
        %v1963 = vld [vmem:[%s1962] ss:$2 sm:$0xff]
        %s1964 = scalar_lea.vmem %s1642, 21 [#allocation2]
        %v1965 = vld [vmem:[%s1964] ss:$2 sm:$0xff]
        %s1966 = scalar_lea.vmem %s1642, 85 [#allocation2]
        %v1967 = vld [vmem:[%s1966] ss:$2 sm:$0xff]
        %s1968 = scalar_lea.vmem %s1642, 101 [#allocation2]
        %v1969 = vld [vmem:[%s1968] ss:$2 sm:$0xff]
        %s1970 = scalar_lea.vmem %s1642, 165 [#allocation2]
        %v1971 = vld [vmem:[%s1970] ss:$2 sm:$0xff]
        %s1972 = scalar_lea.vmem %s1642, 181 [#allocation2]
        %v1973 = vld [vmem:[%s1972] ss:$2 sm:$0xff]
        %s1974 = scalar_lea.vmem %s1642, 245 [#allocation2]
        %v1975 = vld [vmem:[%s1974] ss:$2 sm:$0xff]
        %s1976 = scalar_lea.vmem %s1642, 261 [#allocation2]
        %v1977 = vld [vmem:[%s1976] ss:$2 sm:$0xff]
        %s1978 = scalar_lea.vmem %s1642, 325 [#allocation2]
        %v1979 = vld [vmem:[%s1978] ss:$2 sm:$0xff]
        %s1980 = scalar_lea.vmem %s1642, 341 [#allocation2]
        %v1981 = vld [vmem:[%s1980] ss:$2 sm:$0xff]
        %s1982 = scalar_lea.vmem %s1642, 405 [#allocation2]
        %v1983 = vld [vmem:[%s1982] ss:$2 sm:$0xff]
        %s1984 = scalar_lea.vmem %s1642, 421 [#allocation2]
        %v1985 = vld [vmem:[%s1984] ss:$2 sm:$0xff]
        %s1986 = scalar_lea.vmem %s1642, 485 [#allocation2]
        %v1987 = vld [vmem:[%s1986] ss:$2 sm:$0xff]
        %s1988 = scalar_lea.vmem %s1642, 501 [#allocation2]
        %v1989 = vld [vmem:[%s1988] ss:$2 sm:$0xff]
        %s1990 = scalar_lea.vmem %s1642, 565 [#allocation2]
        %v1991 = vld [vmem:[%s1990] ss:$2 sm:$0xff]
        %s1992 = scalar_lea.vmem %s1642, 581 [#allocation2]
        %v1993 = vld [vmem:[%s1992] ss:$2 sm:$0xff]
        %s1994 = scalar_lea.vmem %s1642, 645 [#allocation2]
        %v1995 = vld [vmem:[%s1994] ss:$2 sm:$0xff]
        %s1996 = scalar_lea.vmem %s1642, 661 [#allocation2]
        %v1997 = vld [vmem:[%s1996] ss:$2 sm:$0xff]
        %s1998 = scalar_lea.vmem %s1642, 725 [#allocation2]
        %v1999 = vld [vmem:[%s1998] ss:$2 sm:$0xff]
        %s2000 = scalar_lea.vmem %s1642, 741 [#allocation2]
        %v2001 = vld [vmem:[%s2000] ss:$2 sm:$0xff]
        %s2002 = scalar_lea.vmem %s1642, 805 [#allocation2]
        %v2003 = vld [vmem:[%s2002] ss:$2 sm:$0xff]
        %s2004 = scalar_lea.vmem %s1642, 821 [#allocation2]
        %v2005 = vld [vmem:[%s2004] ss:$2 sm:$0xff]
        %s2006 = scalar_lea.vmem %s1642, 885 [#allocation2]
        %v2007 = vld [vmem:[%s2006] ss:$2 sm:$0xff]
        %s2008 = scalar_lea.vmem %s1642, 901 [#allocation2]
        %v2009 = vld [vmem:[%s2008] ss:$2 sm:$0xff]
        %s2010 = scalar_lea.vmem %s1642, 965 [#allocation2]
        %v2011 = vld [vmem:[%s2010] ss:$2 sm:$0xff]
        %s2012 = scalar_lea.vmem %s1642, 981 [#allocation2]
        %v2013 = vld [vmem:[%s2012] ss:$2 sm:$0xff]
        %s2014 = scalar_lea.vmem %s1642, 1045 [#allocation2]
        %v2015 = vld [vmem:[%s2014] ss:$2 sm:$0xff]
        %s2016 = scalar_lea.vmem %s1642, 1061 [#allocation2]
        %v2017 = vld [vmem:[%s2016] ss:$2 sm:$0xff]
        %s2018 = scalar_lea.vmem %s1642, 1125 [#allocation2]
        %v2019 = vld [vmem:[%s2018] ss:$2 sm:$0xff]
        %s2020 = scalar_lea.vmem %s1642, 1141 [#allocation2]
        %v2021 = vld [vmem:[%s2020] ss:$2 sm:$0xff]
        %s2022 = scalar_lea.vmem %s1642, 1205 [#allocation2]
        %v2023 = vld [vmem:[%s2022] ss:$2 sm:$0xff]
        %s2024 = scalar_lea.vmem %s1642, 1221 [#allocation2]
        %v2025 = vld [vmem:[%s2024] ss:$2 sm:$0xff]
        %s2026 = scalar_lea.vmem %s1642, 6 [#allocation2]
        %v2027 = vld [vmem:[%s2026] ss:$2 sm:$0xff]
        %s2028 = scalar_lea.vmem %s1642, 22 [#allocation2]
        %v2029 = vld [vmem:[%s2028] ss:$2 sm:$0xff]
        %s2030 = scalar_lea.vmem %s1642, 86 [#allocation2]
        %v2031 = vld [vmem:[%s2030] ss:$2 sm:$0xff]
        %s2032 = scalar_lea.vmem %s1642, 102 [#allocation2]
        %v2033 = vld [vmem:[%s2032] ss:$2 sm:$0xff]
        %s2034 = scalar_lea.vmem %s1642, 166 [#allocation2]
        %v2035 = vld [vmem:[%s2034] ss:$2 sm:$0xff]
        %s2036 = scalar_lea.vmem %s1642, 182 [#allocation2]
        %v2037 = vld [vmem:[%s2036] ss:$2 sm:$0xff]
        %s2038 = scalar_lea.vmem %s1642, 246 [#allocation2]
        %v2039 = vld [vmem:[%s2038] ss:$2 sm:$0xff]
        %s2040 = scalar_lea.vmem %s1642, 262 [#allocation2]
        %v2041 = vld [vmem:[%s2040] ss:$2 sm:$0xff]
        %s2042 = scalar_lea.vmem %s1642, 326 [#allocation2]
        %v2043 = vld [vmem:[%s2042] ss:$2 sm:$0xff]
        %s2044 = scalar_lea.vmem %s1642, 342 [#allocation2]
        %v2045 = vld [vmem:[%s2044] ss:$2 sm:$0xff]
        %s2046 = scalar_lea.vmem %s1642, 406 [#allocation2]
        %v2047 = vld [vmem:[%s2046] ss:$2 sm:$0xff]
        %s2048 = scalar_lea.vmem %s1642, 422 [#allocation2]
        %v2049 = vld [vmem:[%s2048] ss:$2 sm:$0xff]
        %s2050 = scalar_lea.vmem %s1642, 486 [#allocation2]
        %v2051 = vld [vmem:[%s2050] ss:$2 sm:$0xff]
        %s2052 = scalar_lea.vmem %s1642, 502 [#allocation2]
        %v2053 = vld [vmem:[%s2052] ss:$2 sm:$0xff]
        %s2054 = scalar_lea.vmem %s1642, 566 [#allocation2]
        %v2055 = vld [vmem:[%s2054] ss:$2 sm:$0xff]
        %s2056 = scalar_lea.vmem %s1642, 582 [#allocation2]
        %v2057 = vld [vmem:[%s2056] ss:$2 sm:$0xff]
        %s2058 = scalar_lea.vmem %s1642, 646 [#allocation2]
        %v2059 = vld [vmem:[%s2058] ss:$2 sm:$0xff]
        %s2060 = scalar_lea.vmem %s1642, 662 [#allocation2]
        %v2061 = vld [vmem:[%s2060] ss:$2 sm:$0xff]
        %s2062 = scalar_lea.vmem %s1642, 726 [#allocation2]
        %v2063 = vld [vmem:[%s2062] ss:$2 sm:$0xff]
        %s2064 = scalar_lea.vmem %s1642, 742 [#allocation2]
        %v2065 = vld [vmem:[%s2064] ss:$2 sm:$0xff]
        %s2066 = scalar_lea.vmem %s1642, 806 [#allocation2]
        %v2067 = vld [vmem:[%s2066] ss:$2 sm:$0xff]
        %s2068 = scalar_lea.vmem %s1642, 822 [#allocation2]
        %v2069 = vld [vmem:[%s2068] ss:$2 sm:$0xff]
        %s2070 = scalar_lea.vmem %s1642, 886 [#allocation2]
        %v2071 = vld [vmem:[%s2070] ss:$2 sm:$0xff]
        %s2072 = scalar_lea.vmem %s1642, 902 [#allocation2]
        %v2073 = vld [vmem:[%s2072] ss:$2 sm:$0xff]
        %s2074 = scalar_lea.vmem %s1642, 966 [#allocation2]
        %v2075 = vld [vmem:[%s2074] ss:$2 sm:$0xff]
        %s2076 = scalar_lea.vmem %s1642, 982 [#allocation2]
        %v2077 = vld [vmem:[%s2076] ss:$2 sm:$0xff]
        %s2078 = scalar_lea.vmem %s1642, 1046 [#allocation2]
        %v2079 = vld [vmem:[%s2078] ss:$2 sm:$0xff]
        %s2080 = scalar_lea.vmem %s1642, 1062 [#allocation2]
        %v2081 = vld [vmem:[%s2080] ss:$2 sm:$0xff]
        %s2082 = scalar_lea.vmem %s1642, 1126 [#allocation2]
        %v2083 = vld [vmem:[%s2082] ss:$2 sm:$0xff]
        %s2084 = scalar_lea.vmem %s1642, 1142 [#allocation2]
        %v2085 = vld [vmem:[%s2084] ss:$2 sm:$0xff]
        %s2086 = scalar_lea.vmem %s1642, 1206 [#allocation2]
        %v2087 = vld [vmem:[%s2086] ss:$2 sm:$0xff]
        %s2088 = scalar_lea.vmem %s1642, 1222 [#allocation2]
        %v2089 = vld [vmem:[%s2088] ss:$2 sm:$0xff]
        %v2090 = vld [vmem:[%s618] ss:$2 sm:$0xff]
        %s2091 = scalar_lea.vmem %s618, 16 [#allocation2]
        %v2092 = vld [vmem:[%s2091] ss:$2 sm:$0xff]
        %s2093 = scalar_lea.vmem %s618, 80 [#allocation2]
        %v2094 = vld [vmem:[%s2093] ss:$2 sm:$0xff]
        %s2095 = scalar_lea.vmem %s618, 96 [#allocation2]
        %v2096 = vld [vmem:[%s2095] ss:$2 sm:$0xff]
        %s2097 = scalar_lea.vmem %s618, 160 [#allocation2]
        %v2098 = vld [vmem:[%s2097] ss:$2 sm:$0xff]
        %s2099 = scalar_lea.vmem %s618, 176 [#allocation2]
        %v2100 = vld [vmem:[%s2099] ss:$2 sm:$0xff]
        %s2101 = scalar_lea.vmem %s618, 240 [#allocation2]
        %v2102 = vld [vmem:[%s2101] ss:$2 sm:$0xff]
        %s2103 = scalar_lea.vmem %s618, 256 [#allocation2]
        %v2104 = vld [vmem:[%s2103] ss:$2 sm:$0xff]
        %s2105 = scalar_lea.vmem %s618, 320 [#allocation2]
        %v2106 = vld [vmem:[%s2105] ss:$2 sm:$0xff]
        %s2107 = scalar_lea.vmem %s618, 336 [#allocation2]
        %v2108 = vld [vmem:[%s2107] ss:$2 sm:$0xff]
        %s2109 = scalar_lea.vmem %s618, 400 [#allocation2]
        %v2110 = vld [vmem:[%s2109] ss:$2 sm:$0xff]
        %s2111 = scalar_lea.vmem %s618, 416 [#allocation2]
        %v2112 = vld [vmem:[%s2111] ss:$2 sm:$0xff]
        %s2113 = scalar_lea.vmem %s618, 480 [#allocation2]
        %v2114 = vld [vmem:[%s2113] ss:$2 sm:$0xff]
        %s2115 = scalar_lea.vmem %s618, 496 [#allocation2]
        %v2116 = vld [vmem:[%s2115] ss:$2 sm:$0xff]
        %s2117 = scalar_lea.vmem %s618, 560 [#allocation2]
        %v2118 = vld [vmem:[%s2117] ss:$2 sm:$0xff]
        %s2119 = scalar_lea.vmem %s618, 576 [#allocation2]
        %v2120 = vld [vmem:[%s2119] ss:$2 sm:$0xff]
        %s2121 = scalar_lea.vmem %s618, 640 [#allocation2]
        %v2122 = vld [vmem:[%s2121] ss:$2 sm:$0xff]
        %s2123 = scalar_lea.vmem %s618, 656 [#allocation2]
        %v2124 = vld [vmem:[%s2123] ss:$2 sm:$0xff]
        %s2125 = scalar_lea.vmem %s618, 720 [#allocation2]
        %v2126 = vld [vmem:[%s2125] ss:$2 sm:$0xff]
        %s2127 = scalar_lea.vmem %s618, 736 [#allocation2]
        %v2128 = vld [vmem:[%s2127] ss:$2 sm:$0xff]
        %s2129 = scalar_lea.vmem %s618, 800 [#allocation2]
        %v2130 = vld [vmem:[%s2129] ss:$2 sm:$0xff]
        %s2131 = scalar_lea.vmem %s618, 816 [#allocation2]
        %v2132 = vld [vmem:[%s2131] ss:$2 sm:$0xff]
        %s2133 = scalar_lea.vmem %s618, 880 [#allocation2]
        %v2134 = vld [vmem:[%s2133] ss:$2 sm:$0xff]
        %s2135 = scalar_lea.vmem %s618, 896 [#allocation2]
        %v2136 = vld [vmem:[%s2135] ss:$2 sm:$0xff]
        %s2137 = scalar_lea.vmem %s618, 960 [#allocation2]
        %v2138 = vld [vmem:[%s2137] ss:$2 sm:$0xff]
        %s2139 = scalar_lea.vmem %s618, 976 [#allocation2]
        %v2140 = vld [vmem:[%s2139] ss:$2 sm:$0xff]
        %s2141 = scalar_lea.vmem %s618, 1040 [#allocation2]
        %v2142 = vld [vmem:[%s2141] ss:$2 sm:$0xff]
        %s2143 = scalar_lea.vmem %s618, 1056 [#allocation2]
        %v2144 = vld [vmem:[%s2143] ss:$2 sm:$0xff]
        %s2145 = scalar_lea.vmem %s618, 1120 [#allocation2]
        %v2146 = vld [vmem:[%s2145] ss:$2 sm:$0xff]
        %s2147 = scalar_lea.vmem %s618, 1136 [#allocation2]
        %v2148 = vld [vmem:[%s2147] ss:$2 sm:$0xff]
        %s2149 = scalar_lea.vmem %s618, 1200 [#allocation2]
        %v2150 = vld [vmem:[%s2149] ss:$2 sm:$0xff]
        %s2151 = scalar_lea.vmem %s618, 1216 [#allocation2]
        %v2152 = vld [vmem:[%s2151] ss:$2 sm:$0xff]
        %s2153 = scalar_lea.vmem %s618, 1 [#allocation2]
        %v2154 = vld [vmem:[%s2153] ss:$2 sm:$0xff]
        %s2155 = scalar_lea.vmem %s618, 17 [#allocation2]
        %v2156 = vld [vmem:[%s2155] ss:$2 sm:$0xff]
        %s2157 = scalar_lea.vmem %s618, 81 [#allocation2]
        %v2158 = vld [vmem:[%s2157] ss:$2 sm:$0xff]
        %s2159 = scalar_lea.vmem %s618, 97 [#allocation2]
        %v2160 = vld [vmem:[%s2159] ss:$2 sm:$0xff]
        %s2161 = scalar_lea.vmem %s618, 161 [#allocation2]
        %v2162 = vld [vmem:[%s2161] ss:$2 sm:$0xff]
        %s2163 = scalar_lea.vmem %s618, 177 [#allocation2]
        %v2164 = vld [vmem:[%s2163] ss:$2 sm:$0xff]
        %s2165 = scalar_lea.vmem %s618, 241 [#allocation2]
        %v2166 = vld [vmem:[%s2165] ss:$2 sm:$0xff]
        %s2167 = scalar_lea.vmem %s618, 257 [#allocation2]
        %v2168 = vld [vmem:[%s2167] ss:$2 sm:$0xff]
        %s2169 = scalar_lea.vmem %s618, 321 [#allocation2]
        %v2170 = vld [vmem:[%s2169] ss:$2 sm:$0xff]
        %s2171 = scalar_lea.vmem %s618, 337 [#allocation2]
        %v2172 = vld [vmem:[%s2171] ss:$2 sm:$0xff]
        %s2173 = scalar_lea.vmem %s618, 401 [#allocation2]
        %v2174 = vld [vmem:[%s2173] ss:$2 sm:$0xff]
        %s2175 = scalar_lea.vmem %s618, 417 [#allocation2]
        %v2176 = vld [vmem:[%s2175] ss:$2 sm:$0xff]
        %s2177 = scalar_lea.vmem %s618, 481 [#allocation2]
        %v2178 = vld [vmem:[%s2177] ss:$2 sm:$0xff]
        %s2179 = scalar_lea.vmem %s618, 497 [#allocation2]
        %v2180 = vld [vmem:[%s2179] ss:$2 sm:$0xff]
        %s2181 = scalar_lea.vmem %s618, 561 [#allocation2]
        %v2182 = vld [vmem:[%s2181] ss:$2 sm:$0xff]
        %s2183 = scalar_lea.vmem %s618, 577 [#allocation2]
        %v2184 = vld [vmem:[%s2183] ss:$2 sm:$0xff]
        %s2185 = scalar_lea.vmem %s618, 641 [#allocation2]
        %v2186 = vld [vmem:[%s2185] ss:$2 sm:$0xff]
        %s2187 = scalar_lea.vmem %s618, 657 [#allocation2]
        %v2188 = vld [vmem:[%s2187] ss:$2 sm:$0xff]
        %s2189 = scalar_lea.vmem %s618, 721 [#allocation2]
        %v2190 = vld [vmem:[%s2189] ss:$2 sm:$0xff]
        %s2191 = scalar_lea.vmem %s618, 737 [#allocation2]
        %v2192 = vld [vmem:[%s2191] ss:$2 sm:$0xff]
        %s2193 = scalar_lea.vmem %s618, 801 [#allocation2]
        %v2194 = vld [vmem:[%s2193] ss:$2 sm:$0xff]
        %s2195 = scalar_lea.vmem %s618, 817 [#allocation2]
        %v2196 = vld [vmem:[%s2195] ss:$2 sm:$0xff]
        %s2197 = scalar_lea.vmem %s618, 881 [#allocation2]
        %v2198 = vld [vmem:[%s2197] ss:$2 sm:$0xff]
        %s2199 = scalar_lea.vmem %s618, 897 [#allocation2]
        %v2200 = vld [vmem:[%s2199] ss:$2 sm:$0xff]
        %s2201 = scalar_lea.vmem %s618, 961 [#allocation2]
        %v2202 = vld [vmem:[%s2201] ss:$2 sm:$0xff]
        %s2203 = scalar_lea.vmem %s618, 977 [#allocation2]
        %v2204 = vld [vmem:[%s2203] ss:$2 sm:$0xff]
        %s2205 = scalar_lea.vmem %s618, 1041 [#allocation2]
        %v2206 = vld [vmem:[%s2205] ss:$2 sm:$0xff]
        %s2207 = scalar_lea.vmem %s618, 1057 [#allocation2]
        %v2208 = vld [vmem:[%s2207] ss:$2 sm:$0xff]
        %s2209 = scalar_lea.vmem %s618, 1121 [#allocation2]
        %v2210 = vld [vmem:[%s2209] ss:$2 sm:$0xff]
        %s2211 = scalar_lea.vmem %s618, 1137 [#allocation2]
        %v2212 = vld [vmem:[%s2211] ss:$2 sm:$0xff]
        %s2213 = scalar_lea.vmem %s618, 1201 [#allocation2]
        %v2214 = vld [vmem:[%s2213] ss:$2 sm:$0xff]
        %s2215 = scalar_lea.vmem %s618, 1217 [#allocation2]
        %v2216 = vld [vmem:[%s2215] ss:$2 sm:$0xff]
        %s2217 = scalar_lea.vmem %s618, 2 [#allocation2]
        %v2218 = vld [vmem:[%s2217] ss:$2 sm:$0xff]
        %s2219 = scalar_lea.vmem %s618, 18 [#allocation2]
        %v2220 = vld [vmem:[%s2219] ss:$2 sm:$0xff]
        %s2221 = scalar_lea.vmem %s618, 82 [#allocation2]
        %v2222 = vld [vmem:[%s2221] ss:$2 sm:$0xff]
        %s2223 = scalar_lea.vmem %s618, 98 [#allocation2]
        %v2224 = vld [vmem:[%s2223] ss:$2 sm:$0xff]
        %s2225 = scalar_lea.vmem %s618, 162 [#allocation2]
        %v2226 = vld [vmem:[%s2225] ss:$2 sm:$0xff]
        %s2227 = scalar_lea.vmem %s618, 178 [#allocation2]
        %v2228 = vld [vmem:[%s2227] ss:$2 sm:$0xff]
        %s2229 = scalar_lea.vmem %s618, 242 [#allocation2]
        %v2230 = vld [vmem:[%s2229] ss:$2 sm:$0xff]
        %s2231 = scalar_lea.vmem %s618, 258 [#allocation2]
        %v2232 = vld [vmem:[%s2231] ss:$2 sm:$0xff]
        %s2233 = scalar_lea.vmem %s618, 322 [#allocation2]
        %v2234 = vld [vmem:[%s2233] ss:$2 sm:$0xff]
        %s2235 = scalar_lea.vmem %s618, 338 [#allocation2]
        %v2236 = vld [vmem:[%s2235] ss:$2 sm:$0xff]
        %s2237 = scalar_lea.vmem %s618, 402 [#allocation2]
        %v2238 = vld [vmem:[%s2237] ss:$2 sm:$0xff]
        %s2239 = scalar_lea.vmem %s618, 418 [#allocation2]
        %v2240 = vld [vmem:[%s2239] ss:$2 sm:$0xff]
        %s2241 = scalar_lea.vmem %s618, 482 [#allocation2]
        %v2242 = vld [vmem:[%s2241] ss:$2 sm:$0xff]
        %s2243 = scalar_lea.vmem %s618, 498 [#allocation2]
        %v2244 = vld [vmem:[%s2243] ss:$2 sm:$0xff]
        %s2245 = scalar_lea.vmem %s618, 562 [#allocation2]
        %v2246 = vld [vmem:[%s2245] ss:$2 sm:$0xff]
        %s2247 = scalar_lea.vmem %s618, 578 [#allocation2]
        %v2248 = vld [vmem:[%s2247] ss:$2 sm:$0xff]
        %s2249 = scalar_lea.vmem %s618, 642 [#allocation2]
        %v2250 = vld [vmem:[%s2249] ss:$2 sm:$0xff]
        %s2251 = scalar_lea.vmem %s618, 658 [#allocation2]
        %v2252 = vld [vmem:[%s2251] ss:$2 sm:$0xff]
        %s2253 = scalar_lea.vmem %s618, 722 [#allocation2]
        %v2254 = vld [vmem:[%s2253] ss:$2 sm:$0xff]
        %s2255 = scalar_lea.vmem %s618, 738 [#allocation2]
        %v2256 = vld [vmem:[%s2255] ss:$2 sm:$0xff]
        %s2257 = scalar_lea.vmem %s618, 802 [#allocation2]
        %v2258 = vld [vmem:[%s2257] ss:$2 sm:$0xff]
        %s2259 = scalar_lea.vmem %s618, 818 [#allocation2]
        %v2260 = vld [vmem:[%s2259] ss:$2 sm:$0xff]
        %s2261 = scalar_lea.vmem %s618, 882 [#allocation2]
        %v2262 = vld [vmem:[%s2261] ss:$2 sm:$0xff]
        %s2263 = scalar_lea.vmem %s618, 898 [#allocation2]
        %v2264 = vld [vmem:[%s2263] ss:$2 sm:$0xff]
        %s2265 = scalar_lea.vmem %s618, 962 [#allocation2]
        %v2266 = vld [vmem:[%s2265] ss:$2 sm:$0xff]
        %s2267 = scalar_lea.vmem %s618, 978 [#allocation2]
        %v2268 = vld [vmem:[%s2267] ss:$2 sm:$0xff]
        %s2269 = scalar_lea.vmem %s618, 1042 [#allocation2]
        %v2270 = vld [vmem:[%s2269] ss:$2 sm:$0xff]
        %s2271 = scalar_lea.vmem %s618, 1058 [#allocation2]
        %v2272 = vld [vmem:[%s2271] ss:$2 sm:$0xff]
        %s2273 = scalar_lea.vmem %s618, 1122 [#allocation2]
        %v2274 = vld [vmem:[%s2273] ss:$2 sm:$0xff]
        %s2275 = scalar_lea.vmem %s618, 1138 [#allocation2]
        %v2276 = vld [vmem:[%s2275] ss:$2 sm:$0xff]
        %s2277 = scalar_lea.vmem %s618, 1202 [#allocation2]
        %v2278 = vld [vmem:[%s2277] ss:$2 sm:$0xff]
        %s2279 = scalar_lea.vmem %s618, 1218 [#allocation2]
        %v2280 = vld [vmem:[%s2279] ss:$2 sm:$0xff]
        %s2281 = scalar_lea.vmem %s618, 3 [#allocation2]
        %v2282 = vld [vmem:[%s2281] ss:$2 sm:$0xff]
        %s2283 = scalar_lea.vmem %s618, 19 [#allocation2]
        %v2284 = vld [vmem:[%s2283] ss:$2 sm:$0xff]
        %s2285 = scalar_lea.vmem %s618, 83 [#allocation2]
        %v2286 = vld [vmem:[%s2285] ss:$2 sm:$0xff]
        %s2287 = scalar_lea.vmem %s618, 99 [#allocation2]
        %v2288 = vld [vmem:[%s2287] ss:$2 sm:$0xff]
        %s2289 = scalar_lea.vmem %s618, 163 [#allocation2]
        %v2290 = vld [vmem:[%s2289] ss:$2 sm:$0xff]
        %s2291 = scalar_lea.vmem %s618, 179 [#allocation2]
        %v2292 = vld [vmem:[%s2291] ss:$2 sm:$0xff]
        %s2293 = scalar_lea.vmem %s618, 243 [#allocation2]
        %v2294 = vld [vmem:[%s2293] ss:$2 sm:$0xff]
        %s2295 = scalar_lea.vmem %s618, 259 [#allocation2]
        %v2296 = vld [vmem:[%s2295] ss:$2 sm:$0xff]
        %s2297 = scalar_lea.vmem %s618, 323 [#allocation2]
        %v2298 = vld [vmem:[%s2297] ss:$2 sm:$0xff]
        %s2299 = scalar_lea.vmem %s618, 339 [#allocation2]
        %v2300 = vld [vmem:[%s2299] ss:$2 sm:$0xff]
        %s2301 = scalar_lea.vmem %s618, 403 [#allocation2]
        %v2302 = vld [vmem:[%s2301] ss:$2 sm:$0xff]
        %s2303 = scalar_lea.vmem %s618, 419 [#allocation2]
        %v2304 = vld [vmem:[%s2303] ss:$2 sm:$0xff]
        %s2305 = scalar_lea.vmem %s618, 483 [#allocation2]
        %v2306 = vld [vmem:[%s2305] ss:$2 sm:$0xff]
        %s2307 = scalar_lea.vmem %s618, 499 [#allocation2]
        %v2308 = vld [vmem:[%s2307] ss:$2 sm:$0xff]
        %s2309 = scalar_lea.vmem %s618, 563 [#allocation2]
        %v2310 = vld [vmem:[%s2309] ss:$2 sm:$0xff]
        %s2311 = scalar_lea.vmem %s618, 579 [#allocation2]
        %v2312 = vld [vmem:[%s2311] ss:$2 sm:$0xff]
        %s2313 = scalar_lea.vmem %s618, 643 [#allocation2]
        %v2314 = vld [vmem:[%s2313] ss:$2 sm:$0xff]
        %s2315 = scalar_lea.vmem %s618, 659 [#allocation2]
        %v2316 = vld [vmem:[%s2315] ss:$2 sm:$0xff]
        %s2317 = scalar_lea.vmem %s618, 723 [#allocation2]
        %v2318 = vld [vmem:[%s2317] ss:$2 sm:$0xff]
        %s2319 = scalar_lea.vmem %s618, 739 [#allocation2]
        %v2320 = vld [vmem:[%s2319] ss:$2 sm:$0xff]
        %s2321 = scalar_lea.vmem %s618, 803 [#allocation2]
        %v2322 = vld [vmem:[%s2321] ss:$2 sm:$0xff]
        %s2323 = scalar_lea.vmem %s618, 819 [#allocation2]
        %v2324 = vld [vmem:[%s2323] ss:$2 sm:$0xff]
        %s2325 = scalar_lea.vmem %s618, 883 [#allocation2]
        %v2326 = vld [vmem:[%s2325] ss:$2 sm:$0xff]
        %s2327 = scalar_lea.vmem %s618, 899 [#allocation2]
        %v2328 = vld [vmem:[%s2327] ss:$2 sm:$0xff]
        %s2329 = scalar_lea.vmem %s618, 963 [#allocation2]
        %v2330 = vld [vmem:[%s2329] ss:$2 sm:$0xff]
        %s2331 = scalar_lea.vmem %s618, 979 [#allocation2]
        %v2332 = vld [vmem:[%s2331] ss:$2 sm:$0xff]
        %s2333 = scalar_lea.vmem %s618, 1043 [#allocation2]
        %v2334 = vld [vmem:[%s2333] ss:$2 sm:$0xff]
        %s2335 = scalar_lea.vmem %s618, 1059 [#allocation2]
        %v2336 = vld [vmem:[%s2335] ss:$2 sm:$0xff]
        %s2337 = scalar_lea.vmem %s618, 1123 [#allocation2]
        %v2338 = vld [vmem:[%s2337] ss:$2 sm:$0xff]
        %s2339 = scalar_lea.vmem %s618, 1139 [#allocation2]
        %v2340 = vld [vmem:[%s2339] ss:$2 sm:$0xff]
        %s2341 = scalar_lea.vmem %s618, 1203 [#allocation2]
        %v2342 = vld [vmem:[%s2341] ss:$2 sm:$0xff]
        %s2343 = scalar_lea.vmem %s618, 1219 [#allocation2]
        %v2344 = vld [vmem:[%s2343] ss:$2 sm:$0xff]
        %s2345 = scalar_lea.vmem %s618, 4 [#allocation2]
        %v2346 = vld [vmem:[%s2345] ss:$2 sm:$0xff]
        %s2347 = scalar_lea.vmem %s618, 20 [#allocation2]
        %v2348 = vld [vmem:[%s2347] ss:$2 sm:$0xff]
        %s2349 = scalar_lea.vmem %s618, 84 [#allocation2]
        %v2350 = vld [vmem:[%s2349] ss:$2 sm:$0xff]
        %s2351 = scalar_lea.vmem %s618, 100 [#allocation2]
        %v2352 = vld [vmem:[%s2351] ss:$2 sm:$0xff]
        %s2353 = scalar_lea.vmem %s618, 164 [#allocation2]
        %v2354 = vld [vmem:[%s2353] ss:$2 sm:$0xff]
        %s2355 = scalar_lea.vmem %s618, 180 [#allocation2]
        %v2356 = vld [vmem:[%s2355] ss:$2 sm:$0xff]
        %s2357 = scalar_lea.vmem %s618, 244 [#allocation2]
        %v2358 = vld [vmem:[%s2357] ss:$2 sm:$0xff]
        %s2359 = scalar_lea.vmem %s618, 260 [#allocation2]
        %v2360 = vld [vmem:[%s2359] ss:$2 sm:$0xff]
        %s2361 = scalar_lea.vmem %s618, 324 [#allocation2]
        %v2362 = vld [vmem:[%s2361] ss:$2 sm:$0xff]
        %s2363 = scalar_lea.vmem %s618, 340 [#allocation2]
        %v2364 = vld [vmem:[%s2363] ss:$2 sm:$0xff]
        %s2365 = scalar_lea.vmem %s618, 404 [#allocation2]
        %v2366 = vld [vmem:[%s2365] ss:$2 sm:$0xff]
        %s2367 = scalar_lea.vmem %s618, 420 [#allocation2]
        %v2368 = vld [vmem:[%s2367] ss:$2 sm:$0xff]
        %s2369 = scalar_lea.vmem %s618, 484 [#allocation2]
        %v2370 = vld [vmem:[%s2369] ss:$2 sm:$0xff]
        %s2371 = scalar_lea.vmem %s618, 500 [#allocation2]
        %v2372 = vld [vmem:[%s2371] ss:$2 sm:$0xff]
        %s2373 = scalar_lea.vmem %s618, 564 [#allocation2]
        %v2374 = vld [vmem:[%s2373] ss:$2 sm:$0xff]
        %s2375 = scalar_lea.vmem %s618, 580 [#allocation2]
        %v2376 = vld [vmem:[%s2375] ss:$2 sm:$0xff]
        %s2377 = scalar_lea.vmem %s618, 644 [#allocation2]
        %v2378 = vld [vmem:[%s2377] ss:$2 sm:$0xff]
        %s2379 = scalar_lea.vmem %s618, 660 [#allocation2]
        %v2380 = vld [vmem:[%s2379] ss:$2 sm:$0xff]
        %s2381 = scalar_lea.vmem %s618, 724 [#allocation2]
        %v2382 = vld [vmem:[%s2381] ss:$2 sm:$0xff]
        %s2383 = scalar_lea.vmem %s618, 740 [#allocation2]
        %v2384 = vld [vmem:[%s2383] ss:$2 sm:$0xff]
        %s2385 = scalar_lea.vmem %s618, 804 [#allocation2]
        %v2386 = vld [vmem:[%s2385] ss:$2 sm:$0xff]
        %s2387 = scalar_lea.vmem %s618, 820 [#allocation2]
        %v2388 = vld [vmem:[%s2387] ss:$2 sm:$0xff]
        %s2389 = scalar_lea.vmem %s618, 884 [#allocation2]
        %v2390 = vld [vmem:[%s2389] ss:$2 sm:$0xff]
        %s2391 = scalar_lea.vmem %s618, 900 [#allocation2]
        %v2392 = vld [vmem:[%s2391] ss:$2 sm:$0xff]
        %s2393 = scalar_lea.vmem %s618, 964 [#allocation2]
        %v2394 = vld [vmem:[%s2393] ss:$2 sm:$0xff]
        %s2395 = scalar_lea.vmem %s618, 980 [#allocation2]
        %v2396 = vld [vmem:[%s2395] ss:$2 sm:$0xff]
        %s2397 = scalar_lea.vmem %s618, 1044 [#allocation2]
        %v2398 = vld [vmem:[%s2397] ss:$2 sm:$0xff]
        %s2399 = scalar_lea.vmem %s618, 1060 [#allocation2]
        %v2400 = vld [vmem:[%s2399] ss:$2 sm:$0xff]
        %s2401 = scalar_lea.vmem %s618, 1124 [#allocation2]
        %v2402 = vld [vmem:[%s2401] ss:$2 sm:$0xff]
        %s2403 = scalar_lea.vmem %s618, 1140 [#allocation2]
        %v2404 = vld [vmem:[%s2403] ss:$2 sm:$0xff]
        %s2405 = scalar_lea.vmem %s618, 1204 [#allocation2]
        %v2406 = vld [vmem:[%s2405] ss:$2 sm:$0xff]
        %s2407 = scalar_lea.vmem %s618, 1220 [#allocation2]
        %v2408 = vld [vmem:[%s2407] ss:$2 sm:$0xff]
        %s2409 = scalar_lea.vmem %s618, 5 [#allocation2]
        %v2410 = vld [vmem:[%s2409] ss:$2 sm:$0xff]
        %s2411 = scalar_lea.vmem %s618, 21 [#allocation2]
        %v2412 = vld [vmem:[%s2411] ss:$2 sm:$0xff]
        %s2413 = scalar_lea.vmem %s618, 85 [#allocation2]
        %v2414 = vld [vmem:[%s2413] ss:$2 sm:$0xff]
        %s2415 = scalar_lea.vmem %s618, 101 [#allocation2]
        %v2416 = vld [vmem:[%s2415] ss:$2 sm:$0xff]
        %s2417 = scalar_lea.vmem %s618, 165 [#allocation2]
        %v2418 = vld [vmem:[%s2417] ss:$2 sm:$0xff]
        %s2419 = scalar_lea.vmem %s618, 181 [#allocation2]
        %v2420 = vld [vmem:[%s2419] ss:$2 sm:$0xff]
        %s2421 = scalar_lea.vmem %s618, 245 [#allocation2]
        %v2422 = vld [vmem:[%s2421] ss:$2 sm:$0xff]
        %s2423 = scalar_lea.vmem %s618, 261 [#allocation2]
        %v2424 = vld [vmem:[%s2423] ss:$2 sm:$0xff]
        %s2425 = scalar_lea.vmem %s618, 325 [#allocation2]
        %v2426 = vld [vmem:[%s2425] ss:$2 sm:$0xff]
        %s2427 = scalar_lea.vmem %s618, 341 [#allocation2]
        %v2428 = vld [vmem:[%s2427] ss:$2 sm:$0xff]
        %s2429 = scalar_lea.vmem %s618, 405 [#allocation2]
        %v2430 = vld [vmem:[%s2429] ss:$2 sm:$0xff]
        %s2431 = scalar_lea.vmem %s618, 421 [#allocation2]
        %v2432 = vld [vmem:[%s2431] ss:$2 sm:$0xff]
        %s2433 = scalar_lea.vmem %s618, 485 [#allocation2]
        %v2434 = vld [vmem:[%s2433] ss:$2 sm:$0xff]
        %s2435 = scalar_lea.vmem %s618, 501 [#allocation2]
        %v2436 = vld [vmem:[%s2435] ss:$2 sm:$0xff]
        %s2437 = scalar_lea.vmem %s618, 565 [#allocation2]
        %v2438 = vld [vmem:[%s2437] ss:$2 sm:$0xff]
        %s2439 = scalar_lea.vmem %s618, 581 [#allocation2]
        %v2440 = vld [vmem:[%s2439] ss:$2 sm:$0xff]
        %s2441 = scalar_lea.vmem %s618, 645 [#allocation2]
        %v2442 = vld [vmem:[%s2441] ss:$2 sm:$0xff]
        %s2443 = scalar_lea.vmem %s618, 661 [#allocation2]
        %v2444 = vld [vmem:[%s2443] ss:$2 sm:$0xff]
        %s2445 = scalar_lea.vmem %s618, 725 [#allocation2]
        %v2446 = vld [vmem:[%s2445] ss:$2 sm:$0xff]
        %s2447 = scalar_lea.vmem %s618, 741 [#allocation2]
        %v2448 = vld [vmem:[%s2447] ss:$2 sm:$0xff]
        %s2449 = scalar_lea.vmem %s618, 805 [#allocation2]
        %v2450 = vld [vmem:[%s2449] ss:$2 sm:$0xff]
        %s2451 = scalar_lea.vmem %s618, 821 [#allocation2]
        %v2452 = vld [vmem:[%s2451] ss:$2 sm:$0xff]
        %s2453 = scalar_lea.vmem %s618, 885 [#allocation2]
        %v2454 = vld [vmem:[%s2453] ss:$2 sm:$0xff]
        %s2455 = scalar_lea.vmem %s618, 901 [#allocation2]
        %v2456 = vld [vmem:[%s2455] ss:$2 sm:$0xff]
        %s2457 = scalar_lea.vmem %s618, 965 [#allocation2]
        %v2458 = vld [vmem:[%s2457] ss:$2 sm:$0xff]
        %s2459 = scalar_lea.vmem %s618, 981 [#allocation2]
        %v2460 = vld [vmem:[%s2459] ss:$2 sm:$0xff]
        %s2461 = scalar_lea.vmem %s618, 1045 [#allocation2]
        %v2462 = vld [vmem:[%s2461] ss:$2 sm:$0xff]
        %s2463 = scalar_lea.vmem %s618, 1061 [#allocation2]
        %v2464 = vld [vmem:[%s2463] ss:$2 sm:$0xff]
        %s2465 = scalar_lea.vmem %s618, 1125 [#allocation2]
        %v2466 = vld [vmem:[%s2465] ss:$2 sm:$0xff]
        %s2467 = scalar_lea.vmem %s618, 1141 [#allocation2]
        %v2468 = vld [vmem:[%s2467] ss:$2 sm:$0xff]
        %s2469 = scalar_lea.vmem %s618, 1205 [#allocation2]
        %v2470 = vld [vmem:[%s2469] ss:$2 sm:$0xff]
        %s2471 = scalar_lea.vmem %s618, 1221 [#allocation2]
        %v2472 = vld [vmem:[%s2471] ss:$2 sm:$0xff]
        %s2473 = scalar_lea.vmem %s618, 6 [#allocation2]
        %v2474 = vld [vmem:[%s2473] ss:$2 sm:$0xff]
        %s2475 = scalar_lea.vmem %s618, 22 [#allocation2]
        %v2476 = vld [vmem:[%s2475] ss:$2 sm:$0xff]
        %s2477 = scalar_lea.vmem %s618, 86 [#allocation2]
        %v2478 = vld [vmem:[%s2477] ss:$2 sm:$0xff]
        %s2479 = scalar_lea.vmem %s618, 102 [#allocation2]
        %v2480 = vld [vmem:[%s2479] ss:$2 sm:$0xff]
        %s2481 = scalar_lea.vmem %s618, 166 [#allocation2]
        %v2482 = vld [vmem:[%s2481] ss:$2 sm:$0xff]
        %s2483 = scalar_lea.vmem %s618, 182 [#allocation2]
        %v2484 = vld [vmem:[%s2483] ss:$2 sm:$0xff]
        %s2485 = scalar_lea.vmem %s618, 246 [#allocation2]
        %v2486 = vld [vmem:[%s2485] ss:$2 sm:$0xff]
        %s2487 = scalar_lea.vmem %s618, 262 [#allocation2]
        %v2488 = vld [vmem:[%s2487] ss:$2 sm:$0xff]
        %s2489 = scalar_lea.vmem %s618, 326 [#allocation2]
        %v2490 = vld [vmem:[%s2489] ss:$2 sm:$0xff]
        %s2491 = scalar_lea.vmem %s618, 342 [#allocation2]
        %v2492 = vld [vmem:[%s2491] ss:$2 sm:$0xff]
        %s2493 = scalar_lea.vmem %s618, 406 [#allocation2]
        %v2494 = vld [vmem:[%s2493] ss:$2 sm:$0xff]
        %s2495 = scalar_lea.vmem %s618, 422 [#allocation2]
        %v2496 = vld [vmem:[%s2495] ss:$2 sm:$0xff]
        %s2497 = scalar_lea.vmem %s618, 486 [#allocation2]
        %v2498 = vld [vmem:[%s2497] ss:$2 sm:$0xff]
        %s2499 = scalar_lea.vmem %s618, 502 [#allocation2]
        %v2500 = vld [vmem:[%s2499] ss:$2 sm:$0xff]
        %s2501 = scalar_lea.vmem %s618, 566 [#allocation2]
        %v2502 = vld [vmem:[%s2501] ss:$2 sm:$0xff]
        %s2503 = scalar_lea.vmem %s618, 582 [#allocation2]
        %v2504 = vld [vmem:[%s2503] ss:$2 sm:$0xff]
        %s2505 = scalar_lea.vmem %s618, 646 [#allocation2]
        %v2506 = vld [vmem:[%s2505] ss:$2 sm:$0xff]
        %s2507 = scalar_lea.vmem %s618, 662 [#allocation2]
        %v2508 = vld [vmem:[%s2507] ss:$2 sm:$0xff]
        %s2509 = scalar_lea.vmem %s618, 726 [#allocation2]
        %v2510 = vld [vmem:[%s2509] ss:$2 sm:$0xff]
        %s2511 = scalar_lea.vmem %s618, 742 [#allocation2]
        %v2512 = vld [vmem:[%s2511] ss:$2 sm:$0xff]
        %s2513 = scalar_lea.vmem %s618, 806 [#allocation2]
        %v2514 = vld [vmem:[%s2513] ss:$2 sm:$0xff]
        %s2515 = scalar_lea.vmem %s618, 822 [#allocation2]
        %v2516 = vld [vmem:[%s2515] ss:$2 sm:$0xff]
        %s2517 = scalar_lea.vmem %s618, 886 [#allocation2]
        %v2518 = vld [vmem:[%s2517] ss:$2 sm:$0xff]
        %s2519 = scalar_lea.vmem %s618, 902 [#allocation2]
        %v2520 = vld [vmem:[%s2519] ss:$2 sm:$0xff]
        %s2521 = scalar_lea.vmem %s618, 966 [#allocation2]
        %v2522 = vld [vmem:[%s2521] ss:$2 sm:$0xff]
        %s2523 = scalar_lea.vmem %s618, 982 [#allocation2]
        %v2524 = vld [vmem:[%s2523] ss:$2 sm:$0xff]
        %s2525 = scalar_lea.vmem %s618, 1046 [#allocation2]
        %v2526 = vld [vmem:[%s2525] ss:$2 sm:$0xff]
        %s2527 = scalar_lea.vmem %s618, 1062 [#allocation2]
        %v2528 = vld [vmem:[%s2527] ss:$2 sm:$0xff]
        %s2529 = scalar_lea.vmem %s618, 1126 [#allocation2]
        %v2530 = vld [vmem:[%s2529] ss:$2 sm:$0xff]
        %s2531 = scalar_lea.vmem %s618, 1142 [#allocation2]
        %v2532 = vld [vmem:[%s2531] ss:$2 sm:$0xff]
        %s2533 = scalar_lea.vmem %s618, 1206 [#allocation2]
        %v2534 = vld [vmem:[%s2533] ss:$2 sm:$0xff]
        %s2535 = scalar_lea.vmem %s618, 1222 [#allocation2]
        %v2536 = vld [vmem:[%s2535] ss:$2 sm:$0xff]
        %s2537 = scalar_lea.vmem [#allocation2], 160
        %v2538 = vld [vmem:[%s2537] ss:$2 sm:$0xff]
        %s2539 = scalar_lea.vmem %s2537, 16 [#allocation2]
        %v2540 = vld [vmem:[%s2539] ss:$2 sm:$0xff]
        %s2541 = scalar_lea.vmem %s2537, 80 [#allocation2]
        %v2542 = vld [vmem:[%s2541] ss:$2 sm:$0xff]
        %s2543 = scalar_lea.vmem %s2537, 96 [#allocation2]
        %v2544 = vld [vmem:[%s2543] ss:$2 sm:$0xff]
        %s2545 = scalar_lea.vmem %s2537, 160 [#allocation2]
        %v2546 = vld [vmem:[%s2545] ss:$2 sm:$0xff]
        %s2547 = scalar_lea.vmem %s2537, 176 [#allocation2]
        %v2548 = vld [vmem:[%s2547] ss:$2 sm:$0xff]
        %s2549 = scalar_lea.vmem %s2537, 240 [#allocation2]
        %v2550 = vld [vmem:[%s2549] ss:$2 sm:$0xff]
        %s2551 = scalar_lea.vmem %s2537, 256 [#allocation2]
        %v2552 = vld [vmem:[%s2551] ss:$2 sm:$0xff]
        %s2553 = scalar_lea.vmem %s2537, 320 [#allocation2]
        %v2554 = vld [vmem:[%s2553] ss:$2 sm:$0xff]
        %s2555 = scalar_lea.vmem %s2537, 336 [#allocation2]
        %v2556 = vld [vmem:[%s2555] ss:$2 sm:$0xff]
        %s2557 = scalar_lea.vmem %s2537, 400 [#allocation2]
        %v2558 = vld [vmem:[%s2557] ss:$2 sm:$0xff]
        %s2559 = scalar_lea.vmem %s2537, 416 [#allocation2]
        %v2560 = vld [vmem:[%s2559] ss:$2 sm:$0xff]
        %s2561 = scalar_lea.vmem %s2537, 480 [#allocation2]
        %v2562 = vld [vmem:[%s2561] ss:$2 sm:$0xff]
        %s2563 = scalar_lea.vmem %s2537, 496 [#allocation2]
        %v2564 = vld [vmem:[%s2563] ss:$2 sm:$0xff]
        %s2565 = scalar_lea.vmem %s2537, 560 [#allocation2]
        %v2566 = vld [vmem:[%s2565] ss:$2 sm:$0xff]
        %s2567 = scalar_lea.vmem %s2537, 576 [#allocation2]
        %v2568 = vld [vmem:[%s2567] ss:$2 sm:$0xff]
        %s2569 = scalar_lea.vmem %s2537, 640 [#allocation2]
        %v2570 = vld [vmem:[%s2569] ss:$2 sm:$0xff]
        %s2571 = scalar_lea.vmem %s2537, 656 [#allocation2]
        %v2572 = vld [vmem:[%s2571] ss:$2 sm:$0xff]
        %s2573 = scalar_lea.vmem %s2537, 720 [#allocation2]
        %v2574 = vld [vmem:[%s2573] ss:$2 sm:$0xff]
        %s2575 = scalar_lea.vmem %s2537, 736 [#allocation2]
        %v2576 = vld [vmem:[%s2575] ss:$2 sm:$0xff]
        %s2577 = scalar_lea.vmem %s2537, 800 [#allocation2]
        %v2578 = vld [vmem:[%s2577] ss:$2 sm:$0xff]
        %s2579 = scalar_lea.vmem %s2537, 816 [#allocation2]
        %v2580 = vld [vmem:[%s2579] ss:$2 sm:$0xff]
        %s2581 = scalar_lea.vmem %s2537, 880 [#allocation2]
        %v2582 = vld [vmem:[%s2581] ss:$2 sm:$0xff]
        %s2583 = scalar_lea.vmem %s2537, 896 [#allocation2]
        %v2584 = vld [vmem:[%s2583] ss:$2 sm:$0xff]
        %s2585 = scalar_lea.vmem %s2537, 960 [#allocation2]
        %v2586 = vld [vmem:[%s2585] ss:$2 sm:$0xff]
        %s2587 = scalar_lea.vmem %s2537, 976 [#allocation2]
        %v2588 = vld [vmem:[%s2587] ss:$2 sm:$0xff]
        %s2589 = scalar_lea.vmem %s2537, 1040 [#allocation2]
        %v2590 = vld [vmem:[%s2589] ss:$2 sm:$0xff]
        %s2591 = scalar_lea.vmem %s2537, 1056 [#allocation2]
        %v2592 = vld [vmem:[%s2591] ss:$2 sm:$0xff]
        %s2593 = scalar_lea.vmem %s2537, 1120 [#allocation2]
        %v2594 = vld [vmem:[%s2593] ss:$2 sm:$0xff]
        %s2595 = scalar_lea.vmem %s2537, 1136 [#allocation2]
        %v2596 = vld [vmem:[%s2595] ss:$2 sm:$0xff]
        %s2597 = scalar_lea.vmem %s2537, 1200 [#allocation2]
        %v2598 = vld [vmem:[%s2597] ss:$2 sm:$0xff]
        %s2599 = scalar_lea.vmem %s2537, 1216 [#allocation2]
        %v2600 = vld [vmem:[%s2599] ss:$2 sm:$0xff]
        %s2601 = scalar_lea.vmem %s2537, 1 [#allocation2]
        %v2602 = vld [vmem:[%s2601] ss:$2 sm:$0xff]
        %s2603 = scalar_lea.vmem %s2537, 17 [#allocation2]
        %v2604 = vld [vmem:[%s2603] ss:$2 sm:$0xff]
        %s2605 = scalar_lea.vmem %s2537, 81 [#allocation2]
        %v2606 = vld [vmem:[%s2605] ss:$2 sm:$0xff]
        %s2607 = scalar_lea.vmem %s2537, 97 [#allocation2]
        %v2608 = vld [vmem:[%s2607] ss:$2 sm:$0xff]
        %s2609 = scalar_lea.vmem %s2537, 161 [#allocation2]
        %v2610 = vld [vmem:[%s2609] ss:$2 sm:$0xff]
        %s2611 = scalar_lea.vmem %s2537, 177 [#allocation2]
        %v2612 = vld [vmem:[%s2611] ss:$2 sm:$0xff]
        %s2613 = scalar_lea.vmem %s2537, 241 [#allocation2]
        %v2614 = vld [vmem:[%s2613] ss:$2 sm:$0xff]
        %s2615 = scalar_lea.vmem %s2537, 257 [#allocation2]
        %v2616 = vld [vmem:[%s2615] ss:$2 sm:$0xff]
        %s2617 = scalar_lea.vmem %s2537, 321 [#allocation2]
        %v2618 = vld [vmem:[%s2617] ss:$2 sm:$0xff]
        %s2619 = scalar_lea.vmem %s2537, 337 [#allocation2]
        %v2620 = vld [vmem:[%s2619] ss:$2 sm:$0xff]
        %s2621 = scalar_lea.vmem %s2537, 401 [#allocation2]
        %v2622 = vld [vmem:[%s2621] ss:$2 sm:$0xff]
        %s2623 = scalar_lea.vmem %s2537, 417 [#allocation2]
        %v2624 = vld [vmem:[%s2623] ss:$2 sm:$0xff]
        %s2625 = scalar_lea.vmem %s2537, 481 [#allocation2]
        %v2626 = vld [vmem:[%s2625] ss:$2 sm:$0xff]
        %s2627 = scalar_lea.vmem %s2537, 497 [#allocation2]
        %v2628 = vld [vmem:[%s2627] ss:$2 sm:$0xff]
        %s2629 = scalar_lea.vmem %s2537, 561 [#allocation2]
        %v2630 = vld [vmem:[%s2629] ss:$2 sm:$0xff]
        %s2631 = scalar_lea.vmem %s2537, 577 [#allocation2]
        %v2632 = vld [vmem:[%s2631] ss:$2 sm:$0xff]
        %s2633 = scalar_lea.vmem %s2537, 641 [#allocation2]
        %v2634 = vld [vmem:[%s2633] ss:$2 sm:$0xff]
        %s2635 = scalar_lea.vmem %s2537, 657 [#allocation2]
        %v2636 = vld [vmem:[%s2635] ss:$2 sm:$0xff]
        %s2637 = scalar_lea.vmem %s2537, 721 [#allocation2]
        %v2638 = vld [vmem:[%s2637] ss:$2 sm:$0xff]
        %s2639 = scalar_lea.vmem %s2537, 737 [#allocation2]
        %v2640 = vld [vmem:[%s2639] ss:$2 sm:$0xff]
        %s2641 = scalar_lea.vmem %s2537, 801 [#allocation2]
        %v2642 = vld [vmem:[%s2641] ss:$2 sm:$0xff]
        %s2643 = scalar_lea.vmem %s2537, 817 [#allocation2]
        %v2644 = vld [vmem:[%s2643] ss:$2 sm:$0xff]
        %s2645 = scalar_lea.vmem %s2537, 881 [#allocation2]
        %v2646 = vld [vmem:[%s2645] ss:$2 sm:$0xff]
        %s2647 = scalar_lea.vmem %s2537, 897 [#allocation2]
        %v2648 = vld [vmem:[%s2647] ss:$2 sm:$0xff]
        %s2649 = scalar_lea.vmem %s2537, 961 [#allocation2]
        %v2650 = vld [vmem:[%s2649] ss:$2 sm:$0xff]
        %s2651 = scalar_lea.vmem %s2537, 977 [#allocation2]
        %v2652 = vld [vmem:[%s2651] ss:$2 sm:$0xff]
        %s2653 = scalar_lea.vmem %s2537, 1041 [#allocation2]
        %v2654 = vld [vmem:[%s2653] ss:$2 sm:$0xff]
        %s2655 = scalar_lea.vmem %s2537, 1057 [#allocation2]
        %v2656 = vld [vmem:[%s2655] ss:$2 sm:$0xff]
        %s2657 = scalar_lea.vmem %s2537, 1121 [#allocation2]
        %v2658 = vld [vmem:[%s2657] ss:$2 sm:$0xff]
        %s2659 = scalar_lea.vmem %s2537, 1137 [#allocation2]
        %v2660 = vld [vmem:[%s2659] ss:$2 sm:$0xff]
        %s2661 = scalar_lea.vmem %s2537, 1201 [#allocation2]
        %v2662 = vld [vmem:[%s2661] ss:$2 sm:$0xff]
        %s2663 = scalar_lea.vmem %s2537, 1217 [#allocation2]
        %v2664 = vld [vmem:[%s2663] ss:$2 sm:$0xff]
        %s2665 = scalar_lea.vmem %s2537, 2 [#allocation2]
        %v2666 = vld [vmem:[%s2665] ss:$2 sm:$0xff]
        %s2667 = scalar_lea.vmem %s2537, 18 [#allocation2]
        %v2668 = vld [vmem:[%s2667] ss:$2 sm:$0xff]
        %s2669 = scalar_lea.vmem %s2537, 82 [#allocation2]
        %v2670 = vld [vmem:[%s2669] ss:$2 sm:$0xff]
        %s2671 = scalar_lea.vmem %s2537, 98 [#allocation2]
        %v2672 = vld [vmem:[%s2671] ss:$2 sm:$0xff]
        %s2673 = scalar_lea.vmem %s2537, 162 [#allocation2]
        %v2674 = vld [vmem:[%s2673] ss:$2 sm:$0xff]
        %s2675 = scalar_lea.vmem %s2537, 178 [#allocation2]
        %v2676 = vld [vmem:[%s2675] ss:$2 sm:$0xff]
        %s2677 = scalar_lea.vmem %s2537, 242 [#allocation2]
        %v2678 = vld [vmem:[%s2677] ss:$2 sm:$0xff]
        %s2679 = scalar_lea.vmem %s2537, 258 [#allocation2]
        %v2680 = vld [vmem:[%s2679] ss:$2 sm:$0xff]
        %s2681 = scalar_lea.vmem %s2537, 322 [#allocation2]
        %v2682 = vld [vmem:[%s2681] ss:$2 sm:$0xff]
        %s2683 = scalar_lea.vmem %s2537, 338 [#allocation2]
        %v2684 = vld [vmem:[%s2683] ss:$2 sm:$0xff]
        %s2685 = scalar_lea.vmem %s2537, 402 [#allocation2]
        %v2686 = vld [vmem:[%s2685] ss:$2 sm:$0xff]
        %s2687 = scalar_lea.vmem %s2537, 418 [#allocation2]
        %v2688 = vld [vmem:[%s2687] ss:$2 sm:$0xff]
        %s2689 = scalar_lea.vmem %s2537, 482 [#allocation2]
        %v2690 = vld [vmem:[%s2689] ss:$2 sm:$0xff]
        %s2691 = scalar_lea.vmem %s2537, 498 [#allocation2]
        %v2692 = vld [vmem:[%s2691] ss:$2 sm:$0xff]
        %s2693 = scalar_lea.vmem %s2537, 562 [#allocation2]
        %v2694 = vld [vmem:[%s2693] ss:$2 sm:$0xff]
        %s2695 = scalar_lea.vmem %s2537, 578 [#allocation2]
        %v2696 = vld [vmem:[%s2695] ss:$2 sm:$0xff]
        %s2697 = scalar_lea.vmem %s2537, 642 [#allocation2]
        %v2698 = vld [vmem:[%s2697] ss:$2 sm:$0xff]
        %s2699 = scalar_lea.vmem %s2537, 658 [#allocation2]
        %v2700 = vld [vmem:[%s2699] ss:$2 sm:$0xff]
        %s2701 = scalar_lea.vmem %s2537, 722 [#allocation2]
        %v2702 = vld [vmem:[%s2701] ss:$2 sm:$0xff]
        %s2703 = scalar_lea.vmem %s2537, 738 [#allocation2]
        %v2704 = vld [vmem:[%s2703] ss:$2 sm:$0xff]
        %s2705 = scalar_lea.vmem %s2537, 802 [#allocation2]
        %v2706 = vld [vmem:[%s2705] ss:$2 sm:$0xff]
        %s2707 = scalar_lea.vmem %s2537, 818 [#allocation2]
        %v2708 = vld [vmem:[%s2707] ss:$2 sm:$0xff]
        %s2709 = scalar_lea.vmem %s2537, 882 [#allocation2]
        %v2710 = vld [vmem:[%s2709] ss:$2 sm:$0xff]
        %s2711 = scalar_lea.vmem %s2537, 898 [#allocation2]
        %v2712 = vld [vmem:[%s2711] ss:$2 sm:$0xff]
        %s2713 = scalar_lea.vmem %s2537, 962 [#allocation2]
        %v2714 = vld [vmem:[%s2713] ss:$2 sm:$0xff]
        %s2715 = scalar_lea.vmem %s2537, 978 [#allocation2]
        %v2716 = vld [vmem:[%s2715] ss:$2 sm:$0xff]
        %s2717 = scalar_lea.vmem %s2537, 1042 [#allocation2]
        %v2718 = vld [vmem:[%s2717] ss:$2 sm:$0xff]
        %s2719 = scalar_lea.vmem %s2537, 1058 [#allocation2]
        %v2720 = vld [vmem:[%s2719] ss:$2 sm:$0xff]
        %s2721 = scalar_lea.vmem %s2537, 1122 [#allocation2]
        %v2722 = vld [vmem:[%s2721] ss:$2 sm:$0xff]
        %s2723 = scalar_lea.vmem %s2537, 1138 [#allocation2]
        %v2724 = vld [vmem:[%s2723] ss:$2 sm:$0xff]
        %s2725 = scalar_lea.vmem %s2537, 1202 [#allocation2]
        %v2726 = vld [vmem:[%s2725] ss:$2 sm:$0xff]
        %s2727 = scalar_lea.vmem %s2537, 1218 [#allocation2]
        %v2728 = vld [vmem:[%s2727] ss:$2 sm:$0xff]
        %s2729 = scalar_lea.vmem %s2537, 3 [#allocation2]
        %v2730 = vld [vmem:[%s2729] ss:$2 sm:$0xff]
        %s2731 = scalar_lea.vmem %s2537, 19 [#allocation2]
        %v2732 = vld [vmem:[%s2731] ss:$2 sm:$0xff]
        %s2733 = scalar_lea.vmem %s2537, 83 [#allocation2]
        %v2734 = vld [vmem:[%s2733] ss:$2 sm:$0xff]
        %s2735 = scalar_lea.vmem %s2537, 99 [#allocation2]
        %v2736 = vld [vmem:[%s2735] ss:$2 sm:$0xff]
        %s2737 = scalar_lea.vmem %s2537, 163 [#allocation2]
        %v2738 = vld [vmem:[%s2737] ss:$2 sm:$0xff]
        %s2739 = scalar_lea.vmem %s2537, 179 [#allocation2]
        %v2740 = vld [vmem:[%s2739] ss:$2 sm:$0xff]
        %s2741 = scalar_lea.vmem %s2537, 243 [#allocation2]
        %v2742 = vld [vmem:[%s2741] ss:$2 sm:$0xff]
        %s2743 = scalar_lea.vmem %s2537, 259 [#allocation2]
        %v2744 = vld [vmem:[%s2743] ss:$2 sm:$0xff]
        %s2745 = scalar_lea.vmem %s2537, 323 [#allocation2]
        %v2746 = vld [vmem:[%s2745] ss:$2 sm:$0xff]
        %s2747 = scalar_lea.vmem %s2537, 339 [#allocation2]
        %v2748 = vld [vmem:[%s2747] ss:$2 sm:$0xff]
        %s2749 = scalar_lea.vmem %s2537, 403 [#allocation2]
        %v2750 = vld [vmem:[%s2749] ss:$2 sm:$0xff]
        %s2751 = scalar_lea.vmem %s2537, 419 [#allocation2]
        %v2752 = vld [vmem:[%s2751] ss:$2 sm:$0xff]
        %s2753 = scalar_lea.vmem %s2537, 483 [#allocation2]
        %v2754 = vld [vmem:[%s2753] ss:$2 sm:$0xff]
        %s2755 = scalar_lea.vmem %s2537, 499 [#allocation2]
        %v2756 = vld [vmem:[%s2755] ss:$2 sm:$0xff]
        %s2757 = scalar_lea.vmem %s2537, 563 [#allocation2]
        %v2758 = vld [vmem:[%s2757] ss:$2 sm:$0xff]
        %s2759 = scalar_lea.vmem %s2537, 579 [#allocation2]
        %v2760 = vld [vmem:[%s2759] ss:$2 sm:$0xff]
        %s2761 = scalar_lea.vmem %s2537, 643 [#allocation2]
        %v2762 = vld [vmem:[%s2761] ss:$2 sm:$0xff]
        %s2763 = scalar_lea.vmem %s2537, 659 [#allocation2]
        %v2764 = vld [vmem:[%s2763] ss:$2 sm:$0xff]
        %s2765 = scalar_lea.vmem %s2537, 723 [#allocation2]
        %v2766 = vld [vmem:[%s2765] ss:$2 sm:$0xff]
        %s2767 = scalar_lea.vmem %s2537, 739 [#allocation2]
        %v2768 = vld [vmem:[%s2767] ss:$2 sm:$0xff]
        %s2769 = scalar_lea.vmem %s2537, 803 [#allocation2]
        %v2770 = vld [vmem:[%s2769] ss:$2 sm:$0xff]
        %s2771 = scalar_lea.vmem %s2537, 819 [#allocation2]
        %v2772 = vld [vmem:[%s2771] ss:$2 sm:$0xff]
        %s2773 = scalar_lea.vmem %s2537, 883 [#allocation2]
        %v2774 = vld [vmem:[%s2773] ss:$2 sm:$0xff]
        %s2775 = scalar_lea.vmem %s2537, 899 [#allocation2]
        %v2776 = vld [vmem:[%s2775] ss:$2 sm:$0xff]
        %s2777 = scalar_lea.vmem %s2537, 963 [#allocation2]
        %v2778 = vld [vmem:[%s2777] ss:$2 sm:$0xff]
        %s2779 = scalar_lea.vmem %s2537, 979 [#allocation2]
        %v2780 = vld [vmem:[%s2779] ss:$2 sm:$0xff]
        %s2781 = scalar_lea.vmem %s2537, 1043 [#allocation2]
        %v2782 = vld [vmem:[%s2781] ss:$2 sm:$0xff]
        %s2783 = scalar_lea.vmem %s2537, 1059 [#allocation2]
        %v2784 = vld [vmem:[%s2783] ss:$2 sm:$0xff]
        %s2785 = scalar_lea.vmem %s2537, 1123 [#allocation2]
        %v2786 = vld [vmem:[%s2785] ss:$2 sm:$0xff]
        %s2787 = scalar_lea.vmem %s2537, 1139 [#allocation2]
        %v2788 = vld [vmem:[%s2787] ss:$2 sm:$0xff]
        %s2789 = scalar_lea.vmem %s2537, 1203 [#allocation2]
        %v2790 = vld [vmem:[%s2789] ss:$2 sm:$0xff]
        %s2791 = scalar_lea.vmem %s2537, 1219 [#allocation2]
        %v2792 = vld [vmem:[%s2791] ss:$2 sm:$0xff]
        %s2793 = scalar_lea.vmem %s2537, 4 [#allocation2]
        %v2794 = vld [vmem:[%s2793] ss:$2 sm:$0xff]
        %s2795 = scalar_lea.vmem %s2537, 20 [#allocation2]
        %v2796 = vld [vmem:[%s2795] ss:$2 sm:$0xff]
        %s2797 = scalar_lea.vmem %s2537, 84 [#allocation2]
        %v2798 = vld [vmem:[%s2797] ss:$2 sm:$0xff]
        %s2799 = scalar_lea.vmem %s2537, 100 [#allocation2]
        %v2800 = vld [vmem:[%s2799] ss:$2 sm:$0xff]
        %s2801 = scalar_lea.vmem %s2537, 164 [#allocation2]
        %v2802 = vld [vmem:[%s2801] ss:$2 sm:$0xff]
        %s2803 = scalar_lea.vmem %s2537, 180 [#allocation2]
        %v2804 = vld [vmem:[%s2803] ss:$2 sm:$0xff]
        %s2805 = scalar_lea.vmem %s2537, 244 [#allocation2]
        %v2806 = vld [vmem:[%s2805] ss:$2 sm:$0xff]
        %s2807 = scalar_lea.vmem %s2537, 260 [#allocation2]
        %v2808 = vld [vmem:[%s2807] ss:$2 sm:$0xff]
        %s2809 = scalar_lea.vmem %s2537, 324 [#allocation2]
        %v2810 = vld [vmem:[%s2809] ss:$2 sm:$0xff]
        %s2811 = scalar_lea.vmem %s2537, 340 [#allocation2]
        %v2812 = vld [vmem:[%s2811] ss:$2 sm:$0xff]
        %s2813 = scalar_lea.vmem %s2537, 404 [#allocation2]
        %v2814 = vld [vmem:[%s2813] ss:$2 sm:$0xff]
        %s2815 = scalar_lea.vmem %s2537, 420 [#allocation2]
        %v2816 = vld [vmem:[%s2815] ss:$2 sm:$0xff]
        %s2817 = scalar_lea.vmem %s2537, 484 [#allocation2]
        %v2818 = vld [vmem:[%s2817] ss:$2 sm:$0xff]
        %s2819 = scalar_lea.vmem %s2537, 500 [#allocation2]
        %v2820 = vld [vmem:[%s2819] ss:$2 sm:$0xff]
        %s2821 = scalar_lea.vmem %s2537, 564 [#allocation2]
        %v2822 = vld [vmem:[%s2821] ss:$2 sm:$0xff]
        %s2823 = scalar_lea.vmem %s2537, 580 [#allocation2]
        %v2824 = vld [vmem:[%s2823] ss:$2 sm:$0xff]
        %s2825 = scalar_lea.vmem %s2537, 644 [#allocation2]
        %v2826 = vld [vmem:[%s2825] ss:$2 sm:$0xff]
        %s2827 = scalar_lea.vmem %s2537, 660 [#allocation2]
        %v2828 = vld [vmem:[%s2827] ss:$2 sm:$0xff]
        %s2829 = scalar_lea.vmem %s2537, 724 [#allocation2]
        %v2830 = vld [vmem:[%s2829] ss:$2 sm:$0xff]
        %s2831 = scalar_lea.vmem %s2537, 740 [#allocation2]
        %v2832 = vld [vmem:[%s2831] ss:$2 sm:$0xff]
        %s2833 = scalar_lea.vmem %s2537, 804 [#allocation2]
        %v2834 = vld [vmem:[%s2833] ss:$2 sm:$0xff]
        %s2835 = scalar_lea.vmem %s2537, 820 [#allocation2]
        %v2836 = vld [vmem:[%s2835] ss:$2 sm:$0xff]
        %s2837 = scalar_lea.vmem %s2537, 884 [#allocation2]
        %v2838 = vld [vmem:[%s2837] ss:$2 sm:$0xff]
        %s2839 = scalar_lea.vmem %s2537, 900 [#allocation2]
        %v2840 = vld [vmem:[%s2839] ss:$2 sm:$0xff]
        %s2841 = scalar_lea.vmem %s2537, 964 [#allocation2]
        %v2842 = vld [vmem:[%s2841] ss:$2 sm:$0xff]
        %s2843 = scalar_lea.vmem %s2537, 980 [#allocation2]
        %v2844 = vld [vmem:[%s2843] ss:$2 sm:$0xff]
        %s2845 = scalar_lea.vmem %s2537, 1044 [#allocation2]
        %v2846 = vld [vmem:[%s2845] ss:$2 sm:$0xff]
        %s2847 = scalar_lea.vmem %s2537, 1060 [#allocation2]
        %v2848 = vld [vmem:[%s2847] ss:$2 sm:$0xff]
        %s2849 = scalar_lea.vmem %s2537, 1124 [#allocation2]
        %v2850 = vld [vmem:[%s2849] ss:$2 sm:$0xff]
        %s2851 = scalar_lea.vmem %s2537, 1140 [#allocation2]
        %v2852 = vld [vmem:[%s2851] ss:$2 sm:$0xff]
        %s2853 = scalar_lea.vmem %s2537, 1204 [#allocation2]
        %v2854 = vld [vmem:[%s2853] ss:$2 sm:$0xff]
        %s2855 = scalar_lea.vmem %s2537, 1220 [#allocation2]
        %v2856 = vld [vmem:[%s2855] ss:$2 sm:$0xff]
        %s2857 = scalar_lea.vmem %s2537, 5 [#allocation2]
        %v2858 = vld [vmem:[%s2857] ss:$2 sm:$0xff]
        %s2859 = scalar_lea.vmem %s2537, 21 [#allocation2]
        %v2860 = vld [vmem:[%s2859] ss:$2 sm:$0xff]
        %s2861 = scalar_lea.vmem %s2537, 85 [#allocation2]
        %v2862 = vld [vmem:[%s2861] ss:$2 sm:$0xff]
        %s2863 = scalar_lea.vmem %s2537, 101 [#allocation2]
        %v2864 = vld [vmem:[%s2863] ss:$2 sm:$0xff]
        %s2865 = scalar_lea.vmem %s2537, 165 [#allocation2]
        %v2866 = vld [vmem:[%s2865] ss:$2 sm:$0xff]
        %s2867 = scalar_lea.vmem %s2537, 181 [#allocation2]
        %v2868 = vld [vmem:[%s2867] ss:$2 sm:$0xff]
        %s2869 = scalar_lea.vmem %s2537, 245 [#allocation2]
        %v2870 = vld [vmem:[%s2869] ss:$2 sm:$0xff]
        %s2871 = scalar_lea.vmem %s2537, 261 [#allocation2]
        %v2872 = vld [vmem:[%s2871] ss:$2 sm:$0xff]
        %s2873 = scalar_lea.vmem %s2537, 325 [#allocation2]
        %v2874 = vld [vmem:[%s2873] ss:$2 sm:$0xff]
        %s2875 = scalar_lea.vmem %s2537, 341 [#allocation2]
        %v2876 = vld [vmem:[%s2875] ss:$2 sm:$0xff]
        %s2877 = scalar_lea.vmem %s2537, 405 [#allocation2]
        %v2878 = vld [vmem:[%s2877] ss:$2 sm:$0xff]
        %s2879 = scalar_lea.vmem %s2537, 421 [#allocation2]
        %v2880 = vld [vmem:[%s2879] ss:$2 sm:$0xff]
        %s2881 = scalar_lea.vmem %s2537, 485 [#allocation2]
        %v2882 = vld [vmem:[%s2881] ss:$2 sm:$0xff]
        %s2883 = scalar_lea.vmem %s2537, 501 [#allocation2]
        %v2884 = vld [vmem:[%s2883] ss:$2 sm:$0xff]
        %s2885 = scalar_lea.vmem %s2537, 565 [#allocation2]
        %v2886 = vld [vmem:[%s2885] ss:$2 sm:$0xff]
        %s2887 = scalar_lea.vmem %s2537, 581 [#allocation2]
        %v2888 = vld [vmem:[%s2887] ss:$2 sm:$0xff]
        %s2889 = scalar_lea.vmem %s2537, 645 [#allocation2]
        %v2890 = vld [vmem:[%s2889] ss:$2 sm:$0xff]
        %s2891 = scalar_lea.vmem %s2537, 661 [#allocation2]
        %v2892 = vld [vmem:[%s2891] ss:$2 sm:$0xff]
        %s2893 = scalar_lea.vmem %s2537, 725 [#allocation2]
        %v2894 = vld [vmem:[%s2893] ss:$2 sm:$0xff]
        %s2895 = scalar_lea.vmem %s2537, 741 [#allocation2]
        %v2896 = vld [vmem:[%s2895] ss:$2 sm:$0xff]
        %s2897 = scalar_lea.vmem %s2537, 805 [#allocation2]
        %v2898 = vld [vmem:[%s2897] ss:$2 sm:$0xff]
        %s2899 = scalar_lea.vmem %s2537, 821 [#allocation2]
        %v2900 = vld [vmem:[%s2899] ss:$2 sm:$0xff]
        %s2901 = scalar_lea.vmem %s2537, 885 [#allocation2]
        %v2902 = vld [vmem:[%s2901] ss:$2 sm:$0xff]
        %s2903 = scalar_lea.vmem %s2537, 901 [#allocation2]
        %v2904 = vld [vmem:[%s2903] ss:$2 sm:$0xff]
        %s2905 = scalar_lea.vmem %s2537, 965 [#allocation2]
        %v2906 = vld [vmem:[%s2905] ss:$2 sm:$0xff]
        %s2907 = scalar_lea.vmem %s2537, 981 [#allocation2]
        %v2908 = vld [vmem:[%s2907] ss:$2 sm:$0xff]
        %s2909 = scalar_lea.vmem %s2537, 1045 [#allocation2]
        %v2910 = vld [vmem:[%s2909] ss:$2 sm:$0xff]
        %s2911 = scalar_lea.vmem %s2537, 1061 [#allocation2]
        %v2912 = vld [vmem:[%s2911] ss:$2 sm:$0xff]
        %s2913 = scalar_lea.vmem %s2537, 1125 [#allocation2]
        %v2914 = vld [vmem:[%s2913] ss:$2 sm:$0xff]
        %s2915 = scalar_lea.vmem %s2537, 1141 [#allocation2]
        %v2916 = vld [vmem:[%s2915] ss:$2 sm:$0xff]
        %s2917 = scalar_lea.vmem %s2537, 1205 [#allocation2]
        %v2918 = vld [vmem:[%s2917] ss:$2 sm:$0xff]
        %s2919 = scalar_lea.vmem %s2537, 1221 [#allocation2]
        %v2920 = vld [vmem:[%s2919] ss:$2 sm:$0xff]
        %s2921 = scalar_lea.vmem %s2537, 6 [#allocation2]
        %v2922 = vld [vmem:[%s2921] ss:$2 sm:$0xff]
        %s2923 = scalar_lea.vmem %s2537, 22 [#allocation2]
        %v2924 = vld [vmem:[%s2923] ss:$2 sm:$0xff]
        %s2925 = scalar_lea.vmem %s2537, 86 [#allocation2]
        %v2926 = vld [vmem:[%s2925] ss:$2 sm:$0xff]
        %s2927 = scalar_lea.vmem %s2537, 102 [#allocation2]
        %v2928 = vld [vmem:[%s2927] ss:$2 sm:$0xff]
        %s2929 = scalar_lea.vmem %s2537, 166 [#allocation2]
        %v2930 = vld [vmem:[%s2929] ss:$2 sm:$0xff]
        %s2931 = scalar_lea.vmem %s2537, 182 [#allocation2]
        %v2932 = vld [vmem:[%s2931] ss:$2 sm:$0xff]
        %s2933 = scalar_lea.vmem %s2537, 246 [#allocation2]
        %v2934 = vld [vmem:[%s2933] ss:$2 sm:$0xff]
        %s2935 = scalar_lea.vmem %s2537, 262 [#allocation2]
        %v2936 = vld [vmem:[%s2935] ss:$2 sm:$0xff]
        %s2937 = scalar_lea.vmem %s2537, 326 [#allocation2]
        %v2938 = vld [vmem:[%s2937] ss:$2 sm:$0xff]
        %s2939 = scalar_lea.vmem %s2537, 342 [#allocation2]
        %v2940 = vld [vmem:[%s2939] ss:$2 sm:$0xff]
        %s2941 = scalar_lea.vmem %s2537, 406 [#allocation2]
        %v2942 = vld [vmem:[%s2941] ss:$2 sm:$0xff]
        %s2943 = scalar_lea.vmem %s2537, 422 [#allocation2]
        %v2944 = vld [vmem:[%s2943] ss:$2 sm:$0xff]
        %s2945 = scalar_lea.vmem %s2537, 486 [#allocation2]
        %v2946 = vld [vmem:[%s2945] ss:$2 sm:$0xff]
        %s2947 = scalar_lea.vmem %s2537, 502 [#allocation2]
        %v2948 = vld [vmem:[%s2947] ss:$2 sm:$0xff]
        %s2949 = scalar_lea.vmem %s2537, 566 [#allocation2]
        %v2950 = vld [vmem:[%s2949] ss:$2 sm:$0xff]
        %s2951 = scalar_lea.vmem %s2537, 582 [#allocation2]
        %v2952 = vld [vmem:[%s2951] ss:$2 sm:$0xff]
        %s2953 = scalar_lea.vmem %s2537, 646 [#allocation2]
        %v2954 = vld [vmem:[%s2953] ss:$2 sm:$0xff]
        %s2955 = scalar_lea.vmem %s2537, 662 [#allocation2]
        %v2956 = vld [vmem:[%s2955] ss:$2 sm:$0xff]
        %s2957 = scalar_lea.vmem %s2537, 726 [#allocation2]
        %v2958 = vld [vmem:[%s2957] ss:$2 sm:$0xff]
        %s2959 = scalar_lea.vmem %s2537, 742 [#allocation2]
        %v2960 = vld [vmem:[%s2959] ss:$2 sm:$0xff]
        %s2961 = scalar_lea.vmem %s2537, 806 [#allocation2]
        %v2962 = vld [vmem:[%s2961] ss:$2 sm:$0xff]
        %s2963 = scalar_lea.vmem %s2537, 822 [#allocation2]
        %v2964 = vld [vmem:[%s2963] ss:$2 sm:$0xff]
        %s2965 = scalar_lea.vmem %s2537, 886 [#allocation2]
        %v2966 = vld [vmem:[%s2965] ss:$2 sm:$0xff]
        %s2967 = scalar_lea.vmem %s2537, 902 [#allocation2]
        %v2968 = vld [vmem:[%s2967] ss:$2 sm:$0xff]
        %s2969 = scalar_lea.vmem %s2537, 966 [#allocation2]
        %v2970 = vld [vmem:[%s2969] ss:$2 sm:$0xff]
        %s2971 = scalar_lea.vmem %s2537, 982 [#allocation2]
        %v2972 = vld [vmem:[%s2971] ss:$2 sm:$0xff]
        %s2973 = scalar_lea.vmem %s2537, 1046 [#allocation2]
        %v2974 = vld [vmem:[%s2973] ss:$2 sm:$0xff]
        %s2975 = scalar_lea.vmem %s2537, 1062 [#allocation2]
        %v2976 = vld [vmem:[%s2975] ss:$2 sm:$0xff]
        %s2977 = scalar_lea.vmem %s2537, 1126 [#allocation2]
        %v2978 = vld [vmem:[%s2977] ss:$2 sm:$0xff]
        %s2979 = scalar_lea.vmem %s2537, 1142 [#allocation2]
        %v2980 = vld [vmem:[%s2979] ss:$2 sm:$0xff]
        %s2981 = scalar_lea.vmem %s2537, 1206 [#allocation2]
        %v2982 = vld [vmem:[%s2981] ss:$2 sm:$0xff]
        %s2983 = scalar_lea.vmem %s2537, 1222 [#allocation2]
        %v2984 = vld [vmem:[%s2983] ss:$2 sm:$0xff]
        %s2985 = scalar_lea.vmem [#allocation2], 200
        %v2986 = vld [vmem:[%s2985] ss:$2 sm:$0xff]
        %s2987 = scalar_lea.vmem %s2985, 16 [#allocation2]
        %v2988 = vld [vmem:[%s2987] ss:$2 sm:$0xff]
        %s2989 = scalar_lea.vmem %s2985, 80 [#allocation2]
        %v2990 = vld [vmem:[%s2989] ss:$2 sm:$0xff]
        %s2991 = scalar_lea.vmem %s2985, 96 [#allocation2]
        %v2992 = vld [vmem:[%s2991] ss:$2 sm:$0xff]
        %s2993 = scalar_lea.vmem %s2985, 160 [#allocation2]
        %v2994 = vld [vmem:[%s2993] ss:$2 sm:$0xff]
        %s2995 = scalar_lea.vmem %s2985, 176 [#allocation2]
        %v2996 = vld [vmem:[%s2995] ss:$2 sm:$0xff]
        %s2997 = scalar_lea.vmem %s2985, 240 [#allocation2]
        %v2998 = vld [vmem:[%s2997] ss:$2 sm:$0xff]
        %s2999 = scalar_lea.vmem %s2985, 256 [#allocation2]
        %v3000 = vld [vmem:[%s2999] ss:$2 sm:$0xff]
        %s3001 = scalar_lea.vmem %s2985, 320 [#allocation2]
        %v3002 = vld [vmem:[%s3001] ss:$2 sm:$0xff]
        %s3003 = scalar_lea.vmem %s2985, 336 [#allocation2]
        %v3004 = vld [vmem:[%s3003] ss:$2 sm:$0xff]
        %s3005 = scalar_lea.vmem %s2985, 400 [#allocation2]
        %v3006 = vld [vmem:[%s3005] ss:$2 sm:$0xff]
        %s3007 = scalar_lea.vmem %s2985, 416 [#allocation2]
        %v3008 = vld [vmem:[%s3007] ss:$2 sm:$0xff]
        %s3009 = scalar_lea.vmem %s2985, 480 [#allocation2]
        %v3010 = vld [vmem:[%s3009] ss:$2 sm:$0xff]
        %s3011 = scalar_lea.vmem %s2985, 496 [#allocation2]
        %v3012 = vld [vmem:[%s3011] ss:$2 sm:$0xff]
        %s3013 = scalar_lea.vmem %s2985, 560 [#allocation2]
        %v3014 = vld [vmem:[%s3013] ss:$2 sm:$0xff]
        %s3015 = scalar_lea.vmem %s2985, 576 [#allocation2]
        %v3016 = vld [vmem:[%s3015] ss:$2 sm:$0xff]
        %s3017 = scalar_lea.vmem %s2985, 640 [#allocation2]
        %v3018 = vld [vmem:[%s3017] ss:$2 sm:$0xff]
        %s3019 = scalar_lea.vmem %s2985, 656 [#allocation2]
        %v3020 = vld [vmem:[%s3019] ss:$2 sm:$0xff]
        %s3021 = scalar_lea.vmem %s2985, 720 [#allocation2]
        %v3022 = vld [vmem:[%s3021] ss:$2 sm:$0xff]
        %s3023 = scalar_lea.vmem %s2985, 736 [#allocation2]
        %v3024 = vld [vmem:[%s3023] ss:$2 sm:$0xff]
        %s3025 = scalar_lea.vmem %s2985, 800 [#allocation2]
        %v3026 = vld [vmem:[%s3025] ss:$2 sm:$0xff]
        %s3027 = scalar_lea.vmem %s2985, 816 [#allocation2]
        %v3028 = vld [vmem:[%s3027] ss:$2 sm:$0xff]
        %s3029 = scalar_lea.vmem %s2985, 880 [#allocation2]
        %v3030 = vld [vmem:[%s3029] ss:$2 sm:$0xff]
        %s3031 = scalar_lea.vmem %s2985, 896 [#allocation2]
        %v3032 = vld [vmem:[%s3031] ss:$2 sm:$0xff]
        %s3033 = scalar_lea.vmem %s2985, 960 [#allocation2]
        %v3034 = vld [vmem:[%s3033] ss:$2 sm:$0xff]
        %s3035 = scalar_lea.vmem %s2985, 976 [#allocation2]
        %v3036 = vld [vmem:[%s3035] ss:$2 sm:$0xff]
        %s3037 = scalar_lea.vmem %s2985, 1040 [#allocation2]
        %v3038 = vld [vmem:[%s3037] ss:$2 sm:$0xff]
        %s3039 = scalar_lea.vmem %s2985, 1056 [#allocation2]
        %v3040 = vld [vmem:[%s3039] ss:$2 sm:$0xff]
        %s3041 = scalar_lea.vmem %s2985, 1120 [#allocation2]
        %v3042 = vld [vmem:[%s3041] ss:$2 sm:$0xff]
        %s3043 = scalar_lea.vmem %s2985, 1136 [#allocation2]
        %v3044 = vld [vmem:[%s3043] ss:$2 sm:$0xff]
        %s3045 = scalar_lea.vmem %s2985, 1200 [#allocation2]
        %v3046 = vld [vmem:[%s3045] ss:$2 sm:$0xff]
        %s3047 = scalar_lea.vmem %s2985, 1216 [#allocation2]
        %v3048 = vld [vmem:[%s3047] ss:$2 sm:$0xff]
        %s3049 = scalar_lea.vmem %s2985, 1 [#allocation2]
        %v3050 = vld [vmem:[%s3049] ss:$2 sm:$0xff]
        %s3051 = scalar_lea.vmem %s2985, 17 [#allocation2]
        %v3052 = vld [vmem:[%s3051] ss:$2 sm:$0xff]
        %s3053 = scalar_lea.vmem %s2985, 81 [#allocation2]
        %v3054 = vld [vmem:[%s3053] ss:$2 sm:$0xff]
        %s3055 = scalar_lea.vmem %s2985, 97 [#allocation2]
        %v3056 = vld [vmem:[%s3055] ss:$2 sm:$0xff]
        %s3057 = scalar_lea.vmem %s2985, 161 [#allocation2]
        %v3058 = vld [vmem:[%s3057] ss:$2 sm:$0xff]
        %s3059 = scalar_lea.vmem %s2985, 177 [#allocation2]
        %v3060 = vld [vmem:[%s3059] ss:$2 sm:$0xff]
        %s3061 = scalar_lea.vmem %s2985, 241 [#allocation2]
        %v3062 = vld [vmem:[%s3061] ss:$2 sm:$0xff]
        %s3063 = scalar_lea.vmem %s2985, 257 [#allocation2]
        %v3064 = vld [vmem:[%s3063] ss:$2 sm:$0xff]
        %s3065 = scalar_lea.vmem %s2985, 321 [#allocation2]
        %v3066 = vld [vmem:[%s3065] ss:$2 sm:$0xff]
        %s3067 = scalar_lea.vmem %s2985, 337 [#allocation2]
        %v3068 = vld [vmem:[%s3067] ss:$2 sm:$0xff]
        %s3069 = scalar_lea.vmem %s2985, 401 [#allocation2]
        %v3070 = vld [vmem:[%s3069] ss:$2 sm:$0xff]
        %s3071 = scalar_lea.vmem %s2985, 417 [#allocation2]
        %v3072 = vld [vmem:[%s3071] ss:$2 sm:$0xff]
        %s3073 = scalar_lea.vmem %s2985, 481 [#allocation2]
        %v3074 = vld [vmem:[%s3073] ss:$2 sm:$0xff]
        %s3075 = scalar_lea.vmem %s2985, 497 [#allocation2]
        %v3076 = vld [vmem:[%s3075] ss:$2 sm:$0xff]
        %s3077 = scalar_lea.vmem %s2985, 561 [#allocation2]
        %v3078 = vld [vmem:[%s3077] ss:$2 sm:$0xff]
        %s3079 = scalar_lea.vmem %s2985, 577 [#allocation2]
        %v3080 = vld [vmem:[%s3079] ss:$2 sm:$0xff]
        %s3081 = scalar_lea.vmem %s2985, 641 [#allocation2]
        %v3082 = vld [vmem:[%s3081] ss:$2 sm:$0xff]
        %s3083 = scalar_lea.vmem %s2985, 657 [#allocation2]
        %v3084 = vld [vmem:[%s3083] ss:$2 sm:$0xff]
        %s3085 = scalar_lea.vmem %s2985, 721 [#allocation2]
        %v3086 = vld [vmem:[%s3085] ss:$2 sm:$0xff]
        %s3087 = scalar_lea.vmem %s2985, 737 [#allocation2]
        %v3088 = vld [vmem:[%s3087] ss:$2 sm:$0xff]
        %s3089 = scalar_lea.vmem %s2985, 801 [#allocation2]
        %v3090 = vld [vmem:[%s3089] ss:$2 sm:$0xff]
        %s3091 = scalar_lea.vmem %s2985, 817 [#allocation2]
        %v3092 = vld [vmem:[%s3091] ss:$2 sm:$0xff]
        %s3093 = scalar_lea.vmem %s2985, 881 [#allocation2]
        %v3094 = vld [vmem:[%s3093] ss:$2 sm:$0xff]
        %s3095 = scalar_lea.vmem %s2985, 897 [#allocation2]
        %v3096 = vld [vmem:[%s3095] ss:$2 sm:$0xff]
        %s3097 = scalar_lea.vmem %s2985, 961 [#allocation2]
        %v3098 = vld [vmem:[%s3097] ss:$2 sm:$0xff]
        %s3099 = scalar_lea.vmem %s2985, 977 [#allocation2]
        %v3100 = vld [vmem:[%s3099] ss:$2 sm:$0xff]
        %s3101 = scalar_lea.vmem %s2985, 1041 [#allocation2]
        %v3102 = vld [vmem:[%s3101] ss:$2 sm:$0xff]
        %s3103 = scalar_lea.vmem %s2985, 1057 [#allocation2]
        %v3104 = vld [vmem:[%s3103] ss:$2 sm:$0xff]
        %s3105 = scalar_lea.vmem %s2985, 1121 [#allocation2]
        %v3106 = vld [vmem:[%s3105] ss:$2 sm:$0xff]
        %s3107 = scalar_lea.vmem %s2985, 1137 [#allocation2]
        %v3108 = vld [vmem:[%s3107] ss:$2 sm:$0xff]
        %s3109 = scalar_lea.vmem %s2985, 1201 [#allocation2]
        %v3110 = vld [vmem:[%s3109] ss:$2 sm:$0xff]
        %s3111 = scalar_lea.vmem %s2985, 1217 [#allocation2]
        %v3112 = vld [vmem:[%s3111] ss:$2 sm:$0xff]
        %s3113 = scalar_lea.vmem %s2985, 2 [#allocation2]
        %v3114 = vld [vmem:[%s3113] ss:$2 sm:$0xff]
        %s3115 = scalar_lea.vmem %s2985, 18 [#allocation2]
        %v3116 = vld [vmem:[%s3115] ss:$2 sm:$0xff]
        %s3117 = scalar_lea.vmem %s2985, 82 [#allocation2]
        %v3118 = vld [vmem:[%s3117] ss:$2 sm:$0xff]
        %s3119 = scalar_lea.vmem %s2985, 98 [#allocation2]
        %v3120 = vld [vmem:[%s3119] ss:$2 sm:$0xff]
        %s3121 = scalar_lea.vmem %s2985, 162 [#allocation2]
        %v3122 = vld [vmem:[%s3121] ss:$2 sm:$0xff]
        %s3123 = scalar_lea.vmem %s2985, 178 [#allocation2]
        %v3124 = vld [vmem:[%s3123] ss:$2 sm:$0xff]
        %s3125 = scalar_lea.vmem %s2985, 242 [#allocation2]
        %v3126 = vld [vmem:[%s3125] ss:$2 sm:$0xff]
        %s3127 = scalar_lea.vmem %s2985, 258 [#allocation2]
        %v3128 = vld [vmem:[%s3127] ss:$2 sm:$0xff]
        %s3129 = scalar_lea.vmem %s2985, 322 [#allocation2]
        %v3130 = vld [vmem:[%s3129] ss:$2 sm:$0xff]
        %s3131 = scalar_lea.vmem %s2985, 338 [#allocation2]
        %v3132 = vld [vmem:[%s3131] ss:$2 sm:$0xff]
        %s3133 = scalar_lea.vmem %s2985, 402 [#allocation2]
        %v3134 = vld [vmem:[%s3133] ss:$2 sm:$0xff]
        %s3135 = scalar_lea.vmem %s2985, 418 [#allocation2]
        %v3136 = vld [vmem:[%s3135] ss:$2 sm:$0xff]
        %s3137 = scalar_lea.vmem %s2985, 482 [#allocation2]
        %v3138 = vld [vmem:[%s3137] ss:$2 sm:$0xff]
        %s3139 = scalar_lea.vmem %s2985, 498 [#allocation2]
        %v3140 = vld [vmem:[%s3139] ss:$2 sm:$0xff]
        %s3141 = scalar_lea.vmem %s2985, 562 [#allocation2]
        %v3142 = vld [vmem:[%s3141] ss:$2 sm:$0xff]
        %s3143 = scalar_lea.vmem %s2985, 578 [#allocation2]
        %v3144 = vld [vmem:[%s3143] ss:$2 sm:$0xff]
        %s3145 = scalar_lea.vmem %s2985, 642 [#allocation2]
        %v3146 = vld [vmem:[%s3145] ss:$2 sm:$0xff]
        %s3147 = scalar_lea.vmem %s2985, 658 [#allocation2]
        %v3148 = vld [vmem:[%s3147] ss:$2 sm:$0xff]
        %s3149 = scalar_lea.vmem %s2985, 722 [#allocation2]
        %v3150 = vld [vmem:[%s3149] ss:$2 sm:$0xff]
        %s3151 = scalar_lea.vmem %s2985, 738 [#allocation2]
        %v3152 = vld [vmem:[%s3151] ss:$2 sm:$0xff]
        %s3153 = scalar_lea.vmem %s2985, 802 [#allocation2]
        %v3154 = vld [vmem:[%s3153] ss:$2 sm:$0xff]
        %s3155 = scalar_lea.vmem %s2985, 818 [#allocation2]
        %v3156 = vld [vmem:[%s3155] ss:$2 sm:$0xff]
        %s3157 = scalar_lea.vmem %s2985, 882 [#allocation2]
        %v3158 = vld [vmem:[%s3157] ss:$2 sm:$0xff]
        %s3159 = scalar_lea.vmem %s2985, 898 [#allocation2]
        %v3160 = vld [vmem:[%s3159] ss:$2 sm:$0xff]
        %s3161 = scalar_lea.vmem %s2985, 962 [#allocation2]
        %v3162 = vld [vmem:[%s3161] ss:$2 sm:$0xff]
        %s3163 = scalar_lea.vmem %s2985, 978 [#allocation2]
        %v3164 = vld [vmem:[%s3163] ss:$2 sm:$0xff]
        %s3165 = scalar_lea.vmem %s2985, 1042 [#allocation2]
        %v3166 = vld [vmem:[%s3165] ss:$2 sm:$0xff]
        %s3167 = scalar_lea.vmem %s2985, 1058 [#allocation2]
        %v3168 = vld [vmem:[%s3167] ss:$2 sm:$0xff]
        %s3169 = scalar_lea.vmem %s2985, 1122 [#allocation2]
        %v3170 = vld [vmem:[%s3169] ss:$2 sm:$0xff]
        %s3171 = scalar_lea.vmem %s2985, 1138 [#allocation2]
        %v3172 = vld [vmem:[%s3171] ss:$2 sm:$0xff]
        %s3173 = scalar_lea.vmem %s2985, 1202 [#allocation2]
        %v3174 = vld [vmem:[%s3173] ss:$2 sm:$0xff]
        %s3175 = scalar_lea.vmem %s2985, 1218 [#allocation2]
        %v3176 = vld [vmem:[%s3175] ss:$2 sm:$0xff]
        %s3177 = scalar_lea.vmem %s2985, 3 [#allocation2]
        %v3178 = vld [vmem:[%s3177] ss:$2 sm:$0xff]
        %s3179 = scalar_lea.vmem %s2985, 19 [#allocation2]
        %v3180 = vld [vmem:[%s3179] ss:$2 sm:$0xff]
        %s3181 = scalar_lea.vmem %s2985, 83 [#allocation2]
        %v3182 = vld [vmem:[%s3181] ss:$2 sm:$0xff]
        %s3183 = scalar_lea.vmem %s2985, 99 [#allocation2]
        %v3184 = vld [vmem:[%s3183] ss:$2 sm:$0xff]
        %s3185 = scalar_lea.vmem %s2985, 163 [#allocation2]
        %v3186 = vld [vmem:[%s3185] ss:$2 sm:$0xff]
        %s3187 = scalar_lea.vmem %s2985, 179 [#allocation2]
        %v3188 = vld [vmem:[%s3187] ss:$2 sm:$0xff]
        %s3189 = scalar_lea.vmem %s2985, 243 [#allocation2]
        %v3190 = vld [vmem:[%s3189] ss:$2 sm:$0xff]
        %s3191 = scalar_lea.vmem %s2985, 259 [#allocation2]
        %v3192 = vld [vmem:[%s3191] ss:$2 sm:$0xff]
        %s3193 = scalar_lea.vmem %s2985, 323 [#allocation2]
        %v3194 = vld [vmem:[%s3193] ss:$2 sm:$0xff]
        %s3195 = scalar_lea.vmem %s2985, 339 [#allocation2]
        %v3196 = vld [vmem:[%s3195] ss:$2 sm:$0xff]
        %s3197 = scalar_lea.vmem %s2985, 403 [#allocation2]
        %v3198 = vld [vmem:[%s3197] ss:$2 sm:$0xff]
        %s3199 = scalar_lea.vmem %s2985, 419 [#allocation2]
        %v3200 = vld [vmem:[%s3199] ss:$2 sm:$0xff]
        %s3201 = scalar_lea.vmem %s2985, 483 [#allocation2]
        %v3202 = vld [vmem:[%s3201] ss:$2 sm:$0xff]
        %s3203 = scalar_lea.vmem %s2985, 499 [#allocation2]
        %v3204 = vld [vmem:[%s3203] ss:$2 sm:$0xff]
        %s3205 = scalar_lea.vmem %s2985, 563 [#allocation2]
        %v3206 = vld [vmem:[%s3205] ss:$2 sm:$0xff]
        %s3207 = scalar_lea.vmem %s2985, 579 [#allocation2]
        %v3208 = vld [vmem:[%s3207] ss:$2 sm:$0xff]
        %s3209 = scalar_lea.vmem %s2985, 643 [#allocation2]
        %v3210 = vld [vmem:[%s3209] ss:$2 sm:$0xff]
        %s3211 = scalar_lea.vmem %s2985, 659 [#allocation2]
        %v3212 = vld [vmem:[%s3211] ss:$2 sm:$0xff]
        %s3213 = scalar_lea.vmem %s2985, 723 [#allocation2]
        %v3214 = vld [vmem:[%s3213] ss:$2 sm:$0xff]
        %s3215 = scalar_lea.vmem %s2985, 739 [#allocation2]
        %v3216 = vld [vmem:[%s3215] ss:$2 sm:$0xff]
        %s3217 = scalar_lea.vmem %s2985, 803 [#allocation2]
        %v3218 = vld [vmem:[%s3217] ss:$2 sm:$0xff]
        %s3219 = scalar_lea.vmem %s2985, 819 [#allocation2]
        %v3220 = vld [vmem:[%s3219] ss:$2 sm:$0xff]
        %s3221 = scalar_lea.vmem %s2985, 883 [#allocation2]
        %v3222 = vld [vmem:[%s3221] ss:$2 sm:$0xff]
        %s3223 = scalar_lea.vmem %s2985, 899 [#allocation2]
        %v3224 = vld [vmem:[%s3223] ss:$2 sm:$0xff]
        %s3225 = scalar_lea.vmem %s2985, 963 [#allocation2]
        %v3226 = vld [vmem:[%s3225] ss:$2 sm:$0xff]
        %s3227 = scalar_lea.vmem %s2985, 979 [#allocation2]
        %v3228 = vld [vmem:[%s3227] ss:$2 sm:$0xff]
        %s3229 = scalar_lea.vmem %s2985, 1043 [#allocation2]
        %v3230 = vld [vmem:[%s3229] ss:$2 sm:$0xff]
        %s3231 = scalar_lea.vmem %s2985, 1059 [#allocation2]
        %v3232 = vld [vmem:[%s3231] ss:$2 sm:$0xff]
        %s3233 = scalar_lea.vmem %s2985, 1123 [#allocation2]
        %v3234 = vld [vmem:[%s3233] ss:$2 sm:$0xff]
        %s3235 = scalar_lea.vmem %s2985, 1139 [#allocation2]
        %v3236 = vld [vmem:[%s3235] ss:$2 sm:$0xff]
        %s3237 = scalar_lea.vmem %s2985, 1203 [#allocation2]
        %v3238 = vld [vmem:[%s3237] ss:$2 sm:$0xff]
        %s3239 = scalar_lea.vmem %s2985, 1219 [#allocation2]
        %v3240 = vld [vmem:[%s3239] ss:$2 sm:$0xff]
        %s3241 = scalar_lea.vmem %s2985, 4 [#allocation2]
        %v3242 = vld [vmem:[%s3241] ss:$2 sm:$0xff]
        %s3243 = scalar_lea.vmem %s2985, 20 [#allocation2]
        %v3244 = vld [vmem:[%s3243] ss:$2 sm:$0xff]
        %s3245 = scalar_lea.vmem %s2985, 84 [#allocation2]
        %v3246 = vld [vmem:[%s3245] ss:$2 sm:$0xff]
        %s3247 = scalar_lea.vmem %s2985, 100 [#allocation2]
        %v3248 = vld [vmem:[%s3247] ss:$2 sm:$0xff]
        %s3249 = scalar_lea.vmem %s2985, 164 [#allocation2]
        %v3250 = vld [vmem:[%s3249] ss:$2 sm:$0xff]
        %s3251 = scalar_lea.vmem %s2985, 180 [#allocation2]
        %v3252 = vld [vmem:[%s3251] ss:$2 sm:$0xff]
        %s3253 = scalar_lea.vmem %s2985, 244 [#allocation2]
        %v3254 = vld [vmem:[%s3253] ss:$2 sm:$0xff]
        %s3255 = scalar_lea.vmem %s2985, 260 [#allocation2]
        %v3256 = vld [vmem:[%s3255] ss:$2 sm:$0xff]
        %s3257 = scalar_lea.vmem %s2985, 324 [#allocation2]
        %v3258 = vld [vmem:[%s3257] ss:$2 sm:$0xff]
        %s3259 = scalar_lea.vmem %s2985, 340 [#allocation2]
        %v3260 = vld [vmem:[%s3259] ss:$2 sm:$0xff]
        %s3261 = scalar_lea.vmem %s2985, 404 [#allocation2]
        %v3262 = vld [vmem:[%s3261] ss:$2 sm:$0xff]
        %s3263 = scalar_lea.vmem %s2985, 420 [#allocation2]
        %v3264 = vld [vmem:[%s3263] ss:$2 sm:$0xff]
        %s3265 = scalar_lea.vmem %s2985, 484 [#allocation2]
        %v3266 = vld [vmem:[%s3265] ss:$2 sm:$0xff]
        %s3267 = scalar_lea.vmem %s2985, 500 [#allocation2]
        %v3268 = vld [vmem:[%s3267] ss:$2 sm:$0xff]
        %s3269 = scalar_lea.vmem %s2985, 564 [#allocation2]
        %v3270 = vld [vmem:[%s3269] ss:$2 sm:$0xff]
        %s3271 = scalar_lea.vmem %s2985, 580 [#allocation2]
        %v3272 = vld [vmem:[%s3271] ss:$2 sm:$0xff]
        %s3273 = scalar_lea.vmem %s2985, 644 [#allocation2]
        %v3274 = vld [vmem:[%s3273] ss:$2 sm:$0xff]
        %s3275 = scalar_lea.vmem %s2985, 660 [#allocation2]
        %v3276 = vld [vmem:[%s3275] ss:$2 sm:$0xff]
        %s3277 = scalar_lea.vmem %s2985, 724 [#allocation2]
        %v3278 = vld [vmem:[%s3277] ss:$2 sm:$0xff]
        %s3279 = scalar_lea.vmem %s2985, 740 [#allocation2]
        %v3280 = vld [vmem:[%s3279] ss:$2 sm:$0xff]
        %s3281 = scalar_lea.vmem %s2985, 804 [#allocation2]
        %v3282 = vld [vmem:[%s3281] ss:$2 sm:$0xff]
        %s3283 = scalar_lea.vmem %s2985, 820 [#allocation2]
        %v3284 = vld [vmem:[%s3283] ss:$2 sm:$0xff]
        %s3285 = scalar_lea.vmem %s2985, 884 [#allocation2]
        %v3286 = vld [vmem:[%s3285] ss:$2 sm:$0xff]
        %s3287 = scalar_lea.vmem %s2985, 900 [#allocation2]
        %v3288 = vld [vmem:[%s3287] ss:$2 sm:$0xff]
        %s3289 = scalar_lea.vmem %s2985, 964 [#allocation2]
        %v3290 = vld [vmem:[%s3289] ss:$2 sm:$0xff]
        %s3291 = scalar_lea.vmem %s2985, 980 [#allocation2]
        %v3292 = vld [vmem:[%s3291] ss:$2 sm:$0xff]
        %s3293 = scalar_lea.vmem %s2985, 1044 [#allocation2]
        %v3294 = vld [vmem:[%s3293] ss:$2 sm:$0xff]
        %s3295 = scalar_lea.vmem %s2985, 1060 [#allocation2]
        %v3296 = vld [vmem:[%s3295] ss:$2 sm:$0xff]
        %s3297 = scalar_lea.vmem %s2985, 1124 [#allocation2]
        %v3298 = vld [vmem:[%s3297] ss:$2 sm:$0xff]
        %s3299 = scalar_lea.vmem %s2985, 1140 [#allocation2]
        %v3300 = vld [vmem:[%s3299] ss:$2 sm:$0xff]
        %s3301 = scalar_lea.vmem %s2985, 1204 [#allocation2]
        %v3302 = vld [vmem:[%s3301] ss:$2 sm:$0xff]
        %s3303 = scalar_lea.vmem %s2985, 1220 [#allocation2]
        %v3304 = vld [vmem:[%s3303] ss:$2 sm:$0xff]
        %s3305 = scalar_lea.vmem %s2985, 5 [#allocation2]
        %v3306 = vld [vmem:[%s3305] ss:$2 sm:$0xff]
        %s3307 = scalar_lea.vmem %s2985, 21 [#allocation2]
        %v3308 = vld [vmem:[%s3307] ss:$2 sm:$0xff]
        %s3309 = scalar_lea.vmem %s2985, 85 [#allocation2]
        %v3310 = vld [vmem:[%s3309] ss:$2 sm:$0xff]
        %s3311 = scalar_lea.vmem %s2985, 101 [#allocation2]
        %v3312 = vld [vmem:[%s3311] ss:$2 sm:$0xff]
        %s3313 = scalar_lea.vmem %s2985, 165 [#allocation2]
        %v3314 = vld [vmem:[%s3313] ss:$2 sm:$0xff]
        %s3315 = scalar_lea.vmem %s2985, 181 [#allocation2]
        %v3316 = vld [vmem:[%s3315] ss:$2 sm:$0xff]
        %s3317 = scalar_lea.vmem %s2985, 245 [#allocation2]
        %v3318 = vld [vmem:[%s3317] ss:$2 sm:$0xff]
        %s3319 = scalar_lea.vmem %s2985, 261 [#allocation2]
        %v3320 = vld [vmem:[%s3319] ss:$2 sm:$0xff]
        %s3321 = scalar_lea.vmem %s2985, 325 [#allocation2]
        %v3322 = vld [vmem:[%s3321] ss:$2 sm:$0xff]
        %s3323 = scalar_lea.vmem %s2985, 341 [#allocation2]
        %v3324 = vld [vmem:[%s3323] ss:$2 sm:$0xff]
        %s3325 = scalar_lea.vmem %s2985, 405 [#allocation2]
        %v3326 = vld [vmem:[%s3325] ss:$2 sm:$0xff]
        %s3327 = scalar_lea.vmem %s2985, 421 [#allocation2]
        %v3328 = vld [vmem:[%s3327] ss:$2 sm:$0xff]
        %s3329 = scalar_lea.vmem %s2985, 485 [#allocation2]
        %v3330 = vld [vmem:[%s3329] ss:$2 sm:$0xff]
        %s3331 = scalar_lea.vmem %s2985, 501 [#allocation2]
        %v3332 = vld [vmem:[%s3331] ss:$2 sm:$0xff]
        %s3333 = scalar_lea.vmem %s2985, 565 [#allocation2]
        %v3334 = vld [vmem:[%s3333] ss:$2 sm:$0xff]
        %s3335 = scalar_lea.vmem %s2985, 581 [#allocation2]
        %v3336 = vld [vmem:[%s3335] ss:$2 sm:$0xff]
        %s3337 = scalar_lea.vmem %s2985, 645 [#allocation2]
        %v3338 = vld [vmem:[%s3337] ss:$2 sm:$0xff]
        %s3339 = scalar_lea.vmem %s2985, 661 [#allocation2]
        %v3340 = vld [vmem:[%s3339] ss:$2 sm:$0xff]
        %s3341 = scalar_lea.vmem %s2985, 725 [#allocation2]
        %v3342 = vld [vmem:[%s3341] ss:$2 sm:$0xff]
        %s3343 = scalar_lea.vmem %s2985, 741 [#allocation2]
        %v3344 = vld [vmem:[%s3343] ss:$2 sm:$0xff]
        %s3345 = scalar_lea.vmem %s2985, 805 [#allocation2]
        %v3346 = vld [vmem:[%s3345] ss:$2 sm:$0xff]
        %s3347 = scalar_lea.vmem %s2985, 821 [#allocation2]
        %v3348 = vld [vmem:[%s3347] ss:$2 sm:$0xff]
        %s3349 = scalar_lea.vmem %s2985, 885 [#allocation2]
        %v3350 = vld [vmem:[%s3349] ss:$2 sm:$0xff]
        %s3351 = scalar_lea.vmem %s2985, 901 [#allocation2]
        %v3352 = vld [vmem:[%s3351] ss:$2 sm:$0xff]
        %s3353 = scalar_lea.vmem %s2985, 965 [#allocation2]
        %v3354 = vld [vmem:[%s3353] ss:$2 sm:$0xff]
        %s3355 = scalar_lea.vmem %s2985, 981 [#allocation2]
        %v3356 = vld [vmem:[%s3355] ss:$2 sm:$0xff]
        %s3357 = scalar_lea.vmem %s2985, 1045 [#allocation2]
        %v3358 = vld [vmem:[%s3357] ss:$2 sm:$0xff]
        %s3359 = scalar_lea.vmem %s2985, 1061 [#allocation2]
        %v3360 = vld [vmem:[%s3359] ss:$2 sm:$0xff]
        %s3361 = scalar_lea.vmem %s2985, 1125 [#allocation2]
        %v3362 = vld [vmem:[%s3361] ss:$2 sm:$0xff]
        %s3363 = scalar_lea.vmem %s2985, 1141 [#allocation2]
        %v3364 = vld [vmem:[%s3363] ss:$2 sm:$0xff]
        %s3365 = scalar_lea.vmem %s2985, 1205 [#allocation2]
        %v3366 = vld [vmem:[%s3365] ss:$2 sm:$0xff]
        %s3367 = scalar_lea.vmem %s2985, 1221 [#allocation2]
        %v3368 = vld [vmem:[%s3367] ss:$2 sm:$0xff]
        %s3369 = scalar_lea.vmem %s2985, 6 [#allocation2]
        %v3370 = vld [vmem:[%s3369] ss:$2 sm:$0xff]
        %s3371 = scalar_lea.vmem %s2985, 22 [#allocation2]
        %v3372 = vld [vmem:[%s3371] ss:$2 sm:$0xff]
        %s3373 = scalar_lea.vmem %s2985, 86 [#allocation2]
        %v3374 = vld [vmem:[%s3373] ss:$2 sm:$0xff]
        %s3375 = scalar_lea.vmem %s2985, 102 [#allocation2]
        %v3376 = vld [vmem:[%s3375] ss:$2 sm:$0xff]
        %s3377 = scalar_lea.vmem %s2985, 166 [#allocation2]
        %v3378 = vld [vmem:[%s3377] ss:$2 sm:$0xff]
        %s3379 = scalar_lea.vmem %s2985, 182 [#allocation2]
        %v3380 = vld [vmem:[%s3379] ss:$2 sm:$0xff]
        %s3381 = scalar_lea.vmem %s2985, 246 [#allocation2]
        %v3382 = vld [vmem:[%s3381] ss:$2 sm:$0xff]
        %s3383 = scalar_lea.vmem %s2985, 262 [#allocation2]
        %v3384 = vld [vmem:[%s3383] ss:$2 sm:$0xff]
        %s3385 = scalar_lea.vmem %s2985, 326 [#allocation2]
        %v3386 = vld [vmem:[%s3385] ss:$2 sm:$0xff]
        %s3387 = scalar_lea.vmem %s2985, 342 [#allocation2]
        %v3388 = vld [vmem:[%s3387] ss:$2 sm:$0xff]
        %s3389 = scalar_lea.vmem %s2985, 406 [#allocation2]
        %v3390 = vld [vmem:[%s3389] ss:$2 sm:$0xff]
        %s3391 = scalar_lea.vmem %s2985, 422 [#allocation2]
        %v3392 = vld [vmem:[%s3391] ss:$2 sm:$0xff]
        %s3393 = scalar_lea.vmem %s2985, 486 [#allocation2]
        %v3394 = vld [vmem:[%s3393] ss:$2 sm:$0xff]
        %s3395 = scalar_lea.vmem %s2985, 502 [#allocation2]
        %v3396 = vld [vmem:[%s3395] ss:$2 sm:$0xff]
        %s3397 = scalar_lea.vmem %s2985, 566 [#allocation2]
        %v3398 = vld [vmem:[%s3397] ss:$2 sm:$0xff]
        %s3399 = scalar_lea.vmem %s2985, 582 [#allocation2]
        %v3400 = vld [vmem:[%s3399] ss:$2 sm:$0xff]
        %s3401 = scalar_lea.vmem %s2985, 646 [#allocation2]
        %v3402 = vld [vmem:[%s3401] ss:$2 sm:$0xff]
        %s3403 = scalar_lea.vmem %s2985, 662 [#allocation2]
        %v3404 = vld [vmem:[%s3403] ss:$2 sm:$0xff]
        %s3405 = scalar_lea.vmem %s2985, 726 [#allocation2]
        %v3406 = vld [vmem:[%s3405] ss:$2 sm:$0xff]
        %s3407 = scalar_lea.vmem %s2985, 742 [#allocation2]
        %v3408 = vld [vmem:[%s3407] ss:$2 sm:$0xff]
        %s3409 = scalar_lea.vmem %s2985, 806 [#allocation2]
        %v3410 = vld [vmem:[%s3409] ss:$2 sm:$0xff]
        %s3411 = scalar_lea.vmem %s2985, 822 [#allocation2]
        %v3412 = vld [vmem:[%s3411] ss:$2 sm:$0xff]
        %s3413 = scalar_lea.vmem %s2985, 886 [#allocation2]
        %v3414 = vld [vmem:[%s3413] ss:$2 sm:$0xff]
        %s3415 = scalar_lea.vmem %s2985, 902 [#allocation2]
        %v3416 = vld [vmem:[%s3415] ss:$2 sm:$0xff]
        %s3417 = scalar_lea.vmem %s2985, 966 [#allocation2]
        %v3418 = vld [vmem:[%s3417] ss:$2 sm:$0xff]
        %s3419 = scalar_lea.vmem %s2985, 982 [#allocation2]
        %v3420 = vld [vmem:[%s3419] ss:$2 sm:$0xff]
        %s3421 = scalar_lea.vmem %s2985, 1046 [#allocation2]
        %v3422 = vld [vmem:[%s3421] ss:$2 sm:$0xff]
        %s3423 = scalar_lea.vmem %s2985, 1062 [#allocation2]
        %v3424 = vld [vmem:[%s3423] ss:$2 sm:$0xff]
        %s3425 = scalar_lea.vmem %s2985, 1126 [#allocation2]
        %v3426 = vld [vmem:[%s3425] ss:$2 sm:$0xff]
        %s3427 = scalar_lea.vmem %s2985, 1142 [#allocation2]
        %v3428 = vld [vmem:[%s3427] ss:$2 sm:$0xff]
        %s3429 = scalar_lea.vmem %s2985, 1206 [#allocation2]
        %v3430 = vld [vmem:[%s3429] ss:$2 sm:$0xff]
        %s3431 = scalar_lea.vmem %s2985, 1222 [#allocation2]
        %v3432 = vld [vmem:[%s3431] ss:$2 sm:$0xff]
        %s3433 = scalar_lea.vmem [#allocation2], 240
        %v3434 = vld [vmem:[%s3433] ss:$2 sm:$0xff]
        %s3435 = scalar_lea.vmem %s3433, 16 [#allocation2]
        %v3436 = vld [vmem:[%s3435] ss:$2 sm:$0xff]
        %s3437 = scalar_lea.vmem %s3433, 80 [#allocation2]
        %v3438 = vld [vmem:[%s3437] ss:$2 sm:$0xff]
        %s3439 = scalar_lea.vmem %s3433, 96 [#allocation2]
        %v3440 = vld [vmem:[%s3439] ss:$2 sm:$0xff]
        %s3441 = scalar_lea.vmem %s3433, 160 [#allocation2]
        %v3442 = vld [vmem:[%s3441] ss:$2 sm:$0xff]
        %s3443 = scalar_lea.vmem %s3433, 176 [#allocation2]
        %v3444 = vld [vmem:[%s3443] ss:$2 sm:$0xff]
        %s3445 = scalar_lea.vmem %s3433, 240 [#allocation2]
        %v3446 = vld [vmem:[%s3445] ss:$2 sm:$0xff]
        %s3447 = scalar_lea.vmem %s3433, 256 [#allocation2]
        %v3448 = vld [vmem:[%s3447] ss:$2 sm:$0xff]
        %s3449 = scalar_lea.vmem %s3433, 320 [#allocation2]
        %v3450 = vld [vmem:[%s3449] ss:$2 sm:$0xff]
        %s3451 = scalar_lea.vmem %s3433, 336 [#allocation2]
        %v3452 = vld [vmem:[%s3451] ss:$2 sm:$0xff]
        %s3453 = scalar_lea.vmem %s3433, 400 [#allocation2]
        %v3454 = vld [vmem:[%s3453] ss:$2 sm:$0xff]
        %s3455 = scalar_lea.vmem %s3433, 416 [#allocation2]
        %v3456 = vld [vmem:[%s3455] ss:$2 sm:$0xff]
        %s3457 = scalar_lea.vmem %s3433, 480 [#allocation2]
        %v3458 = vld [vmem:[%s3457] ss:$2 sm:$0xff]
        %s3459 = scalar_lea.vmem %s3433, 496 [#allocation2]
        %v3460 = vld [vmem:[%s3459] ss:$2 sm:$0xff]
        %s3461 = scalar_lea.vmem %s3433, 560 [#allocation2]
        %v3462 = vld [vmem:[%s3461] ss:$2 sm:$0xff]
        %s3463 = scalar_lea.vmem %s3433, 576 [#allocation2]
        %v3464 = vld [vmem:[%s3463] ss:$2 sm:$0xff]
        %s3465 = scalar_lea.vmem %s3433, 640 [#allocation2]
        %v3466 = vld [vmem:[%s3465] ss:$2 sm:$0xff]
        %s3467 = scalar_lea.vmem %s3433, 656 [#allocation2]
        %v3468 = vld [vmem:[%s3467] ss:$2 sm:$0xff]
        %s3469 = scalar_lea.vmem %s3433, 720 [#allocation2]
        %v3470 = vld [vmem:[%s3469] ss:$2 sm:$0xff]
        %s3471 = scalar_lea.vmem %s3433, 736 [#allocation2]
        %v3472 = vld [vmem:[%s3471] ss:$2 sm:$0xff]
        %s3473 = scalar_lea.vmem %s3433, 800 [#allocation2]
        %v3474 = vld [vmem:[%s3473] ss:$2 sm:$0xff]
        %s3475 = scalar_lea.vmem %s3433, 816 [#allocation2]
        %v3476 = vld [vmem:[%s3475] ss:$2 sm:$0xff]
        %s3477 = scalar_lea.vmem %s3433, 880 [#allocation2]
        %v3478 = vld [vmem:[%s3477] ss:$2 sm:$0xff]
        %s3479 = scalar_lea.vmem %s3433, 896 [#allocation2]
        %v3480 = vld [vmem:[%s3479] ss:$2 sm:$0xff]
        %s3481 = scalar_lea.vmem %s3433, 960 [#allocation2]
        %v3482 = vld [vmem:[%s3481] ss:$2 sm:$0xff]
        %s3483 = scalar_lea.vmem %s3433, 976 [#allocation2]
        %v3484 = vld [vmem:[%s3483] ss:$2 sm:$0xff]
        %s3485 = scalar_lea.vmem %s3433, 1040 [#allocation2]
        %v3486 = vld [vmem:[%s3485] ss:$2 sm:$0xff]
        %s3487 = scalar_lea.vmem %s3433, 1056 [#allocation2]
        %v3488 = vld [vmem:[%s3487] ss:$2 sm:$0xff]
        %s3489 = scalar_lea.vmem %s3433, 1120 [#allocation2]
        %v3490 = vld [vmem:[%s3489] ss:$2 sm:$0xff]
        %s3491 = scalar_lea.vmem %s3433, 1136 [#allocation2]
        %v3492 = vld [vmem:[%s3491] ss:$2 sm:$0xff]
        %s3493 = scalar_lea.vmem %s3433, 1200 [#allocation2]
        %v3494 = vld [vmem:[%s3493] ss:$2 sm:$0xff]
        %s3495 = scalar_lea.vmem %s3433, 1216 [#allocation2]
        %v3496 = vld [vmem:[%s3495] ss:$2 sm:$0xff]
        %s3497 = scalar_lea.vmem %s3433, 1 [#allocation2]
        %v3498 = vld [vmem:[%s3497] ss:$2 sm:$0xff]
        %s3499 = scalar_lea.vmem %s3433, 17 [#allocation2]
        %v3500 = vld [vmem:[%s3499] ss:$2 sm:$0xff]
        %s3501 = scalar_lea.vmem %s3433, 81 [#allocation2]
        %v3502 = vld [vmem:[%s3501] ss:$2 sm:$0xff]
        %s3503 = scalar_lea.vmem %s3433, 97 [#allocation2]
        %v3504 = vld [vmem:[%s3503] ss:$2 sm:$0xff]
        %s3505 = scalar_lea.vmem %s3433, 161 [#allocation2]
        %v3506 = vld [vmem:[%s3505] ss:$2 sm:$0xff]
        %s3507 = scalar_lea.vmem %s3433, 177 [#allocation2]
        %v3508 = vld [vmem:[%s3507] ss:$2 sm:$0xff]
        %s3509 = scalar_lea.vmem %s3433, 241 [#allocation2]
        %v3510 = vld [vmem:[%s3509] ss:$2 sm:$0xff]
        %s3511 = scalar_lea.vmem %s3433, 257 [#allocation2]
        %v3512 = vld [vmem:[%s3511] ss:$2 sm:$0xff]
        %s3513 = scalar_lea.vmem %s3433, 321 [#allocation2]
        %v3514 = vld [vmem:[%s3513] ss:$2 sm:$0xff]
        %s3515 = scalar_lea.vmem %s3433, 337 [#allocation2]
        %v3516 = vld [vmem:[%s3515] ss:$2 sm:$0xff]
        %s3517 = scalar_lea.vmem %s3433, 401 [#allocation2]
        %v3518 = vld [vmem:[%s3517] ss:$2 sm:$0xff]
        %s3519 = scalar_lea.vmem %s3433, 417 [#allocation2]
        %v3520 = vld [vmem:[%s3519] ss:$2 sm:$0xff]
        %s3521 = scalar_lea.vmem %s3433, 481 [#allocation2]
        %v3522 = vld [vmem:[%s3521] ss:$2 sm:$0xff]
        %s3523 = scalar_lea.vmem %s3433, 497 [#allocation2]
        %v3524 = vld [vmem:[%s3523] ss:$2 sm:$0xff]
        %s3525 = scalar_lea.vmem %s3433, 561 [#allocation2]
        %v3526 = vld [vmem:[%s3525] ss:$2 sm:$0xff]
        %s3527 = scalar_lea.vmem %s3433, 577 [#allocation2]
        %v3528 = vld [vmem:[%s3527] ss:$2 sm:$0xff]
        %s3529 = scalar_lea.vmem %s3433, 641 [#allocation2]
        %v3530 = vld [vmem:[%s3529] ss:$2 sm:$0xff]
        %s3531 = scalar_lea.vmem %s3433, 657 [#allocation2]
        %v3532 = vld [vmem:[%s3531] ss:$2 sm:$0xff]
        %s3533 = scalar_lea.vmem %s3433, 721 [#allocation2]
        %v3534 = vld [vmem:[%s3533] ss:$2 sm:$0xff]
        %s3535 = scalar_lea.vmem %s3433, 737 [#allocation2]
        %v3536 = vld [vmem:[%s3535] ss:$2 sm:$0xff]
        %s3537 = scalar_lea.vmem %s3433, 801 [#allocation2]
        %v3538 = vld [vmem:[%s3537] ss:$2 sm:$0xff]
        %s3539 = scalar_lea.vmem %s3433, 817 [#allocation2]
        %v3540 = vld [vmem:[%s3539] ss:$2 sm:$0xff]
        %s3541 = scalar_lea.vmem %s3433, 881 [#allocation2]
        %v3542 = vld [vmem:[%s3541] ss:$2 sm:$0xff]
        %s3543 = scalar_lea.vmem %s3433, 897 [#allocation2]
        %v3544 = vld [vmem:[%s3543] ss:$2 sm:$0xff]
        %s3545 = scalar_lea.vmem %s3433, 961 [#allocation2]
        %v3546 = vld [vmem:[%s3545] ss:$2 sm:$0xff]
        %s3547 = scalar_lea.vmem %s3433, 977 [#allocation2]
        %v3548 = vld [vmem:[%s3547] ss:$2 sm:$0xff]
        %s3549 = scalar_lea.vmem %s3433, 1041 [#allocation2]
        %v3550 = vld [vmem:[%s3549] ss:$2 sm:$0xff]
        %s3551 = scalar_lea.vmem %s3433, 1057 [#allocation2]
        %v3552 = vld [vmem:[%s3551] ss:$2 sm:$0xff]
        %s3553 = scalar_lea.vmem %s3433, 1121 [#allocation2]
        %v3554 = vld [vmem:[%s3553] ss:$2 sm:$0xff]
        %s3555 = scalar_lea.vmem %s3433, 1137 [#allocation2]
        %v3556 = vld [vmem:[%s3555] ss:$2 sm:$0xff]
        %s3557 = scalar_lea.vmem %s3433, 1201 [#allocation2]
        %v3558 = vld [vmem:[%s3557] ss:$2 sm:$0xff]
        %s3559 = scalar_lea.vmem %s3433, 1217 [#allocation2]
        %v3560 = vld [vmem:[%s3559] ss:$2 sm:$0xff]
        %s3561 = scalar_lea.vmem %s3433, 2 [#allocation2]
        %v3562 = vld [vmem:[%s3561] ss:$2 sm:$0xff]
        %s3563 = scalar_lea.vmem %s3433, 18 [#allocation2]
        %v3564 = vld [vmem:[%s3563] ss:$2 sm:$0xff]
        %s3565 = scalar_lea.vmem %s3433, 82 [#allocation2]
        %v3566 = vld [vmem:[%s3565] ss:$2 sm:$0xff]
        %s3567 = scalar_lea.vmem %s3433, 98 [#allocation2]
        %v3568 = vld [vmem:[%s3567] ss:$2 sm:$0xff]
        %s3569 = scalar_lea.vmem %s3433, 162 [#allocation2]
        %v3570 = vld [vmem:[%s3569] ss:$2 sm:$0xff]
        %s3571 = scalar_lea.vmem %s3433, 178 [#allocation2]
        %v3572 = vld [vmem:[%s3571] ss:$2 sm:$0xff]
        %s3573 = scalar_lea.vmem %s3433, 242 [#allocation2]
        %v3574 = vld [vmem:[%s3573] ss:$2 sm:$0xff]
        %s3575 = scalar_lea.vmem %s3433, 258 [#allocation2]
        %v3576 = vld [vmem:[%s3575] ss:$2 sm:$0xff]
        %s3577 = scalar_lea.vmem %s3433, 322 [#allocation2]
        %v3578 = vld [vmem:[%s3577] ss:$2 sm:$0xff]
        %s3579 = scalar_lea.vmem %s3433, 338 [#allocation2]
        %v3580 = vld [vmem:[%s3579] ss:$2 sm:$0xff]
        %s3581 = scalar_lea.vmem %s3433, 402 [#allocation2]
        %v3582 = vld [vmem:[%s3581] ss:$2 sm:$0xff]
        %s3583 = scalar_lea.vmem %s3433, 418 [#allocation2]
        %v3584 = vld [vmem:[%s3583] ss:$2 sm:$0xff]
        %s3585 = scalar_lea.vmem %s3433, 482 [#allocation2]
        %v3586 = vld [vmem:[%s3585] ss:$2 sm:$0xff]
        %s3587 = scalar_lea.vmem %s3433, 498 [#allocation2]
        %v3588 = vld [vmem:[%s3587] ss:$2 sm:$0xff]
        %s3589 = scalar_lea.vmem %s3433, 562 [#allocation2]
        %v3590 = vld [vmem:[%s3589] ss:$2 sm:$0xff]
        %s3591 = scalar_lea.vmem %s3433, 578 [#allocation2]
        %v3592 = vld [vmem:[%s3591] ss:$2 sm:$0xff]
        %s3593 = scalar_lea.vmem %s3433, 642 [#allocation2]
        %v3594 = vld [vmem:[%s3593] ss:$2 sm:$0xff]
        %s3595 = scalar_lea.vmem %s3433, 658 [#allocation2]
        %v3596 = vld [vmem:[%s3595] ss:$2 sm:$0xff]
        %s3597 = scalar_lea.vmem %s3433, 722 [#allocation2]
        %v3598 = vld [vmem:[%s3597] ss:$2 sm:$0xff]
        %s3599 = scalar_lea.vmem %s3433, 738 [#allocation2]
        %v3600 = vld [vmem:[%s3599] ss:$2 sm:$0xff]
        %s3601 = scalar_lea.vmem %s3433, 802 [#allocation2]
        %v3602 = vld [vmem:[%s3601] ss:$2 sm:$0xff]
        %s3603 = scalar_lea.vmem %s3433, 818 [#allocation2]
        %v3604 = vld [vmem:[%s3603] ss:$2 sm:$0xff]
        %s3605 = scalar_lea.vmem %s3433, 882 [#allocation2]
        %v3606 = vld [vmem:[%s3605] ss:$2 sm:$0xff]
        %s3607 = scalar_lea.vmem %s3433, 898 [#allocation2]
        %v3608 = vld [vmem:[%s3607] ss:$2 sm:$0xff]
        %s3609 = scalar_lea.vmem %s3433, 962 [#allocation2]
        %v3610 = vld [vmem:[%s3609] ss:$2 sm:$0xff]
        %s3611 = scalar_lea.vmem %s3433, 978 [#allocation2]
        %v3612 = vld [vmem:[%s3611] ss:$2 sm:$0xff]
        %s3613 = scalar_lea.vmem %s3433, 1042 [#allocation2]
        %v3614 = vld [vmem:[%s3613] ss:$2 sm:$0xff]
        %s3615 = scalar_lea.vmem %s3433, 1058 [#allocation2]
        %v3616 = vld [vmem:[%s3615] ss:$2 sm:$0xff]
        %s3617 = scalar_lea.vmem %s3433, 1122 [#allocation2]
        %v3618 = vld [vmem:[%s3617] ss:$2 sm:$0xff]
        %s3619 = scalar_lea.vmem %s3433, 1138 [#allocation2]
        %v3620 = vld [vmem:[%s3619] ss:$2 sm:$0xff]
        %s3621 = scalar_lea.vmem %s3433, 1202 [#allocation2]
        %v3622 = vld [vmem:[%s3621] ss:$2 sm:$0xff]
        %s3623 = scalar_lea.vmem %s3433, 1218 [#allocation2]
        %v3624 = vld [vmem:[%s3623] ss:$2 sm:$0xff]
        %s3625 = scalar_lea.vmem %s3433, 3 [#allocation2]
        %v3626 = vld [vmem:[%s3625] ss:$2 sm:$0xff]
        %s3627 = scalar_lea.vmem %s3433, 19 [#allocation2]
        %v3628 = vld [vmem:[%s3627] ss:$2 sm:$0xff]
        %s3629 = scalar_lea.vmem %s3433, 83 [#allocation2]
        %v3630 = vld [vmem:[%s3629] ss:$2 sm:$0xff]
        %s3631 = scalar_lea.vmem %s3433, 99 [#allocation2]
        %v3632 = vld [vmem:[%s3631] ss:$2 sm:$0xff]
        %s3633 = scalar_lea.vmem %s3433, 163 [#allocation2]
        %v3634 = vld [vmem:[%s3633] ss:$2 sm:$0xff]
        %s3635 = scalar_lea.vmem %s3433, 179 [#allocation2]
        %v3636 = vld [vmem:[%s3635] ss:$2 sm:$0xff]
        %s3637 = scalar_lea.vmem %s3433, 243 [#allocation2]
        %v3638 = vld [vmem:[%s3637] ss:$2 sm:$0xff]
        %s3639 = scalar_lea.vmem %s3433, 259 [#allocation2]
        %v3640 = vld [vmem:[%s3639] ss:$2 sm:$0xff]
        %s3641 = scalar_lea.vmem %s3433, 323 [#allocation2]
        %v3642 = vld [vmem:[%s3641] ss:$2 sm:$0xff]
        %s3643 = scalar_lea.vmem %s3433, 339 [#allocation2]
        %v3644 = vld [vmem:[%s3643] ss:$2 sm:$0xff]
        %s3645 = scalar_lea.vmem %s3433, 403 [#allocation2]
        %v3646 = vld [vmem:[%s3645] ss:$2 sm:$0xff]
        %s3647 = scalar_lea.vmem %s3433, 419 [#allocation2]
        %v3648 = vld [vmem:[%s3647] ss:$2 sm:$0xff]
        %s3649 = scalar_lea.vmem %s3433, 483 [#allocation2]
        %v3650 = vld [vmem:[%s3649] ss:$2 sm:$0xff]
        %s3651 = scalar_lea.vmem %s3433, 499 [#allocation2]
        %v3652 = vld [vmem:[%s3651] ss:$2 sm:$0xff]
        %s3653 = scalar_lea.vmem %s3433, 563 [#allocation2]
        %v3654 = vld [vmem:[%s3653] ss:$2 sm:$0xff]
        %s3655 = scalar_lea.vmem %s3433, 579 [#allocation2]
        %v3656 = vld [vmem:[%s3655] ss:$2 sm:$0xff]
        %s3657 = scalar_lea.vmem %s3433, 643 [#allocation2]
        %v3658 = vld [vmem:[%s3657] ss:$2 sm:$0xff]
        %s3659 = scalar_lea.vmem %s3433, 659 [#allocation2]
        %v3660 = vld [vmem:[%s3659] ss:$2 sm:$0xff]
        %s3661 = scalar_lea.vmem %s3433, 723 [#allocation2]
        %v3662 = vld [vmem:[%s3661] ss:$2 sm:$0xff]
        %s3663 = scalar_lea.vmem %s3433, 739 [#allocation2]
        %v3664 = vld [vmem:[%s3663] ss:$2 sm:$0xff]
        %s3665 = scalar_lea.vmem %s3433, 803 [#allocation2]
        %v3666 = vld [vmem:[%s3665] ss:$2 sm:$0xff]
        %s3667 = scalar_lea.vmem %s3433, 819 [#allocation2]
        %v3668 = vld [vmem:[%s3667] ss:$2 sm:$0xff]
        %s3669 = scalar_lea.vmem %s3433, 883 [#allocation2]
        %v3670 = vld [vmem:[%s3669] ss:$2 sm:$0xff]
        %s3671 = scalar_lea.vmem %s3433, 899 [#allocation2]
        %v3672 = vld [vmem:[%s3671] ss:$2 sm:$0xff]
        %s3673 = scalar_lea.vmem %s3433, 963 [#allocation2]
        %v3674 = vld [vmem:[%s3673] ss:$2 sm:$0xff]
        %s3675 = scalar_lea.vmem %s3433, 979 [#allocation2]
        %v3676 = vld [vmem:[%s3675] ss:$2 sm:$0xff]
        %s3677 = scalar_lea.vmem %s3433, 1043 [#allocation2]
        %v3678 = vld [vmem:[%s3677] ss:$2 sm:$0xff]
        %s3679 = scalar_lea.vmem %s3433, 1059 [#allocation2]
        %v3680 = vld [vmem:[%s3679] ss:$2 sm:$0xff]
        %s3681 = scalar_lea.vmem %s3433, 1123 [#allocation2]
        %v3682 = vld [vmem:[%s3681] ss:$2 sm:$0xff]
        %s3683 = scalar_lea.vmem %s3433, 1139 [#allocation2]
        %v3684 = vld [vmem:[%s3683] ss:$2 sm:$0xff]
        %s3685 = scalar_lea.vmem %s3433, 1203 [#allocation2]
        %v3686 = vld [vmem:[%s3685] ss:$2 sm:$0xff]
        %s3687 = scalar_lea.vmem %s3433, 1219 [#allocation2]
        %v3688 = vld [vmem:[%s3687] ss:$2 sm:$0xff]
        %s3689 = scalar_lea.vmem %s3433, 4 [#allocation2]
        %v3690 = vld [vmem:[%s3689] ss:$2 sm:$0xff]
        %s3691 = scalar_lea.vmem %s3433, 20 [#allocation2]
        %v3692 = vld [vmem:[%s3691] ss:$2 sm:$0xff]
        %s3693 = scalar_lea.vmem %s3433, 84 [#allocation2]
        %v3694 = vld [vmem:[%s3693] ss:$2 sm:$0xff]
        %s3695 = scalar_lea.vmem %s3433, 100 [#allocation2]
        %v3696 = vld [vmem:[%s3695] ss:$2 sm:$0xff]
        %s3697 = scalar_lea.vmem %s3433, 164 [#allocation2]
        %v3698 = vld [vmem:[%s3697] ss:$2 sm:$0xff]
        %s3699 = scalar_lea.vmem %s3433, 180 [#allocation2]
        %v3700 = vld [vmem:[%s3699] ss:$2 sm:$0xff]
        %s3701 = scalar_lea.vmem %s3433, 244 [#allocation2]
        %v3702 = vld [vmem:[%s3701] ss:$2 sm:$0xff]
        %s3703 = scalar_lea.vmem %s3433, 260 [#allocation2]
        %v3704 = vld [vmem:[%s3703] ss:$2 sm:$0xff]
        %s3705 = scalar_lea.vmem %s3433, 324 [#allocation2]
        %v3706 = vld [vmem:[%s3705] ss:$2 sm:$0xff]
        %s3707 = scalar_lea.vmem %s3433, 340 [#allocation2]
        %v3708 = vld [vmem:[%s3707] ss:$2 sm:$0xff]
        %s3709 = scalar_lea.vmem %s3433, 404 [#allocation2]
        %v3710 = vld [vmem:[%s3709] ss:$2 sm:$0xff]
        %s3711 = scalar_lea.vmem %s3433, 420 [#allocation2]
        %v3712 = vld [vmem:[%s3711] ss:$2 sm:$0xff]
        %s3713 = scalar_lea.vmem %s3433, 484 [#allocation2]
        %v3714 = vld [vmem:[%s3713] ss:$2 sm:$0xff]
        %s3715 = scalar_lea.vmem %s3433, 500 [#allocation2]
        %v3716 = vld [vmem:[%s3715] ss:$2 sm:$0xff]
        %s3717 = scalar_lea.vmem %s3433, 564 [#allocation2]
        %v3718 = vld [vmem:[%s3717] ss:$2 sm:$0xff]
        %s3719 = scalar_lea.vmem %s3433, 580 [#allocation2]
        %v3720 = vld [vmem:[%s3719] ss:$2 sm:$0xff]
        %s3721 = scalar_lea.vmem %s3433, 644 [#allocation2]
        %v3722 = vld [vmem:[%s3721] ss:$2 sm:$0xff]
        %s3723 = scalar_lea.vmem %s3433, 660 [#allocation2]
        %v3724 = vld [vmem:[%s3723] ss:$2 sm:$0xff]
        %s3725 = scalar_lea.vmem %s3433, 724 [#allocation2]
        %v3726 = vld [vmem:[%s3725] ss:$2 sm:$0xff]
        %s3727 = scalar_lea.vmem %s3433, 740 [#allocation2]
        %v3728 = vld [vmem:[%s3727] ss:$2 sm:$0xff]
        %s3729 = scalar_lea.vmem %s3433, 804 [#allocation2]
        %v3730 = vld [vmem:[%s3729] ss:$2 sm:$0xff]
        %s3731 = scalar_lea.vmem %s3433, 820 [#allocation2]
        %v3732 = vld [vmem:[%s3731] ss:$2 sm:$0xff]
        %s3733 = scalar_lea.vmem %s3433, 884 [#allocation2]
        %v3734 = vld [vmem:[%s3733] ss:$2 sm:$0xff]
        %s3735 = scalar_lea.vmem %s3433, 900 [#allocation2]
        %v3736 = vld [vmem:[%s3735] ss:$2 sm:$0xff]
        %s3737 = scalar_lea.vmem %s3433, 964 [#allocation2]
        %v3738 = vld [vmem:[%s3737] ss:$2 sm:$0xff]
        %s3739 = scalar_lea.vmem %s3433, 980 [#allocation2]
        %v3740 = vld [vmem:[%s3739] ss:$2 sm:$0xff]
        %s3741 = scalar_lea.vmem %s3433, 1044 [#allocation2]
        %v3742 = vld [vmem:[%s3741] ss:$2 sm:$0xff]
        %s3743 = scalar_lea.vmem %s3433, 1060 [#allocation2]
        %v3744 = vld [vmem:[%s3743] ss:$2 sm:$0xff]
        %s3745 = scalar_lea.vmem %s3433, 1124 [#allocation2]
        %v3746 = vld [vmem:[%s3745] ss:$2 sm:$0xff]
        %s3747 = scalar_lea.vmem %s3433, 1140 [#allocation2]
        %v3748 = vld [vmem:[%s3747] ss:$2 sm:$0xff]
        %s3749 = scalar_lea.vmem %s3433, 1204 [#allocation2]
        %v3750 = vld [vmem:[%s3749] ss:$2 sm:$0xff]
        %s3751 = scalar_lea.vmem %s3433, 1220 [#allocation2]
        %v3752 = vld [vmem:[%s3751] ss:$2 sm:$0xff]
        %s3753 = scalar_lea.vmem %s3433, 5 [#allocation2]
        %v3754 = vld [vmem:[%s3753] ss:$2 sm:$0xff]
        %s3755 = scalar_lea.vmem %s3433, 21 [#allocation2]
        %v3756 = vld [vmem:[%s3755] ss:$2 sm:$0xff]
        %s3757 = scalar_lea.vmem %s3433, 85 [#allocation2]
        %v3758 = vld [vmem:[%s3757] ss:$2 sm:$0xff]
        %s3759 = scalar_lea.vmem %s3433, 101 [#allocation2]
        %v3760 = vld [vmem:[%s3759] ss:$2 sm:$0xff]
        %s3761 = scalar_lea.vmem %s3433, 165 [#allocation2]
        %v3762 = vld [vmem:[%s3761] ss:$2 sm:$0xff]
        %s3763 = scalar_lea.vmem %s3433, 181 [#allocation2]
        %v3764 = vld [vmem:[%s3763] ss:$2 sm:$0xff]
        %s3765 = scalar_lea.vmem %s3433, 245 [#allocation2]
        %v3766 = vld [vmem:[%s3765] ss:$2 sm:$0xff]
        %s3767 = scalar_lea.vmem %s3433, 261 [#allocation2]
        %v3768 = vld [vmem:[%s3767] ss:$2 sm:$0xff]
        %s3769 = scalar_lea.vmem %s3433, 325 [#allocation2]
        %v3770 = vld [vmem:[%s3769] ss:$2 sm:$0xff]
        %s3771 = scalar_lea.vmem %s3433, 341 [#allocation2]
        %v3772 = vld [vmem:[%s3771] ss:$2 sm:$0xff]
        %s3773 = scalar_lea.vmem %s3433, 405 [#allocation2]
        %v3774 = vld [vmem:[%s3773] ss:$2 sm:$0xff]
        %s3775 = scalar_lea.vmem %s3433, 421 [#allocation2]
        %v3776 = vld [vmem:[%s3775] ss:$2 sm:$0xff]
        %s3777 = scalar_lea.vmem %s3433, 485 [#allocation2]
        %v3778 = vld [vmem:[%s3777] ss:$2 sm:$0xff]
        %s3779 = scalar_lea.vmem %s3433, 501 [#allocation2]
        %v3780 = vld [vmem:[%s3779] ss:$2 sm:$0xff]
        %s3781 = scalar_lea.vmem %s3433, 565 [#allocation2]
        %v3782 = vld [vmem:[%s3781] ss:$2 sm:$0xff]
        %s3783 = scalar_lea.vmem %s3433, 581 [#allocation2]
        %v3784 = vld [vmem:[%s3783] ss:$2 sm:$0xff]
        %s3785 = scalar_lea.vmem %s3433, 645 [#allocation2]
        %v3786 = vld [vmem:[%s3785] ss:$2 sm:$0xff]
        %s3787 = scalar_lea.vmem %s3433, 661 [#allocation2]
        %v3788 = vld [vmem:[%s3787] ss:$2 sm:$0xff]
        %s3789 = scalar_lea.vmem %s3433, 725 [#allocation2]
        %v3790 = vld [vmem:[%s3789] ss:$2 sm:$0xff]
        %s3791 = scalar_lea.vmem %s3433, 741 [#allocation2]
        %v3792 = vld [vmem:[%s3791] ss:$2 sm:$0xff]
        %s3793 = scalar_lea.vmem %s3433, 805 [#allocation2]
        %v3794 = vld [vmem:[%s3793] ss:$2 sm:$0xff]
        %s3795 = scalar_lea.vmem %s3433, 821 [#allocation2]
        %v3796 = vld [vmem:[%s3795] ss:$2 sm:$0xff]
        %s3797 = scalar_lea.vmem %s3433, 885 [#allocation2]
        %v3798 = vld [vmem:[%s3797] ss:$2 sm:$0xff]
        %s3799 = scalar_lea.vmem %s3433, 901 [#allocation2]
        %v3800 = vld [vmem:[%s3799] ss:$2 sm:$0xff]
        %s3801 = scalar_lea.vmem %s3433, 965 [#allocation2]
        %v3802 = vld [vmem:[%s3801] ss:$2 sm:$0xff]
        %s3803 = scalar_lea.vmem %s3433, 981 [#allocation2]
        %v3804 = vld [vmem:[%s3803] ss:$2 sm:$0xff]
        %s3805 = scalar_lea.vmem %s3433, 1045 [#allocation2]
        %v3806 = vld [vmem:[%s3805] ss:$2 sm:$0xff]
        %s3807 = scalar_lea.vmem %s3433, 1061 [#allocation2]
        %v3808 = vld [vmem:[%s3807] ss:$2 sm:$0xff]
        %s3809 = scalar_lea.vmem %s3433, 1125 [#allocation2]
        %v3810 = vld [vmem:[%s3809] ss:$2 sm:$0xff]
        %s3811 = scalar_lea.vmem %s3433, 1141 [#allocation2]
        %v3812 = vld [vmem:[%s3811] ss:$2 sm:$0xff]
        %s3813 = scalar_lea.vmem %s3433, 1205 [#allocation2]
        %v3814 = vld [vmem:[%s3813] ss:$2 sm:$0xff]
        %s3815 = scalar_lea.vmem %s3433, 1221 [#allocation2]
        %v3816 = vld [vmem:[%s3815] ss:$2 sm:$0xff]
        %s3817 = scalar_lea.vmem %s3433, 6 [#allocation2]
        %v3818 = vld [vmem:[%s3817] ss:$2 sm:$0xff]
        %s3819 = scalar_lea.vmem %s3433, 22 [#allocation2]
        %v3820 = vld [vmem:[%s3819] ss:$2 sm:$0xff]
        %s3821 = scalar_lea.vmem %s3433, 86 [#allocation2]
        %v3822 = vld [vmem:[%s3821] ss:$2 sm:$0xff]
        %s3823 = scalar_lea.vmem %s3433, 102 [#allocation2]
        %v3824 = vld [vmem:[%s3823] ss:$2 sm:$0xff]
        %s3825 = scalar_lea.vmem %s3433, 166 [#allocation2]
        %v3826 = vld [vmem:[%s3825] ss:$2 sm:$0xff]
        %s3827 = scalar_lea.vmem %s3433, 182 [#allocation2]
        %v3828 = vld [vmem:[%s3827] ss:$2 sm:$0xff]
        %s3829 = scalar_lea.vmem %s3433, 246 [#allocation2]
        %v3830 = vld [vmem:[%s3829] ss:$2 sm:$0xff]
        %s3831 = scalar_lea.vmem %s3433, 262 [#allocation2]
        %v3832 = vld [vmem:[%s3831] ss:$2 sm:$0xff]
        %s3833 = scalar_lea.vmem %s3433, 326 [#allocation2]
        %v3834 = vld [vmem:[%s3833] ss:$2 sm:$0xff]
        %s3835 = scalar_lea.vmem %s3433, 342 [#allocation2]
        %v3836 = vld [vmem:[%s3835] ss:$2 sm:$0xff]
        %s3837 = scalar_lea.vmem %s3433, 406 [#allocation2]
        %v3838 = vld [vmem:[%s3837] ss:$2 sm:$0xff]
        %s3839 = scalar_lea.vmem %s3433, 422 [#allocation2]
        %v3840 = vld [vmem:[%s3839] ss:$2 sm:$0xff]
        %s3841 = scalar_lea.vmem %s3433, 486 [#allocation2]
        %v3842 = vld [vmem:[%s3841] ss:$2 sm:$0xff]
        %s3843 = scalar_lea.vmem %s3433, 502 [#allocation2]
        %v3844 = vld [vmem:[%s3843] ss:$2 sm:$0xff]
        %s3845 = scalar_lea.vmem %s3433, 566 [#allocation2]
        %v3846 = vld [vmem:[%s3845] ss:$2 sm:$0xff]
        %s3847 = scalar_lea.vmem %s3433, 582 [#allocation2]
        %v3848 = vld [vmem:[%s3847] ss:$2 sm:$0xff]
        %s3849 = scalar_lea.vmem %s3433, 646 [#allocation2]
        %v3850 = vld [vmem:[%s3849] ss:$2 sm:$0xff]
        %s3851 = scalar_lea.vmem %s3433, 662 [#allocation2]
        %v3852 = vld [vmem:[%s3851] ss:$2 sm:$0xff]
        %s3853 = scalar_lea.vmem %s3433, 726 [#allocation2]
        %v3854 = vld [vmem:[%s3853] ss:$2 sm:$0xff]
        %s3855 = scalar_lea.vmem %s3433, 742 [#allocation2]
        %v3856 = vld [vmem:[%s3855] ss:$2 sm:$0xff]
        %s3857 = scalar_lea.vmem %s3433, 806 [#allocation2]
        %v3858 = vld [vmem:[%s3857] ss:$2 sm:$0xff]
        %s3859 = scalar_lea.vmem %s3433, 822 [#allocation2]
        %v3860 = vld [vmem:[%s3859] ss:$2 sm:$0xff]
        %s3861 = scalar_lea.vmem %s3433, 886 [#allocation2]
        %v3862 = vld [vmem:[%s3861] ss:$2 sm:$0xff]
        %s3863 = scalar_lea.vmem %s3433, 902 [#allocation2]
        %v3864 = vld [vmem:[%s3863] ss:$2 sm:$0xff]
        %s3865 = scalar_lea.vmem %s3433, 966 [#allocation2]
        %v3866 = vld [vmem:[%s3865] ss:$2 sm:$0xff]
        %s3867 = scalar_lea.vmem %s3433, 982 [#allocation2]
        %v3868 = vld [vmem:[%s3867] ss:$2 sm:$0xff]
        %s3869 = scalar_lea.vmem %s3433, 1046 [#allocation2]
        %v3870 = vld [vmem:[%s3869] ss:$2 sm:$0xff]
        %s3871 = scalar_lea.vmem %s3433, 1062 [#allocation2]
        %v3872 = vld [vmem:[%s3871] ss:$2 sm:$0xff]
        %s3873 = scalar_lea.vmem %s3433, 1126 [#allocation2]
        %v3874 = vld [vmem:[%s3873] ss:$2 sm:$0xff]
        %s3875 = scalar_lea.vmem %s3433, 1142 [#allocation2]
        %v3876 = vld [vmem:[%s3875] ss:$2 sm:$0xff]
        %s3877 = scalar_lea.vmem %s3433, 1206 [#allocation2]
        %v3878 = vld [vmem:[%s3877] ss:$2 sm:$0xff]
        %s3879 = scalar_lea.vmem %s3433, 1222 [#allocation2]
        %v3880 = vld [vmem:[%s3879] ss:$2 sm:$0xff]
        %3913 = vrot.lane.b32.xlu0 %v811, 1
        %v3914 = vpop.permute.xlu0 %3913
        %3915 = vrot.lane.b32.xlu0 %v813, 1
        %v3916 = vpop.permute.xlu0 %3915
        %3917 = vrot.lane.b32.xlu0 %v815, 1
        %v3918 = vpop.permute.xlu0 %3917
        %3919 = vrot.lane.b32.xlu0 %v817, 1
        %v3920 = vpop.permute.xlu0 %3919
        %3921 = vrot.lane.b32.xlu0 %v819, 1
        %v3922 = vpop.permute.xlu0 %3921
        %3923 = vrot.lane.b32.xlu0 %v821, 1
        %v3924 = vpop.permute.xlu0 %3923
        %3925 = vrot.lane.b32.xlu0 %v823, 1
        %v3926 = vpop.permute.xlu0 %3925
        %3927 = vrot.lane.b32.xlu0 %v825, 1
        %v3928 = vpop.permute.xlu0 %3927
        %3929 = vrot.lane.b32.xlu0 %v827, 1
        %v3930 = vpop.permute.xlu0 %3929
        %3931 = vrot.lane.b32.xlu0 %v829, 1
        %v3932 = vpop.permute.xlu0 %3931
        %3933 = vrot.lane.b32.xlu0 %v831, 1
        %v3934 = vpop.permute.xlu0 %3933
        %3935 = vrot.lane.b32.xlu0 %v833, 1
        %v3936 = vpop.permute.xlu0 %3935
        %3937 = vrot.lane.b32.xlu0 %v835, 1
        %v3938 = vpop.permute.xlu0 %3937
        %3939 = vrot.lane.b32.xlu0 %v837, 1
        %v3940 = vpop.permute.xlu0 %3939
        %3941 = vrot.lane.b32.xlu0 %v839, 1
        %v3942 = vpop.permute.xlu0 %3941
        %3943 = vrot.lane.b32.xlu0 %v841, 1
        %v3944 = vpop.permute.xlu0 %3943
        %3945 = vrot.lane.b32.xlu0 %v843, 1
        %v3946 = vpop.permute.xlu0 %3945
        %3947 = vrot.lane.b32.xlu0 %v845, 1
        %v3948 = vpop.permute.xlu0 %3947
        %3949 = vrot.lane.b32.xlu0 %v847, 1
        %v3950 = vpop.permute.xlu0 %3949
        %3951 = vrot.lane.b32.xlu0 %v849, 1
        %v3952 = vpop.permute.xlu0 %3951
        %3953 = vrot.lane.b32.xlu0 %v851, 1
        %v3954 = vpop.permute.xlu0 %3953
        %3955 = vrot.lane.b32.xlu0 %v853, 1
        %v3956 = vpop.permute.xlu0 %3955
        %3957 = vrot.lane.b32.xlu0 %v855, 1
        %v3958 = vpop.permute.xlu0 %3957
        %3959 = vrot.lane.b32.xlu0 %v857, 1
        %v3960 = vpop.permute.xlu0 %3959
        %3961 = vrot.lane.b32.xlu0 %v859, 1
        %v3962 = vpop.permute.xlu0 %3961
        %3963 = vrot.lane.b32.xlu0 %v861, 1
        %v3964 = vpop.permute.xlu0 %3963
        %3965 = vrot.lane.b32.xlu0 %v863, 1
        %v3966 = vpop.permute.xlu0 %3965
        %3967 = vrot.lane.b32.xlu0 %v865, 1
        %v3968 = vpop.permute.xlu0 %3967
        %3969 = vrot.lane.b32.xlu0 %v867, 1
        %v3970 = vpop.permute.xlu0 %3969
        %3971 = vrot.lane.b32.xlu0 %v869, 1
        %v3972 = vpop.permute.xlu0 %3971
        %3973 = vrot.lane.b32.xlu0 %v871, 1
        %v3974 = vpop.permute.xlu0 %3973
        %3975 = vrot.lane.b32.xlu0 %v873, 1
        %v3976 = vpop.permute.xlu0 %3975
        %4041 = vrot.lane.b32.xlu0 %v875, 2
        %v4042 = vpop.permute.xlu0 %4041
        %4043 = vrot.lane.b32.xlu0 %v877, 2
        %v4044 = vpop.permute.xlu0 %4043
        %4045 = vrot.lane.b32.xlu0 %v879, 2
        %v4046 = vpop.permute.xlu0 %4045
        %4047 = vrot.lane.b32.xlu0 %v881, 2
        %v4048 = vpop.permute.xlu0 %4047
        %4049 = vrot.lane.b32.xlu0 %v883, 2
        %v4050 = vpop.permute.xlu0 %4049
        %4051 = vrot.lane.b32.xlu0 %v885, 2
        %v4052 = vpop.permute.xlu0 %4051
        %4053 = vrot.lane.b32.xlu0 %v887, 2
        %v4054 = vpop.permute.xlu0 %4053
        %4055 = vrot.lane.b32.xlu0 %v889, 2
        %v4056 = vpop.permute.xlu0 %4055
        %4057 = vrot.lane.b32.xlu0 %v891, 2
        %v4058 = vpop.permute.xlu0 %4057
        %4059 = vrot.lane.b32.xlu0 %v893, 2
        %v4060 = vpop.permute.xlu0 %4059
        %4061 = vrot.lane.b32.xlu0 %v895, 2
        %v4062 = vpop.permute.xlu0 %4061
        %4063 = vrot.lane.b32.xlu0 %v897, 2
        %v4064 = vpop.permute.xlu0 %4063
        %4065 = vrot.lane.b32.xlu0 %v899, 2
        %v4066 = vpop.permute.xlu0 %4065
        %4067 = vrot.lane.b32.xlu0 %v901, 2
        %v4068 = vpop.permute.xlu0 %4067
        %4069 = vrot.lane.b32.xlu0 %v903, 2
        %v4070 = vpop.permute.xlu0 %4069
        %4071 = vrot.lane.b32.xlu0 %v905, 2
        %v4072 = vpop.permute.xlu0 %4071
        %4073 = vrot.lane.b32.xlu0 %v907, 2
        %v4074 = vpop.permute.xlu0 %4073
        %4075 = vrot.lane.b32.xlu0 %v909, 2
        %v4076 = vpop.permute.xlu0 %4075
        %4077 = vrot.lane.b32.xlu0 %v911, 2
        %v4078 = vpop.permute.xlu0 %4077
        %4079 = vrot.lane.b32.xlu0 %v913, 2
        %v4080 = vpop.permute.xlu0 %4079
        %4081 = vrot.lane.b32.xlu0 %v915, 2
        %v4082 = vpop.permute.xlu0 %4081
        %4083 = vrot.lane.b32.xlu0 %v917, 2
        %v4084 = vpop.permute.xlu0 %4083
        %4085 = vrot.lane.b32.xlu0 %v919, 2
        %v4086 = vpop.permute.xlu0 %4085
        %4087 = vrot.lane.b32.xlu0 %v921, 2
        %v4088 = vpop.permute.xlu0 %4087
        %4089 = vrot.lane.b32.xlu0 %v923, 2
        %v4090 = vpop.permute.xlu0 %4089
        %4091 = vrot.lane.b32.xlu0 %v925, 2
        %v4092 = vpop.permute.xlu0 %4091
        %4093 = vrot.lane.b32.xlu0 %v927, 2
        %v4094 = vpop.permute.xlu0 %4093
        %4095 = vrot.lane.b32.xlu0 %v929, 2
        %v4096 = vpop.permute.xlu0 %4095
        %4097 = vrot.lane.b32.xlu0 %v931, 2
        %v4098 = vpop.permute.xlu0 %4097
        %4099 = vrot.lane.b32.xlu0 %v933, 2
        %v4100 = vpop.permute.xlu0 %4099
        %4101 = vrot.lane.b32.xlu0 %v935, 2
        %v4102 = vpop.permute.xlu0 %4101
        %4103 = vrot.lane.b32.xlu0 %v937, 2
        %v4104 = vpop.permute.xlu0 %4103
        %4169 = vrot.lane.b32.xlu0 %v939, 3
        %v4170 = vpop.permute.xlu0 %4169
        %4171 = vrot.lane.b32.xlu0 %v941, 3
        %v4172 = vpop.permute.xlu0 %4171
        %4173 = vrot.lane.b32.xlu0 %v943, 3
        %v4174 = vpop.permute.xlu0 %4173
        %4175 = vrot.lane.b32.xlu0 %v945, 3
        %v4176 = vpop.permute.xlu0 %4175
        %4177 = vrot.lane.b32.xlu0 %v947, 3
        %v4178 = vpop.permute.xlu0 %4177
        %4179 = vrot.lane.b32.xlu0 %v949, 3
        %v4180 = vpop.permute.xlu0 %4179
        %4181 = vrot.lane.b32.xlu0 %v951, 3
        %v4182 = vpop.permute.xlu0 %4181
        %4183 = vrot.lane.b32.xlu0 %v953, 3
        %v4184 = vpop.permute.xlu0 %4183
        %4185 = vrot.lane.b32.xlu0 %v955, 3
        %v4186 = vpop.permute.xlu0 %4185
        %4187 = vrot.lane.b32.xlu0 %v957, 3
        %v4188 = vpop.permute.xlu0 %4187
        %4189 = vrot.lane.b32.xlu0 %v959, 3
        %v4190 = vpop.permute.xlu0 %4189
        %4191 = vrot.lane.b32.xlu0 %v961, 3
        %v4192 = vpop.permute.xlu0 %4191
        %4193 = vrot.lane.b32.xlu0 %v963, 3
        %v4194 = vpop.permute.xlu0 %4193
        %4195 = vrot.lane.b32.xlu0 %v965, 3
        %v4196 = vpop.permute.xlu0 %4195
        %4197 = vrot.lane.b32.xlu0 %v967, 3
        %v4198 = vpop.permute.xlu0 %4197
        %4199 = vrot.lane.b32.xlu0 %v969, 3
        %v4200 = vpop.permute.xlu0 %4199
        %4201 = vrot.lane.b32.xlu0 %v971, 3
        %v4202 = vpop.permute.xlu0 %4201
        %4203 = vrot.lane.b32.xlu0 %v973, 3
        %v4204 = vpop.permute.xlu0 %4203
        %4205 = vrot.lane.b32.xlu0 %v975, 3
        %v4206 = vpop.permute.xlu0 %4205
        %4207 = vrot.lane.b32.xlu0 %v977, 3
        %v4208 = vpop.permute.xlu0 %4207
        %4209 = vrot.lane.b32.xlu0 %v979, 3
        %v4210 = vpop.permute.xlu0 %4209
        %4211 = vrot.lane.b32.xlu0 %v981, 3
        %v4212 = vpop.permute.xlu0 %4211
        %4213 = vrot.lane.b32.xlu0 %v983, 3
        %v4214 = vpop.permute.xlu0 %4213
        %4215 = vrot.lane.b32.xlu0 %v985, 3
        %v4216 = vpop.permute.xlu0 %4215
        %4217 = vrot.lane.b32.xlu0 %v987, 3
        %v4218 = vpop.permute.xlu0 %4217
        %4219 = vrot.lane.b32.xlu0 %v989, 3
        %v4220 = vpop.permute.xlu0 %4219
        %4221 = vrot.lane.b32.xlu0 %v991, 3
        %v4222 = vpop.permute.xlu0 %4221
        %4223 = vrot.lane.b32.xlu0 %v993, 3
        %v4224 = vpop.permute.xlu0 %4223
        %4225 = vrot.lane.b32.xlu0 %v995, 3
        %v4226 = vpop.permute.xlu0 %4225
        %4227 = vrot.lane.b32.xlu0 %v997, 3
        %v4228 = vpop.permute.xlu0 %4227
        %4229 = vrot.lane.b32.xlu0 %v999, 3
        %v4230 = vpop.permute.xlu0 %4229
        %4231 = vrot.lane.b32.xlu0 %v1001, 3
        %v4232 = vpop.permute.xlu0 %4231
        %4297 = vrot.lane.b32.xlu0 %v1003, 4
        %v4298 = vpop.permute.xlu0 %4297
        %4299 = vrot.lane.b32.xlu0 %v1005, 4
        %v4300 = vpop.permute.xlu0 %4299
        %4301 = vrot.lane.b32.xlu0 %v1007, 4
        %v4302 = vpop.permute.xlu0 %4301
        %4303 = vrot.lane.b32.xlu0 %v1009, 4
        %v4304 = vpop.permute.xlu0 %4303
        %4305 = vrot.lane.b32.xlu0 %v1011, 4
        %v4306 = vpop.permute.xlu0 %4305
        %4307 = vrot.lane.b32.xlu0 %v1013, 4
        %v4308 = vpop.permute.xlu0 %4307
        %4309 = vrot.lane.b32.xlu0 %v1015, 4
        %v4310 = vpop.permute.xlu0 %4309
        %4311 = vrot.lane.b32.xlu0 %v1017, 4
        %v4312 = vpop.permute.xlu0 %4311
        %4313 = vrot.lane.b32.xlu0 %v1019, 4
        %v4314 = vpop.permute.xlu0 %4313
        %4315 = vrot.lane.b32.xlu0 %v1021, 4
        %v4316 = vpop.permute.xlu0 %4315
        %4317 = vrot.lane.b32.xlu0 %v1023, 4
        %v4318 = vpop.permute.xlu0 %4317
        %4319 = vrot.lane.b32.xlu0 %v1025, 4
        %v4320 = vpop.permute.xlu0 %4319
        %4321 = vrot.lane.b32.xlu0 %v1027, 4
        %v4322 = vpop.permute.xlu0 %4321
        %4323 = vrot.lane.b32.xlu0 %v1029, 4
        %v4324 = vpop.permute.xlu0 %4323
        %4325 = vrot.lane.b32.xlu0 %v1031, 4
        %v4326 = vpop.permute.xlu0 %4325
        %4327 = vrot.lane.b32.xlu0 %v1033, 4
        %v4328 = vpop.permute.xlu0 %4327
        %4329 = vrot.lane.b32.xlu0 %v1035, 4
        %v4330 = vpop.permute.xlu0 %4329
        %4331 = vrot.lane.b32.xlu0 %v1037, 4
        %v4332 = vpop.permute.xlu0 %4331
        %4333 = vrot.lane.b32.xlu0 %v1039, 4
        %v4334 = vpop.permute.xlu0 %4333
        %4335 = vrot.lane.b32.xlu0 %v1041, 4
        %v4336 = vpop.permute.xlu0 %4335
        %4337 = vrot.lane.b32.xlu0 %v1043, 4
        %v4338 = vpop.permute.xlu0 %4337
        %4339 = vrot.lane.b32.xlu0 %v1045, 4
        %v4340 = vpop.permute.xlu0 %4339
        %4341 = vrot.lane.b32.xlu0 %v1047, 4
        %v4342 = vpop.permute.xlu0 %4341
        %4343 = vrot.lane.b32.xlu0 %v1049, 4
        %v4344 = vpop.permute.xlu0 %4343
        %4345 = vrot.lane.b32.xlu0 %v1051, 4
        %v4346 = vpop.permute.xlu0 %4345
        %4347 = vrot.lane.b32.xlu0 %v1053, 4
        %v4348 = vpop.permute.xlu0 %4347
        %4349 = vrot.lane.b32.xlu0 %v1055, 4
        %v4350 = vpop.permute.xlu0 %4349
        %4351 = vrot.lane.b32.xlu0 %v1057, 4
        %v4352 = vpop.permute.xlu0 %4351
        %4353 = vrot.lane.b32.xlu0 %v1059, 4
        %v4354 = vpop.permute.xlu0 %4353
        %4355 = vrot.lane.b32.xlu0 %v1061, 4
        %v4356 = vpop.permute.xlu0 %4355
        %4357 = vrot.lane.b32.xlu0 %v1063, 4
        %v4358 = vpop.permute.xlu0 %4357
        %4359 = vrot.lane.b32.xlu0 %v1065, 4
        %v4360 = vpop.permute.xlu0 %4359
        %4425 = vrot.lane.b32.xlu0 %v1067, 5
        %v4426 = vpop.permute.xlu0 %4425
        %4427 = vrot.lane.b32.xlu0 %v1069, 5
        %v4428 = vpop.permute.xlu0 %4427
        %4429 = vrot.lane.b32.xlu0 %v1071, 5
        %v4430 = vpop.permute.xlu0 %4429
        %4431 = vrot.lane.b32.xlu0 %v1073, 5
        %v4432 = vpop.permute.xlu0 %4431
        %4433 = vrot.lane.b32.xlu0 %v1075, 5
        %v4434 = vpop.permute.xlu0 %4433
        %4435 = vrot.lane.b32.xlu0 %v1077, 5
        %v4436 = vpop.permute.xlu0 %4435
        %4437 = vrot.lane.b32.xlu0 %v1079, 5
        %v4438 = vpop.permute.xlu0 %4437
        %4439 = vrot.lane.b32.xlu0 %v1081, 5
        %v4440 = vpop.permute.xlu0 %4439
        %4441 = vrot.lane.b32.xlu0 %v1083, 5
        %v4442 = vpop.permute.xlu0 %4441
        %4443 = vrot.lane.b32.xlu0 %v1085, 5
        %v4444 = vpop.permute.xlu0 %4443
        %4445 = vrot.lane.b32.xlu0 %v1087, 5
        %v4446 = vpop.permute.xlu0 %4445
        %4447 = vrot.lane.b32.xlu0 %v1089, 5
        %v4448 = vpop.permute.xlu0 %4447
        %4449 = vrot.lane.b32.xlu0 %v1091, 5
        %v4450 = vpop.permute.xlu0 %4449
        %4451 = vrot.lane.b32.xlu0 %v1093, 5
        %v4452 = vpop.permute.xlu0 %4451
        %4453 = vrot.lane.b32.xlu0 %v1095, 5
        %v4454 = vpop.permute.xlu0 %4453
        %4455 = vrot.lane.b32.xlu0 %v1097, 5
        %v4456 = vpop.permute.xlu0 %4455
        %4457 = vrot.lane.b32.xlu0 %v1099, 5
        %v4458 = vpop.permute.xlu0 %4457
        %4459 = vrot.lane.b32.xlu0 %v1101, 5
        %v4460 = vpop.permute.xlu0 %4459
        %4461 = vrot.lane.b32.xlu0 %v1103, 5
        %v4462 = vpop.permute.xlu0 %4461
        %4463 = vrot.lane.b32.xlu0 %v1105, 5
        %v4464 = vpop.permute.xlu0 %4463
        %4465 = vrot.lane.b32.xlu0 %v1107, 5
        %v4466 = vpop.permute.xlu0 %4465
        %4467 = vrot.lane.b32.xlu0 %v1109, 5
        %v4468 = vpop.permute.xlu0 %4467
        %4469 = vrot.lane.b32.xlu0 %v1111, 5
        %v4470 = vpop.permute.xlu0 %4469
        %4471 = vrot.lane.b32.xlu0 %v1113, 5
        %v4472 = vpop.permute.xlu0 %4471
        %4473 = vrot.lane.b32.xlu0 %v1115, 5
        %v4474 = vpop.permute.xlu0 %4473
        %4475 = vrot.lane.b32.xlu0 %v1117, 5
        %v4476 = vpop.permute.xlu0 %4475
        %4477 = vrot.lane.b32.xlu0 %v1119, 5
        %v4478 = vpop.permute.xlu0 %4477
        %4479 = vrot.lane.b32.xlu0 %v1121, 5
        %v4480 = vpop.permute.xlu0 %4479
        %4481 = vrot.lane.b32.xlu0 %v1123, 5
        %v4482 = vpop.permute.xlu0 %4481
        %4483 = vrot.lane.b32.xlu0 %v1125, 5
        %v4484 = vpop.permute.xlu0 %4483
        %4485 = vrot.lane.b32.xlu0 %v1127, 5
        %v4486 = vpop.permute.xlu0 %4485
        %4487 = vrot.lane.b32.xlu0 %v1129, 5
        %v4488 = vpop.permute.xlu0 %4487
        %4553 = vrot.lane.b32.xlu0 %v1131, 6
        %v4554 = vpop.permute.xlu0 %4553
        %4555 = vrot.lane.b32.xlu0 %v1133, 6
        %v4556 = vpop.permute.xlu0 %4555
        %4557 = vrot.lane.b32.xlu0 %v1135, 6
        %v4558 = vpop.permute.xlu0 %4557
        %4559 = vrot.lane.b32.xlu0 %v1137, 6
        %v4560 = vpop.permute.xlu0 %4559
        %4561 = vrot.lane.b32.xlu0 %v1139, 6
        %v4562 = vpop.permute.xlu0 %4561
        %4563 = vrot.lane.b32.xlu0 %v1141, 6
        %v4564 = vpop.permute.xlu0 %4563
        %4565 = vrot.lane.b32.xlu0 %v1143, 6
        %v4566 = vpop.permute.xlu0 %4565
        %4567 = vrot.lane.b32.xlu0 %v1145, 6
        %v4568 = vpop.permute.xlu0 %4567
        %4569 = vrot.lane.b32.xlu0 %v1147, 6
        %v4570 = vpop.permute.xlu0 %4569
        %4571 = vrot.lane.b32.xlu0 %v1149, 6
        %v4572 = vpop.permute.xlu0 %4571
        %4573 = vrot.lane.b32.xlu0 %v1151, 6
        %v4574 = vpop.permute.xlu0 %4573
        %4575 = vrot.lane.b32.xlu0 %v1153, 6
        %v4576 = vpop.permute.xlu0 %4575
        %4577 = vrot.lane.b32.xlu0 %v1155, 6
        %v4578 = vpop.permute.xlu0 %4577
        %4579 = vrot.lane.b32.xlu0 %v1157, 6
        %v4580 = vpop.permute.xlu0 %4579
        %4581 = vrot.lane.b32.xlu0 %v1159, 6
        %v4582 = vpop.permute.xlu0 %4581
        %4583 = vrot.lane.b32.xlu0 %v1161, 6
        %v4584 = vpop.permute.xlu0 %4583
        %4585 = vrot.lane.b32.xlu0 %v1163, 6
        %v4586 = vpop.permute.xlu0 %4585
        %4587 = vrot.lane.b32.xlu0 %v1165, 6
        %v4588 = vpop.permute.xlu0 %4587
        %4589 = vrot.lane.b32.xlu0 %v1167, 6
        %v4590 = vpop.permute.xlu0 %4589
        %4591 = vrot.lane.b32.xlu0 %v1169, 6
        %v4592 = vpop.permute.xlu0 %4591
        %4593 = vrot.lane.b32.xlu0 %v1171, 6
        %v4594 = vpop.permute.xlu0 %4593
        %4595 = vrot.lane.b32.xlu0 %v1173, 6
        %v4596 = vpop.permute.xlu0 %4595
        %4597 = vrot.lane.b32.xlu0 %v1175, 6
        %v4598 = vpop.permute.xlu0 %4597
        %4599 = vrot.lane.b32.xlu0 %v1177, 6
        %v4600 = vpop.permute.xlu0 %4599
        %4601 = vrot.lane.b32.xlu0 %v1179, 6
        %v4602 = vpop.permute.xlu0 %4601
        %4603 = vrot.lane.b32.xlu0 %v1181, 6
        %v4604 = vpop.permute.xlu0 %4603
        %4605 = vrot.lane.b32.xlu0 %v1183, 6
        %v4606 = vpop.permute.xlu0 %4605
        %4607 = vrot.lane.b32.xlu0 %v1185, 6
        %v4608 = vpop.permute.xlu0 %4607
        %4609 = vrot.lane.b32.xlu0 %v1187, 6
        %v4610 = vpop.permute.xlu0 %4609
        %4611 = vrot.lane.b32.xlu0 %v1189, 6
        %v4612 = vpop.permute.xlu0 %4611
        %4613 = vrot.lane.b32.xlu0 %v1191, 6
        %v4614 = vpop.permute.xlu0 %4613
        %4615 = vrot.lane.b32.xlu0 %v1193, 6
        %v4616 = vpop.permute.xlu0 %4615
        %4681 = vrot.lane.b32.xlu0 %v1195, 7
        %v4682 = vpop.permute.xlu0 %4681
        %4683 = vrot.lane.b32.xlu0 %v1197, 7
        %v4684 = vpop.permute.xlu0 %4683
        %4685 = vrot.lane.b32.xlu0 %v1199, 7
        %v4686 = vpop.permute.xlu0 %4685
        %4687 = vrot.lane.b32.xlu0 %v1201, 7
        %v4688 = vpop.permute.xlu0 %4687
        %4689 = vrot.lane.b32.xlu0 %v1203, 7
        %v4690 = vpop.permute.xlu0 %4689
        %4691 = vrot.lane.b32.xlu0 %v1205, 7
        %v4692 = vpop.permute.xlu0 %4691
        %4693 = vrot.lane.b32.xlu0 %v1207, 7
        %v4694 = vpop.permute.xlu0 %4693
        %4695 = vrot.lane.b32.xlu0 %v1209, 7
        %v4696 = vpop.permute.xlu0 %4695
        %4697 = vrot.lane.b32.xlu0 %v1211, 7
        %v4698 = vpop.permute.xlu0 %4697
        %4699 = vrot.lane.b32.xlu0 %v1213, 7
        %v4700 = vpop.permute.xlu0 %4699
        %4701 = vrot.lane.b32.xlu0 %v1215, 7
        %v4702 = vpop.permute.xlu0 %4701
        %4703 = vrot.lane.b32.xlu0 %v1217, 7
        %v4704 = vpop.permute.xlu0 %4703
        %4705 = vrot.lane.b32.xlu0 %v1219, 7
        %v4706 = vpop.permute.xlu0 %4705
        %4707 = vrot.lane.b32.xlu0 %v1221, 7
        %v4708 = vpop.permute.xlu0 %4707
        %4709 = vrot.lane.b32.xlu0 %v1223, 7
        %v4710 = vpop.permute.xlu0 %4709
        %4711 = vrot.lane.b32.xlu0 %v1225, 7
        %v4712 = vpop.permute.xlu0 %4711
        %4713 = vrot.lane.b32.xlu0 %v1227, 7
        %v4714 = vpop.permute.xlu0 %4713
        %4715 = vrot.lane.b32.xlu0 %v1229, 7
        %v4716 = vpop.permute.xlu0 %4715
        %4717 = vrot.lane.b32.xlu0 %v1231, 7
        %v4718 = vpop.permute.xlu0 %4717
        %4719 = vrot.lane.b32.xlu0 %v1233, 7
        %v4720 = vpop.permute.xlu0 %4719
        %4721 = vrot.lane.b32.xlu0 %v1235, 7
        %v4722 = vpop.permute.xlu0 %4721
        %4723 = vrot.lane.b32.xlu0 %v1237, 7
        %v4724 = vpop.permute.xlu0 %4723
        %4725 = vrot.lane.b32.xlu0 %v1239, 7
        %v4726 = vpop.permute.xlu0 %4725
        %4727 = vrot.lane.b32.xlu0 %v1241, 7
        %v4728 = vpop.permute.xlu0 %4727
        %4729 = vrot.lane.b32.xlu0 %v1243, 7
        %v4730 = vpop.permute.xlu0 %4729
        %4731 = vrot.lane.b32.xlu0 %v1245, 7
        %v4732 = vpop.permute.xlu0 %4731
        %4733 = vrot.lane.b32.xlu0 %v1247, 7
        %v4734 = vpop.permute.xlu0 %4733
        %4735 = vrot.lane.b32.xlu0 %v1249, 7
        %v4736 = vpop.permute.xlu0 %4735
        %4737 = vrot.lane.b32.xlu0 %v1251, 7
        %v4738 = vpop.permute.xlu0 %4737
        %4739 = vrot.lane.b32.xlu0 %v1253, 7
        %v4740 = vpop.permute.xlu0 %4739
        %4741 = vrot.lane.b32.xlu0 %v1255, 7
        %v4742 = vpop.permute.xlu0 %4741
        %4743 = vrot.lane.b32.xlu0 %v1257, 7
        %v4744 = vpop.permute.xlu0 %4743
        %4809 = vrot.lane.b32.xlu0 %v1259, 8
        %v4810 = vpop.permute.xlu0 %4809
        %4811 = vrot.lane.b32.xlu0 %v1261, 8
        %v4812 = vpop.permute.xlu0 %4811
        %4813 = vrot.lane.b32.xlu0 %v1263, 8
        %v4814 = vpop.permute.xlu0 %4813
        %4815 = vrot.lane.b32.xlu0 %v1265, 8
        %v4816 = vpop.permute.xlu0 %4815
        %4817 = vrot.lane.b32.xlu0 %v1267, 8
        %v4818 = vpop.permute.xlu0 %4817
        %4819 = vrot.lane.b32.xlu0 %v1269, 8
        %v4820 = vpop.permute.xlu0 %4819
        %4821 = vrot.lane.b32.xlu0 %v1271, 8
        %v4822 = vpop.permute.xlu0 %4821
        %4823 = vrot.lane.b32.xlu0 %v1273, 8
        %v4824 = vpop.permute.xlu0 %4823
        %4825 = vrot.lane.b32.xlu0 %v1275, 8
        %v4826 = vpop.permute.xlu0 %4825
        %4827 = vrot.lane.b32.xlu0 %v1277, 8
        %v4828 = vpop.permute.xlu0 %4827
        %4829 = vrot.lane.b32.xlu0 %v1279, 8
        %v4830 = vpop.permute.xlu0 %4829
        %4831 = vrot.lane.b32.xlu0 %v1281, 8
        %v4832 = vpop.permute.xlu0 %4831
        %4833 = vrot.lane.b32.xlu0 %v1283, 8
        %v4834 = vpop.permute.xlu0 %4833
        %4835 = vrot.lane.b32.xlu0 %v1285, 8
        %v4836 = vpop.permute.xlu0 %4835
        %4837 = vrot.lane.b32.xlu0 %v1287, 8
        %v4838 = vpop.permute.xlu0 %4837
        %4839 = vrot.lane.b32.xlu0 %v1289, 8
        %v4840 = vpop.permute.xlu0 %4839
        %4841 = vrot.lane.b32.xlu0 %v1291, 8
        %v4842 = vpop.permute.xlu0 %4841
        %4843 = vrot.lane.b32.xlu0 %v1293, 8
        %v4844 = vpop.permute.xlu0 %4843
        %4845 = vrot.lane.b32.xlu0 %v1295, 8
        %v4846 = vpop.permute.xlu0 %4845
        %4847 = vrot.lane.b32.xlu0 %v1297, 8
        %v4848 = vpop.permute.xlu0 %4847
        %4849 = vrot.lane.b32.xlu0 %v1299, 8
        %v4850 = vpop.permute.xlu0 %4849
        %4851 = vrot.lane.b32.xlu0 %v1301, 8
        %v4852 = vpop.permute.xlu0 %4851
        %4853 = vrot.lane.b32.xlu0 %v1303, 8
        %v4854 = vpop.permute.xlu0 %4853
        %4855 = vrot.lane.b32.xlu0 %v1305, 8
        %v4856 = vpop.permute.xlu0 %4855
        %4857 = vrot.lane.b32.xlu0 %v1307, 8
        %v4858 = vpop.permute.xlu0 %4857
        %4859 = vrot.lane.b32.xlu0 %v1309, 8
        %v4860 = vpop.permute.xlu0 %4859
        %4861 = vrot.lane.b32.xlu0 %v1311, 8
        %v4862 = vpop.permute.xlu0 %4861
        %4863 = vrot.lane.b32.xlu0 %v1313, 8
        %v4864 = vpop.permute.xlu0 %4863
        %4865 = vrot.lane.b32.xlu0 %v1315, 8
        %v4866 = vpop.permute.xlu0 %4865
        %4867 = vrot.lane.b32.xlu0 %v1317, 8
        %v4868 = vpop.permute.xlu0 %4867
        %4869 = vrot.lane.b32.xlu0 %v1319, 8
        %v4870 = vpop.permute.xlu0 %4869
        %4871 = vrot.lane.b32.xlu0 %v1321, 8
        %v4872 = vpop.permute.xlu0 %4871
        %4937 = vrot.lane.b32.xlu0 %v1323, 9
        %v4938 = vpop.permute.xlu0 %4937
        %4939 = vrot.lane.b32.xlu0 %v1325, 9
        %v4940 = vpop.permute.xlu0 %4939
        %4941 = vrot.lane.b32.xlu0 %v1327, 9
        %v4942 = vpop.permute.xlu0 %4941
        %4943 = vrot.lane.b32.xlu0 %v1329, 9
        %v4944 = vpop.permute.xlu0 %4943
        %4945 = vrot.lane.b32.xlu0 %v1331, 9
        %v4946 = vpop.permute.xlu0 %4945
        %4947 = vrot.lane.b32.xlu0 %v1333, 9
        %v4948 = vpop.permute.xlu0 %4947
        %4949 = vrot.lane.b32.xlu0 %v1335, 9
        %v4950 = vpop.permute.xlu0 %4949
        %4951 = vrot.lane.b32.xlu0 %v1337, 9
        %v4952 = vpop.permute.xlu0 %4951
        %4953 = vrot.lane.b32.xlu0 %v1339, 9
        %v4954 = vpop.permute.xlu0 %4953
        %4955 = vrot.lane.b32.xlu0 %v1341, 9
        %v4956 = vpop.permute.xlu0 %4955
        %4957 = vrot.lane.b32.xlu0 %v1343, 9
        %v4958 = vpop.permute.xlu0 %4957
        %4959 = vrot.lane.b32.xlu0 %v1345, 9
        %v4960 = vpop.permute.xlu0 %4959
        %4961 = vrot.lane.b32.xlu0 %v1347, 9
        %v4962 = vpop.permute.xlu0 %4961
        %4963 = vrot.lane.b32.xlu0 %v1349, 9
        %v4964 = vpop.permute.xlu0 %4963
        %4965 = vrot.lane.b32.xlu0 %v1351, 9
        %v4966 = vpop.permute.xlu0 %4965
        %4967 = vrot.lane.b32.xlu0 %v1353, 9
        %v4968 = vpop.permute.xlu0 %4967
        %4969 = vrot.lane.b32.xlu0 %v1355, 9
        %v4970 = vpop.permute.xlu0 %4969
        %4971 = vrot.lane.b32.xlu0 %v1357, 9
        %v4972 = vpop.permute.xlu0 %4971
        %4973 = vrot.lane.b32.xlu0 %v1359, 9
        %v4974 = vpop.permute.xlu0 %4973
        %4975 = vrot.lane.b32.xlu0 %v1361, 9
        %v4976 = vpop.permute.xlu0 %4975
        %4977 = vrot.lane.b32.xlu0 %v1363, 9
        %v4978 = vpop.permute.xlu0 %4977
        %4979 = vrot.lane.b32.xlu0 %v1365, 9
        %v4980 = vpop.permute.xlu0 %4979
        %4981 = vrot.lane.b32.xlu0 %v1367, 9
        %v4982 = vpop.permute.xlu0 %4981
        %4983 = vrot.lane.b32.xlu0 %v1369, 9
        %v4984 = vpop.permute.xlu0 %4983
        %4985 = vrot.lane.b32.xlu0 %v1371, 9
        %v4986 = vpop.permute.xlu0 %4985
        %4987 = vrot.lane.b32.xlu0 %v1373, 9
        %v4988 = vpop.permute.xlu0 %4987
        %4989 = vrot.lane.b32.xlu0 %v1375, 9
        %v4990 = vpop.permute.xlu0 %4989
        %4991 = vrot.lane.b32.xlu0 %v1377, 9
        %v4992 = vpop.permute.xlu0 %4991
        %4993 = vrot.lane.b32.xlu0 %v1379, 9
        %v4994 = vpop.permute.xlu0 %4993
        %4995 = vrot.lane.b32.xlu0 %v1381, 9
        %v4996 = vpop.permute.xlu0 %4995
        %4997 = vrot.lane.b32.xlu0 %v1383, 9
        %v4998 = vpop.permute.xlu0 %4997
        %4999 = vrot.lane.b32.xlu0 %v1385, 9
        %v5000 = vpop.permute.xlu0 %4999
        %5065 = vrot.lane.b32.xlu0 %v1387, 10
        %v5066 = vpop.permute.xlu0 %5065
        %5067 = vrot.lane.b32.xlu0 %v1389, 10
        %v5068 = vpop.permute.xlu0 %5067
        %5069 = vrot.lane.b32.xlu0 %v1391, 10
        %v5070 = vpop.permute.xlu0 %5069
        %5071 = vrot.lane.b32.xlu0 %v1393, 10
        %v5072 = vpop.permute.xlu0 %5071
        %5073 = vrot.lane.b32.xlu0 %v1395, 10
        %v5074 = vpop.permute.xlu0 %5073
        %5075 = vrot.lane.b32.xlu0 %v1397, 10
        %v5076 = vpop.permute.xlu0 %5075
        %5077 = vrot.lane.b32.xlu0 %v1399, 10
        %v5078 = vpop.permute.xlu0 %5077
        %5079 = vrot.lane.b32.xlu0 %v1401, 10
        %v5080 = vpop.permute.xlu0 %5079
        %5081 = vrot.lane.b32.xlu0 %v1403, 10
        %v5082 = vpop.permute.xlu0 %5081
        %5083 = vrot.lane.b32.xlu0 %v1405, 10
        %v5084 = vpop.permute.xlu0 %5083
        %5085 = vrot.lane.b32.xlu0 %v1407, 10
        %v5086 = vpop.permute.xlu0 %5085
        %5087 = vrot.lane.b32.xlu0 %v1409, 10
        %v5088 = vpop.permute.xlu0 %5087
        %5089 = vrot.lane.b32.xlu0 %v1411, 10
        %v5090 = vpop.permute.xlu0 %5089
        %5091 = vrot.lane.b32.xlu0 %v1413, 10
        %v5092 = vpop.permute.xlu0 %5091
        %5093 = vrot.lane.b32.xlu0 %v1415, 10
        %v5094 = vpop.permute.xlu0 %5093
        %5095 = vrot.lane.b32.xlu0 %v1417, 10
        %v5096 = vpop.permute.xlu0 %5095
        %5097 = vrot.lane.b32.xlu0 %v1419, 10
        %v5098 = vpop.permute.xlu0 %5097
        %5099 = vrot.lane.b32.xlu0 %v1421, 10
        %v5100 = vpop.permute.xlu0 %5099
        %5101 = vrot.lane.b32.xlu0 %v1423, 10
        %v5102 = vpop.permute.xlu0 %5101
        %5103 = vrot.lane.b32.xlu0 %v1425, 10
        %v5104 = vpop.permute.xlu0 %5103
        %5105 = vrot.lane.b32.xlu0 %v1427, 10
        %v5106 = vpop.permute.xlu0 %5105
        %5107 = vrot.lane.b32.xlu0 %v1429, 10
        %v5108 = vpop.permute.xlu0 %5107
        %5109 = vrot.lane.b32.xlu0 %v1431, 10
        %v5110 = vpop.permute.xlu0 %5109
        %5111 = vrot.lane.b32.xlu0 %v1433, 10
        %v5112 = vpop.permute.xlu0 %5111
        %5113 = vrot.lane.b32.xlu0 %v1435, 10
        %v5114 = vpop.permute.xlu0 %5113
        %5115 = vrot.lane.b32.xlu0 %v1437, 10
        %v5116 = vpop.permute.xlu0 %5115
        %5117 = vrot.lane.b32.xlu0 %v1439, 10
        %v5118 = vpop.permute.xlu0 %5117
        %5119 = vrot.lane.b32.xlu0 %v1441, 10
        %v5120 = vpop.permute.xlu0 %5119
        %5121 = vrot.lane.b32.xlu0 %v1443, 10
        %v5122 = vpop.permute.xlu0 %5121
        %5123 = vrot.lane.b32.xlu0 %v1445, 10
        %v5124 = vpop.permute.xlu0 %5123
        %5125 = vrot.lane.b32.xlu0 %v1447, 10
        %v5126 = vpop.permute.xlu0 %5125
        %5127 = vrot.lane.b32.xlu0 %v1449, 10
        %v5128 = vpop.permute.xlu0 %5127
        %5193 = vrot.lane.b32.xlu0 %v1451, 11
        %v5194 = vpop.permute.xlu0 %5193
        %5195 = vrot.lane.b32.xlu0 %v1453, 11
        %v5196 = vpop.permute.xlu0 %5195
        %5197 = vrot.lane.b32.xlu0 %v1455, 11
        %v5198 = vpop.permute.xlu0 %5197
        %5199 = vrot.lane.b32.xlu0 %v1457, 11
        %v5200 = vpop.permute.xlu0 %5199
        %5201 = vrot.lane.b32.xlu0 %v1459, 11
        %v5202 = vpop.permute.xlu0 %5201
        %5203 = vrot.lane.b32.xlu0 %v1461, 11
        %v5204 = vpop.permute.xlu0 %5203
        %5205 = vrot.lane.b32.xlu0 %v1463, 11
        %v5206 = vpop.permute.xlu0 %5205
        %5207 = vrot.lane.b32.xlu0 %v1465, 11
        %v5208 = vpop.permute.xlu0 %5207
        %5209 = vrot.lane.b32.xlu0 %v1467, 11
        %v5210 = vpop.permute.xlu0 %5209
        %5211 = vrot.lane.b32.xlu0 %v1469, 11
        %v5212 = vpop.permute.xlu0 %5211
        %5213 = vrot.lane.b32.xlu0 %v1471, 11
        %v5214 = vpop.permute.xlu0 %5213
        %5215 = vrot.lane.b32.xlu0 %v1473, 11
        %v5216 = vpop.permute.xlu0 %5215
        %5217 = vrot.lane.b32.xlu0 %v1475, 11
        %v5218 = vpop.permute.xlu0 %5217
        %5219 = vrot.lane.b32.xlu0 %v1477, 11
        %v5220 = vpop.permute.xlu0 %5219
        %5221 = vrot.lane.b32.xlu0 %v1479, 11
        %v5222 = vpop.permute.xlu0 %5221
        %5223 = vrot.lane.b32.xlu0 %v1481, 11
        %v5224 = vpop.permute.xlu0 %5223
        %5225 = vrot.lane.b32.xlu0 %v1483, 11
        %v5226 = vpop.permute.xlu0 %5225
        %5227 = vrot.lane.b32.xlu0 %v1485, 11
        %v5228 = vpop.permute.xlu0 %5227
        %5229 = vrot.lane.b32.xlu0 %v1487, 11
        %v5230 = vpop.permute.xlu0 %5229
        %5231 = vrot.lane.b32.xlu0 %v1489, 11
        %v5232 = vpop.permute.xlu0 %5231
        %5233 = vrot.lane.b32.xlu0 %v1491, 11
        %v5234 = vpop.permute.xlu0 %5233
        %5235 = vrot.lane.b32.xlu0 %v1493, 11
        %v5236 = vpop.permute.xlu0 %5235
        %5237 = vrot.lane.b32.xlu0 %v1495, 11
        %v5238 = vpop.permute.xlu0 %5237
        %5239 = vrot.lane.b32.xlu0 %v1497, 11
        %v5240 = vpop.permute.xlu0 %5239
        %5241 = vrot.lane.b32.xlu0 %v1499, 11
        %v5242 = vpop.permute.xlu0 %5241
        %5243 = vrot.lane.b32.xlu0 %v1501, 11
        %v5244 = vpop.permute.xlu0 %5243
        %5245 = vrot.lane.b32.xlu0 %v1503, 11
        %v5246 = vpop.permute.xlu0 %5245
        %5247 = vrot.lane.b32.xlu0 %v1505, 11
        %v5248 = vpop.permute.xlu0 %5247
        %5249 = vrot.lane.b32.xlu0 %v1507, 11
        %v5250 = vpop.permute.xlu0 %5249
        %5251 = vrot.lane.b32.xlu0 %v1509, 11
        %v5252 = vpop.permute.xlu0 %5251
        %5253 = vrot.lane.b32.xlu0 %v1511, 11
        %v5254 = vpop.permute.xlu0 %5253
        %5255 = vrot.lane.b32.xlu0 %v1513, 11
        %v5256 = vpop.permute.xlu0 %5255
        %5321 = vrot.lane.b32.xlu0 %v1515, 12
        %v5322 = vpop.permute.xlu0 %5321
        %5323 = vrot.lane.b32.xlu0 %v1517, 12
        %v5324 = vpop.permute.xlu0 %5323
        %5325 = vrot.lane.b32.xlu0 %v1519, 12
        %v5326 = vpop.permute.xlu0 %5325
        %5327 = vrot.lane.b32.xlu0 %v1521, 12
        %v5328 = vpop.permute.xlu0 %5327
        %5329 = vrot.lane.b32.xlu0 %v1523, 12
        %v5330 = vpop.permute.xlu0 %5329
        %5331 = vrot.lane.b32.xlu0 %v1525, 12
        %v5332 = vpop.permute.xlu0 %5331
        %5333 = vrot.lane.b32.xlu0 %v1527, 12
        %v5334 = vpop.permute.xlu0 %5333
        %5335 = vrot.lane.b32.xlu0 %v1529, 12
        %v5336 = vpop.permute.xlu0 %5335
        %5337 = vrot.lane.b32.xlu0 %v1531, 12
        %v5338 = vpop.permute.xlu0 %5337
        %5339 = vrot.lane.b32.xlu0 %v1533, 12
        %v5340 = vpop.permute.xlu0 %5339
        %5341 = vrot.lane.b32.xlu0 %v1535, 12
        %v5342 = vpop.permute.xlu0 %5341
        %5343 = vrot.lane.b32.xlu0 %v1537, 12
        %v5344 = vpop.permute.xlu0 %5343
        %5345 = vrot.lane.b32.xlu0 %v1539, 12
        %v5346 = vpop.permute.xlu0 %5345
        %5347 = vrot.lane.b32.xlu0 %v1541, 12
        %v5348 = vpop.permute.xlu0 %5347
        %5349 = vrot.lane.b32.xlu0 %v1543, 12
        %v5350 = vpop.permute.xlu0 %5349
        %5351 = vrot.lane.b32.xlu0 %v1545, 12
        %v5352 = vpop.permute.xlu0 %5351
        %5353 = vrot.lane.b32.xlu0 %v1547, 12
        %v5354 = vpop.permute.xlu0 %5353
        %5355 = vrot.lane.b32.xlu0 %v1549, 12
        %v5356 = vpop.permute.xlu0 %5355
        %5357 = vrot.lane.b32.xlu0 %v1551, 12
        %v5358 = vpop.permute.xlu0 %5357
        %5359 = vrot.lane.b32.xlu0 %v1553, 12
        %v5360 = vpop.permute.xlu0 %5359
        %5361 = vrot.lane.b32.xlu0 %v1555, 12
        %v5362 = vpop.permute.xlu0 %5361
        %5363 = vrot.lane.b32.xlu0 %v1557, 12
        %v5364 = vpop.permute.xlu0 %5363
        %5365 = vrot.lane.b32.xlu0 %v1559, 12
        %v5366 = vpop.permute.xlu0 %5365
        %5367 = vrot.lane.b32.xlu0 %v1561, 12
        %v5368 = vpop.permute.xlu0 %5367
        %5369 = vrot.lane.b32.xlu0 %v1563, 12
        %v5370 = vpop.permute.xlu0 %5369
        %5371 = vrot.lane.b32.xlu0 %v1565, 12
        %v5372 = vpop.permute.xlu0 %5371
        %5373 = vrot.lane.b32.xlu0 %v1567, 12
        %v5374 = vpop.permute.xlu0 %5373
        %5375 = vrot.lane.b32.xlu0 %v1569, 12
        %v5376 = vpop.permute.xlu0 %5375
        %5377 = vrot.lane.b32.xlu0 %v1571, 12
        %v5378 = vpop.permute.xlu0 %5377
        %5379 = vrot.lane.b32.xlu0 %v1573, 12
        %v5380 = vpop.permute.xlu0 %5379
        %5381 = vrot.lane.b32.xlu0 %v1575, 12
        %v5382 = vpop.permute.xlu0 %5381
        %5383 = vrot.lane.b32.xlu0 %v1577, 12
        %v5384 = vpop.permute.xlu0 %5383
        %5449 = vrot.lane.b32.xlu0 %v1579, 13
        %v5450 = vpop.permute.xlu0 %5449
        %5451 = vrot.lane.b32.xlu0 %v1581, 13
        %v5452 = vpop.permute.xlu0 %5451
        %5453 = vrot.lane.b32.xlu0 %v1583, 13
        %v5454 = vpop.permute.xlu0 %5453
        %5455 = vrot.lane.b32.xlu0 %v1585, 13
        %v5456 = vpop.permute.xlu0 %5455
        %5457 = vrot.lane.b32.xlu0 %v1587, 13
        %v5458 = vpop.permute.xlu0 %5457
        %5459 = vrot.lane.b32.xlu0 %v1589, 13
        %v5460 = vpop.permute.xlu0 %5459
        %5461 = vrot.lane.b32.xlu0 %v1591, 13
        %v5462 = vpop.permute.xlu0 %5461
        %5463 = vrot.lane.b32.xlu0 %v1593, 13
        %v5464 = vpop.permute.xlu0 %5463
        %5465 = vrot.lane.b32.xlu0 %v1595, 13
        %v5466 = vpop.permute.xlu0 %5465
        %5467 = vrot.lane.b32.xlu0 %v1597, 13
        %v5468 = vpop.permute.xlu0 %5467
        %5469 = vrot.lane.b32.xlu0 %v1599, 13
        %v5470 = vpop.permute.xlu0 %5469
        %5471 = vrot.lane.b32.xlu0 %v1601, 13
        %v5472 = vpop.permute.xlu0 %5471
        %5473 = vrot.lane.b32.xlu0 %v1603, 13
        %v5474 = vpop.permute.xlu0 %5473
        %5475 = vrot.lane.b32.xlu0 %v1605, 13
        %v5476 = vpop.permute.xlu0 %5475
        %5477 = vrot.lane.b32.xlu0 %v1607, 13
        %v5478 = vpop.permute.xlu0 %5477
        %5479 = vrot.lane.b32.xlu0 %v1609, 13
        %v5480 = vpop.permute.xlu0 %5479
        %5481 = vrot.lane.b32.xlu0 %v1611, 13
        %v5482 = vpop.permute.xlu0 %5481
        %5483 = vrot.lane.b32.xlu0 %v1613, 13
        %v5484 = vpop.permute.xlu0 %5483
        %5485 = vrot.lane.b32.xlu0 %v1615, 13
        %v5486 = vpop.permute.xlu0 %5485
        %5487 = vrot.lane.b32.xlu0 %v1617, 13
        %v5488 = vpop.permute.xlu0 %5487
        %5489 = vrot.lane.b32.xlu0 %v1619, 13
        %v5490 = vpop.permute.xlu0 %5489
        %5491 = vrot.lane.b32.xlu0 %v1621, 13
        %v5492 = vpop.permute.xlu0 %5491
        %5493 = vrot.lane.b32.xlu0 %v1623, 13
        %v5494 = vpop.permute.xlu0 %5493
        %5495 = vrot.lane.b32.xlu0 %v1625, 13
        %v5496 = vpop.permute.xlu0 %5495
        %5497 = vrot.lane.b32.xlu0 %v1627, 13
        %v5498 = vpop.permute.xlu0 %5497
        %5499 = vrot.lane.b32.xlu0 %v1629, 13
        %v5500 = vpop.permute.xlu0 %5499
        %5501 = vrot.lane.b32.xlu0 %v1631, 13
        %v5502 = vpop.permute.xlu0 %5501
        %5503 = vrot.lane.b32.xlu0 %v1633, 13
        %v5504 = vpop.permute.xlu0 %5503
        %5505 = vrot.lane.b32.xlu0 %v1635, 13
        %v5506 = vpop.permute.xlu0 %5505
        %5507 = vrot.lane.b32.xlu0 %v1637, 13
        %v5508 = vpop.permute.xlu0 %5507
        %5509 = vrot.lane.b32.xlu0 %v1639, 13
        %v5510 = vpop.permute.xlu0 %5509
        %5511 = vrot.lane.b32.xlu0 %v1641, 13
        %v5512 = vpop.permute.xlu0 %5511
        %5577 = vrot.lane.b32.xlu0 %v1643, 14
        %v5578 = vpop.permute.xlu0 %5577
        %5579 = vrot.lane.b32.xlu0 %v1645, 14
        %v5580 = vpop.permute.xlu0 %5579
        %5581 = vrot.lane.b32.xlu0 %v1647, 14
        %v5582 = vpop.permute.xlu0 %5581
        %5583 = vrot.lane.b32.xlu0 %v1649, 14
        %v5584 = vpop.permute.xlu0 %5583
        %5585 = vrot.lane.b32.xlu0 %v1651, 14
        %v5586 = vpop.permute.xlu0 %5585
        %5587 = vrot.lane.b32.xlu0 %v1653, 14
        %v5588 = vpop.permute.xlu0 %5587
        %5589 = vrot.lane.b32.xlu0 %v1655, 14
        %v5590 = vpop.permute.xlu0 %5589
        %5591 = vrot.lane.b32.xlu0 %v1657, 14
        %v5592 = vpop.permute.xlu0 %5591
        %5593 = vrot.lane.b32.xlu0 %v1659, 14
        %v5594 = vpop.permute.xlu0 %5593
        %5595 = vrot.lane.b32.xlu0 %v1661, 14
        %v5596 = vpop.permute.xlu0 %5595
        %5597 = vrot.lane.b32.xlu0 %v1663, 14
        %v5598 = vpop.permute.xlu0 %5597
        %5599 = vrot.lane.b32.xlu0 %v1665, 14
        %v5600 = vpop.permute.xlu0 %5599
        %5601 = vrot.lane.b32.xlu0 %v1667, 14
        %v5602 = vpop.permute.xlu0 %5601
        %5603 = vrot.lane.b32.xlu0 %v1669, 14
        %v5604 = vpop.permute.xlu0 %5603
        %5605 = vrot.lane.b32.xlu0 %v1671, 14
        %v5606 = vpop.permute.xlu0 %5605
        %5607 = vrot.lane.b32.xlu0 %v1673, 14
        %v5608 = vpop.permute.xlu0 %5607
        %5609 = vrot.lane.b32.xlu0 %v1675, 14
        %v5610 = vpop.permute.xlu0 %5609
        %5611 = vrot.lane.b32.xlu0 %v1677, 14
        %v5612 = vpop.permute.xlu0 %5611
        %5613 = vrot.lane.b32.xlu0 %v1679, 14
        %v5614 = vpop.permute.xlu0 %5613
        %5615 = vrot.lane.b32.xlu0 %v1681, 14
        %v5616 = vpop.permute.xlu0 %5615
        %5617 = vrot.lane.b32.xlu0 %v1683, 14
        %v5618 = vpop.permute.xlu0 %5617
        %5619 = vrot.lane.b32.xlu0 %v1685, 14
        %v5620 = vpop.permute.xlu0 %5619
        %5621 = vrot.lane.b32.xlu0 %v1687, 14
        %v5622 = vpop.permute.xlu0 %5621
        %5623 = vrot.lane.b32.xlu0 %v1689, 14
        %v5624 = vpop.permute.xlu0 %5623
        %5625 = vrot.lane.b32.xlu0 %v1691, 14
        %v5626 = vpop.permute.xlu0 %5625
        %5627 = vrot.lane.b32.xlu0 %v1693, 14
        %v5628 = vpop.permute.xlu0 %5627
        %5629 = vrot.lane.b32.xlu0 %v1695, 14
        %v5630 = vpop.permute.xlu0 %5629
        %5631 = vrot.lane.b32.xlu0 %v1697, 14
        %v5632 = vpop.permute.xlu0 %5631
        %5633 = vrot.lane.b32.xlu0 %v1699, 14
        %v5634 = vpop.permute.xlu0 %5633
        %5635 = vrot.lane.b32.xlu0 %v1701, 14
        %v5636 = vpop.permute.xlu0 %5635
        %5637 = vrot.lane.b32.xlu0 %v1703, 14
        %v5638 = vpop.permute.xlu0 %5637
        %5639 = vrot.lane.b32.xlu0 %v1705, 14
        %v5640 = vpop.permute.xlu0 %5639
        %5705 = vrot.lane.b32.xlu0 %v1707, 15
        %v5706 = vpop.permute.xlu0 %5705
        %5707 = vrot.lane.b32.xlu0 %v1709, 15
        %v5708 = vpop.permute.xlu0 %5707
        %5709 = vrot.lane.b32.xlu0 %v1711, 15
        %v5710 = vpop.permute.xlu0 %5709
        %5711 = vrot.lane.b32.xlu0 %v1713, 15
        %v5712 = vpop.permute.xlu0 %5711
        %5713 = vrot.lane.b32.xlu0 %v1715, 15
        %v5714 = vpop.permute.xlu0 %5713
        %5715 = vrot.lane.b32.xlu0 %v1717, 15
        %v5716 = vpop.permute.xlu0 %5715
        %5717 = vrot.lane.b32.xlu0 %v1719, 15
        %v5718 = vpop.permute.xlu0 %5717
        %5719 = vrot.lane.b32.xlu0 %v1721, 15
        %v5720 = vpop.permute.xlu0 %5719
        %5721 = vrot.lane.b32.xlu0 %v1723, 15
        %v5722 = vpop.permute.xlu0 %5721
        %5723 = vrot.lane.b32.xlu0 %v1725, 15
        %v5724 = vpop.permute.xlu0 %5723
        %5725 = vrot.lane.b32.xlu0 %v1727, 15
        %v5726 = vpop.permute.xlu0 %5725
        %5727 = vrot.lane.b32.xlu0 %v1729, 15
        %v5728 = vpop.permute.xlu0 %5727
        %5729 = vrot.lane.b32.xlu0 %v1731, 15
        %v5730 = vpop.permute.xlu0 %5729
        %5731 = vrot.lane.b32.xlu0 %v1733, 15
        %v5732 = vpop.permute.xlu0 %5731
        %5733 = vrot.lane.b32.xlu0 %v1735, 15
        %v5734 = vpop.permute.xlu0 %5733
        %5735 = vrot.lane.b32.xlu0 %v1737, 15
        %v5736 = vpop.permute.xlu0 %5735
        %5737 = vrot.lane.b32.xlu0 %v1739, 15
        %v5738 = vpop.permute.xlu0 %5737
        %5739 = vrot.lane.b32.xlu0 %v1741, 15
        %v5740 = vpop.permute.xlu0 %5739
        %5741 = vrot.lane.b32.xlu0 %v1743, 15
        %v5742 = vpop.permute.xlu0 %5741
        %5743 = vrot.lane.b32.xlu0 %v1745, 15
        %v5744 = vpop.permute.xlu0 %5743
        %5745 = vrot.lane.b32.xlu0 %v1747, 15
        %v5746 = vpop.permute.xlu0 %5745
        %5747 = vrot.lane.b32.xlu0 %v1749, 15
        %v5748 = vpop.permute.xlu0 %5747
        %5749 = vrot.lane.b32.xlu0 %v1751, 15
        %v5750 = vpop.permute.xlu0 %5749
        %5751 = vrot.lane.b32.xlu0 %v1753, 15
        %v5752 = vpop.permute.xlu0 %5751
        %5753 = vrot.lane.b32.xlu0 %v1755, 15
        %v5754 = vpop.permute.xlu0 %5753
        %5755 = vrot.lane.b32.xlu0 %v1757, 15
        %v5756 = vpop.permute.xlu0 %5755
        %5757 = vrot.lane.b32.xlu0 %v1759, 15
        %v5758 = vpop.permute.xlu0 %5757
        %5759 = vrot.lane.b32.xlu0 %v1761, 15
        %v5760 = vpop.permute.xlu0 %5759
        %5761 = vrot.lane.b32.xlu0 %v1763, 15
        %v5762 = vpop.permute.xlu0 %5761
        %5763 = vrot.lane.b32.xlu0 %v1765, 15
        %v5764 = vpop.permute.xlu0 %5763
        %5765 = vrot.lane.b32.xlu0 %v1767, 15
        %v5766 = vpop.permute.xlu0 %5765
        %5767 = vrot.lane.b32.xlu0 %v1769, 15
        %v5768 = vpop.permute.xlu0 %5767
        %v5801 = vsel %vm170, %v747, %v3914
        %v5802 = vsel %vm170, %v749, %v3916
        %v5803 = vsel %vm170, %v751, %v3918
        %v5804 = vsel %vm170, %v753, %v3920
        %v5805 = vsel %vm170, %v755, %v3922
        %v5806 = vsel %vm170, %v757, %v3924
        %v5807 = vsel %vm170, %v759, %v3926
        %v5808 = vsel %vm170, %v761, %v3928
        %v5809 = vsel %vm170, %v763, %v3930
        %v5810 = vsel %vm170, %v765, %v3932
        %v5811 = vsel %vm170, %v767, %v3934
        %v5812 = vsel %vm170, %v769, %v3936
        %v5813 = vsel %vm170, %v771, %v3938
        %v5814 = vsel %vm170, %v773, %v3940
        %v5815 = vsel %vm170, %v775, %v3942
        %v5816 = vsel %vm170, %v777, %v3944
        %v5817 = vsel %vm170, %v779, %v3946
        %v5818 = vsel %vm170, %v781, %v3948
        %v5819 = vsel %vm170, %v783, %v3950
        %v5820 = vsel %vm170, %v785, %v3952
        %v5821 = vsel %vm170, %v787, %v3954
        %v5822 = vsel %vm170, %v789, %v3956
        %v5823 = vsel %vm170, %v791, %v3958
        %v5824 = vsel %vm170, %v793, %v3960
        %v5825 = vsel %vm170, %v795, %v3962
        %v5826 = vsel %vm170, %v797, %v3964
        %v5827 = vsel %vm170, %v799, %v3966
        %v5828 = vsel %vm170, %v801, %v3968
        %v5829 = vsel %vm170, %v803, %v3970
        %v5830 = vsel %vm170, %v805, %v3972
        %v5831 = vsel %vm170, %v807, %v3974
        %v5832 = vsel %vm170, %v809, %v3976
        %vm5833 = vcmask 15360
        %v5834 = vsel %vm5833, %v5801, %v4042
        %v5835 = vsel %vm5833, %v5802, %v4044
        %v5836 = vsel %vm5833, %v5803, %v4046
        %v5837 = vsel %vm5833, %v5804, %v4048
        %v5838 = vsel %vm5833, %v5805, %v4050
        %v5839 = vsel %vm5833, %v5806, %v4052
        %v5840 = vsel %vm5833, %v5807, %v4054
        %v5841 = vsel %vm5833, %v5808, %v4056
        %v5842 = vsel %vm5833, %v5809, %v4058
        %v5843 = vsel %vm5833, %v5810, %v4060
        %v5844 = vsel %vm5833, %v5811, %v4062
        %v5845 = vsel %vm5833, %v5812, %v4064
        %v5846 = vsel %vm5833, %v5813, %v4066
        %v5847 = vsel %vm5833, %v5814, %v4068
        %v5848 = vsel %vm5833, %v5815, %v4070
        %v5849 = vsel %vm5833, %v5816, %v4072
        %v5850 = vsel %vm5833, %v5817, %v4074
        %v5851 = vsel %vm5833, %v5818, %v4076
        %v5852 = vsel %vm5833, %v5819, %v4078
        %v5853 = vsel %vm5833, %v5820, %v4080
        %v5854 = vsel %vm5833, %v5821, %v4082
        %v5855 = vsel %vm5833, %v5822, %v4084
        %v5856 = vsel %vm5833, %v5823, %v4086
        %v5857 = vsel %vm5833, %v5824, %v4088
        %v5858 = vsel %vm5833, %v5825, %v4090
        %v5859 = vsel %vm5833, %v5826, %v4092
        %v5860 = vsel %vm5833, %v5827, %v4094
        %v5861 = vsel %vm5833, %v5828, %v4096
        %v5862 = vsel %vm5833, %v5829, %v4098
        %v5863 = vsel %vm5833, %v5830, %v4100
        %v5864 = vsel %vm5833, %v5831, %v4102
        %v5865 = vsel %vm5833, %v5832, %v4104
        %vm5866 = vcmask 23552
        %v5867 = vsel %vm5866, %v5834, %v4170
        %v5868 = vsel %vm5866, %v5835, %v4172
        %v5869 = vsel %vm5866, %v5836, %v4174
        %v5870 = vsel %vm5866, %v5837, %v4176
        %v5871 = vsel %vm5866, %v5838, %v4178
        %v5872 = vsel %vm5866, %v5839, %v4180
        %v5873 = vsel %vm5866, %v5840, %v4182
        %v5874 = vsel %vm5866, %v5841, %v4184
        %v5875 = vsel %vm5866, %v5842, %v4186
        %v5876 = vsel %vm5866, %v5843, %v4188
        %v5877 = vsel %vm5866, %v5844, %v4190
        %v5878 = vsel %vm5866, %v5845, %v4192
        %v5879 = vsel %vm5866, %v5846, %v4194
        %v5880 = vsel %vm5866, %v5847, %v4196
        %v5881 = vsel %vm5866, %v5848, %v4198
        %v5882 = vsel %vm5866, %v5849, %v4200
        %v5883 = vsel %vm5866, %v5850, %v4202
        %v5884 = vsel %vm5866, %v5851, %v4204
        %v5885 = vsel %vm5866, %v5852, %v4206
        %v5886 = vsel %vm5866, %v5853, %v4208
        %v5887 = vsel %vm5866, %v5854, %v4210
        %v5888 = vsel %vm5866, %v5855, %v4212
        %v5889 = vsel %vm5866, %v5856, %v4214
        %v5890 = vsel %vm5866, %v5857, %v4216
        %v5891 = vsel %vm5866, %v5858, %v4218
        %v5892 = vsel %vm5866, %v5859, %v4220
        %v5893 = vsel %vm5866, %v5860, %v4222
        %v5894 = vsel %vm5866, %v5861, %v4224
        %v5895 = vsel %vm5866, %v5862, %v4226
        %v5896 = vsel %vm5866, %v5863, %v4228
        %v5897 = vsel %vm5866, %v5864, %v4230
        %v5898 = vsel %vm5866, %v5865, %v4232
        %vm5899 = vcmask 31744
        %v5900 = vsel %vm5899, %v5867, %v4298
        %v5901 = vsel %vm5899, %v5868, %v4300
        %v5902 = vsel %vm5899, %v5869, %v4302
        %v5903 = vsel %vm5899, %v5870, %v4304
        %v5904 = vsel %vm5899, %v5871, %v4306
        %v5905 = vsel %vm5899, %v5872, %v4308
        %v5906 = vsel %vm5899, %v5873, %v4310
        %v5907 = vsel %vm5899, %v5874, %v4312
        %v5908 = vsel %vm5899, %v5875, %v4314
        %v5909 = vsel %vm5899, %v5876, %v4316
        %v5910 = vsel %vm5899, %v5877, %v4318
        %v5911 = vsel %vm5899, %v5878, %v4320
        %v5912 = vsel %vm5899, %v5879, %v4322
        %v5913 = vsel %vm5899, %v5880, %v4324
        %v5914 = vsel %vm5899, %v5881, %v4326
        %v5915 = vsel %vm5899, %v5882, %v4328
        %v5916 = vsel %vm5899, %v5883, %v4330
        %v5917 = vsel %vm5899, %v5884, %v4332
        %v5918 = vsel %vm5899, %v5885, %v4334
        %v5919 = vsel %vm5899, %v5886, %v4336
        %v5920 = vsel %vm5899, %v5887, %v4338
        %v5921 = vsel %vm5899, %v5888, %v4340
        %v5922 = vsel %vm5899, %v5889, %v4342
        %v5923 = vsel %vm5899, %v5890, %v4344
        %v5924 = vsel %vm5899, %v5891, %v4346
        %v5925 = vsel %vm5899, %v5892, %v4348
        %v5926 = vsel %vm5899, %v5893, %v4350
        %v5927 = vsel %vm5899, %v5894, %v4352
        %v5928 = vsel %vm5899, %v5895, %v4354
        %v5929 = vsel %vm5899, %v5896, %v4356
        %v5930 = vsel %vm5899, %v5897, %v4358
        %v5931 = vsel %vm5899, %v5898, %v4360
        %vm5932 = vcmask 39936
        %v5933 = vsel %vm5932, %v5900, %v4426
        %v5934 = vsel %vm5932, %v5901, %v4428
        %v5935 = vsel %vm5932, %v5902, %v4430
        %v5936 = vsel %vm5932, %v5903, %v4432
        %v5937 = vsel %vm5932, %v5904, %v4434
        %v5938 = vsel %vm5932, %v5905, %v4436
        %v5939 = vsel %vm5932, %v5906, %v4438
        %v5940 = vsel %vm5932, %v5907, %v4440
        %v5941 = vsel %vm5932, %v5908, %v4442
        %v5942 = vsel %vm5932, %v5909, %v4444
        %v5943 = vsel %vm5932, %v5910, %v4446
        %v5944 = vsel %vm5932, %v5911, %v4448
        %v5945 = vsel %vm5932, %v5912, %v4450
        %v5946 = vsel %vm5932, %v5913, %v4452
        %v5947 = vsel %vm5932, %v5914, %v4454
        %v5948 = vsel %vm5932, %v5915, %v4456
        %v5949 = vsel %vm5932, %v5916, %v4458
        %v5950 = vsel %vm5932, %v5917, %v4460
        %v5951 = vsel %vm5932, %v5918, %v4462
        %v5952 = vsel %vm5932, %v5919, %v4464
        %v5953 = vsel %vm5932, %v5920, %v4466
        %v5954 = vsel %vm5932, %v5921, %v4468
        %v5955 = vsel %vm5932, %v5922, %v4470
        %v5956 = vsel %vm5932, %v5923, %v4472
        %v5957 = vsel %vm5932, %v5924, %v4474
        %v5958 = vsel %vm5932, %v5925, %v4476
        %v5959 = vsel %vm5932, %v5926, %v4478
        %v5960 = vsel %vm5932, %v5927, %v4480
        %v5961 = vsel %vm5932, %v5928, %v4482
        %v5962 = vsel %vm5932, %v5929, %v4484
        %v5963 = vsel %vm5932, %v5930, %v4486
        %v5964 = vsel %vm5932, %v5931, %v4488
        %vm5965 = vcmask 48128
        %v5966 = vsel %vm5965, %v5933, %v4554
        %v5967 = vsel %vm5965, %v5934, %v4556
        %v5968 = vsel %vm5965, %v5935, %v4558
        %v5969 = vsel %vm5965, %v5936, %v4560
        %v5970 = vsel %vm5965, %v5937, %v4562
        %v5971 = vsel %vm5965, %v5938, %v4564
        %v5972 = vsel %vm5965, %v5939, %v4566
        %v5973 = vsel %vm5965, %v5940, %v4568
        %v5974 = vsel %vm5965, %v5941, %v4570
        %v5975 = vsel %vm5965, %v5942, %v4572
        %v5976 = vsel %vm5965, %v5943, %v4574
        %v5977 = vsel %vm5965, %v5944, %v4576
        %v5978 = vsel %vm5965, %v5945, %v4578
        %v5979 = vsel %vm5965, %v5946, %v4580
        %v5980 = vsel %vm5965, %v5947, %v4582
        %v5981 = vsel %vm5965, %v5948, %v4584
        %v5982 = vsel %vm5965, %v5949, %v4586
        %v5983 = vsel %vm5965, %v5950, %v4588
        %v5984 = vsel %vm5965, %v5951, %v4590
        %v5985 = vsel %vm5965, %v5952, %v4592
        %v5986 = vsel %vm5965, %v5953, %v4594
        %v5987 = vsel %vm5965, %v5954, %v4596
        %v5988 = vsel %vm5965, %v5955, %v4598
        %v5989 = vsel %vm5965, %v5956, %v4600
        %v5990 = vsel %vm5965, %v5957, %v4602
        %v5991 = vsel %vm5965, %v5958, %v4604
        %v5992 = vsel %vm5965, %v5959, %v4606
        %v5993 = vsel %vm5965, %v5960, %v4608
        %v5994 = vsel %vm5965, %v5961, %v4610
        %v5995 = vsel %vm5965, %v5962, %v4612
        %v5996 = vsel %vm5965, %v5963, %v4614
        %v5997 = vsel %vm5965, %v5964, %v4616
        %vm5998 = vcmask 56320
        %v5999 = vsel %vm5998, %v5966, %v4682
        %v6000 = vsel %vm5998, %v5967, %v4684
        %v6001 = vsel %vm5998, %v5968, %v4686
        %v6002 = vsel %vm5998, %v5969, %v4688
        %v6003 = vsel %vm5998, %v5970, %v4690
        %v6004 = vsel %vm5998, %v5971, %v4692
        %v6005 = vsel %vm5998, %v5972, %v4694
        %v6006 = vsel %vm5998, %v5973, %v4696
        %v6007 = vsel %vm5998, %v5974, %v4698
        %v6008 = vsel %vm5998, %v5975, %v4700
        %v6009 = vsel %vm5998, %v5976, %v4702
        %v6010 = vsel %vm5998, %v5977, %v4704
        %v6011 = vsel %vm5998, %v5978, %v4706
        %v6012 = vsel %vm5998, %v5979, %v4708
        %v6013 = vsel %vm5998, %v5980, %v4710
        %v6014 = vsel %vm5998, %v5981, %v4712
        %v6015 = vsel %vm5998, %v5982, %v4714
        %v6016 = vsel %vm5998, %v5983, %v4716
        %v6017 = vsel %vm5998, %v5984, %v4718
        %v6018 = vsel %vm5998, %v5985, %v4720
        %v6019 = vsel %vm5998, %v5986, %v4722
        %v6020 = vsel %vm5998, %v5987, %v4724
        %v6021 = vsel %vm5998, %v5988, %v4726
        %v6022 = vsel %vm5998, %v5989, %v4728
        %v6023 = vsel %vm5998, %v5990, %v4730
        %v6024 = vsel %vm5998, %v5991, %v4732
        %v6025 = vsel %vm5998, %v5992, %v4734
        %v6026 = vsel %vm5998, %v5993, %v4736
        %v6027 = vsel %vm5998, %v5994, %v4738
        %v6028 = vsel %vm5998, %v5995, %v4740
        %v6029 = vsel %vm5998, %v5996, %v4742
        %v6030 = vsel %vm5998, %v5997, %v4744
        %vm6031 = vcmask 64512
        %v6032 = vsel %vm6031, %v5999, %v4810
        %v6033 = vsel %vm6031, %v6000, %v4812
        %v6034 = vsel %vm6031, %v6001, %v4814
        %v6035 = vsel %vm6031, %v6002, %v4816
        %v6036 = vsel %vm6031, %v6003, %v4818
        %v6037 = vsel %vm6031, %v6004, %v4820
        %v6038 = vsel %vm6031, %v6005, %v4822
        %v6039 = vsel %vm6031, %v6006, %v4824
        %v6040 = vsel %vm6031, %v6007, %v4826
        %v6041 = vsel %vm6031, %v6008, %v4828
        %v6042 = vsel %vm6031, %v6009, %v4830
        %v6043 = vsel %vm6031, %v6010, %v4832
        %v6044 = vsel %vm6031, %v6011, %v4834
        %v6045 = vsel %vm6031, %v6012, %v4836
        %v6046 = vsel %vm6031, %v6013, %v4838
        %v6047 = vsel %vm6031, %v6014, %v4840
        %v6048 = vsel %vm6031, %v6015, %v4842
        %v6049 = vsel %vm6031, %v6016, %v4844
        %v6050 = vsel %vm6031, %v6017, %v4846
        %v6051 = vsel %vm6031, %v6018, %v4848
        %v6052 = vsel %vm6031, %v6019, %v4850
        %v6053 = vsel %vm6031, %v6020, %v4852
        %v6054 = vsel %vm6031, %v6021, %v4854
        %v6055 = vsel %vm6031, %v6022, %v4856
        %v6056 = vsel %vm6031, %v6023, %v4858
        %v6057 = vsel %vm6031, %v6024, %v4860
        %v6058 = vsel %vm6031, %v6025, %v4862
        %v6059 = vsel %vm6031, %v6026, %v4864
        %v6060 = vsel %vm6031, %v6027, %v4866
        %v6061 = vsel %vm6031, %v6028, %v4868
        %v6062 = vsel %vm6031, %v6029, %v4870
        %v6063 = vsel %vm6031, %v6030, %v4872
        %vm6064 = vcmask 72704
        %v6065 = vsel %vm6064, %v6032, %v4938
        %v6066 = vsel %vm6064, %v6033, %v4940
        %v6067 = vsel %vm6064, %v6034, %v4942
        %v6068 = vsel %vm6064, %v6035, %v4944
        %v6069 = vsel %vm6064, %v6036, %v4946
        %v6070 = vsel %vm6064, %v6037, %v4948
        %v6071 = vsel %vm6064, %v6038, %v4950
        %v6072 = vsel %vm6064, %v6039, %v4952
        %v6073 = vsel %vm6064, %v6040, %v4954
        %v6074 = vsel %vm6064, %v6041, %v4956
        %v6075 = vsel %vm6064, %v6042, %v4958
        %v6076 = vsel %vm6064, %v6043, %v4960
        %v6077 = vsel %vm6064, %v6044, %v4962
        %v6078 = vsel %vm6064, %v6045, %v4964
        %v6079 = vsel %vm6064, %v6046, %v4966
        %v6080 = vsel %vm6064, %v6047, %v4968
        %v6081 = vsel %vm6064, %v6048, %v4970
        %v6082 = vsel %vm6064, %v6049, %v4972
        %v6083 = vsel %vm6064, %v6050, %v4974
        %v6084 = vsel %vm6064, %v6051, %v4976
        %v6085 = vsel %vm6064, %v6052, %v4978
        %v6086 = vsel %vm6064, %v6053, %v4980
        %v6087 = vsel %vm6064, %v6054, %v4982
        %v6088 = vsel %vm6064, %v6055, %v4984
        %v6089 = vsel %vm6064, %v6056, %v4986
        %v6090 = vsel %vm6064, %v6057, %v4988
        %v6091 = vsel %vm6064, %v6058, %v4990
        %v6092 = vsel %vm6064, %v6059, %v4992
        %v6093 = vsel %vm6064, %v6060, %v4994
        %v6094 = vsel %vm6064, %v6061, %v4996
        %v6095 = vsel %vm6064, %v6062, %v4998
        %v6096 = vsel %vm6064, %v6063, %v5000
        %vm6097 = vcmask 80896
        %v6098 = vsel %vm6097, %v6065, %v5066
        %v6099 = vsel %vm6097, %v6066, %v5068
        %v6100 = vsel %vm6097, %v6067, %v5070
        %v6101 = vsel %vm6097, %v6068, %v5072
        %v6102 = vsel %vm6097, %v6069, %v5074
        %v6103 = vsel %vm6097, %v6070, %v5076
        %v6104 = vsel %vm6097, %v6071, %v5078
        %v6105 = vsel %vm6097, %v6072, %v5080
        %v6106 = vsel %vm6097, %v6073, %v5082
        %v6107 = vsel %vm6097, %v6074, %v5084
        %v6108 = vsel %vm6097, %v6075, %v5086
        %v6109 = vsel %vm6097, %v6076, %v5088
        %v6110 = vsel %vm6097, %v6077, %v5090
        %v6111 = vsel %vm6097, %v6078, %v5092
        %v6112 = vsel %vm6097, %v6079, %v5094
        %v6113 = vsel %vm6097, %v6080, %v5096
        %v6114 = vsel %vm6097, %v6081, %v5098
        %v6115 = vsel %vm6097, %v6082, %v5100
        %v6116 = vsel %vm6097, %v6083, %v5102
        %v6117 = vsel %vm6097, %v6084, %v5104
        %v6118 = vsel %vm6097, %v6085, %v5106
        %v6119 = vsel %vm6097, %v6086, %v5108
        %v6120 = vsel %vm6097, %v6087, %v5110
        %v6121 = vsel %vm6097, %v6088, %v5112
        %v6122 = vsel %vm6097, %v6089, %v5114
        %v6123 = vsel %vm6097, %v6090, %v5116
        %v6124 = vsel %vm6097, %v6091, %v5118
        %v6125 = vsel %vm6097, %v6092, %v5120
        %v6126 = vsel %vm6097, %v6093, %v5122
        %v6127 = vsel %vm6097, %v6094, %v5124
        %v6128 = vsel %vm6097, %v6095, %v5126
        %v6129 = vsel %vm6097, %v6096, %v5128
        %vm6130 = vcmask 89088
        %v6131 = vsel %vm6130, %v6098, %v5194
        %v6132 = vsel %vm6130, %v6099, %v5196
        %v6133 = vsel %vm6130, %v6100, %v5198
        %v6134 = vsel %vm6130, %v6101, %v5200
        %v6135 = vsel %vm6130, %v6102, %v5202
        %v6136 = vsel %vm6130, %v6103, %v5204
        %v6137 = vsel %vm6130, %v6104, %v5206
        %v6138 = vsel %vm6130, %v6105, %v5208
        %v6139 = vsel %vm6130, %v6106, %v5210
        %v6140 = vsel %vm6130, %v6107, %v5212
        %v6141 = vsel %vm6130, %v6108, %v5214
        %v6142 = vsel %vm6130, %v6109, %v5216
        %v6143 = vsel %vm6130, %v6110, %v5218
        %v6144 = vsel %vm6130, %v6111, %v5220
        %v6145 = vsel %vm6130, %v6112, %v5222
        %v6146 = vsel %vm6130, %v6113, %v5224
        %v6147 = vsel %vm6130, %v6114, %v5226
        %v6148 = vsel %vm6130, %v6115, %v5228
        %v6149 = vsel %vm6130, %v6116, %v5230
        %v6150 = vsel %vm6130, %v6117, %v5232
        %v6151 = vsel %vm6130, %v6118, %v5234
        %v6152 = vsel %vm6130, %v6119, %v5236
        %v6153 = vsel %vm6130, %v6120, %v5238
        %v6154 = vsel %vm6130, %v6121, %v5240
        %v6155 = vsel %vm6130, %v6122, %v5242
        %v6156 = vsel %vm6130, %v6123, %v5244
        %v6157 = vsel %vm6130, %v6124, %v5246
        %v6158 = vsel %vm6130, %v6125, %v5248
        %v6159 = vsel %vm6130, %v6126, %v5250
        %v6160 = vsel %vm6130, %v6127, %v5252
        %v6161 = vsel %vm6130, %v6128, %v5254
        %v6162 = vsel %vm6130, %v6129, %v5256
        %vm6163 = vcmask 97280
        %v6164 = vsel %vm6163, %v6131, %v5322
        %v6165 = vsel %vm6163, %v6132, %v5324
        %v6166 = vsel %vm6163, %v6133, %v5326
        %v6167 = vsel %vm6163, %v6134, %v5328
        %v6168 = vsel %vm6163, %v6135, %v5330
        %v6169 = vsel %vm6163, %v6136, %v5332
        %v6170 = vsel %vm6163, %v6137, %v5334
        %v6171 = vsel %vm6163, %v6138, %v5336
        %v6172 = vsel %vm6163, %v6139, %v5338
        %v6173 = vsel %vm6163, %v6140, %v5340
        %v6174 = vsel %vm6163, %v6141, %v5342
        %v6175 = vsel %vm6163, %v6142, %v5344
        %v6176 = vsel %vm6163, %v6143, %v5346
        %v6177 = vsel %vm6163, %v6144, %v5348
        %v6178 = vsel %vm6163, %v6145, %v5350
        %v6179 = vsel %vm6163, %v6146, %v5352
        %v6180 = vsel %vm6163, %v6147, %v5354
        %v6181 = vsel %vm6163, %v6148, %v5356
        %v6182 = vsel %vm6163, %v6149, %v5358
        %v6183 = vsel %vm6163, %v6150, %v5360
        %v6184 = vsel %vm6163, %v6151, %v5362
        %v6185 = vsel %vm6163, %v6152, %v5364
        %v6186 = vsel %vm6163, %v6153, %v5366
        %v6187 = vsel %vm6163, %v6154, %v5368
        %v6188 = vsel %vm6163, %v6155, %v5370
        %v6189 = vsel %vm6163, %v6156, %v5372
        %v6190 = vsel %vm6163, %v6157, %v5374
        %v6191 = vsel %vm6163, %v6158, %v5376
        %v6192 = vsel %vm6163, %v6159, %v5378
        %v6193 = vsel %vm6163, %v6160, %v5380
        %v6194 = vsel %vm6163, %v6161, %v5382
        %v6195 = vsel %vm6163, %v6162, %v5384
        %vm6196 = vcmask 105472
        %v6197 = vsel %vm6196, %v6164, %v5450
        %v6198 = vsel %vm6196, %v6165, %v5452
        %v6199 = vsel %vm6196, %v6166, %v5454
        %v6200 = vsel %vm6196, %v6167, %v5456
        %v6201 = vsel %vm6196, %v6168, %v5458
        %v6202 = vsel %vm6196, %v6169, %v5460
        %v6203 = vsel %vm6196, %v6170, %v5462
        %v6204 = vsel %vm6196, %v6171, %v5464
        %v6205 = vsel %vm6196, %v6172, %v5466
        %v6206 = vsel %vm6196, %v6173, %v5468
        %v6207 = vsel %vm6196, %v6174, %v5470
        %v6208 = vsel %vm6196, %v6175, %v5472
        %v6209 = vsel %vm6196, %v6176, %v5474
        %v6210 = vsel %vm6196, %v6177, %v5476
        %v6211 = vsel %vm6196, %v6178, %v5478
        %v6212 = vsel %vm6196, %v6179, %v5480
        %v6213 = vsel %vm6196, %v6180, %v5482
        %v6214 = vsel %vm6196, %v6181, %v5484
        %v6215 = vsel %vm6196, %v6182, %v5486
        %v6216 = vsel %vm6196, %v6183, %v5488
        %v6217 = vsel %vm6196, %v6184, %v5490
        %v6218 = vsel %vm6196, %v6185, %v5492
        %v6219 = vsel %vm6196, %v6186, %v5494
        %v6220 = vsel %vm6196, %v6187, %v5496
        %v6221 = vsel %vm6196, %v6188, %v5498
        %v6222 = vsel %vm6196, %v6189, %v5500
        %v6223 = vsel %vm6196, %v6190, %v5502
        %v6224 = vsel %vm6196, %v6191, %v5504
        %v6225 = vsel %vm6196, %v6192, %v5506
        %v6226 = vsel %vm6196, %v6193, %v5508
        %v6227 = vsel %vm6196, %v6194, %v5510
        %v6228 = vsel %vm6196, %v6195, %v5512
        %vm6229 = vcmask 113664
        %v6230 = vsel %vm6229, %v6197, %v5578
        %v6231 = vsel %vm6229, %v6198, %v5580
        %v6232 = vsel %vm6229, %v6199, %v5582
        %v6233 = vsel %vm6229, %v6200, %v5584
        %v6234 = vsel %vm6229, %v6201, %v5586
        %v6235 = vsel %vm6229, %v6202, %v5588
        %v6236 = vsel %vm6229, %v6203, %v5590
        %v6237 = vsel %vm6229, %v6204, %v5592
        %v6238 = vsel %vm6229, %v6205, %v5594
        %v6239 = vsel %vm6229, %v6206, %v5596
        %v6240 = vsel %vm6229, %v6207, %v5598
        %v6241 = vsel %vm6229, %v6208, %v5600
        %v6242 = vsel %vm6229, %v6209, %v5602
        %v6243 = vsel %vm6229, %v6210, %v5604
        %v6244 = vsel %vm6229, %v6211, %v5606
        %v6245 = vsel %vm6229, %v6212, %v5608
        %v6246 = vsel %vm6229, %v6213, %v5610
        %v6247 = vsel %vm6229, %v6214, %v5612
        %v6248 = vsel %vm6229, %v6215, %v5614
        %v6249 = vsel %vm6229, %v6216, %v5616
        %v6250 = vsel %vm6229, %v6217, %v5618
        %v6251 = vsel %vm6229, %v6218, %v5620
        %v6252 = vsel %vm6229, %v6219, %v5622
        %v6253 = vsel %vm6229, %v6220, %v5624
        %v6254 = vsel %vm6229, %v6221, %v5626
        %v6255 = vsel %vm6229, %v6222, %v5628
        %v6256 = vsel %vm6229, %v6223, %v5630
        %v6257 = vsel %vm6229, %v6224, %v5632
        %v6258 = vsel %vm6229, %v6225, %v5634
        %v6259 = vsel %vm6229, %v6226, %v5636
        %v6260 = vsel %vm6229, %v6227, %v5638
        %v6261 = vsel %vm6229, %v6228, %v5640
        %vm6262 = vcmask 121856
        %v6263 = vsel %vm6262, %v6230, %v5706
        %v6264 = vsel %vm6262, %v6231, %v5708
        %v6265 = vsel %vm6262, %v6232, %v5710
        %v6266 = vsel %vm6262, %v6233, %v5712
        %v6267 = vsel %vm6262, %v6234, %v5714
        %v6268 = vsel %vm6262, %v6235, %v5716
        %v6269 = vsel %vm6262, %v6236, %v5718
        %v6270 = vsel %vm6262, %v6237, %v5720
        %v6271 = vsel %vm6262, %v6238, %v5722
        %v6272 = vsel %vm6262, %v6239, %v5724
        %v6273 = vsel %vm6262, %v6240, %v5726
        %v6274 = vsel %vm6262, %v6241, %v5728
        %v6275 = vsel %vm6262, %v6242, %v5730
        %v6276 = vsel %vm6262, %v6243, %v5732
        %v6277 = vsel %vm6262, %v6244, %v5734
        %v6278 = vsel %vm6262, %v6245, %v5736
        %v6279 = vsel %vm6262, %v6246, %v5738
        %v6280 = vsel %vm6262, %v6247, %v5740
        %v6281 = vsel %vm6262, %v6248, %v5742
        %v6282 = vsel %vm6262, %v6249, %v5744
        %v6283 = vsel %vm6262, %v6250, %v5746
        %v6284 = vsel %vm6262, %v6251, %v5748
        %v6285 = vsel %vm6262, %v6252, %v5750
        %v6286 = vsel %vm6262, %v6253, %v5752
        %v6287 = vsel %vm6262, %v6254, %v5754
        %v6288 = vsel %vm6262, %v6255, %v5756
        %v6289 = vsel %vm6262, %v6256, %v5758
        %v6290 = vsel %vm6262, %v6257, %v5760
        %v6291 = vsel %vm6262, %v6258, %v5762
        %v6292 = vsel %vm6262, %v6259, %v5764
        %v6293 = vsel %vm6262, %v6260, %v5766
        %v6294 = vsel %vm6262, %v6261, %v5768
        %6327 = vrot.lane.b32.xlu0 %v1835, 1
        %v6328 = vpop.permute.xlu0 %6327
        %6329 = vrot.lane.b32.xlu0 %v1837, 1
        %v6330 = vpop.permute.xlu0 %6329
        %6331 = vrot.lane.b32.xlu0 %v1839, 1
        %v6332 = vpop.permute.xlu0 %6331
        %6333 = vrot.lane.b32.xlu0 %v1841, 1
        %v6334 = vpop.permute.xlu0 %6333
        %6335 = vrot.lane.b32.xlu0 %v1843, 1
        %v6336 = vpop.permute.xlu0 %6335
        %6337 = vrot.lane.b32.xlu0 %v1845, 1
        %v6338 = vpop.permute.xlu0 %6337
        %6339 = vrot.lane.b32.xlu0 %v1847, 1
        %v6340 = vpop.permute.xlu0 %6339
        %6341 = vrot.lane.b32.xlu0 %v1849, 1
        %v6342 = vpop.permute.xlu0 %6341
        %6343 = vrot.lane.b32.xlu0 %v1851, 1
        %v6344 = vpop.permute.xlu0 %6343
        %6345 = vrot.lane.b32.xlu0 %v1853, 1
        %v6346 = vpop.permute.xlu0 %6345
        %6347 = vrot.lane.b32.xlu0 %v1855, 1
        %v6348 = vpop.permute.xlu0 %6347
        %6349 = vrot.lane.b32.xlu0 %v1857, 1
        %v6350 = vpop.permute.xlu0 %6349
        %6351 = vrot.lane.b32.xlu0 %v1859, 1
        %v6352 = vpop.permute.xlu0 %6351
        %6353 = vrot.lane.b32.xlu0 %v1861, 1
        %v6354 = vpop.permute.xlu0 %6353
        %6355 = vrot.lane.b32.xlu0 %v1863, 1
        %v6356 = vpop.permute.xlu0 %6355
        %6357 = vrot.lane.b32.xlu0 %v1865, 1
        %v6358 = vpop.permute.xlu0 %6357
        %6359 = vrot.lane.b32.xlu0 %v1867, 1
        %v6360 = vpop.permute.xlu0 %6359
        %6361 = vrot.lane.b32.xlu0 %v1869, 1
        %v6362 = vpop.permute.xlu0 %6361
        %6363 = vrot.lane.b32.xlu0 %v1871, 1
        %v6364 = vpop.permute.xlu0 %6363
        %6365 = vrot.lane.b32.xlu0 %v1873, 1
        %v6366 = vpop.permute.xlu0 %6365
        %6367 = vrot.lane.b32.xlu0 %v1875, 1
        %v6368 = vpop.permute.xlu0 %6367
        %6369 = vrot.lane.b32.xlu0 %v1877, 1
        %v6370 = vpop.permute.xlu0 %6369
        %6371 = vrot.lane.b32.xlu0 %v1879, 1
        %v6372 = vpop.permute.xlu0 %6371
        %6373 = vrot.lane.b32.xlu0 %v1881, 1
        %v6374 = vpop.permute.xlu0 %6373
        %6375 = vrot.lane.b32.xlu0 %v1883, 1
        %v6376 = vpop.permute.xlu0 %6375
        %6377 = vrot.lane.b32.xlu0 %v1885, 1
        %v6378 = vpop.permute.xlu0 %6377
        %6379 = vrot.lane.b32.xlu0 %v1887, 1
        %v6380 = vpop.permute.xlu0 %6379
        %6381 = vrot.lane.b32.xlu0 %v1889, 1
        %v6382 = vpop.permute.xlu0 %6381
        %6383 = vrot.lane.b32.xlu0 %v1891, 1
        %v6384 = vpop.permute.xlu0 %6383
        %6385 = vrot.lane.b32.xlu0 %v1893, 1
        %v6386 = vpop.permute.xlu0 %6385
        %6387 = vrot.lane.b32.xlu0 %v1895, 1
        %v6388 = vpop.permute.xlu0 %6387
        %6389 = vrot.lane.b32.xlu0 %v1897, 1
        %v6390 = vpop.permute.xlu0 %6389
        %6455 = vrot.lane.b32.xlu0 %v1899, 2
        %v6456 = vpop.permute.xlu0 %6455
        %6457 = vrot.lane.b32.xlu0 %v1901, 2
        %v6458 = vpop.permute.xlu0 %6457
        %6459 = vrot.lane.b32.xlu0 %v1903, 2
        %v6460 = vpop.permute.xlu0 %6459
        %6461 = vrot.lane.b32.xlu0 %v1905, 2
        %v6462 = vpop.permute.xlu0 %6461
        %6463 = vrot.lane.b32.xlu0 %v1907, 2
        %v6464 = vpop.permute.xlu0 %6463
        %6465 = vrot.lane.b32.xlu0 %v1909, 2
        %v6466 = vpop.permute.xlu0 %6465
        %6467 = vrot.lane.b32.xlu0 %v1911, 2
        %v6468 = vpop.permute.xlu0 %6467
        %6469 = vrot.lane.b32.xlu0 %v1913, 2
        %v6470 = vpop.permute.xlu0 %6469
        %6471 = vrot.lane.b32.xlu0 %v1915, 2
        %v6472 = vpop.permute.xlu0 %6471
        %6473 = vrot.lane.b32.xlu0 %v1917, 2
        %v6474 = vpop.permute.xlu0 %6473
        %6475 = vrot.lane.b32.xlu0 %v1919, 2
        %v6476 = vpop.permute.xlu0 %6475
        %6477 = vrot.lane.b32.xlu0 %v1921, 2
        %v6478 = vpop.permute.xlu0 %6477
        %6479 = vrot.lane.b32.xlu0 %v1923, 2
        %v6480 = vpop.permute.xlu0 %6479
        %6481 = vrot.lane.b32.xlu0 %v1925, 2
        %v6482 = vpop.permute.xlu0 %6481
        %6483 = vrot.lane.b32.xlu0 %v1927, 2
        %v6484 = vpop.permute.xlu0 %6483
        %6485 = vrot.lane.b32.xlu0 %v1929, 2
        %v6486 = vpop.permute.xlu0 %6485
        %6487 = vrot.lane.b32.xlu0 %v1931, 2
        %v6488 = vpop.permute.xlu0 %6487
        %6489 = vrot.lane.b32.xlu0 %v1933, 2
        %v6490 = vpop.permute.xlu0 %6489
        %6491 = vrot.lane.b32.xlu0 %v1935, 2
        %v6492 = vpop.permute.xlu0 %6491
        %6493 = vrot.lane.b32.xlu0 %v1937, 2
        %v6494 = vpop.permute.xlu0 %6493
        %6495 = vrot.lane.b32.xlu0 %v1939, 2
        %v6496 = vpop.permute.xlu0 %6495
        %6497 = vrot.lane.b32.xlu0 %v1941, 2
        %v6498 = vpop.permute.xlu0 %6497
        %6499 = vrot.lane.b32.xlu0 %v1943, 2
        %v6500 = vpop.permute.xlu0 %6499
        %6501 = vrot.lane.b32.xlu0 %v1945, 2
        %v6502 = vpop.permute.xlu0 %6501
        %6503 = vrot.lane.b32.xlu0 %v1947, 2
        %v6504 = vpop.permute.xlu0 %6503
        %6505 = vrot.lane.b32.xlu0 %v1949, 2
        %v6506 = vpop.permute.xlu0 %6505
        %6507 = vrot.lane.b32.xlu0 %v1951, 2
        %v6508 = vpop.permute.xlu0 %6507
        %6509 = vrot.lane.b32.xlu0 %v1953, 2
        %v6510 = vpop.permute.xlu0 %6509
        %6511 = vrot.lane.b32.xlu0 %v1955, 2
        %v6512 = vpop.permute.xlu0 %6511
        %6513 = vrot.lane.b32.xlu0 %v1957, 2
        %v6514 = vpop.permute.xlu0 %6513
        %6515 = vrot.lane.b32.xlu0 %v1959, 2
        %v6516 = vpop.permute.xlu0 %6515
        %6517 = vrot.lane.b32.xlu0 %v1961, 2
        %v6518 = vpop.permute.xlu0 %6517
        %6583 = vrot.lane.b32.xlu0 %v1963, 3
        %v6584 = vpop.permute.xlu0 %6583
        %6585 = vrot.lane.b32.xlu0 %v1965, 3
        %v6586 = vpop.permute.xlu0 %6585
        %6587 = vrot.lane.b32.xlu0 %v1967, 3
        %v6588 = vpop.permute.xlu0 %6587
        %6589 = vrot.lane.b32.xlu0 %v1969, 3
        %v6590 = vpop.permute.xlu0 %6589
        %6591 = vrot.lane.b32.xlu0 %v1971, 3
        %v6592 = vpop.permute.xlu0 %6591
        %6593 = vrot.lane.b32.xlu0 %v1973, 3
        %v6594 = vpop.permute.xlu0 %6593
        %6595 = vrot.lane.b32.xlu0 %v1975, 3
        %v6596 = vpop.permute.xlu0 %6595
        %6597 = vrot.lane.b32.xlu0 %v1977, 3
        %v6598 = vpop.permute.xlu0 %6597
        %6599 = vrot.lane.b32.xlu0 %v1979, 3
        %v6600 = vpop.permute.xlu0 %6599
        %6601 = vrot.lane.b32.xlu0 %v1981, 3
        %v6602 = vpop.permute.xlu0 %6601
        %6603 = vrot.lane.b32.xlu0 %v1983, 3
        %v6604 = vpop.permute.xlu0 %6603
        %6605 = vrot.lane.b32.xlu0 %v1985, 3
        %v6606 = vpop.permute.xlu0 %6605
        %6607 = vrot.lane.b32.xlu0 %v1987, 3
        %v6608 = vpop.permute.xlu0 %6607
        %6609 = vrot.lane.b32.xlu0 %v1989, 3
        %v6610 = vpop.permute.xlu0 %6609
        %6611 = vrot.lane.b32.xlu0 %v1991, 3
        %v6612 = vpop.permute.xlu0 %6611
        %6613 = vrot.lane.b32.xlu0 %v1993, 3
        %v6614 = vpop.permute.xlu0 %6613
        %6615 = vrot.lane.b32.xlu0 %v1995, 3
        %v6616 = vpop.permute.xlu0 %6615
        %6617 = vrot.lane.b32.xlu0 %v1997, 3
        %v6618 = vpop.permute.xlu0 %6617
        %6619 = vrot.lane.b32.xlu0 %v1999, 3
        %v6620 = vpop.permute.xlu0 %6619
        %6621 = vrot.lane.b32.xlu0 %v2001, 3
        %v6622 = vpop.permute.xlu0 %6621
        %6623 = vrot.lane.b32.xlu0 %v2003, 3
        %v6624 = vpop.permute.xlu0 %6623
        %6625 = vrot.lane.b32.xlu0 %v2005, 3
        %v6626 = vpop.permute.xlu0 %6625
        %6627 = vrot.lane.b32.xlu0 %v2007, 3
        %v6628 = vpop.permute.xlu0 %6627
        %6629 = vrot.lane.b32.xlu0 %v2009, 3
        %v6630 = vpop.permute.xlu0 %6629
        %6631 = vrot.lane.b32.xlu0 %v2011, 3
        %v6632 = vpop.permute.xlu0 %6631
        %6633 = vrot.lane.b32.xlu0 %v2013, 3
        %v6634 = vpop.permute.xlu0 %6633
        %6635 = vrot.lane.b32.xlu0 %v2015, 3
        %v6636 = vpop.permute.xlu0 %6635
        %6637 = vrot.lane.b32.xlu0 %v2017, 3
        %v6638 = vpop.permute.xlu0 %6637
        %6639 = vrot.lane.b32.xlu0 %v2019, 3
        %v6640 = vpop.permute.xlu0 %6639
        %6641 = vrot.lane.b32.xlu0 %v2021, 3
        %v6642 = vpop.permute.xlu0 %6641
        %6643 = vrot.lane.b32.xlu0 %v2023, 3
        %v6644 = vpop.permute.xlu0 %6643
        %6645 = vrot.lane.b32.xlu0 %v2025, 3
        %v6646 = vpop.permute.xlu0 %6645
        %6711 = vrot.lane.b32.xlu0 %v2027, 4
        %v6712 = vpop.permute.xlu0 %6711
        %6713 = vrot.lane.b32.xlu0 %v2029, 4
        %v6714 = vpop.permute.xlu0 %6713
        %6715 = vrot.lane.b32.xlu0 %v2031, 4
        %v6716 = vpop.permute.xlu0 %6715
        %6717 = vrot.lane.b32.xlu0 %v2033, 4
        %v6718 = vpop.permute.xlu0 %6717
        %6719 = vrot.lane.b32.xlu0 %v2035, 4
        %v6720 = vpop.permute.xlu0 %6719
        %6721 = vrot.lane.b32.xlu0 %v2037, 4
        %v6722 = vpop.permute.xlu0 %6721
        %6723 = vrot.lane.b32.xlu0 %v2039, 4
        %v6724 = vpop.permute.xlu0 %6723
        %6725 = vrot.lane.b32.xlu0 %v2041, 4
        %v6726 = vpop.permute.xlu0 %6725
        %6727 = vrot.lane.b32.xlu0 %v2043, 4
        %v6728 = vpop.permute.xlu0 %6727
        %6729 = vrot.lane.b32.xlu0 %v2045, 4
        %v6730 = vpop.permute.xlu0 %6729
        %6731 = vrot.lane.b32.xlu0 %v2047, 4
        %v6732 = vpop.permute.xlu0 %6731
        %6733 = vrot.lane.b32.xlu0 %v2049, 4
        %v6734 = vpop.permute.xlu0 %6733
        %6735 = vrot.lane.b32.xlu0 %v2051, 4
        %v6736 = vpop.permute.xlu0 %6735
        %6737 = vrot.lane.b32.xlu0 %v2053, 4
        %v6738 = vpop.permute.xlu0 %6737
        %6739 = vrot.lane.b32.xlu0 %v2055, 4
        %v6740 = vpop.permute.xlu0 %6739
        %6741 = vrot.lane.b32.xlu0 %v2057, 4
        %v6742 = vpop.permute.xlu0 %6741
        %6743 = vrot.lane.b32.xlu0 %v2059, 4
        %v6744 = vpop.permute.xlu0 %6743
        %6745 = vrot.lane.b32.xlu0 %v2061, 4
        %v6746 = vpop.permute.xlu0 %6745
        %6747 = vrot.lane.b32.xlu0 %v2063, 4
        %v6748 = vpop.permute.xlu0 %6747
        %6749 = vrot.lane.b32.xlu0 %v2065, 4
        %v6750 = vpop.permute.xlu0 %6749
        %6751 = vrot.lane.b32.xlu0 %v2067, 4
        %v6752 = vpop.permute.xlu0 %6751
        %6753 = vrot.lane.b32.xlu0 %v2069, 4
        %v6754 = vpop.permute.xlu0 %6753
        %6755 = vrot.lane.b32.xlu0 %v2071, 4
        %v6756 = vpop.permute.xlu0 %6755
        %6757 = vrot.lane.b32.xlu0 %v2073, 4
        %v6758 = vpop.permute.xlu0 %6757
        %6759 = vrot.lane.b32.xlu0 %v2075, 4
        %v6760 = vpop.permute.xlu0 %6759
        %6761 = vrot.lane.b32.xlu0 %v2077, 4
        %v6762 = vpop.permute.xlu0 %6761
        %6763 = vrot.lane.b32.xlu0 %v2079, 4
        %v6764 = vpop.permute.xlu0 %6763
        %6765 = vrot.lane.b32.xlu0 %v2081, 4
        %v6766 = vpop.permute.xlu0 %6765
        %6767 = vrot.lane.b32.xlu0 %v2083, 4
        %v6768 = vpop.permute.xlu0 %6767
        %6769 = vrot.lane.b32.xlu0 %v2085, 4
        %v6770 = vpop.permute.xlu0 %6769
        %6771 = vrot.lane.b32.xlu0 %v2087, 4
        %v6772 = vpop.permute.xlu0 %6771
        %6773 = vrot.lane.b32.xlu0 %v2089, 4
        %v6774 = vpop.permute.xlu0 %6773
        %6839 = vrot.lane.b32.xlu0 %v2090, 5
        %v6840 = vpop.permute.xlu0 %6839
        %6841 = vrot.lane.b32.xlu0 %v2092, 5
        %v6842 = vpop.permute.xlu0 %6841
        %6843 = vrot.lane.b32.xlu0 %v2094, 5
        %v6844 = vpop.permute.xlu0 %6843
        %6845 = vrot.lane.b32.xlu0 %v2096, 5
        %v6846 = vpop.permute.xlu0 %6845
        %6847 = vrot.lane.b32.xlu0 %v2098, 5
        %v6848 = vpop.permute.xlu0 %6847
        %6849 = vrot.lane.b32.xlu0 %v2100, 5
        %v6850 = vpop.permute.xlu0 %6849
        %6851 = vrot.lane.b32.xlu0 %v2102, 5
        %v6852 = vpop.permute.xlu0 %6851
        %6853 = vrot.lane.b32.xlu0 %v2104, 5
        %v6854 = vpop.permute.xlu0 %6853
        %6855 = vrot.lane.b32.xlu0 %v2106, 5
        %v6856 = vpop.permute.xlu0 %6855
        %6857 = vrot.lane.b32.xlu0 %v2108, 5
        %v6858 = vpop.permute.xlu0 %6857
        %6859 = vrot.lane.b32.xlu0 %v2110, 5
        %v6860 = vpop.permute.xlu0 %6859
        %6861 = vrot.lane.b32.xlu0 %v2112, 5
        %v6862 = vpop.permute.xlu0 %6861
        %6863 = vrot.lane.b32.xlu0 %v2114, 5
        %v6864 = vpop.permute.xlu0 %6863
        %6865 = vrot.lane.b32.xlu0 %v2116, 5
        %v6866 = vpop.permute.xlu0 %6865
        %6867 = vrot.lane.b32.xlu0 %v2118, 5
        %v6868 = vpop.permute.xlu0 %6867
        %6869 = vrot.lane.b32.xlu0 %v2120, 5
        %v6870 = vpop.permute.xlu0 %6869
        %6871 = vrot.lane.b32.xlu0 %v2122, 5
        %v6872 = vpop.permute.xlu0 %6871
        %6873 = vrot.lane.b32.xlu0 %v2124, 5
        %v6874 = vpop.permute.xlu0 %6873
        %6875 = vrot.lane.b32.xlu0 %v2126, 5
        %v6876 = vpop.permute.xlu0 %6875
        %6877 = vrot.lane.b32.xlu0 %v2128, 5
        %v6878 = vpop.permute.xlu0 %6877
        %6879 = vrot.lane.b32.xlu0 %v2130, 5
        %v6880 = vpop.permute.xlu0 %6879
        %6881 = vrot.lane.b32.xlu0 %v2132, 5
        %v6882 = vpop.permute.xlu0 %6881
        %6883 = vrot.lane.b32.xlu0 %v2134, 5
        %v6884 = vpop.permute.xlu0 %6883
        %6885 = vrot.lane.b32.xlu0 %v2136, 5
        %v6886 = vpop.permute.xlu0 %6885
        %6887 = vrot.lane.b32.xlu0 %v2138, 5
        %v6888 = vpop.permute.xlu0 %6887
        %6889 = vrot.lane.b32.xlu0 %v2140, 5
        %v6890 = vpop.permute.xlu0 %6889
        %6891 = vrot.lane.b32.xlu0 %v2142, 5
        %v6892 = vpop.permute.xlu0 %6891
        %6893 = vrot.lane.b32.xlu0 %v2144, 5
        %v6894 = vpop.permute.xlu0 %6893
        %6895 = vrot.lane.b32.xlu0 %v2146, 5
        %v6896 = vpop.permute.xlu0 %6895
        %6897 = vrot.lane.b32.xlu0 %v2148, 5
        %v6898 = vpop.permute.xlu0 %6897
        %6899 = vrot.lane.b32.xlu0 %v2150, 5
        %v6900 = vpop.permute.xlu0 %6899
        %6901 = vrot.lane.b32.xlu0 %v2152, 5
        %v6902 = vpop.permute.xlu0 %6901
        %6967 = vrot.lane.b32.xlu0 %v2154, 6
        %v6968 = vpop.permute.xlu0 %6967
        %6969 = vrot.lane.b32.xlu0 %v2156, 6
        %v6970 = vpop.permute.xlu0 %6969
        %6971 = vrot.lane.b32.xlu0 %v2158, 6
        %v6972 = vpop.permute.xlu0 %6971
        %6973 = vrot.lane.b32.xlu0 %v2160, 6
        %v6974 = vpop.permute.xlu0 %6973
        %6975 = vrot.lane.b32.xlu0 %v2162, 6
        %v6976 = vpop.permute.xlu0 %6975
        %6977 = vrot.lane.b32.xlu0 %v2164, 6
        %v6978 = vpop.permute.xlu0 %6977
        %6979 = vrot.lane.b32.xlu0 %v2166, 6
        %v6980 = vpop.permute.xlu0 %6979
        %6981 = vrot.lane.b32.xlu0 %v2168, 6
        %v6982 = vpop.permute.xlu0 %6981
        %6983 = vrot.lane.b32.xlu0 %v2170, 6
        %v6984 = vpop.permute.xlu0 %6983
        %6985 = vrot.lane.b32.xlu0 %v2172, 6
        %v6986 = vpop.permute.xlu0 %6985
        %6987 = vrot.lane.b32.xlu0 %v2174, 6
        %v6988 = vpop.permute.xlu0 %6987
        %6989 = vrot.lane.b32.xlu0 %v2176, 6
        %v6990 = vpop.permute.xlu0 %6989
        %6991 = vrot.lane.b32.xlu0 %v2178, 6
        %v6992 = vpop.permute.xlu0 %6991
        %6993 = vrot.lane.b32.xlu0 %v2180, 6
        %v6994 = vpop.permute.xlu0 %6993
        %6995 = vrot.lane.b32.xlu0 %v2182, 6
        %v6996 = vpop.permute.xlu0 %6995
        %6997 = vrot.lane.b32.xlu0 %v2184, 6
        %v6998 = vpop.permute.xlu0 %6997
        %6999 = vrot.lane.b32.xlu0 %v2186, 6
        %v7000 = vpop.permute.xlu0 %6999
        %7001 = vrot.lane.b32.xlu0 %v2188, 6
        %v7002 = vpop.permute.xlu0 %7001
        %7003 = vrot.lane.b32.xlu0 %v2190, 6
        %v7004 = vpop.permute.xlu0 %7003
        %7005 = vrot.lane.b32.xlu0 %v2192, 6
        %v7006 = vpop.permute.xlu0 %7005
        %7007 = vrot.lane.b32.xlu0 %v2194, 6
        %v7008 = vpop.permute.xlu0 %7007
        %7009 = vrot.lane.b32.xlu0 %v2196, 6
        %v7010 = vpop.permute.xlu0 %7009
        %7011 = vrot.lane.b32.xlu0 %v2198, 6
        %v7012 = vpop.permute.xlu0 %7011
        %7013 = vrot.lane.b32.xlu0 %v2200, 6
        %v7014 = vpop.permute.xlu0 %7013
        %7015 = vrot.lane.b32.xlu0 %v2202, 6
        %v7016 = vpop.permute.xlu0 %7015
        %7017 = vrot.lane.b32.xlu0 %v2204, 6
        %v7018 = vpop.permute.xlu0 %7017
        %7019 = vrot.lane.b32.xlu0 %v2206, 6
        %v7020 = vpop.permute.xlu0 %7019
        %7021 = vrot.lane.b32.xlu0 %v2208, 6
        %v7022 = vpop.permute.xlu0 %7021
        %7023 = vrot.lane.b32.xlu0 %v2210, 6
        %v7024 = vpop.permute.xlu0 %7023
        %7025 = vrot.lane.b32.xlu0 %v2212, 6
        %v7026 = vpop.permute.xlu0 %7025
        %7027 = vrot.lane.b32.xlu0 %v2214, 6
        %v7028 = vpop.permute.xlu0 %7027
        %7029 = vrot.lane.b32.xlu0 %v2216, 6
        %v7030 = vpop.permute.xlu0 %7029
        %7095 = vrot.lane.b32.xlu0 %v2218, 7
        %v7096 = vpop.permute.xlu0 %7095
        %7097 = vrot.lane.b32.xlu0 %v2220, 7
        %v7098 = vpop.permute.xlu0 %7097
        %7099 = vrot.lane.b32.xlu0 %v2222, 7
        %v7100 = vpop.permute.xlu0 %7099
        %7101 = vrot.lane.b32.xlu0 %v2224, 7
        %v7102 = vpop.permute.xlu0 %7101
        %7103 = vrot.lane.b32.xlu0 %v2226, 7
        %v7104 = vpop.permute.xlu0 %7103
        %7105 = vrot.lane.b32.xlu0 %v2228, 7
        %v7106 = vpop.permute.xlu0 %7105
        %7107 = vrot.lane.b32.xlu0 %v2230, 7
        %v7108 = vpop.permute.xlu0 %7107
        %7109 = vrot.lane.b32.xlu0 %v2232, 7
        %v7110 = vpop.permute.xlu0 %7109
        %7111 = vrot.lane.b32.xlu0 %v2234, 7
        %v7112 = vpop.permute.xlu0 %7111
        %7113 = vrot.lane.b32.xlu0 %v2236, 7
        %v7114 = vpop.permute.xlu0 %7113
        %7115 = vrot.lane.b32.xlu0 %v2238, 7
        %v7116 = vpop.permute.xlu0 %7115
        %7117 = vrot.lane.b32.xlu0 %v2240, 7
        %v7118 = vpop.permute.xlu0 %7117
        %7119 = vrot.lane.b32.xlu0 %v2242, 7
        %v7120 = vpop.permute.xlu0 %7119
        %7121 = vrot.lane.b32.xlu0 %v2244, 7
        %v7122 = vpop.permute.xlu0 %7121
        %7123 = vrot.lane.b32.xlu0 %v2246, 7
        %v7124 = vpop.permute.xlu0 %7123
        %7125 = vrot.lane.b32.xlu0 %v2248, 7
        %v7126 = vpop.permute.xlu0 %7125
        %7127 = vrot.lane.b32.xlu0 %v2250, 7
        %v7128 = vpop.permute.xlu0 %7127
        %7129 = vrot.lane.b32.xlu0 %v2252, 7
        %v7130 = vpop.permute.xlu0 %7129
        %7131 = vrot.lane.b32.xlu0 %v2254, 7
        %v7132 = vpop.permute.xlu0 %7131
        %7133 = vrot.lane.b32.xlu0 %v2256, 7
        %v7134 = vpop.permute.xlu0 %7133
        %7135 = vrot.lane.b32.xlu0 %v2258, 7
        %v7136 = vpop.permute.xlu0 %7135
        %7137 = vrot.lane.b32.xlu0 %v2260, 7
        %v7138 = vpop.permute.xlu0 %7137
        %7139 = vrot.lane.b32.xlu0 %v2262, 7
        %v7140 = vpop.permute.xlu0 %7139
        %7141 = vrot.lane.b32.xlu0 %v2264, 7
        %v7142 = vpop.permute.xlu0 %7141
        %7143 = vrot.lane.b32.xlu0 %v2266, 7
        %v7144 = vpop.permute.xlu0 %7143
        %7145 = vrot.lane.b32.xlu0 %v2268, 7
        %v7146 = vpop.permute.xlu0 %7145
        %7147 = vrot.lane.b32.xlu0 %v2270, 7
        %v7148 = vpop.permute.xlu0 %7147
        %7149 = vrot.lane.b32.xlu0 %v2272, 7
        %v7150 = vpop.permute.xlu0 %7149
        %7151 = vrot.lane.b32.xlu0 %v2274, 7
        %v7152 = vpop.permute.xlu0 %7151
        %7153 = vrot.lane.b32.xlu0 %v2276, 7
        %v7154 = vpop.permute.xlu0 %7153
        %7155 = vrot.lane.b32.xlu0 %v2278, 7
        %v7156 = vpop.permute.xlu0 %7155
        %7157 = vrot.lane.b32.xlu0 %v2280, 7
        %v7158 = vpop.permute.xlu0 %7157
        %7223 = vrot.lane.b32.xlu0 %v2282, 8
        %v7224 = vpop.permute.xlu0 %7223
        %7225 = vrot.lane.b32.xlu0 %v2284, 8
        %v7226 = vpop.permute.xlu0 %7225
        %7227 = vrot.lane.b32.xlu0 %v2286, 8
        %v7228 = vpop.permute.xlu0 %7227
        %7229 = vrot.lane.b32.xlu0 %v2288, 8
        %v7230 = vpop.permute.xlu0 %7229
        %7231 = vrot.lane.b32.xlu0 %v2290, 8
        %v7232 = vpop.permute.xlu0 %7231
        %7233 = vrot.lane.b32.xlu0 %v2292, 8
        %v7234 = vpop.permute.xlu0 %7233
        %7235 = vrot.lane.b32.xlu0 %v2294, 8
        %v7236 = vpop.permute.xlu0 %7235
        %7237 = vrot.lane.b32.xlu0 %v2296, 8
        %v7238 = vpop.permute.xlu0 %7237
        %7239 = vrot.lane.b32.xlu0 %v2298, 8
        %v7240 = vpop.permute.xlu0 %7239
        %7241 = vrot.lane.b32.xlu0 %v2300, 8
        %v7242 = vpop.permute.xlu0 %7241
        %7243 = vrot.lane.b32.xlu0 %v2302, 8
        %v7244 = vpop.permute.xlu0 %7243
        %7245 = vrot.lane.b32.xlu0 %v2304, 8
        %v7246 = vpop.permute.xlu0 %7245
        %7247 = vrot.lane.b32.xlu0 %v2306, 8
        %v7248 = vpop.permute.xlu0 %7247
        %7249 = vrot.lane.b32.xlu0 %v2308, 8
        %v7250 = vpop.permute.xlu0 %7249
        %7251 = vrot.lane.b32.xlu0 %v2310, 8
        %v7252 = vpop.permute.xlu0 %7251
        %7253 = vrot.lane.b32.xlu0 %v2312, 8
        %v7254 = vpop.permute.xlu0 %7253
        %7255 = vrot.lane.b32.xlu0 %v2314, 8
        %v7256 = vpop.permute.xlu0 %7255
        %7257 = vrot.lane.b32.xlu0 %v2316, 8
        %v7258 = vpop.permute.xlu0 %7257
        %7259 = vrot.lane.b32.xlu0 %v2318, 8
        %v7260 = vpop.permute.xlu0 %7259
        %7261 = vrot.lane.b32.xlu0 %v2320, 8
        %v7262 = vpop.permute.xlu0 %7261
        %7263 = vrot.lane.b32.xlu0 %v2322, 8
        %v7264 = vpop.permute.xlu0 %7263
        %7265 = vrot.lane.b32.xlu0 %v2324, 8
        %v7266 = vpop.permute.xlu0 %7265
        %7267 = vrot.lane.b32.xlu0 %v2326, 8
        %v7268 = vpop.permute.xlu0 %7267
        %7269 = vrot.lane.b32.xlu0 %v2328, 8
        %v7270 = vpop.permute.xlu0 %7269
        %7271 = vrot.lane.b32.xlu0 %v2330, 8
        %v7272 = vpop.permute.xlu0 %7271
        %7273 = vrot.lane.b32.xlu0 %v2332, 8
        %v7274 = vpop.permute.xlu0 %7273
        %7275 = vrot.lane.b32.xlu0 %v2334, 8
        %v7276 = vpop.permute.xlu0 %7275
        %7277 = vrot.lane.b32.xlu0 %v2336, 8
        %v7278 = vpop.permute.xlu0 %7277
        %7279 = vrot.lane.b32.xlu0 %v2338, 8
        %v7280 = vpop.permute.xlu0 %7279
        %7281 = vrot.lane.b32.xlu0 %v2340, 8
        %v7282 = vpop.permute.xlu0 %7281
        %7283 = vrot.lane.b32.xlu0 %v2342, 8
        %v7284 = vpop.permute.xlu0 %7283
        %7285 = vrot.lane.b32.xlu0 %v2344, 8
        %v7286 = vpop.permute.xlu0 %7285
        %7351 = vrot.lane.b32.xlu0 %v2346, 9
        %v7352 = vpop.permute.xlu0 %7351
        %7353 = vrot.lane.b32.xlu0 %v2348, 9
        %v7354 = vpop.permute.xlu0 %7353
        %7355 = vrot.lane.b32.xlu0 %v2350, 9
        %v7356 = vpop.permute.xlu0 %7355
        %7357 = vrot.lane.b32.xlu0 %v2352, 9
        %v7358 = vpop.permute.xlu0 %7357
        %7359 = vrot.lane.b32.xlu0 %v2354, 9
        %v7360 = vpop.permute.xlu0 %7359
        %7361 = vrot.lane.b32.xlu0 %v2356, 9
        %v7362 = vpop.permute.xlu0 %7361
        %7363 = vrot.lane.b32.xlu0 %v2358, 9
        %v7364 = vpop.permute.xlu0 %7363
        %7365 = vrot.lane.b32.xlu0 %v2360, 9
        %v7366 = vpop.permute.xlu0 %7365
        %7367 = vrot.lane.b32.xlu0 %v2362, 9
        %v7368 = vpop.permute.xlu0 %7367
        %7369 = vrot.lane.b32.xlu0 %v2364, 9
        %v7370 = vpop.permute.xlu0 %7369
        %7371 = vrot.lane.b32.xlu0 %v2366, 9
        %v7372 = vpop.permute.xlu0 %7371
        %7373 = vrot.lane.b32.xlu0 %v2368, 9
        %v7374 = vpop.permute.xlu0 %7373
        %7375 = vrot.lane.b32.xlu0 %v2370, 9
        %v7376 = vpop.permute.xlu0 %7375
        %7377 = vrot.lane.b32.xlu0 %v2372, 9
        %v7378 = vpop.permute.xlu0 %7377
        %7379 = vrot.lane.b32.xlu0 %v2374, 9
        %v7380 = vpop.permute.xlu0 %7379
        %7381 = vrot.lane.b32.xlu0 %v2376, 9
        %v7382 = vpop.permute.xlu0 %7381
        %7383 = vrot.lane.b32.xlu0 %v2378, 9
        %v7384 = vpop.permute.xlu0 %7383
        %7385 = vrot.lane.b32.xlu0 %v2380, 9
        %v7386 = vpop.permute.xlu0 %7385
        %7387 = vrot.lane.b32.xlu0 %v2382, 9
        %v7388 = vpop.permute.xlu0 %7387
        %7389 = vrot.lane.b32.xlu0 %v2384, 9
        %v7390 = vpop.permute.xlu0 %7389
        %7391 = vrot.lane.b32.xlu0 %v2386, 9
        %v7392 = vpop.permute.xlu0 %7391
        %7393 = vrot.lane.b32.xlu0 %v2388, 9
        %v7394 = vpop.permute.xlu0 %7393
        %7395 = vrot.lane.b32.xlu0 %v2390, 9
        %v7396 = vpop.permute.xlu0 %7395
        %7397 = vrot.lane.b32.xlu0 %v2392, 9
        %v7398 = vpop.permute.xlu0 %7397
        %7399 = vrot.lane.b32.xlu0 %v2394, 9
        %v7400 = vpop.permute.xlu0 %7399
        %7401 = vrot.lane.b32.xlu0 %v2396, 9
        %v7402 = vpop.permute.xlu0 %7401
        %7403 = vrot.lane.b32.xlu0 %v2398, 9
        %v7404 = vpop.permute.xlu0 %7403
        %7405 = vrot.lane.b32.xlu0 %v2400, 9
        %v7406 = vpop.permute.xlu0 %7405
        %7407 = vrot.lane.b32.xlu0 %v2402, 9
        %v7408 = vpop.permute.xlu0 %7407
        %7409 = vrot.lane.b32.xlu0 %v2404, 9
        %v7410 = vpop.permute.xlu0 %7409
        %7411 = vrot.lane.b32.xlu0 %v2406, 9
        %v7412 = vpop.permute.xlu0 %7411
        %7413 = vrot.lane.b32.xlu0 %v2408, 9
        %v7414 = vpop.permute.xlu0 %7413
        %7479 = vrot.lane.b32.xlu0 %v2410, 10
        %v7480 = vpop.permute.xlu0 %7479
        %7481 = vrot.lane.b32.xlu0 %v2412, 10
        %v7482 = vpop.permute.xlu0 %7481
        %7483 = vrot.lane.b32.xlu0 %v2414, 10
        %v7484 = vpop.permute.xlu0 %7483
        %7485 = vrot.lane.b32.xlu0 %v2416, 10
        %v7486 = vpop.permute.xlu0 %7485
        %7487 = vrot.lane.b32.xlu0 %v2418, 10
        %v7488 = vpop.permute.xlu0 %7487
        %7489 = vrot.lane.b32.xlu0 %v2420, 10
        %v7490 = vpop.permute.xlu0 %7489
        %7491 = vrot.lane.b32.xlu0 %v2422, 10
        %v7492 = vpop.permute.xlu0 %7491
        %7493 = vrot.lane.b32.xlu0 %v2424, 10
        %v7494 = vpop.permute.xlu0 %7493
        %7495 = vrot.lane.b32.xlu0 %v2426, 10
        %v7496 = vpop.permute.xlu0 %7495
        %7497 = vrot.lane.b32.xlu0 %v2428, 10
        %v7498 = vpop.permute.xlu0 %7497
        %7499 = vrot.lane.b32.xlu0 %v2430, 10
        %v7500 = vpop.permute.xlu0 %7499
        %7501 = vrot.lane.b32.xlu0 %v2432, 10
        %v7502 = vpop.permute.xlu0 %7501
        %7503 = vrot.lane.b32.xlu0 %v2434, 10
        %v7504 = vpop.permute.xlu0 %7503
        %7505 = vrot.lane.b32.xlu0 %v2436, 10
        %v7506 = vpop.permute.xlu0 %7505
        %7507 = vrot.lane.b32.xlu0 %v2438, 10
        %v7508 = vpop.permute.xlu0 %7507
        %7509 = vrot.lane.b32.xlu0 %v2440, 10
        %v7510 = vpop.permute.xlu0 %7509
        %7511 = vrot.lane.b32.xlu0 %v2442, 10
        %v7512 = vpop.permute.xlu0 %7511
        %7513 = vrot.lane.b32.xlu0 %v2444, 10
        %v7514 = vpop.permute.xlu0 %7513
        %7515 = vrot.lane.b32.xlu0 %v2446, 10
        %v7516 = vpop.permute.xlu0 %7515
        %7517 = vrot.lane.b32.xlu0 %v2448, 10
        %v7518 = vpop.permute.xlu0 %7517
        %7519 = vrot.lane.b32.xlu0 %v2450, 10
        %v7520 = vpop.permute.xlu0 %7519
        %7521 = vrot.lane.b32.xlu0 %v2452, 10
        %v7522 = vpop.permute.xlu0 %7521
        %7523 = vrot.lane.b32.xlu0 %v2454, 10
        %v7524 = vpop.permute.xlu0 %7523
        %7525 = vrot.lane.b32.xlu0 %v2456, 10
        %v7526 = vpop.permute.xlu0 %7525
        %7527 = vrot.lane.b32.xlu0 %v2458, 10
        %v7528 = vpop.permute.xlu0 %7527
        %7529 = vrot.lane.b32.xlu0 %v2460, 10
        %v7530 = vpop.permute.xlu0 %7529
        %7531 = vrot.lane.b32.xlu0 %v2462, 10
        %v7532 = vpop.permute.xlu0 %7531
        %7533 = vrot.lane.b32.xlu0 %v2464, 10
        %v7534 = vpop.permute.xlu0 %7533
        %7535 = vrot.lane.b32.xlu0 %v2466, 10
        %v7536 = vpop.permute.xlu0 %7535
        %7537 = vrot.lane.b32.xlu0 %v2468, 10
        %v7538 = vpop.permute.xlu0 %7537
        %7539 = vrot.lane.b32.xlu0 %v2470, 10
        %v7540 = vpop.permute.xlu0 %7539
        %7541 = vrot.lane.b32.xlu0 %v2472, 10
        %v7542 = vpop.permute.xlu0 %7541
        %7607 = vrot.lane.b32.xlu0 %v2474, 11
        %v7608 = vpop.permute.xlu0 %7607
        %7609 = vrot.lane.b32.xlu0 %v2476, 11
        %v7610 = vpop.permute.xlu0 %7609
        %7611 = vrot.lane.b32.xlu0 %v2478, 11
        %v7612 = vpop.permute.xlu0 %7611
        %7613 = vrot.lane.b32.xlu0 %v2480, 11
        %v7614 = vpop.permute.xlu0 %7613
        %7615 = vrot.lane.b32.xlu0 %v2482, 11
        %v7616 = vpop.permute.xlu0 %7615
        %7617 = vrot.lane.b32.xlu0 %v2484, 11
        %v7618 = vpop.permute.xlu0 %7617
        %7619 = vrot.lane.b32.xlu0 %v2486, 11
        %v7620 = vpop.permute.xlu0 %7619
        %7621 = vrot.lane.b32.xlu0 %v2488, 11
        %v7622 = vpop.permute.xlu0 %7621
        %7623 = vrot.lane.b32.xlu0 %v2490, 11
        %v7624 = vpop.permute.xlu0 %7623
        %7625 = vrot.lane.b32.xlu0 %v2492, 11
        %v7626 = vpop.permute.xlu0 %7625
        %7627 = vrot.lane.b32.xlu0 %v2494, 11
        %v7628 = vpop.permute.xlu0 %7627
        %7629 = vrot.lane.b32.xlu0 %v2496, 11
        %v7630 = vpop.permute.xlu0 %7629
        %7631 = vrot.lane.b32.xlu0 %v2498, 11
        %v7632 = vpop.permute.xlu0 %7631
        %7633 = vrot.lane.b32.xlu0 %v2500, 11
        %v7634 = vpop.permute.xlu0 %7633
        %7635 = vrot.lane.b32.xlu0 %v2502, 11
        %v7636 = vpop.permute.xlu0 %7635
        %7637 = vrot.lane.b32.xlu0 %v2504, 11
        %v7638 = vpop.permute.xlu0 %7637
        %7639 = vrot.lane.b32.xlu0 %v2506, 11
        %v7640 = vpop.permute.xlu0 %7639
        %7641 = vrot.lane.b32.xlu0 %v2508, 11
        %v7642 = vpop.permute.xlu0 %7641
        %7643 = vrot.lane.b32.xlu0 %v2510, 11
        %v7644 = vpop.permute.xlu0 %7643
        %7645 = vrot.lane.b32.xlu0 %v2512, 11
        %v7646 = vpop.permute.xlu0 %7645
        %7647 = vrot.lane.b32.xlu0 %v2514, 11
        %v7648 = vpop.permute.xlu0 %7647
        %7649 = vrot.lane.b32.xlu0 %v2516, 11
        %v7650 = vpop.permute.xlu0 %7649
        %7651 = vrot.lane.b32.xlu0 %v2518, 11
        %v7652 = vpop.permute.xlu0 %7651
        %7653 = vrot.lane.b32.xlu0 %v2520, 11
        %v7654 = vpop.permute.xlu0 %7653
        %7655 = vrot.lane.b32.xlu0 %v2522, 11
        %v7656 = vpop.permute.xlu0 %7655
        %7657 = vrot.lane.b32.xlu0 %v2524, 11
        %v7658 = vpop.permute.xlu0 %7657
        %7659 = vrot.lane.b32.xlu0 %v2526, 11
        %v7660 = vpop.permute.xlu0 %7659
        %7661 = vrot.lane.b32.xlu0 %v2528, 11
        %v7662 = vpop.permute.xlu0 %7661
        %7663 = vrot.lane.b32.xlu0 %v2530, 11
        %v7664 = vpop.permute.xlu0 %7663
        %7665 = vrot.lane.b32.xlu0 %v2532, 11
        %v7666 = vpop.permute.xlu0 %7665
        %7667 = vrot.lane.b32.xlu0 %v2534, 11
        %v7668 = vpop.permute.xlu0 %7667
        %7669 = vrot.lane.b32.xlu0 %v2536, 11
        %v7670 = vpop.permute.xlu0 %7669
        %7735 = vrot.lane.b32.xlu0 %v2538, 12
        %v7736 = vpop.permute.xlu0 %7735
        %7737 = vrot.lane.b32.xlu0 %v2540, 12
        %v7738 = vpop.permute.xlu0 %7737
        %7739 = vrot.lane.b32.xlu0 %v2542, 12
        %v7740 = vpop.permute.xlu0 %7739
        %7741 = vrot.lane.b32.xlu0 %v2544, 12
        %v7742 = vpop.permute.xlu0 %7741
        %7743 = vrot.lane.b32.xlu0 %v2546, 12
        %v7744 = vpop.permute.xlu0 %7743
        %7745 = vrot.lane.b32.xlu0 %v2548, 12
        %v7746 = vpop.permute.xlu0 %7745
        %7747 = vrot.lane.b32.xlu0 %v2550, 12
        %v7748 = vpop.permute.xlu0 %7747
        %7749 = vrot.lane.b32.xlu0 %v2552, 12
        %v7750 = vpop.permute.xlu0 %7749
        %7751 = vrot.lane.b32.xlu0 %v2554, 12
        %v7752 = vpop.permute.xlu0 %7751
        %7753 = vrot.lane.b32.xlu0 %v2556, 12
        %v7754 = vpop.permute.xlu0 %7753
        %7755 = vrot.lane.b32.xlu0 %v2558, 12
        %v7756 = vpop.permute.xlu0 %7755
        %7757 = vrot.lane.b32.xlu0 %v2560, 12
        %v7758 = vpop.permute.xlu0 %7757
        %7759 = vrot.lane.b32.xlu0 %v2562, 12
        %v7760 = vpop.permute.xlu0 %7759
        %7761 = vrot.lane.b32.xlu0 %v2564, 12
        %v7762 = vpop.permute.xlu0 %7761
        %7763 = vrot.lane.b32.xlu0 %v2566, 12
        %v7764 = vpop.permute.xlu0 %7763
        %7765 = vrot.lane.b32.xlu0 %v2568, 12
        %v7766 = vpop.permute.xlu0 %7765
        %7767 = vrot.lane.b32.xlu0 %v2570, 12
        %v7768 = vpop.permute.xlu0 %7767
        %7769 = vrot.lane.b32.xlu0 %v2572, 12
        %v7770 = vpop.permute.xlu0 %7769
        %7771 = vrot.lane.b32.xlu0 %v2574, 12
        %v7772 = vpop.permute.xlu0 %7771
        %7773 = vrot.lane.b32.xlu0 %v2576, 12
        %v7774 = vpop.permute.xlu0 %7773
        %7775 = vrot.lane.b32.xlu0 %v2578, 12
        %v7776 = vpop.permute.xlu0 %7775
        %7777 = vrot.lane.b32.xlu0 %v2580, 12
        %v7778 = vpop.permute.xlu0 %7777
        %7779 = vrot.lane.b32.xlu0 %v2582, 12
        %v7780 = vpop.permute.xlu0 %7779
        %7781 = vrot.lane.b32.xlu0 %v2584, 12
        %v7782 = vpop.permute.xlu0 %7781
        %7783 = vrot.lane.b32.xlu0 %v2586, 12
        %v7784 = vpop.permute.xlu0 %7783
        %7785 = vrot.lane.b32.xlu0 %v2588, 12
        %v7786 = vpop.permute.xlu0 %7785
        %7787 = vrot.lane.b32.xlu0 %v2590, 12
        %v7788 = vpop.permute.xlu0 %7787
        %7789 = vrot.lane.b32.xlu0 %v2592, 12
        %v7790 = vpop.permute.xlu0 %7789
        %7791 = vrot.lane.b32.xlu0 %v2594, 12
        %v7792 = vpop.permute.xlu0 %7791
        %7793 = vrot.lane.b32.xlu0 %v2596, 12
        %v7794 = vpop.permute.xlu0 %7793
        %7795 = vrot.lane.b32.xlu0 %v2598, 12
        %v7796 = vpop.permute.xlu0 %7795
        %7797 = vrot.lane.b32.xlu0 %v2600, 12
        %v7798 = vpop.permute.xlu0 %7797
        %7863 = vrot.lane.b32.xlu0 %v2602, 13
        %v7864 = vpop.permute.xlu0 %7863
        %7865 = vrot.lane.b32.xlu0 %v2604, 13
        %v7866 = vpop.permute.xlu0 %7865
        %7867 = vrot.lane.b32.xlu0 %v2606, 13
        %v7868 = vpop.permute.xlu0 %7867
        %7869 = vrot.lane.b32.xlu0 %v2608, 13
        %v7870 = vpop.permute.xlu0 %7869
        %7871 = vrot.lane.b32.xlu0 %v2610, 13
        %v7872 = vpop.permute.xlu0 %7871
        %7873 = vrot.lane.b32.xlu0 %v2612, 13
        %v7874 = vpop.permute.xlu0 %7873
        %7875 = vrot.lane.b32.xlu0 %v2614, 13
        %v7876 = vpop.permute.xlu0 %7875
        %7877 = vrot.lane.b32.xlu0 %v2616, 13
        %v7878 = vpop.permute.xlu0 %7877
        %7879 = vrot.lane.b32.xlu0 %v2618, 13
        %v7880 = vpop.permute.xlu0 %7879
        %7881 = vrot.lane.b32.xlu0 %v2620, 13
        %v7882 = vpop.permute.xlu0 %7881
        %7883 = vrot.lane.b32.xlu0 %v2622, 13
        %v7884 = vpop.permute.xlu0 %7883
        %7885 = vrot.lane.b32.xlu0 %v2624, 13
        %v7886 = vpop.permute.xlu0 %7885
        %7887 = vrot.lane.b32.xlu0 %v2626, 13
        %v7888 = vpop.permute.xlu0 %7887
        %7889 = vrot.lane.b32.xlu0 %v2628, 13
        %v7890 = vpop.permute.xlu0 %7889
        %7891 = vrot.lane.b32.xlu0 %v2630, 13
        %v7892 = vpop.permute.xlu0 %7891
        %7893 = vrot.lane.b32.xlu0 %v2632, 13
        %v7894 = vpop.permute.xlu0 %7893
        %7895 = vrot.lane.b32.xlu0 %v2634, 13
        %v7896 = vpop.permute.xlu0 %7895
        %7897 = vrot.lane.b32.xlu0 %v2636, 13
        %v7898 = vpop.permute.xlu0 %7897
        %7899 = vrot.lane.b32.xlu0 %v2638, 13
        %v7900 = vpop.permute.xlu0 %7899
        %7901 = vrot.lane.b32.xlu0 %v2640, 13
        %v7902 = vpop.permute.xlu0 %7901
        %7903 = vrot.lane.b32.xlu0 %v2642, 13
        %v7904 = vpop.permute.xlu0 %7903
        %7905 = vrot.lane.b32.xlu0 %v2644, 13
        %v7906 = vpop.permute.xlu0 %7905
        %7907 = vrot.lane.b32.xlu0 %v2646, 13
        %v7908 = vpop.permute.xlu0 %7907
        %7909 = vrot.lane.b32.xlu0 %v2648, 13
        %v7910 = vpop.permute.xlu0 %7909
        %7911 = vrot.lane.b32.xlu0 %v2650, 13
        %v7912 = vpop.permute.xlu0 %7911
        %7913 = vrot.lane.b32.xlu0 %v2652, 13
        %v7914 = vpop.permute.xlu0 %7913
        %7915 = vrot.lane.b32.xlu0 %v2654, 13
        %v7916 = vpop.permute.xlu0 %7915
        %7917 = vrot.lane.b32.xlu0 %v2656, 13
        %v7918 = vpop.permute.xlu0 %7917
        %7919 = vrot.lane.b32.xlu0 %v2658, 13
        %v7920 = vpop.permute.xlu0 %7919
        %7921 = vrot.lane.b32.xlu0 %v2660, 13
        %v7922 = vpop.permute.xlu0 %7921
        %7923 = vrot.lane.b32.xlu0 %v2662, 13
        %v7924 = vpop.permute.xlu0 %7923
        %7925 = vrot.lane.b32.xlu0 %v2664, 13
        %v7926 = vpop.permute.xlu0 %7925
        %7991 = vrot.lane.b32.xlu0 %v2666, 14
        %v7992 = vpop.permute.xlu0 %7991
        %7993 = vrot.lane.b32.xlu0 %v2668, 14
        %v7994 = vpop.permute.xlu0 %7993
        %7995 = vrot.lane.b32.xlu0 %v2670, 14
        %v7996 = vpop.permute.xlu0 %7995
        %7997 = vrot.lane.b32.xlu0 %v2672, 14
        %v7998 = vpop.permute.xlu0 %7997
        %7999 = vrot.lane.b32.xlu0 %v2674, 14
        %v8000 = vpop.permute.xlu0 %7999
        %8001 = vrot.lane.b32.xlu0 %v2676, 14
        %v8002 = vpop.permute.xlu0 %8001
        %8003 = vrot.lane.b32.xlu0 %v2678, 14
        %v8004 = vpop.permute.xlu0 %8003
        %8005 = vrot.lane.b32.xlu0 %v2680, 14
        %v8006 = vpop.permute.xlu0 %8005
        %8007 = vrot.lane.b32.xlu0 %v2682, 14
        %v8008 = vpop.permute.xlu0 %8007
        %8009 = vrot.lane.b32.xlu0 %v2684, 14
        %v8010 = vpop.permute.xlu0 %8009
        %8011 = vrot.lane.b32.xlu0 %v2686, 14
        %v8012 = vpop.permute.xlu0 %8011
        %8013 = vrot.lane.b32.xlu0 %v2688, 14
        %v8014 = vpop.permute.xlu0 %8013
        %8015 = vrot.lane.b32.xlu0 %v2690, 14
        %v8016 = vpop.permute.xlu0 %8015
        %8017 = vrot.lane.b32.xlu0 %v2692, 14
        %v8018 = vpop.permute.xlu0 %8017
        %8019 = vrot.lane.b32.xlu0 %v2694, 14
        %v8020 = vpop.permute.xlu0 %8019
        %8021 = vrot.lane.b32.xlu0 %v2696, 14
        %v8022 = vpop.permute.xlu0 %8021
        %8023 = vrot.lane.b32.xlu0 %v2698, 14
        %v8024 = vpop.permute.xlu0 %8023
        %8025 = vrot.lane.b32.xlu0 %v2700, 14
        %v8026 = vpop.permute.xlu0 %8025
        %8027 = vrot.lane.b32.xlu0 %v2702, 14
        %v8028 = vpop.permute.xlu0 %8027
        %8029 = vrot.lane.b32.xlu0 %v2704, 14
        %v8030 = vpop.permute.xlu0 %8029
        %8031 = vrot.lane.b32.xlu0 %v2706, 14
        %v8032 = vpop.permute.xlu0 %8031
        %8033 = vrot.lane.b32.xlu0 %v2708, 14
        %v8034 = vpop.permute.xlu0 %8033
        %8035 = vrot.lane.b32.xlu0 %v2710, 14
        %v8036 = vpop.permute.xlu0 %8035
        %8037 = vrot.lane.b32.xlu0 %v2712, 14
        %v8038 = vpop.permute.xlu0 %8037
        %8039 = vrot.lane.b32.xlu0 %v2714, 14
        %v8040 = vpop.permute.xlu0 %8039
        %8041 = vrot.lane.b32.xlu0 %v2716, 14
        %v8042 = vpop.permute.xlu0 %8041
        %8043 = vrot.lane.b32.xlu0 %v2718, 14
        %v8044 = vpop.permute.xlu0 %8043
        %8045 = vrot.lane.b32.xlu0 %v2720, 14
        %v8046 = vpop.permute.xlu0 %8045
        %8047 = vrot.lane.b32.xlu0 %v2722, 14
        %v8048 = vpop.permute.xlu0 %8047
        %8049 = vrot.lane.b32.xlu0 %v2724, 14
        %v8050 = vpop.permute.xlu0 %8049
        %8051 = vrot.lane.b32.xlu0 %v2726, 14
        %v8052 = vpop.permute.xlu0 %8051
        %8053 = vrot.lane.b32.xlu0 %v2728, 14
        %v8054 = vpop.permute.xlu0 %8053
        %8119 = vrot.lane.b32.xlu0 %v2730, 15
        %v8120 = vpop.permute.xlu0 %8119
        %8121 = vrot.lane.b32.xlu0 %v2732, 15
        %v8122 = vpop.permute.xlu0 %8121
        %8123 = vrot.lane.b32.xlu0 %v2734, 15
        %v8124 = vpop.permute.xlu0 %8123
        %8125 = vrot.lane.b32.xlu0 %v2736, 15
        %v8126 = vpop.permute.xlu0 %8125
        %8127 = vrot.lane.b32.xlu0 %v2738, 15
        %v8128 = vpop.permute.xlu0 %8127
        %8129 = vrot.lane.b32.xlu0 %v2740, 15
        %v8130 = vpop.permute.xlu0 %8129
        %8131 = vrot.lane.b32.xlu0 %v2742, 15
        %v8132 = vpop.permute.xlu0 %8131
        %8133 = vrot.lane.b32.xlu0 %v2744, 15
        %v8134 = vpop.permute.xlu0 %8133
        %8135 = vrot.lane.b32.xlu0 %v2746, 15
        %v8136 = vpop.permute.xlu0 %8135
        %8137 = vrot.lane.b32.xlu0 %v2748, 15
        %v8138 = vpop.permute.xlu0 %8137
        %8139 = vrot.lane.b32.xlu0 %v2750, 15
        %v8140 = vpop.permute.xlu0 %8139
        %8141 = vrot.lane.b32.xlu0 %v2752, 15
        %v8142 = vpop.permute.xlu0 %8141
        %8143 = vrot.lane.b32.xlu0 %v2754, 15
        %v8144 = vpop.permute.xlu0 %8143
        %8145 = vrot.lane.b32.xlu0 %v2756, 15
        %v8146 = vpop.permute.xlu0 %8145
        %8147 = vrot.lane.b32.xlu0 %v2758, 15
        %v8148 = vpop.permute.xlu0 %8147
        %8149 = vrot.lane.b32.xlu0 %v2760, 15
        %v8150 = vpop.permute.xlu0 %8149
        %8151 = vrot.lane.b32.xlu0 %v2762, 15
        %v8152 = vpop.permute.xlu0 %8151
        %8153 = vrot.lane.b32.xlu0 %v2764, 15
        %v8154 = vpop.permute.xlu0 %8153
        %8155 = vrot.lane.b32.xlu0 %v2766, 15
        %v8156 = vpop.permute.xlu0 %8155
        %8157 = vrot.lane.b32.xlu0 %v2768, 15
        %v8158 = vpop.permute.xlu0 %8157
        %8159 = vrot.lane.b32.xlu0 %v2770, 15
        %v8160 = vpop.permute.xlu0 %8159
        %8161 = vrot.lane.b32.xlu0 %v2772, 15
        %v8162 = vpop.permute.xlu0 %8161
        %8163 = vrot.lane.b32.xlu0 %v2774, 15
        %v8164 = vpop.permute.xlu0 %8163
        %8165 = vrot.lane.b32.xlu0 %v2776, 15
        %v8166 = vpop.permute.xlu0 %8165
        %8167 = vrot.lane.b32.xlu0 %v2778, 15
        %v8168 = vpop.permute.xlu0 %8167
        %8169 = vrot.lane.b32.xlu0 %v2780, 15
        %v8170 = vpop.permute.xlu0 %8169
        %8171 = vrot.lane.b32.xlu0 %v2782, 15
        %v8172 = vpop.permute.xlu0 %8171
        %8173 = vrot.lane.b32.xlu0 %v2784, 15
        %v8174 = vpop.permute.xlu0 %8173
        %8175 = vrot.lane.b32.xlu0 %v2786, 15
        %v8176 = vpop.permute.xlu0 %8175
        %8177 = vrot.lane.b32.xlu0 %v2788, 15
        %v8178 = vpop.permute.xlu0 %8177
        %8179 = vrot.lane.b32.xlu0 %v2790, 15
        %v8180 = vpop.permute.xlu0 %8179
        %8181 = vrot.lane.b32.xlu0 %v2792, 15
        %v8182 = vpop.permute.xlu0 %8181
        %v8215 = vsel %vm170, %v1771, %v6328
        %v8216 = vsel %vm170, %v1773, %v6330
        %v8217 = vsel %vm170, %v1775, %v6332
        %v8218 = vsel %vm170, %v1777, %v6334
        %v8219 = vsel %vm170, %v1779, %v6336
        %v8220 = vsel %vm170, %v1781, %v6338
        %v8221 = vsel %vm170, %v1783, %v6340
        %v8222 = vsel %vm170, %v1785, %v6342
        %v8223 = vsel %vm170, %v1787, %v6344
        %v8224 = vsel %vm170, %v1789, %v6346
        %v8225 = vsel %vm170, %v1791, %v6348
        %v8226 = vsel %vm170, %v1793, %v6350
        %v8227 = vsel %vm170, %v1795, %v6352
        %v8228 = vsel %vm170, %v1797, %v6354
        %v8229 = vsel %vm170, %v1799, %v6356
        %v8230 = vsel %vm170, %v1801, %v6358
        %v8231 = vsel %vm170, %v1803, %v6360
        %v8232 = vsel %vm170, %v1805, %v6362
        %v8233 = vsel %vm170, %v1807, %v6364
        %v8234 = vsel %vm170, %v1809, %v6366
        %v8235 = vsel %vm170, %v1811, %v6368
        %v8236 = vsel %vm170, %v1813, %v6370
        %v8237 = vsel %vm170, %v1815, %v6372
        %v8238 = vsel %vm170, %v1817, %v6374
        %v8239 = vsel %vm170, %v1819, %v6376
        %v8240 = vsel %vm170, %v1821, %v6378
        %v8241 = vsel %vm170, %v1823, %v6380
        %v8242 = vsel %vm170, %v1825, %v6382
        %v8243 = vsel %vm170, %v1827, %v6384
        %v8244 = vsel %vm170, %v1829, %v6386
        %v8245 = vsel %vm170, %v1831, %v6388
        %v8246 = vsel %vm170, %v1833, %v6390
        %v8247 = vsel %vm5833, %v8215, %v6456
        %v8248 = vsel %vm5833, %v8216, %v6458
        %v8249 = vsel %vm5833, %v8217, %v6460
        %v8250 = vsel %vm5833, %v8218, %v6462
        %v8251 = vsel %vm5833, %v8219, %v6464
        %v8252 = vsel %vm5833, %v8220, %v6466
        %v8253 = vsel %vm5833, %v8221, %v6468
        %v8254 = vsel %vm5833, %v8222, %v6470
        %v8255 = vsel %vm5833, %v8223, %v6472
        %v8256 = vsel %vm5833, %v8224, %v6474
        %v8257 = vsel %vm5833, %v8225, %v6476
        %v8258 = vsel %vm5833, %v8226, %v6478
        %v8259 = vsel %vm5833, %v8227, %v6480
        %v8260 = vsel %vm5833, %v8228, %v6482
        %v8261 = vsel %vm5833, %v8229, %v6484
        %v8262 = vsel %vm5833, %v8230, %v6486
        %v8263 = vsel %vm5833, %v8231, %v6488
        %v8264 = vsel %vm5833, %v8232, %v6490
        %v8265 = vsel %vm5833, %v8233, %v6492
        %v8266 = vsel %vm5833, %v8234, %v6494
        %v8267 = vsel %vm5833, %v8235, %v6496
        %v8268 = vsel %vm5833, %v8236, %v6498
        %v8269 = vsel %vm5833, %v8237, %v6500
        %v8270 = vsel %vm5833, %v8238, %v6502
        %v8271 = vsel %vm5833, %v8239, %v6504
        %v8272 = vsel %vm5833, %v8240, %v6506
        %v8273 = vsel %vm5833, %v8241, %v6508
        %v8274 = vsel %vm5833, %v8242, %v6510
        %v8275 = vsel %vm5833, %v8243, %v6512
        %v8276 = vsel %vm5833, %v8244, %v6514
        %v8277 = vsel %vm5833, %v8245, %v6516
        %v8278 = vsel %vm5833, %v8246, %v6518
        %v8279 = vsel %vm5866, %v8247, %v6584
        %v8280 = vsel %vm5866, %v8248, %v6586
        %v8281 = vsel %vm5866, %v8249, %v6588
        %v8282 = vsel %vm5866, %v8250, %v6590
        %v8283 = vsel %vm5866, %v8251, %v6592
        %v8284 = vsel %vm5866, %v8252, %v6594
        %v8285 = vsel %vm5866, %v8253, %v6596
        %v8286 = vsel %vm5866, %v8254, %v6598
        %v8287 = vsel %vm5866, %v8255, %v6600
        %v8288 = vsel %vm5866, %v8256, %v6602
        %v8289 = vsel %vm5866, %v8257, %v6604
        %v8290 = vsel %vm5866, %v8258, %v6606
        %v8291 = vsel %vm5866, %v8259, %v6608
        %v8292 = vsel %vm5866, %v8260, %v6610
        %v8293 = vsel %vm5866, %v8261, %v6612
        %v8294 = vsel %vm5866, %v8262, %v6614
        %v8295 = vsel %vm5866, %v8263, %v6616
        %v8296 = vsel %vm5866, %v8264, %v6618
        %v8297 = vsel %vm5866, %v8265, %v6620
        %v8298 = vsel %vm5866, %v8266, %v6622
        %v8299 = vsel %vm5866, %v8267, %v6624
        %v8300 = vsel %vm5866, %v8268, %v6626
        %v8301 = vsel %vm5866, %v8269, %v6628
        %v8302 = vsel %vm5866, %v8270, %v6630
        %v8303 = vsel %vm5866, %v8271, %v6632
        %v8304 = vsel %vm5866, %v8272, %v6634
        %v8305 = vsel %vm5866, %v8273, %v6636
        %v8306 = vsel %vm5866, %v8274, %v6638
        %v8307 = vsel %vm5866, %v8275, %v6640
        %v8308 = vsel %vm5866, %v8276, %v6642
        %v8309 = vsel %vm5866, %v8277, %v6644
        %v8310 = vsel %vm5866, %v8278, %v6646
        %v8311 = vsel %vm5899, %v8279, %v6712
        %v8312 = vsel %vm5899, %v8280, %v6714
        %v8313 = vsel %vm5899, %v8281, %v6716
        %v8314 = vsel %vm5899, %v8282, %v6718
        %v8315 = vsel %vm5899, %v8283, %v6720
        %v8316 = vsel %vm5899, %v8284, %v6722
        %v8317 = vsel %vm5899, %v8285, %v6724
        %v8318 = vsel %vm5899, %v8286, %v6726
        %v8319 = vsel %vm5899, %v8287, %v6728
        %v8320 = vsel %vm5899, %v8288, %v6730
        %v8321 = vsel %vm5899, %v8289, %v6732
        %v8322 = vsel %vm5899, %v8290, %v6734
        %v8323 = vsel %vm5899, %v8291, %v6736
        %v8324 = vsel %vm5899, %v8292, %v6738
        %v8325 = vsel %vm5899, %v8293, %v6740
        %v8326 = vsel %vm5899, %v8294, %v6742
        %v8327 = vsel %vm5899, %v8295, %v6744
        %v8328 = vsel %vm5899, %v8296, %v6746
        %v8329 = vsel %vm5899, %v8297, %v6748
        %v8330 = vsel %vm5899, %v8298, %v6750
        %v8331 = vsel %vm5899, %v8299, %v6752
        %v8332 = vsel %vm5899, %v8300, %v6754
        %v8333 = vsel %vm5899, %v8301, %v6756
        %v8334 = vsel %vm5899, %v8302, %v6758
        %v8335 = vsel %vm5899, %v8303, %v6760
        %v8336 = vsel %vm5899, %v8304, %v6762
        %v8337 = vsel %vm5899, %v8305, %v6764
        %v8338 = vsel %vm5899, %v8306, %v6766
        %v8339 = vsel %vm5899, %v8307, %v6768
        %v8340 = vsel %vm5899, %v8308, %v6770
        %v8341 = vsel %vm5899, %v8309, %v6772
        %v8342 = vsel %vm5899, %v8310, %v6774
        %v8343 = vsel %vm5932, %v8311, %v6840
        %v8344 = vsel %vm5932, %v8312, %v6842
        %v8345 = vsel %vm5932, %v8313, %v6844
        %v8346 = vsel %vm5932, %v8314, %v6846
        %v8347 = vsel %vm5932, %v8315, %v6848
        %v8348 = vsel %vm5932, %v8316, %v6850
        %v8349 = vsel %vm5932, %v8317, %v6852
        %v8350 = vsel %vm5932, %v8318, %v6854
        %v8351 = vsel %vm5932, %v8319, %v6856
        %v8352 = vsel %vm5932, %v8320, %v6858
        %v8353 = vsel %vm5932, %v8321, %v6860
        %v8354 = vsel %vm5932, %v8322, %v6862
        %v8355 = vsel %vm5932, %v8323, %v6864
        %v8356 = vsel %vm5932, %v8324, %v6866
        %v8357 = vsel %vm5932, %v8325, %v6868
        %v8358 = vsel %vm5932, %v8326, %v6870
        %v8359 = vsel %vm5932, %v8327, %v6872
        %v8360 = vsel %vm5932, %v8328, %v6874
        %v8361 = vsel %vm5932, %v8329, %v6876
        %v8362 = vsel %vm5932, %v8330, %v6878
        %v8363 = vsel %vm5932, %v8331, %v6880
        %v8364 = vsel %vm5932, %v8332, %v6882
        %v8365 = vsel %vm5932, %v8333, %v6884
        %v8366 = vsel %vm5932, %v8334, %v6886
        %v8367 = vsel %vm5932, %v8335, %v6888
        %v8368 = vsel %vm5932, %v8336, %v6890
        %v8369 = vsel %vm5932, %v8337, %v6892
        %v8370 = vsel %vm5932, %v8338, %v6894
        %v8371 = vsel %vm5932, %v8339, %v6896
        %v8372 = vsel %vm5932, %v8340, %v6898
        %v8373 = vsel %vm5932, %v8341, %v6900
        %v8374 = vsel %vm5932, %v8342, %v6902
        %v8375 = vsel %vm5965, %v8343, %v6968
        %v8376 = vsel %vm5965, %v8344, %v6970
        %v8377 = vsel %vm5965, %v8345, %v6972
        %v8378 = vsel %vm5965, %v8346, %v6974
        %v8379 = vsel %vm5965, %v8347, %v6976
        %v8380 = vsel %vm5965, %v8348, %v6978
        %v8381 = vsel %vm5965, %v8349, %v6980
        %v8382 = vsel %vm5965, %v8350, %v6982
        %v8383 = vsel %vm5965, %v8351, %v6984
        %v8384 = vsel %vm5965, %v8352, %v6986
        %v8385 = vsel %vm5965, %v8353, %v6988
        %v8386 = vsel %vm5965, %v8354, %v6990
        %v8387 = vsel %vm5965, %v8355, %v6992
        %v8388 = vsel %vm5965, %v8356, %v6994
        %v8389 = vsel %vm5965, %v8357, %v6996
        %v8390 = vsel %vm5965, %v8358, %v6998
        %v8391 = vsel %vm5965, %v8359, %v7000
        %v8392 = vsel %vm5965, %v8360, %v7002
        %v8393 = vsel %vm5965, %v8361, %v7004
        %v8394 = vsel %vm5965, %v8362, %v7006
        %v8395 = vsel %vm5965, %v8363, %v7008
        %v8396 = vsel %vm5965, %v8364, %v7010
        %v8397 = vsel %vm5965, %v8365, %v7012
        %v8398 = vsel %vm5965, %v8366, %v7014
        %v8399 = vsel %vm5965, %v8367, %v7016
        %v8400 = vsel %vm5965, %v8368, %v7018
        %v8401 = vsel %vm5965, %v8369, %v7020
        %v8402 = vsel %vm5965, %v8370, %v7022
        %v8403 = vsel %vm5965, %v8371, %v7024
        %v8404 = vsel %vm5965, %v8372, %v7026
        %v8405 = vsel %vm5965, %v8373, %v7028
        %v8406 = vsel %vm5965, %v8374, %v7030
        %v8407 = vsel %vm5998, %v8375, %v7096
        %v8408 = vsel %vm5998, %v8376, %v7098
        %v8409 = vsel %vm5998, %v8377, %v7100
        %v8410 = vsel %vm5998, %v8378, %v7102
        %v8411 = vsel %vm5998, %v8379, %v7104
        %v8412 = vsel %vm5998, %v8380, %v7106
        %v8413 = vsel %vm5998, %v8381, %v7108
        %v8414 = vsel %vm5998, %v8382, %v7110
        %v8415 = vsel %vm5998, %v8383, %v7112
        %v8416 = vsel %vm5998, %v8384, %v7114
        %v8417 = vsel %vm5998, %v8385, %v7116
        %v8418 = vsel %vm5998, %v8386, %v7118
        %v8419 = vsel %vm5998, %v8387, %v7120
        %v8420 = vsel %vm5998, %v8388, %v7122
        %v8421 = vsel %vm5998, %v8389, %v7124
        %v8422 = vsel %vm5998, %v8390, %v7126
        %v8423 = vsel %vm5998, %v8391, %v7128
        %v8424 = vsel %vm5998, %v8392, %v7130
        %v8425 = vsel %vm5998, %v8393, %v7132
        %v8426 = vsel %vm5998, %v8394, %v7134
        %v8427 = vsel %vm5998, %v8395, %v7136
        %v8428 = vsel %vm5998, %v8396, %v7138
        %v8429 = vsel %vm5998, %v8397, %v7140
        %v8430 = vsel %vm5998, %v8398, %v7142
        %v8431 = vsel %vm5998, %v8399, %v7144
        %v8432 = vsel %vm5998, %v8400, %v7146
        %v8433 = vsel %vm5998, %v8401, %v7148
        %v8434 = vsel %vm5998, %v8402, %v7150
        %v8435 = vsel %vm5998, %v8403, %v7152
        %v8436 = vsel %vm5998, %v8404, %v7154
        %v8437 = vsel %vm5998, %v8405, %v7156
        %v8438 = vsel %vm5998, %v8406, %v7158
        %v8439 = vsel %vm6031, %v8407, %v7224
        %v8440 = vsel %vm6031, %v8408, %v7226
        %v8441 = vsel %vm6031, %v8409, %v7228
        %v8442 = vsel %vm6031, %v8410, %v7230
        %v8443 = vsel %vm6031, %v8411, %v7232
        %v8444 = vsel %vm6031, %v8412, %v7234
        %v8445 = vsel %vm6031, %v8413, %v7236
        %v8446 = vsel %vm6031, %v8414, %v7238
        %v8447 = vsel %vm6031, %v8415, %v7240
        %v8448 = vsel %vm6031, %v8416, %v7242
        %v8449 = vsel %vm6031, %v8417, %v7244
        %v8450 = vsel %vm6031, %v8418, %v7246
        %v8451 = vsel %vm6031, %v8419, %v7248
        %v8452 = vsel %vm6031, %v8420, %v7250
        %v8453 = vsel %vm6031, %v8421, %v7252
        %v8454 = vsel %vm6031, %v8422, %v7254
        %v8455 = vsel %vm6031, %v8423, %v7256
        %v8456 = vsel %vm6031, %v8424, %v7258
        %v8457 = vsel %vm6031, %v8425, %v7260
        %v8458 = vsel %vm6031, %v8426, %v7262
        %v8459 = vsel %vm6031, %v8427, %v7264
        %v8460 = vsel %vm6031, %v8428, %v7266
        %v8461 = vsel %vm6031, %v8429, %v7268
        %v8462 = vsel %vm6031, %v8430, %v7270
        %v8463 = vsel %vm6031, %v8431, %v7272
        %v8464 = vsel %vm6031, %v8432, %v7274
        %v8465 = vsel %vm6031, %v8433, %v7276
        %v8466 = vsel %vm6031, %v8434, %v7278
        %v8467 = vsel %vm6031, %v8435, %v7280
        %v8468 = vsel %vm6031, %v8436, %v7282
        %v8469 = vsel %vm6031, %v8437, %v7284
        %v8470 = vsel %vm6031, %v8438, %v7286
        %v8471 = vsel %vm6064, %v8439, %v7352
        %v8472 = vsel %vm6064, %v8440, %v7354
        %v8473 = vsel %vm6064, %v8441, %v7356
        %v8474 = vsel %vm6064, %v8442, %v7358
        %v8475 = vsel %vm6064, %v8443, %v7360
        %v8476 = vsel %vm6064, %v8444, %v7362
        %v8477 = vsel %vm6064, %v8445, %v7364
        %v8478 = vsel %vm6064, %v8446, %v7366
        %v8479 = vsel %vm6064, %v8447, %v7368
        %v8480 = vsel %vm6064, %v8448, %v7370
        %v8481 = vsel %vm6064, %v8449, %v7372
        %v8482 = vsel %vm6064, %v8450, %v7374
        %v8483 = vsel %vm6064, %v8451, %v7376
        %v8484 = vsel %vm6064, %v8452, %v7378
        %v8485 = vsel %vm6064, %v8453, %v7380
        %v8486 = vsel %vm6064, %v8454, %v7382
        %v8487 = vsel %vm6064, %v8455, %v7384
        %v8488 = vsel %vm6064, %v8456, %v7386
        %v8489 = vsel %vm6064, %v8457, %v7388
        %v8490 = vsel %vm6064, %v8458, %v7390
        %v8491 = vsel %vm6064, %v8459, %v7392
        %v8492 = vsel %vm6064, %v8460, %v7394
        %v8493 = vsel %vm6064, %v8461, %v7396
        %v8494 = vsel %vm6064, %v8462, %v7398
        %v8495 = vsel %vm6064, %v8463, %v7400
        %v8496 = vsel %vm6064, %v8464, %v7402
        %v8497 = vsel %vm6064, %v8465, %v7404
        %v8498 = vsel %vm6064, %v8466, %v7406
        %v8499 = vsel %vm6064, %v8467, %v7408
        %v8500 = vsel %vm6064, %v8468, %v7410
        %v8501 = vsel %vm6064, %v8469, %v7412
        %v8502 = vsel %vm6064, %v8470, %v7414
        %v8503 = vsel %vm6097, %v8471, %v7480
        %v8504 = vsel %vm6097, %v8472, %v7482
        %v8505 = vsel %vm6097, %v8473, %v7484
        %v8506 = vsel %vm6097, %v8474, %v7486
        %v8507 = vsel %vm6097, %v8475, %v7488
        %v8508 = vsel %vm6097, %v8476, %v7490
        %v8509 = vsel %vm6097, %v8477, %v7492
        %v8510 = vsel %vm6097, %v8478, %v7494
        %v8511 = vsel %vm6097, %v8479, %v7496
        %v8512 = vsel %vm6097, %v8480, %v7498
        %v8513 = vsel %vm6097, %v8481, %v7500
        %v8514 = vsel %vm6097, %v8482, %v7502
        %v8515 = vsel %vm6097, %v8483, %v7504
        %v8516 = vsel %vm6097, %v8484, %v7506
        %v8517 = vsel %vm6097, %v8485, %v7508
        %v8518 = vsel %vm6097, %v8486, %v7510
        %v8519 = vsel %vm6097, %v8487, %v7512
        %v8520 = vsel %vm6097, %v8488, %v7514
        %v8521 = vsel %vm6097, %v8489, %v7516
        %v8522 = vsel %vm6097, %v8490, %v7518
        %v8523 = vsel %vm6097, %v8491, %v7520
        %v8524 = vsel %vm6097, %v8492, %v7522
        %v8525 = vsel %vm6097, %v8493, %v7524
        %v8526 = vsel %vm6097, %v8494, %v7526
        %v8527 = vsel %vm6097, %v8495, %v7528
        %v8528 = vsel %vm6097, %v8496, %v7530
        %v8529 = vsel %vm6097, %v8497, %v7532
        %v8530 = vsel %vm6097, %v8498, %v7534
        %v8531 = vsel %vm6097, %v8499, %v7536
        %v8532 = vsel %vm6097, %v8500, %v7538
        %v8533 = vsel %vm6097, %v8501, %v7540
        %v8534 = vsel %vm6097, %v8502, %v7542
        %v8535 = vsel %vm6130, %v8503, %v7608
        %v8536 = vsel %vm6130, %v8504, %v7610
        %v8537 = vsel %vm6130, %v8505, %v7612
        %v8538 = vsel %vm6130, %v8506, %v7614
        %v8539 = vsel %vm6130, %v8507, %v7616
        %v8540 = vsel %vm6130, %v8508, %v7618
        %v8541 = vsel %vm6130, %v8509, %v7620
        %v8542 = vsel %vm6130, %v8510, %v7622
        %v8543 = vsel %vm6130, %v8511, %v7624
        %v8544 = vsel %vm6130, %v8512, %v7626
        %v8545 = vsel %vm6130, %v8513, %v7628
        %v8546 = vsel %vm6130, %v8514, %v7630
        %v8547 = vsel %vm6130, %v8515, %v7632
        %v8548 = vsel %vm6130, %v8516, %v7634
        %v8549 = vsel %vm6130, %v8517, %v7636
        %v8550 = vsel %vm6130, %v8518, %v7638
        %v8551 = vsel %vm6130, %v8519, %v7640
        %v8552 = vsel %vm6130, %v8520, %v7642
        %v8553 = vsel %vm6130, %v8521, %v7644
        %v8554 = vsel %vm6130, %v8522, %v7646
        %v8555 = vsel %vm6130, %v8523, %v7648
        %v8556 = vsel %vm6130, %v8524, %v7650
        %v8557 = vsel %vm6130, %v8525, %v7652
        %v8558 = vsel %vm6130, %v8526, %v7654
        %v8559 = vsel %vm6130, %v8527, %v7656
        %v8560 = vsel %vm6130, %v8528, %v7658
        %v8561 = vsel %vm6130, %v8529, %v7660
        %v8562 = vsel %vm6130, %v8530, %v7662
        %v8563 = vsel %vm6130, %v8531, %v7664
        %v8564 = vsel %vm6130, %v8532, %v7666
        %v8565 = vsel %vm6130, %v8533, %v7668
        %v8566 = vsel %vm6130, %v8534, %v7670
        %v8567 = vsel %vm6163, %v8535, %v7736
        %v8568 = vsel %vm6163, %v8536, %v7738
        %v8569 = vsel %vm6163, %v8537, %v7740
        %v8570 = vsel %vm6163, %v8538, %v7742
        %v8571 = vsel %vm6163, %v8539, %v7744
        %v8572 = vsel %vm6163, %v8540, %v7746
        %v8573 = vsel %vm6163, %v8541, %v7748
        %v8574 = vsel %vm6163, %v8542, %v7750
        %v8575 = vsel %vm6163, %v8543, %v7752
        %v8576 = vsel %vm6163, %v8544, %v7754
        %v8577 = vsel %vm6163, %v8545, %v7756
        %v8578 = vsel %vm6163, %v8546, %v7758
        %v8579 = vsel %vm6163, %v8547, %v7760
        %v8580 = vsel %vm6163, %v8548, %v7762
        %v8581 = vsel %vm6163, %v8549, %v7764
        %v8582 = vsel %vm6163, %v8550, %v7766
        %v8583 = vsel %vm6163, %v8551, %v7768
        %v8584 = vsel %vm6163, %v8552, %v7770
        %v8585 = vsel %vm6163, %v8553, %v7772
        %v8586 = vsel %vm6163, %v8554, %v7774
        %v8587 = vsel %vm6163, %v8555, %v7776
        %v8588 = vsel %vm6163, %v8556, %v7778
        %v8589 = vsel %vm6163, %v8557, %v7780
        %v8590 = vsel %vm6163, %v8558, %v7782
        %v8591 = vsel %vm6163, %v8559, %v7784
        %v8592 = vsel %vm6163, %v8560, %v7786
        %v8593 = vsel %vm6163, %v8561, %v7788
        %v8594 = vsel %vm6163, %v8562, %v7790
        %v8595 = vsel %vm6163, %v8563, %v7792
        %v8596 = vsel %vm6163, %v8564, %v7794
        %v8597 = vsel %vm6163, %v8565, %v7796
        %v8598 = vsel %vm6163, %v8566, %v7798
        %v8599 = vsel %vm6196, %v8567, %v7864
        %v8600 = vsel %vm6196, %v8568, %v7866
        %v8601 = vsel %vm6196, %v8569, %v7868
        %v8602 = vsel %vm6196, %v8570, %v7870
        %v8603 = vsel %vm6196, %v8571, %v7872
        %v8604 = vsel %vm6196, %v8572, %v7874
        %v8605 = vsel %vm6196, %v8573, %v7876
        %v8606 = vsel %vm6196, %v8574, %v7878
        %v8607 = vsel %vm6196, %v8575, %v7880
        %v8608 = vsel %vm6196, %v8576, %v7882
        %v8609 = vsel %vm6196, %v8577, %v7884
        %v8610 = vsel %vm6196, %v8578, %v7886
        %v8611 = vsel %vm6196, %v8579, %v7888
        %v8612 = vsel %vm6196, %v8580, %v7890
        %v8613 = vsel %vm6196, %v8581, %v7892
        %v8614 = vsel %vm6196, %v8582, %v7894
        %v8615 = vsel %vm6196, %v8583, %v7896
        %v8616 = vsel %vm6196, %v8584, %v7898
        %v8617 = vsel %vm6196, %v8585, %v7900
        %v8618 = vsel %vm6196, %v8586, %v7902
        %v8619 = vsel %vm6196, %v8587, %v7904
        %v8620 = vsel %vm6196, %v8588, %v7906
        %v8621 = vsel %vm6196, %v8589, %v7908
        %v8622 = vsel %vm6196, %v8590, %v7910
        %v8623 = vsel %vm6196, %v8591, %v7912
        %v8624 = vsel %vm6196, %v8592, %v7914
        %v8625 = vsel %vm6196, %v8593, %v7916
        %v8626 = vsel %vm6196, %v8594, %v7918
        %v8627 = vsel %vm6196, %v8595, %v7920
        %v8628 = vsel %vm6196, %v8596, %v7922
        %v8629 = vsel %vm6196, %v8597, %v7924
        %v8630 = vsel %vm6196, %v8598, %v7926
        %v8631 = vsel %vm6229, %v8599, %v7992
        %v8632 = vsel %vm6229, %v8600, %v7994
        %v8633 = vsel %vm6229, %v8601, %v7996
        %v8634 = vsel %vm6229, %v8602, %v7998
        %v8635 = vsel %vm6229, %v8603, %v8000
        %v8636 = vsel %vm6229, %v8604, %v8002
        %v8637 = vsel %vm6229, %v8605, %v8004
        %v8638 = vsel %vm6229, %v8606, %v8006
        %v8639 = vsel %vm6229, %v8607, %v8008
        %v8640 = vsel %vm6229, %v8608, %v8010
        %v8641 = vsel %vm6229, %v8609, %v8012
        %v8642 = vsel %vm6229, %v8610, %v8014
        %v8643 = vsel %vm6229, %v8611, %v8016
        %v8644 = vsel %vm6229, %v8612, %v8018
        %v8645 = vsel %vm6229, %v8613, %v8020
        %v8646 = vsel %vm6229, %v8614, %v8022
        %v8647 = vsel %vm6229, %v8615, %v8024
        %v8648 = vsel %vm6229, %v8616, %v8026
        %v8649 = vsel %vm6229, %v8617, %v8028
        %v8650 = vsel %vm6229, %v8618, %v8030
        %v8651 = vsel %vm6229, %v8619, %v8032
        %v8652 = vsel %vm6229, %v8620, %v8034
        %v8653 = vsel %vm6229, %v8621, %v8036
        %v8654 = vsel %vm6229, %v8622, %v8038
        %v8655 = vsel %vm6229, %v8623, %v8040
        %v8656 = vsel %vm6229, %v8624, %v8042
        %v8657 = vsel %vm6229, %v8625, %v8044
        %v8658 = vsel %vm6229, %v8626, %v8046
        %v8659 = vsel %vm6229, %v8627, %v8048
        %v8660 = vsel %vm6229, %v8628, %v8050
        %v8661 = vsel %vm6229, %v8629, %v8052
        %v8662 = vsel %vm6229, %v8630, %v8054
        %v8663 = vsel %vm6262, %v8631, %v8120
        %v8664 = vsel %vm6262, %v8632, %v8122
        %v8665 = vsel %vm6262, %v8633, %v8124
        %v8666 = vsel %vm6262, %v8634, %v8126
        %v8667 = vsel %vm6262, %v8635, %v8128
        %v8668 = vsel %vm6262, %v8636, %v8130
        %v8669 = vsel %vm6262, %v8637, %v8132
        %v8670 = vsel %vm6262, %v8638, %v8134
        %v8671 = vsel %vm6262, %v8639, %v8136
        %v8672 = vsel %vm6262, %v8640, %v8138
        %v8673 = vsel %vm6262, %v8641, %v8140
        %v8674 = vsel %vm6262, %v8642, %v8142
        %v8675 = vsel %vm6262, %v8643, %v8144
        %v8676 = vsel %vm6262, %v8644, %v8146
        %v8677 = vsel %vm6262, %v8645, %v8148
        %v8678 = vsel %vm6262, %v8646, %v8150
        %v8679 = vsel %vm6262, %v8647, %v8152
        %v8680 = vsel %vm6262, %v8648, %v8154
        %v8681 = vsel %vm6262, %v8649, %v8156
        %v8682 = vsel %vm6262, %v8650, %v8158
        %v8683 = vsel %vm6262, %v8651, %v8160
        %v8684 = vsel %vm6262, %v8652, %v8162
        %v8685 = vsel %vm6262, %v8653, %v8164
        %v8686 = vsel %vm6262, %v8654, %v8166
        %v8687 = vsel %vm6262, %v8655, %v8168
        %v8688 = vsel %vm6262, %v8656, %v8170
        %v8689 = vsel %vm6262, %v8657, %v8172
        %v8690 = vsel %vm6262, %v8658, %v8174
        %v8691 = vsel %vm6262, %v8659, %v8176
        %v8692 = vsel %vm6262, %v8660, %v8178
        %v8693 = vsel %vm6262, %v8661, %v8180
        %v8694 = vsel %vm6262, %v8662, %v8182
        %8727 = vrot.lane.b32.xlu0 %v2858, 1
        %v8728 = vpop.permute.xlu0 %8727
        %8729 = vrot.lane.b32.xlu0 %v2860, 1
        %v8730 = vpop.permute.xlu0 %8729
        %8731 = vrot.lane.b32.xlu0 %v2862, 1
        %v8732 = vpop.permute.xlu0 %8731
        %8733 = vrot.lane.b32.xlu0 %v2864, 1
        %v8734 = vpop.permute.xlu0 %8733
        %8735 = vrot.lane.b32.xlu0 %v2866, 1
        %v8736 = vpop.permute.xlu0 %8735
        %8737 = vrot.lane.b32.xlu0 %v2868, 1
        %v8738 = vpop.permute.xlu0 %8737
        %8739 = vrot.lane.b32.xlu0 %v2870, 1
        %v8740 = vpop.permute.xlu0 %8739
        %8741 = vrot.lane.b32.xlu0 %v2872, 1
        %v8742 = vpop.permute.xlu0 %8741
        %8743 = vrot.lane.b32.xlu0 %v2874, 1
        %v8744 = vpop.permute.xlu0 %8743
        %8745 = vrot.lane.b32.xlu0 %v2876, 1
        %v8746 = vpop.permute.xlu0 %8745
        %8747 = vrot.lane.b32.xlu0 %v2878, 1
        %v8748 = vpop.permute.xlu0 %8747
        %8749 = vrot.lane.b32.xlu0 %v2880, 1
        %v8750 = vpop.permute.xlu0 %8749
        %8751 = vrot.lane.b32.xlu0 %v2882, 1
        %v8752 = vpop.permute.xlu0 %8751
        %8753 = vrot.lane.b32.xlu0 %v2884, 1
        %v8754 = vpop.permute.xlu0 %8753
        %8755 = vrot.lane.b32.xlu0 %v2886, 1
        %v8756 = vpop.permute.xlu0 %8755
        %8757 = vrot.lane.b32.xlu0 %v2888, 1
        %v8758 = vpop.permute.xlu0 %8757
        %8759 = vrot.lane.b32.xlu0 %v2890, 1
        %v8760 = vpop.permute.xlu0 %8759
        %8761 = vrot.lane.b32.xlu0 %v2892, 1
        %v8762 = vpop.permute.xlu0 %8761
        %8763 = vrot.lane.b32.xlu0 %v2894, 1
        %v8764 = vpop.permute.xlu0 %8763
        %8765 = vrot.lane.b32.xlu0 %v2896, 1
        %v8766 = vpop.permute.xlu0 %8765
        %8767 = vrot.lane.b32.xlu0 %v2898, 1
        %v8768 = vpop.permute.xlu0 %8767
        %8769 = vrot.lane.b32.xlu0 %v2900, 1
        %v8770 = vpop.permute.xlu0 %8769
        %8771 = vrot.lane.b32.xlu0 %v2902, 1
        %v8772 = vpop.permute.xlu0 %8771
        %8773 = vrot.lane.b32.xlu0 %v2904, 1
        %v8774 = vpop.permute.xlu0 %8773
        %8775 = vrot.lane.b32.xlu0 %v2906, 1
        %v8776 = vpop.permute.xlu0 %8775
        %8777 = vrot.lane.b32.xlu0 %v2908, 1
        %v8778 = vpop.permute.xlu0 %8777
        %8779 = vrot.lane.b32.xlu0 %v2910, 1
        %v8780 = vpop.permute.xlu0 %8779
        %8781 = vrot.lane.b32.xlu0 %v2912, 1
        %v8782 = vpop.permute.xlu0 %8781
        %8783 = vrot.lane.b32.xlu0 %v2914, 1
        %v8784 = vpop.permute.xlu0 %8783
        %8785 = vrot.lane.b32.xlu0 %v2916, 1
        %v8786 = vpop.permute.xlu0 %8785
        %8787 = vrot.lane.b32.xlu0 %v2918, 1
        %v8788 = vpop.permute.xlu0 %8787
        %8789 = vrot.lane.b32.xlu0 %v2920, 1
        %v8790 = vpop.permute.xlu0 %8789
        %8855 = vrot.lane.b32.xlu0 %v2922, 2
        %v8856 = vpop.permute.xlu0 %8855
        %8857 = vrot.lane.b32.xlu0 %v2924, 2
        %v8858 = vpop.permute.xlu0 %8857
        %8859 = vrot.lane.b32.xlu0 %v2926, 2
        %v8860 = vpop.permute.xlu0 %8859
        %8861 = vrot.lane.b32.xlu0 %v2928, 2
        %v8862 = vpop.permute.xlu0 %8861
        %8863 = vrot.lane.b32.xlu0 %v2930, 2
        %v8864 = vpop.permute.xlu0 %8863
        %8865 = vrot.lane.b32.xlu0 %v2932, 2
        %v8866 = vpop.permute.xlu0 %8865
        %8867 = vrot.lane.b32.xlu0 %v2934, 2
        %v8868 = vpop.permute.xlu0 %8867
        %8869 = vrot.lane.b32.xlu0 %v2936, 2
        %v8870 = vpop.permute.xlu0 %8869
        %8871 = vrot.lane.b32.xlu0 %v2938, 2
        %v8872 = vpop.permute.xlu0 %8871
        %8873 = vrot.lane.b32.xlu0 %v2940, 2
        %v8874 = vpop.permute.xlu0 %8873
        %8875 = vrot.lane.b32.xlu0 %v2942, 2
        %v8876 = vpop.permute.xlu0 %8875
        %8877 = vrot.lane.b32.xlu0 %v2944, 2
        %v8878 = vpop.permute.xlu0 %8877
        %8879 = vrot.lane.b32.xlu0 %v2946, 2
        %v8880 = vpop.permute.xlu0 %8879
        %8881 = vrot.lane.b32.xlu0 %v2948, 2
        %v8882 = vpop.permute.xlu0 %8881
        %8883 = vrot.lane.b32.xlu0 %v2950, 2
        %v8884 = vpop.permute.xlu0 %8883
        %8885 = vrot.lane.b32.xlu0 %v2952, 2
        %v8886 = vpop.permute.xlu0 %8885
        %8887 = vrot.lane.b32.xlu0 %v2954, 2
        %v8888 = vpop.permute.xlu0 %8887
        %8889 = vrot.lane.b32.xlu0 %v2956, 2
        %v8890 = vpop.permute.xlu0 %8889
        %8891 = vrot.lane.b32.xlu0 %v2958, 2
        %v8892 = vpop.permute.xlu0 %8891
        %8893 = vrot.lane.b32.xlu0 %v2960, 2
        %v8894 = vpop.permute.xlu0 %8893
        %8895 = vrot.lane.b32.xlu0 %v2962, 2
        %v8896 = vpop.permute.xlu0 %8895
        %8897 = vrot.lane.b32.xlu0 %v2964, 2
        %v8898 = vpop.permute.xlu0 %8897
        %8899 = vrot.lane.b32.xlu0 %v2966, 2
        %v8900 = vpop.permute.xlu0 %8899
        %8901 = vrot.lane.b32.xlu0 %v2968, 2
        %v8902 = vpop.permute.xlu0 %8901
        %8903 = vrot.lane.b32.xlu0 %v2970, 2
        %v8904 = vpop.permute.xlu0 %8903
        %8905 = vrot.lane.b32.xlu0 %v2972, 2
        %v8906 = vpop.permute.xlu0 %8905
        %8907 = vrot.lane.b32.xlu0 %v2974, 2
        %v8908 = vpop.permute.xlu0 %8907
        %8909 = vrot.lane.b32.xlu0 %v2976, 2
        %v8910 = vpop.permute.xlu0 %8909
        %8911 = vrot.lane.b32.xlu0 %v2978, 2
        %v8912 = vpop.permute.xlu0 %8911
        %8913 = vrot.lane.b32.xlu0 %v2980, 2
        %v8914 = vpop.permute.xlu0 %8913
        %8915 = vrot.lane.b32.xlu0 %v2982, 2
        %v8916 = vpop.permute.xlu0 %8915
        %8917 = vrot.lane.b32.xlu0 %v2984, 2
        %v8918 = vpop.permute.xlu0 %8917
        %8983 = vrot.lane.b32.xlu0 %v2986, 3
        %v8984 = vpop.permute.xlu0 %8983
        %8985 = vrot.lane.b32.xlu0 %v2988, 3
        %v8986 = vpop.permute.xlu0 %8985
        %8987 = vrot.lane.b32.xlu0 %v2990, 3
        %v8988 = vpop.permute.xlu0 %8987
        %8989 = vrot.lane.b32.xlu0 %v2992, 3
        %v8990 = vpop.permute.xlu0 %8989
        %8991 = vrot.lane.b32.xlu0 %v2994, 3
        %v8992 = vpop.permute.xlu0 %8991
        %8993 = vrot.lane.b32.xlu0 %v2996, 3
        %v8994 = vpop.permute.xlu0 %8993
        %8995 = vrot.lane.b32.xlu0 %v2998, 3
        %v8996 = vpop.permute.xlu0 %8995
        %8997 = vrot.lane.b32.xlu0 %v3000, 3
        %v8998 = vpop.permute.xlu0 %8997
        %8999 = vrot.lane.b32.xlu0 %v3002, 3
        %v9000 = vpop.permute.xlu0 %8999
        %9001 = vrot.lane.b32.xlu0 %v3004, 3
        %v9002 = vpop.permute.xlu0 %9001
        %9003 = vrot.lane.b32.xlu0 %v3006, 3
        %v9004 = vpop.permute.xlu0 %9003
        %9005 = vrot.lane.b32.xlu0 %v3008, 3
        %v9006 = vpop.permute.xlu0 %9005
        %9007 = vrot.lane.b32.xlu0 %v3010, 3
        %v9008 = vpop.permute.xlu0 %9007
        %9009 = vrot.lane.b32.xlu0 %v3012, 3
        %v9010 = vpop.permute.xlu0 %9009
        %9011 = vrot.lane.b32.xlu0 %v3014, 3
        %v9012 = vpop.permute.xlu0 %9011
        %9013 = vrot.lane.b32.xlu0 %v3016, 3
        %v9014 = vpop.permute.xlu0 %9013
        %9015 = vrot.lane.b32.xlu0 %v3018, 3
        %v9016 = vpop.permute.xlu0 %9015
        %9017 = vrot.lane.b32.xlu0 %v3020, 3
        %v9018 = vpop.permute.xlu0 %9017
        %9019 = vrot.lane.b32.xlu0 %v3022, 3
        %v9020 = vpop.permute.xlu0 %9019
        %9021 = vrot.lane.b32.xlu0 %v3024, 3
        %v9022 = vpop.permute.xlu0 %9021
        %9023 = vrot.lane.b32.xlu0 %v3026, 3
        %v9024 = vpop.permute.xlu0 %9023
        %9025 = vrot.lane.b32.xlu0 %v3028, 3
        %v9026 = vpop.permute.xlu0 %9025
        %9027 = vrot.lane.b32.xlu0 %v3030, 3
        %v9028 = vpop.permute.xlu0 %9027
        %9029 = vrot.lane.b32.xlu0 %v3032, 3
        %v9030 = vpop.permute.xlu0 %9029
        %9031 = vrot.lane.b32.xlu0 %v3034, 3
        %v9032 = vpop.permute.xlu0 %9031
        %9033 = vrot.lane.b32.xlu0 %v3036, 3
        %v9034 = vpop.permute.xlu0 %9033
        %9035 = vrot.lane.b32.xlu0 %v3038, 3
        %v9036 = vpop.permute.xlu0 %9035
        %9037 = vrot.lane.b32.xlu0 %v3040, 3
        %v9038 = vpop.permute.xlu0 %9037
        %9039 = vrot.lane.b32.xlu0 %v3042, 3
        %v9040 = vpop.permute.xlu0 %9039
        %9041 = vrot.lane.b32.xlu0 %v3044, 3
        %v9042 = vpop.permute.xlu0 %9041
        %9043 = vrot.lane.b32.xlu0 %v3046, 3
        %v9044 = vpop.permute.xlu0 %9043
        %9045 = vrot.lane.b32.xlu0 %v3048, 3
        %v9046 = vpop.permute.xlu0 %9045
        %9111 = vrot.lane.b32.xlu0 %v3050, 4
        %v9112 = vpop.permute.xlu0 %9111
        %9113 = vrot.lane.b32.xlu0 %v3052, 4
        %v9114 = vpop.permute.xlu0 %9113
        %9115 = vrot.lane.b32.xlu0 %v3054, 4
        %v9116 = vpop.permute.xlu0 %9115
        %9117 = vrot.lane.b32.xlu0 %v3056, 4
        %v9118 = vpop.permute.xlu0 %9117
        %9119 = vrot.lane.b32.xlu0 %v3058, 4
        %v9120 = vpop.permute.xlu0 %9119
        %9121 = vrot.lane.b32.xlu0 %v3060, 4
        %v9122 = vpop.permute.xlu0 %9121
        %9123 = vrot.lane.b32.xlu0 %v3062, 4
        %v9124 = vpop.permute.xlu0 %9123
        %9125 = vrot.lane.b32.xlu0 %v3064, 4
        %v9126 = vpop.permute.xlu0 %9125
        %9127 = vrot.lane.b32.xlu0 %v3066, 4
        %v9128 = vpop.permute.xlu0 %9127
        %9129 = vrot.lane.b32.xlu0 %v3068, 4
        %v9130 = vpop.permute.xlu0 %9129
        %9131 = vrot.lane.b32.xlu0 %v3070, 4
        %v9132 = vpop.permute.xlu0 %9131
        %9133 = vrot.lane.b32.xlu0 %v3072, 4
        %v9134 = vpop.permute.xlu0 %9133
        %9135 = vrot.lane.b32.xlu0 %v3074, 4
        %v9136 = vpop.permute.xlu0 %9135
        %9137 = vrot.lane.b32.xlu0 %v3076, 4
        %v9138 = vpop.permute.xlu0 %9137
        %9139 = vrot.lane.b32.xlu0 %v3078, 4
        %v9140 = vpop.permute.xlu0 %9139
        %9141 = vrot.lane.b32.xlu0 %v3080, 4
        %v9142 = vpop.permute.xlu0 %9141
        %9143 = vrot.lane.b32.xlu0 %v3082, 4
        %v9144 = vpop.permute.xlu0 %9143
        %9145 = vrot.lane.b32.xlu0 %v3084, 4
        %v9146 = vpop.permute.xlu0 %9145
        %9147 = vrot.lane.b32.xlu0 %v3086, 4
        %v9148 = vpop.permute.xlu0 %9147
        %9149 = vrot.lane.b32.xlu0 %v3088, 4
        %v9150 = vpop.permute.xlu0 %9149
        %9151 = vrot.lane.b32.xlu0 %v3090, 4
        %v9152 = vpop.permute.xlu0 %9151
        %9153 = vrot.lane.b32.xlu0 %v3092, 4
        %v9154 = vpop.permute.xlu0 %9153
        %9155 = vrot.lane.b32.xlu0 %v3094, 4
        %v9156 = vpop.permute.xlu0 %9155
        %9157 = vrot.lane.b32.xlu0 %v3096, 4
        %v9158 = vpop.permute.xlu0 %9157
        %9159 = vrot.lane.b32.xlu0 %v3098, 4
        %v9160 = vpop.permute.xlu0 %9159
        %9161 = vrot.lane.b32.xlu0 %v3100, 4
        %v9162 = vpop.permute.xlu0 %9161
        %9163 = vrot.lane.b32.xlu0 %v3102, 4
        %v9164 = vpop.permute.xlu0 %9163
        %9165 = vrot.lane.b32.xlu0 %v3104, 4
        %v9166 = vpop.permute.xlu0 %9165
        %9167 = vrot.lane.b32.xlu0 %v3106, 4
        %v9168 = vpop.permute.xlu0 %9167
        %9169 = vrot.lane.b32.xlu0 %v3108, 4
        %v9170 = vpop.permute.xlu0 %9169
        %9171 = vrot.lane.b32.xlu0 %v3110, 4
        %v9172 = vpop.permute.xlu0 %9171
        %9173 = vrot.lane.b32.xlu0 %v3112, 4
        %v9174 = vpop.permute.xlu0 %9173
        %9239 = vrot.lane.b32.xlu0 %v3114, 5
        %v9240 = vpop.permute.xlu0 %9239
        %9241 = vrot.lane.b32.xlu0 %v3116, 5
        %v9242 = vpop.permute.xlu0 %9241
        %9243 = vrot.lane.b32.xlu0 %v3118, 5
        %v9244 = vpop.permute.xlu0 %9243
        %9245 = vrot.lane.b32.xlu0 %v3120, 5
        %v9246 = vpop.permute.xlu0 %9245
        %9247 = vrot.lane.b32.xlu0 %v3122, 5
        %v9248 = vpop.permute.xlu0 %9247
        %9249 = vrot.lane.b32.xlu0 %v3124, 5
        %v9250 = vpop.permute.xlu0 %9249
        %9251 = vrot.lane.b32.xlu0 %v3126, 5
        %v9252 = vpop.permute.xlu0 %9251
        %9253 = vrot.lane.b32.xlu0 %v3128, 5
        %v9254 = vpop.permute.xlu0 %9253
        %9255 = vrot.lane.b32.xlu0 %v3130, 5
        %v9256 = vpop.permute.xlu0 %9255
        %9257 = vrot.lane.b32.xlu0 %v3132, 5
        %v9258 = vpop.permute.xlu0 %9257
        %9259 = vrot.lane.b32.xlu0 %v3134, 5
        %v9260 = vpop.permute.xlu0 %9259
        %9261 = vrot.lane.b32.xlu0 %v3136, 5
        %v9262 = vpop.permute.xlu0 %9261
        %9263 = vrot.lane.b32.xlu0 %v3138, 5
        %v9264 = vpop.permute.xlu0 %9263
        %9265 = vrot.lane.b32.xlu0 %v3140, 5
        %v9266 = vpop.permute.xlu0 %9265
        %9267 = vrot.lane.b32.xlu0 %v3142, 5
        %v9268 = vpop.permute.xlu0 %9267
        %9269 = vrot.lane.b32.xlu0 %v3144, 5
        %v9270 = vpop.permute.xlu0 %9269
        %9271 = vrot.lane.b32.xlu0 %v3146, 5
        %v9272 = vpop.permute.xlu0 %9271
        %9273 = vrot.lane.b32.xlu0 %v3148, 5
        %v9274 = vpop.permute.xlu0 %9273
        %9275 = vrot.lane.b32.xlu0 %v3150, 5
        %v9276 = vpop.permute.xlu0 %9275
        %9277 = vrot.lane.b32.xlu0 %v3152, 5
        %v9278 = vpop.permute.xlu0 %9277
        %9279 = vrot.lane.b32.xlu0 %v3154, 5
        %v9280 = vpop.permute.xlu0 %9279
        %9281 = vrot.lane.b32.xlu0 %v3156, 5
        %v9282 = vpop.permute.xlu0 %9281
        %9283 = vrot.lane.b32.xlu0 %v3158, 5
        %v9284 = vpop.permute.xlu0 %9283
        %9285 = vrot.lane.b32.xlu0 %v3160, 5
        %v9286 = vpop.permute.xlu0 %9285
        %9287 = vrot.lane.b32.xlu0 %v3162, 5
        %v9288 = vpop.permute.xlu0 %9287
        %9289 = vrot.lane.b32.xlu0 %v3164, 5
        %v9290 = vpop.permute.xlu0 %9289
        %9291 = vrot.lane.b32.xlu0 %v3166, 5
        %v9292 = vpop.permute.xlu0 %9291
        %9293 = vrot.lane.b32.xlu0 %v3168, 5
        %v9294 = vpop.permute.xlu0 %9293
        %9295 = vrot.lane.b32.xlu0 %v3170, 5
        %v9296 = vpop.permute.xlu0 %9295
        %9297 = vrot.lane.b32.xlu0 %v3172, 5
        %v9298 = vpop.permute.xlu0 %9297
        %9299 = vrot.lane.b32.xlu0 %v3174, 5
        %v9300 = vpop.permute.xlu0 %9299
        %9301 = vrot.lane.b32.xlu0 %v3176, 5
        %v9302 = vpop.permute.xlu0 %9301
        %9367 = vrot.lane.b32.xlu0 %v3178, 6
        %v9368 = vpop.permute.xlu0 %9367
        %9369 = vrot.lane.b32.xlu0 %v3180, 6
        %v9370 = vpop.permute.xlu0 %9369
        %9371 = vrot.lane.b32.xlu0 %v3182, 6
        %v9372 = vpop.permute.xlu0 %9371
        %9373 = vrot.lane.b32.xlu0 %v3184, 6
        %v9374 = vpop.permute.xlu0 %9373
        %9375 = vrot.lane.b32.xlu0 %v3186, 6
        %v9376 = vpop.permute.xlu0 %9375
        %9377 = vrot.lane.b32.xlu0 %v3188, 6
        %v9378 = vpop.permute.xlu0 %9377
        %9379 = vrot.lane.b32.xlu0 %v3190, 6
        %v9380 = vpop.permute.xlu0 %9379
        %9381 = vrot.lane.b32.xlu0 %v3192, 6
        %v9382 = vpop.permute.xlu0 %9381
        %9383 = vrot.lane.b32.xlu0 %v3194, 6
        %v9384 = vpop.permute.xlu0 %9383
        %9385 = vrot.lane.b32.xlu0 %v3196, 6
        %v9386 = vpop.permute.xlu0 %9385
        %9387 = vrot.lane.b32.xlu0 %v3198, 6
        %v9388 = vpop.permute.xlu0 %9387
        %9389 = vrot.lane.b32.xlu0 %v3200, 6
        %v9390 = vpop.permute.xlu0 %9389
        %9391 = vrot.lane.b32.xlu0 %v3202, 6
        %v9392 = vpop.permute.xlu0 %9391
        %9393 = vrot.lane.b32.xlu0 %v3204, 6
        %v9394 = vpop.permute.xlu0 %9393
        %9395 = vrot.lane.b32.xlu0 %v3206, 6
        %v9396 = vpop.permute.xlu0 %9395
        %9397 = vrot.lane.b32.xlu0 %v3208, 6
        %v9398 = vpop.permute.xlu0 %9397
        %9399 = vrot.lane.b32.xlu0 %v3210, 6
        %v9400 = vpop.permute.xlu0 %9399
        %9401 = vrot.lane.b32.xlu0 %v3212, 6
        %v9402 = vpop.permute.xlu0 %9401
        %9403 = vrot.lane.b32.xlu0 %v3214, 6
        %v9404 = vpop.permute.xlu0 %9403
        %9405 = vrot.lane.b32.xlu0 %v3216, 6
        %v9406 = vpop.permute.xlu0 %9405
        %9407 = vrot.lane.b32.xlu0 %v3218, 6
        %v9408 = vpop.permute.xlu0 %9407
        %9409 = vrot.lane.b32.xlu0 %v3220, 6
        %v9410 = vpop.permute.xlu0 %9409
        %9411 = vrot.lane.b32.xlu0 %v3222, 6
        %v9412 = vpop.permute.xlu0 %9411
        %9413 = vrot.lane.b32.xlu0 %v3224, 6
        %v9414 = vpop.permute.xlu0 %9413
        %9415 = vrot.lane.b32.xlu0 %v3226, 6
        %v9416 = vpop.permute.xlu0 %9415
        %9417 = vrot.lane.b32.xlu0 %v3228, 6
        %v9418 = vpop.permute.xlu0 %9417
        %9419 = vrot.lane.b32.xlu0 %v3230, 6
        %v9420 = vpop.permute.xlu0 %9419
        %9421 = vrot.lane.b32.xlu0 %v3232, 6
        %v9422 = vpop.permute.xlu0 %9421
        %9423 = vrot.lane.b32.xlu0 %v3234, 6
        %v9424 = vpop.permute.xlu0 %9423
        %9425 = vrot.lane.b32.xlu0 %v3236, 6
        %v9426 = vpop.permute.xlu0 %9425
        %9427 = vrot.lane.b32.xlu0 %v3238, 6
        %v9428 = vpop.permute.xlu0 %9427
        %9429 = vrot.lane.b32.xlu0 %v3240, 6
        %v9430 = vpop.permute.xlu0 %9429
        %9495 = vrot.lane.b32.xlu0 %v3242, 7
        %v9496 = vpop.permute.xlu0 %9495
        %9497 = vrot.lane.b32.xlu0 %v3244, 7
        %v9498 = vpop.permute.xlu0 %9497
        %9499 = vrot.lane.b32.xlu0 %v3246, 7
        %v9500 = vpop.permute.xlu0 %9499
        %9501 = vrot.lane.b32.xlu0 %v3248, 7
        %v9502 = vpop.permute.xlu0 %9501
        %9503 = vrot.lane.b32.xlu0 %v3250, 7
        %v9504 = vpop.permute.xlu0 %9503
        %9505 = vrot.lane.b32.xlu0 %v3252, 7
        %v9506 = vpop.permute.xlu0 %9505
        %9507 = vrot.lane.b32.xlu0 %v3254, 7
        %v9508 = vpop.permute.xlu0 %9507
        %9509 = vrot.lane.b32.xlu0 %v3256, 7
        %v9510 = vpop.permute.xlu0 %9509
        %9511 = vrot.lane.b32.xlu0 %v3258, 7
        %v9512 = vpop.permute.xlu0 %9511
        %9513 = vrot.lane.b32.xlu0 %v3260, 7
        %v9514 = vpop.permute.xlu0 %9513
        %9515 = vrot.lane.b32.xlu0 %v3262, 7
        %v9516 = vpop.permute.xlu0 %9515
        %9517 = vrot.lane.b32.xlu0 %v3264, 7
        %v9518 = vpop.permute.xlu0 %9517
        %9519 = vrot.lane.b32.xlu0 %v3266, 7
        %v9520 = vpop.permute.xlu0 %9519
        %9521 = vrot.lane.b32.xlu0 %v3268, 7
        %v9522 = vpop.permute.xlu0 %9521
        %9523 = vrot.lane.b32.xlu0 %v3270, 7
        %v9524 = vpop.permute.xlu0 %9523
        %9525 = vrot.lane.b32.xlu0 %v3272, 7
        %v9526 = vpop.permute.xlu0 %9525
        %9527 = vrot.lane.b32.xlu0 %v3274, 7
        %v9528 = vpop.permute.xlu0 %9527
        %9529 = vrot.lane.b32.xlu0 %v3276, 7
        %v9530 = vpop.permute.xlu0 %9529
        %9531 = vrot.lane.b32.xlu0 %v3278, 7
        %v9532 = vpop.permute.xlu0 %9531
        %9533 = vrot.lane.b32.xlu0 %v3280, 7
        %v9534 = vpop.permute.xlu0 %9533
        %9535 = vrot.lane.b32.xlu0 %v3282, 7
        %v9536 = vpop.permute.xlu0 %9535
        %9537 = vrot.lane.b32.xlu0 %v3284, 7
        %v9538 = vpop.permute.xlu0 %9537
        %9539 = vrot.lane.b32.xlu0 %v3286, 7
        %v9540 = vpop.permute.xlu0 %9539
        %9541 = vrot.lane.b32.xlu0 %v3288, 7
        %v9542 = vpop.permute.xlu0 %9541
        %9543 = vrot.lane.b32.xlu0 %v3290, 7
        %v9544 = vpop.permute.xlu0 %9543
        %9545 = vrot.lane.b32.xlu0 %v3292, 7
        %v9546 = vpop.permute.xlu0 %9545
        %9547 = vrot.lane.b32.xlu0 %v3294, 7
        %v9548 = vpop.permute.xlu0 %9547
        %9549 = vrot.lane.b32.xlu0 %v3296, 7
        %v9550 = vpop.permute.xlu0 %9549
        %9551 = vrot.lane.b32.xlu0 %v3298, 7
        %v9552 = vpop.permute.xlu0 %9551
        %9553 = vrot.lane.b32.xlu0 %v3300, 7
        %v9554 = vpop.permute.xlu0 %9553
        %9555 = vrot.lane.b32.xlu0 %v3302, 7
        %v9556 = vpop.permute.xlu0 %9555
        %9557 = vrot.lane.b32.xlu0 %v3304, 7
        %v9558 = vpop.permute.xlu0 %9557
        %9623 = vrot.lane.b32.xlu0 %v3306, 8
        %v9624 = vpop.permute.xlu0 %9623
        %9625 = vrot.lane.b32.xlu0 %v3308, 8
        %v9626 = vpop.permute.xlu0 %9625
        %9627 = vrot.lane.b32.xlu0 %v3310, 8
        %v9628 = vpop.permute.xlu0 %9627
        %9629 = vrot.lane.b32.xlu0 %v3312, 8
        %v9630 = vpop.permute.xlu0 %9629
        %9631 = vrot.lane.b32.xlu0 %v3314, 8
        %v9632 = vpop.permute.xlu0 %9631
        %9633 = vrot.lane.b32.xlu0 %v3316, 8
        %v9634 = vpop.permute.xlu0 %9633
        %9635 = vrot.lane.b32.xlu0 %v3318, 8
        %v9636 = vpop.permute.xlu0 %9635
        %9637 = vrot.lane.b32.xlu0 %v3320, 8
        %v9638 = vpop.permute.xlu0 %9637
        %9639 = vrot.lane.b32.xlu0 %v3322, 8
        %v9640 = vpop.permute.xlu0 %9639
        %9641 = vrot.lane.b32.xlu0 %v3324, 8
        %v9642 = vpop.permute.xlu0 %9641
        %9643 = vrot.lane.b32.xlu0 %v3326, 8
        %v9644 = vpop.permute.xlu0 %9643
        %9645 = vrot.lane.b32.xlu0 %v3328, 8
        %v9646 = vpop.permute.xlu0 %9645
        %9647 = vrot.lane.b32.xlu0 %v3330, 8
        %v9648 = vpop.permute.xlu0 %9647
        %9649 = vrot.lane.b32.xlu0 %v3332, 8
        %v9650 = vpop.permute.xlu0 %9649
        %9651 = vrot.lane.b32.xlu0 %v3334, 8
        %v9652 = vpop.permute.xlu0 %9651
        %9653 = vrot.lane.b32.xlu0 %v3336, 8
        %v9654 = vpop.permute.xlu0 %9653
        %9655 = vrot.lane.b32.xlu0 %v3338, 8
        %v9656 = vpop.permute.xlu0 %9655
        %9657 = vrot.lane.b32.xlu0 %v3340, 8
        %v9658 = vpop.permute.xlu0 %9657
        %9659 = vrot.lane.b32.xlu0 %v3342, 8
        %v9660 = vpop.permute.xlu0 %9659
        %9661 = vrot.lane.b32.xlu0 %v3344, 8
        %v9662 = vpop.permute.xlu0 %9661
        %9663 = vrot.lane.b32.xlu0 %v3346, 8
        %v9664 = vpop.permute.xlu0 %9663
        %9665 = vrot.lane.b32.xlu0 %v3348, 8
        %v9666 = vpop.permute.xlu0 %9665
        %9667 = vrot.lane.b32.xlu0 %v3350, 8
        %v9668 = vpop.permute.xlu0 %9667
        %9669 = vrot.lane.b32.xlu0 %v3352, 8
        %v9670 = vpop.permute.xlu0 %9669
        %9671 = vrot.lane.b32.xlu0 %v3354, 8
        %v9672 = vpop.permute.xlu0 %9671
        %9673 = vrot.lane.b32.xlu0 %v3356, 8
        %v9674 = vpop.permute.xlu0 %9673
        %9675 = vrot.lane.b32.xlu0 %v3358, 8
        %v9676 = vpop.permute.xlu0 %9675
        %9677 = vrot.lane.b32.xlu0 %v3360, 8
        %v9678 = vpop.permute.xlu0 %9677
        %9679 = vrot.lane.b32.xlu0 %v3362, 8
        %v9680 = vpop.permute.xlu0 %9679
        %9681 = vrot.lane.b32.xlu0 %v3364, 8
        %v9682 = vpop.permute.xlu0 %9681
        %9683 = vrot.lane.b32.xlu0 %v3366, 8
        %v9684 = vpop.permute.xlu0 %9683
        %9685 = vrot.lane.b32.xlu0 %v3368, 8
        %v9686 = vpop.permute.xlu0 %9685
        %9751 = vrot.lane.b32.xlu0 %v3370, 9
        %v9752 = vpop.permute.xlu0 %9751
        %9753 = vrot.lane.b32.xlu0 %v3372, 9
        %v9754 = vpop.permute.xlu0 %9753
        %9755 = vrot.lane.b32.xlu0 %v3374, 9
        %v9756 = vpop.permute.xlu0 %9755
        %9757 = vrot.lane.b32.xlu0 %v3376, 9
        %v9758 = vpop.permute.xlu0 %9757
        %9759 = vrot.lane.b32.xlu0 %v3378, 9
        %v9760 = vpop.permute.xlu0 %9759
        %9761 = vrot.lane.b32.xlu0 %v3380, 9
        %v9762 = vpop.permute.xlu0 %9761
        %9763 = vrot.lane.b32.xlu0 %v3382, 9
        %v9764 = vpop.permute.xlu0 %9763
        %9765 = vrot.lane.b32.xlu0 %v3384, 9
        %v9766 = vpop.permute.xlu0 %9765
        %9767 = vrot.lane.b32.xlu0 %v3386, 9
        %v9768 = vpop.permute.xlu0 %9767
        %9769 = vrot.lane.b32.xlu0 %v3388, 9
        %v9770 = vpop.permute.xlu0 %9769
        %9771 = vrot.lane.b32.xlu0 %v3390, 9
        %v9772 = vpop.permute.xlu0 %9771
        %9773 = vrot.lane.b32.xlu0 %v3392, 9
        %v9774 = vpop.permute.xlu0 %9773
        %9775 = vrot.lane.b32.xlu0 %v3394, 9
        %v9776 = vpop.permute.xlu0 %9775
        %9777 = vrot.lane.b32.xlu0 %v3396, 9
        %v9778 = vpop.permute.xlu0 %9777
        %9779 = vrot.lane.b32.xlu0 %v3398, 9
        %v9780 = vpop.permute.xlu0 %9779
        %9781 = vrot.lane.b32.xlu0 %v3400, 9
        %v9782 = vpop.permute.xlu0 %9781
        %9783 = vrot.lane.b32.xlu0 %v3402, 9
        %v9784 = vpop.permute.xlu0 %9783
        %9785 = vrot.lane.b32.xlu0 %v3404, 9
        %v9786 = vpop.permute.xlu0 %9785
        %9787 = vrot.lane.b32.xlu0 %v3406, 9
        %v9788 = vpop.permute.xlu0 %9787
        %9789 = vrot.lane.b32.xlu0 %v3408, 9
        %v9790 = vpop.permute.xlu0 %9789
        %9791 = vrot.lane.b32.xlu0 %v3410, 9
        %v9792 = vpop.permute.xlu0 %9791
        %9793 = vrot.lane.b32.xlu0 %v3412, 9
        %v9794 = vpop.permute.xlu0 %9793
        %9795 = vrot.lane.b32.xlu0 %v3414, 9
        %v9796 = vpop.permute.xlu0 %9795
        %9797 = vrot.lane.b32.xlu0 %v3416, 9
        %v9798 = vpop.permute.xlu0 %9797
        %9799 = vrot.lane.b32.xlu0 %v3418, 9
        %v9800 = vpop.permute.xlu0 %9799
        %9801 = vrot.lane.b32.xlu0 %v3420, 9
        %v9802 = vpop.permute.xlu0 %9801
        %9803 = vrot.lane.b32.xlu0 %v3422, 9
        %v9804 = vpop.permute.xlu0 %9803
        %9805 = vrot.lane.b32.xlu0 %v3424, 9
        %v9806 = vpop.permute.xlu0 %9805
        %9807 = vrot.lane.b32.xlu0 %v3426, 9
        %v9808 = vpop.permute.xlu0 %9807
        %9809 = vrot.lane.b32.xlu0 %v3428, 9
        %v9810 = vpop.permute.xlu0 %9809
        %9811 = vrot.lane.b32.xlu0 %v3430, 9
        %v9812 = vpop.permute.xlu0 %9811
        %9813 = vrot.lane.b32.xlu0 %v3432, 9
        %v9814 = vpop.permute.xlu0 %9813
        %9879 = vrot.lane.b32.xlu0 %v3434, 10
        %v9880 = vpop.permute.xlu0 %9879
        %9881 = vrot.lane.b32.xlu0 %v3436, 10
        %v9882 = vpop.permute.xlu0 %9881
        %9883 = vrot.lane.b32.xlu0 %v3438, 10
        %v9884 = vpop.permute.xlu0 %9883
        %9885 = vrot.lane.b32.xlu0 %v3440, 10
        %v9886 = vpop.permute.xlu0 %9885
        %9887 = vrot.lane.b32.xlu0 %v3442, 10
        %v9888 = vpop.permute.xlu0 %9887
        %9889 = vrot.lane.b32.xlu0 %v3444, 10
        %v9890 = vpop.permute.xlu0 %9889
        %9891 = vrot.lane.b32.xlu0 %v3446, 10
        %v9892 = vpop.permute.xlu0 %9891
        %9893 = vrot.lane.b32.xlu0 %v3448, 10
        %v9894 = vpop.permute.xlu0 %9893
        %9895 = vrot.lane.b32.xlu0 %v3450, 10
        %v9896 = vpop.permute.xlu0 %9895
        %9897 = vrot.lane.b32.xlu0 %v3452, 10
        %v9898 = vpop.permute.xlu0 %9897
        %9899 = vrot.lane.b32.xlu0 %v3454, 10
        %v9900 = vpop.permute.xlu0 %9899
        %9901 = vrot.lane.b32.xlu0 %v3456, 10
        %v9902 = vpop.permute.xlu0 %9901
        %9903 = vrot.lane.b32.xlu0 %v3458, 10
        %v9904 = vpop.permute.xlu0 %9903
        %9905 = vrot.lane.b32.xlu0 %v3460, 10
        %v9906 = vpop.permute.xlu0 %9905
        %9907 = vrot.lane.b32.xlu0 %v3462, 10
        %v9908 = vpop.permute.xlu0 %9907
        %9909 = vrot.lane.b32.xlu0 %v3464, 10
        %v9910 = vpop.permute.xlu0 %9909
        %9911 = vrot.lane.b32.xlu0 %v3466, 10
        %v9912 = vpop.permute.xlu0 %9911
        %9913 = vrot.lane.b32.xlu0 %v3468, 10
        %v9914 = vpop.permute.xlu0 %9913
        %9915 = vrot.lane.b32.xlu0 %v3470, 10
        %v9916 = vpop.permute.xlu0 %9915
        %9917 = vrot.lane.b32.xlu0 %v3472, 10
        %v9918 = vpop.permute.xlu0 %9917
        %9919 = vrot.lane.b32.xlu0 %v3474, 10
        %v9920 = vpop.permute.xlu0 %9919
        %9921 = vrot.lane.b32.xlu0 %v3476, 10
        %v9922 = vpop.permute.xlu0 %9921
        %9923 = vrot.lane.b32.xlu0 %v3478, 10
        %v9924 = vpop.permute.xlu0 %9923
        %9925 = vrot.lane.b32.xlu0 %v3480, 10
        %v9926 = vpop.permute.xlu0 %9925
        %9927 = vrot.lane.b32.xlu0 %v3482, 10
        %v9928 = vpop.permute.xlu0 %9927
        %9929 = vrot.lane.b32.xlu0 %v3484, 10
        %v9930 = vpop.permute.xlu0 %9929
        %9931 = vrot.lane.b32.xlu0 %v3486, 10
        %v9932 = vpop.permute.xlu0 %9931
        %9933 = vrot.lane.b32.xlu0 %v3488, 10
        %v9934 = vpop.permute.xlu0 %9933
        %9935 = vrot.lane.b32.xlu0 %v3490, 10
        %v9936 = vpop.permute.xlu0 %9935
        %9937 = vrot.lane.b32.xlu0 %v3492, 10
        %v9938 = vpop.permute.xlu0 %9937
        %9939 = vrot.lane.b32.xlu0 %v3494, 10
        %v9940 = vpop.permute.xlu0 %9939
        %9941 = vrot.lane.b32.xlu0 %v3496, 10
        %v9942 = vpop.permute.xlu0 %9941
        %10007 = vrot.lane.b32.xlu0 %v3498, 11
        %v10008 = vpop.permute.xlu0 %10007
        %10009 = vrot.lane.b32.xlu0 %v3500, 11
        %v10010 = vpop.permute.xlu0 %10009
        %10011 = vrot.lane.b32.xlu0 %v3502, 11
        %v10012 = vpop.permute.xlu0 %10011
        %10013 = vrot.lane.b32.xlu0 %v3504, 11
        %v10014 = vpop.permute.xlu0 %10013
        %10015 = vrot.lane.b32.xlu0 %v3506, 11
        %v10016 = vpop.permute.xlu0 %10015
        %10017 = vrot.lane.b32.xlu0 %v3508, 11
        %v10018 = vpop.permute.xlu0 %10017
        %10019 = vrot.lane.b32.xlu0 %v3510, 11
        %v10020 = vpop.permute.xlu0 %10019
        %10021 = vrot.lane.b32.xlu0 %v3512, 11
        %v10022 = vpop.permute.xlu0 %10021
        %10023 = vrot.lane.b32.xlu0 %v3514, 11
        %v10024 = vpop.permute.xlu0 %10023
        %10025 = vrot.lane.b32.xlu0 %v3516, 11
        %v10026 = vpop.permute.xlu0 %10025
        %10027 = vrot.lane.b32.xlu0 %v3518, 11
        %v10028 = vpop.permute.xlu0 %10027
        %10029 = vrot.lane.b32.xlu0 %v3520, 11
        %v10030 = vpop.permute.xlu0 %10029
        %10031 = vrot.lane.b32.xlu0 %v3522, 11
        %v10032 = vpop.permute.xlu0 %10031
        %10033 = vrot.lane.b32.xlu0 %v3524, 11
        %v10034 = vpop.permute.xlu0 %10033
        %10035 = vrot.lane.b32.xlu0 %v3526, 11
        %v10036 = vpop.permute.xlu0 %10035
        %10037 = vrot.lane.b32.xlu0 %v3528, 11
        %v10038 = vpop.permute.xlu0 %10037
        %10039 = vrot.lane.b32.xlu0 %v3530, 11
        %v10040 = vpop.permute.xlu0 %10039
        %10041 = vrot.lane.b32.xlu0 %v3532, 11
        %v10042 = vpop.permute.xlu0 %10041
        %10043 = vrot.lane.b32.xlu0 %v3534, 11
        %v10044 = vpop.permute.xlu0 %10043
        %10045 = vrot.lane.b32.xlu0 %v3536, 11
        %v10046 = vpop.permute.xlu0 %10045
        %10047 = vrot.lane.b32.xlu0 %v3538, 11
        %v10048 = vpop.permute.xlu0 %10047
        %10049 = vrot.lane.b32.xlu0 %v3540, 11
        %v10050 = vpop.permute.xlu0 %10049
        %10051 = vrot.lane.b32.xlu0 %v3542, 11
        %v10052 = vpop.permute.xlu0 %10051
        %10053 = vrot.lane.b32.xlu0 %v3544, 11
        %v10054 = vpop.permute.xlu0 %10053
        %10055 = vrot.lane.b32.xlu0 %v3546, 11
        %v10056 = vpop.permute.xlu0 %10055
        %10057 = vrot.lane.b32.xlu0 %v3548, 11
        %v10058 = vpop.permute.xlu0 %10057
        %10059 = vrot.lane.b32.xlu0 %v3550, 11
        %v10060 = vpop.permute.xlu0 %10059
        %10061 = vrot.lane.b32.xlu0 %v3552, 11
        %v10062 = vpop.permute.xlu0 %10061
        %10063 = vrot.lane.b32.xlu0 %v3554, 11
        %v10064 = vpop.permute.xlu0 %10063
        %10065 = vrot.lane.b32.xlu0 %v3556, 11
        %v10066 = vpop.permute.xlu0 %10065
        %10067 = vrot.lane.b32.xlu0 %v3558, 11
        %v10068 = vpop.permute.xlu0 %10067
        %10069 = vrot.lane.b32.xlu0 %v3560, 11
        %v10070 = vpop.permute.xlu0 %10069
        %10135 = vrot.lane.b32.xlu0 %v3562, 12
        %v10136 = vpop.permute.xlu0 %10135
        %10137 = vrot.lane.b32.xlu0 %v3564, 12
        %v10138 = vpop.permute.xlu0 %10137
        %10139 = vrot.lane.b32.xlu0 %v3566, 12
        %v10140 = vpop.permute.xlu0 %10139
        %10141 = vrot.lane.b32.xlu0 %v3568, 12
        %v10142 = vpop.permute.xlu0 %10141
        %10143 = vrot.lane.b32.xlu0 %v3570, 12
        %v10144 = vpop.permute.xlu0 %10143
        %10145 = vrot.lane.b32.xlu0 %v3572, 12
        %v10146 = vpop.permute.xlu0 %10145
        %10147 = vrot.lane.b32.xlu0 %v3574, 12
        %v10148 = vpop.permute.xlu0 %10147
        %10149 = vrot.lane.b32.xlu0 %v3576, 12
        %v10150 = vpop.permute.xlu0 %10149
        %10151 = vrot.lane.b32.xlu0 %v3578, 12
        %v10152 = vpop.permute.xlu0 %10151
        %10153 = vrot.lane.b32.xlu0 %v3580, 12
        %v10154 = vpop.permute.xlu0 %10153
        %10155 = vrot.lane.b32.xlu0 %v3582, 12
        %v10156 = vpop.permute.xlu0 %10155
        %10157 = vrot.lane.b32.xlu0 %v3584, 12
        %v10158 = vpop.permute.xlu0 %10157
        %10159 = vrot.lane.b32.xlu0 %v3586, 12
        %v10160 = vpop.permute.xlu0 %10159
        %10161 = vrot.lane.b32.xlu0 %v3588, 12
        %v10162 = vpop.permute.xlu0 %10161
        %10163 = vrot.lane.b32.xlu0 %v3590, 12
        %v10164 = vpop.permute.xlu0 %10163
        %10165 = vrot.lane.b32.xlu0 %v3592, 12
        %v10166 = vpop.permute.xlu0 %10165
        %10167 = vrot.lane.b32.xlu0 %v3594, 12
        %v10168 = vpop.permute.xlu0 %10167
        %10169 = vrot.lane.b32.xlu0 %v3596, 12
        %v10170 = vpop.permute.xlu0 %10169
        %10171 = vrot.lane.b32.xlu0 %v3598, 12
        %v10172 = vpop.permute.xlu0 %10171
        %10173 = vrot.lane.b32.xlu0 %v3600, 12
        %v10174 = vpop.permute.xlu0 %10173
        %10175 = vrot.lane.b32.xlu0 %v3602, 12
        %v10176 = vpop.permute.xlu0 %10175
        %10177 = vrot.lane.b32.xlu0 %v3604, 12
        %v10178 = vpop.permute.xlu0 %10177
        %10179 = vrot.lane.b32.xlu0 %v3606, 12
        %v10180 = vpop.permute.xlu0 %10179
        %10181 = vrot.lane.b32.xlu0 %v3608, 12
        %v10182 = vpop.permute.xlu0 %10181
        %10183 = vrot.lane.b32.xlu0 %v3610, 12
        %v10184 = vpop.permute.xlu0 %10183
        %10185 = vrot.lane.b32.xlu0 %v3612, 12
        %v10186 = vpop.permute.xlu0 %10185
        %10187 = vrot.lane.b32.xlu0 %v3614, 12
        %v10188 = vpop.permute.xlu0 %10187
        %10189 = vrot.lane.b32.xlu0 %v3616, 12
        %v10190 = vpop.permute.xlu0 %10189
        %10191 = vrot.lane.b32.xlu0 %v3618, 12
        %v10192 = vpop.permute.xlu0 %10191
        %10193 = vrot.lane.b32.xlu0 %v3620, 12
        %v10194 = vpop.permute.xlu0 %10193
        %10195 = vrot.lane.b32.xlu0 %v3622, 12
        %v10196 = vpop.permute.xlu0 %10195
        %10197 = vrot.lane.b32.xlu0 %v3624, 12
        %v10198 = vpop.permute.xlu0 %10197
        %10263 = vrot.lane.b32.xlu0 %v3626, 13
        %v10264 = vpop.permute.xlu0 %10263
        %10265 = vrot.lane.b32.xlu0 %v3628, 13
        %v10266 = vpop.permute.xlu0 %10265
        %10267 = vrot.lane.b32.xlu0 %v3630, 13
        %v10268 = vpop.permute.xlu0 %10267
        %10269 = vrot.lane.b32.xlu0 %v3632, 13
        %v10270 = vpop.permute.xlu0 %10269
        %10271 = vrot.lane.b32.xlu0 %v3634, 13
        %v10272 = vpop.permute.xlu0 %10271
        %10273 = vrot.lane.b32.xlu0 %v3636, 13
        %v10274 = vpop.permute.xlu0 %10273
        %10275 = vrot.lane.b32.xlu0 %v3638, 13
        %v10276 = vpop.permute.xlu0 %10275
        %10277 = vrot.lane.b32.xlu0 %v3640, 13
        %v10278 = vpop.permute.xlu0 %10277
        %10279 = vrot.lane.b32.xlu0 %v3642, 13
        %v10280 = vpop.permute.xlu0 %10279
        %10281 = vrot.lane.b32.xlu0 %v3644, 13
        %v10282 = vpop.permute.xlu0 %10281
        %10283 = vrot.lane.b32.xlu0 %v3646, 13
        %v10284 = vpop.permute.xlu0 %10283
        %10285 = vrot.lane.b32.xlu0 %v3648, 13
        %v10286 = vpop.permute.xlu0 %10285
        %10287 = vrot.lane.b32.xlu0 %v3650, 13
        %v10288 = vpop.permute.xlu0 %10287
        %10289 = vrot.lane.b32.xlu0 %v3652, 13
        %v10290 = vpop.permute.xlu0 %10289
        %10291 = vrot.lane.b32.xlu0 %v3654, 13
        %v10292 = vpop.permute.xlu0 %10291
        %10293 = vrot.lane.b32.xlu0 %v3656, 13
        %v10294 = vpop.permute.xlu0 %10293
        %10295 = vrot.lane.b32.xlu0 %v3658, 13
        %v10296 = vpop.permute.xlu0 %10295
        %10297 = vrot.lane.b32.xlu0 %v3660, 13
        %v10298 = vpop.permute.xlu0 %10297
        %10299 = vrot.lane.b32.xlu0 %v3662, 13
        %v10300 = vpop.permute.xlu0 %10299
        %10301 = vrot.lane.b32.xlu0 %v3664, 13
        %v10302 = vpop.permute.xlu0 %10301
        %10303 = vrot.lane.b32.xlu0 %v3666, 13
        %v10304 = vpop.permute.xlu0 %10303
        %10305 = vrot.lane.b32.xlu0 %v3668, 13
        %v10306 = vpop.permute.xlu0 %10305
        %10307 = vrot.lane.b32.xlu0 %v3670, 13
        %v10308 = vpop.permute.xlu0 %10307
        %10309 = vrot.lane.b32.xlu0 %v3672, 13
        %v10310 = vpop.permute.xlu0 %10309
        %10311 = vrot.lane.b32.xlu0 %v3674, 13
        %v10312 = vpop.permute.xlu0 %10311
        %10313 = vrot.lane.b32.xlu0 %v3676, 13
        %v10314 = vpop.permute.xlu0 %10313
        %10315 = vrot.lane.b32.xlu0 %v3678, 13
        %v10316 = vpop.permute.xlu0 %10315
        %10317 = vrot.lane.b32.xlu0 %v3680, 13
        %v10318 = vpop.permute.xlu0 %10317
        %10319 = vrot.lane.b32.xlu0 %v3682, 13
        %v10320 = vpop.permute.xlu0 %10319
        %10321 = vrot.lane.b32.xlu0 %v3684, 13
        %v10322 = vpop.permute.xlu0 %10321
        %10323 = vrot.lane.b32.xlu0 %v3686, 13
        %v10324 = vpop.permute.xlu0 %10323
        %10325 = vrot.lane.b32.xlu0 %v3688, 13
        %v10326 = vpop.permute.xlu0 %10325
        %10391 = vrot.lane.b32.xlu0 %v3690, 14
        %v10392 = vpop.permute.xlu0 %10391
        %10393 = vrot.lane.b32.xlu0 %v3692, 14
        %v10394 = vpop.permute.xlu0 %10393
        %10395 = vrot.lane.b32.xlu0 %v3694, 14
        %v10396 = vpop.permute.xlu0 %10395
        %10397 = vrot.lane.b32.xlu0 %v3696, 14
        %v10398 = vpop.permute.xlu0 %10397
        %10399 = vrot.lane.b32.xlu0 %v3698, 14
        %v10400 = vpop.permute.xlu0 %10399
        %10401 = vrot.lane.b32.xlu0 %v3700, 14
        %v10402 = vpop.permute.xlu0 %10401
        %10403 = vrot.lane.b32.xlu0 %v3702, 14
        %v10404 = vpop.permute.xlu0 %10403
        %10405 = vrot.lane.b32.xlu0 %v3704, 14
        %v10406 = vpop.permute.xlu0 %10405
        %10407 = vrot.lane.b32.xlu0 %v3706, 14
        %v10408 = vpop.permute.xlu0 %10407
        %10409 = vrot.lane.b32.xlu0 %v3708, 14
        %v10410 = vpop.permute.xlu0 %10409
        %10411 = vrot.lane.b32.xlu0 %v3710, 14
        %v10412 = vpop.permute.xlu0 %10411
        %10413 = vrot.lane.b32.xlu0 %v3712, 14
        %v10414 = vpop.permute.xlu0 %10413
        %10415 = vrot.lane.b32.xlu0 %v3714, 14
        %v10416 = vpop.permute.xlu0 %10415
        %10417 = vrot.lane.b32.xlu0 %v3716, 14
        %v10418 = vpop.permute.xlu0 %10417
        %10419 = vrot.lane.b32.xlu0 %v3718, 14
        %v10420 = vpop.permute.xlu0 %10419
        %10421 = vrot.lane.b32.xlu0 %v3720, 14
        %v10422 = vpop.permute.xlu0 %10421
        %10423 = vrot.lane.b32.xlu0 %v3722, 14
        %v10424 = vpop.permute.xlu0 %10423
        %10425 = vrot.lane.b32.xlu0 %v3724, 14
        %v10426 = vpop.permute.xlu0 %10425
        %10427 = vrot.lane.b32.xlu0 %v3726, 14
        %v10428 = vpop.permute.xlu0 %10427
        %10429 = vrot.lane.b32.xlu0 %v3728, 14
        %v10430 = vpop.permute.xlu0 %10429
        %10431 = vrot.lane.b32.xlu0 %v3730, 14
        %v10432 = vpop.permute.xlu0 %10431
        %10433 = vrot.lane.b32.xlu0 %v3732, 14
        %v10434 = vpop.permute.xlu0 %10433
        %10435 = vrot.lane.b32.xlu0 %v3734, 14
        %v10436 = vpop.permute.xlu0 %10435
        %10437 = vrot.lane.b32.xlu0 %v3736, 14
        %v10438 = vpop.permute.xlu0 %10437
        %10439 = vrot.lane.b32.xlu0 %v3738, 14
        %v10440 = vpop.permute.xlu0 %10439
        %10441 = vrot.lane.b32.xlu0 %v3740, 14
        %v10442 = vpop.permute.xlu0 %10441
        %10443 = vrot.lane.b32.xlu0 %v3742, 14
        %v10444 = vpop.permute.xlu0 %10443
        %10445 = vrot.lane.b32.xlu0 %v3744, 14
        %v10446 = vpop.permute.xlu0 %10445
        %10447 = vrot.lane.b32.xlu0 %v3746, 14
        %v10448 = vpop.permute.xlu0 %10447
        %10449 = vrot.lane.b32.xlu0 %v3748, 14
        %v10450 = vpop.permute.xlu0 %10449
        %10451 = vrot.lane.b32.xlu0 %v3750, 14
        %v10452 = vpop.permute.xlu0 %10451
        %10453 = vrot.lane.b32.xlu0 %v3752, 14
        %v10454 = vpop.permute.xlu0 %10453
        %10519 = vrot.lane.b32.xlu0 %v3754, 15
        %v10520 = vpop.permute.xlu0 %10519
        %10521 = vrot.lane.b32.xlu0 %v3756, 15
        %v10522 = vpop.permute.xlu0 %10521
        %10523 = vrot.lane.b32.xlu0 %v3758, 15
        %v10524 = vpop.permute.xlu0 %10523
        %10525 = vrot.lane.b32.xlu0 %v3760, 15
        %v10526 = vpop.permute.xlu0 %10525
        %10527 = vrot.lane.b32.xlu0 %v3762, 15
        %v10528 = vpop.permute.xlu0 %10527
        %10529 = vrot.lane.b32.xlu0 %v3764, 15
        %v10530 = vpop.permute.xlu0 %10529
        %10531 = vrot.lane.b32.xlu0 %v3766, 15
        %v10532 = vpop.permute.xlu0 %10531
        %10533 = vrot.lane.b32.xlu0 %v3768, 15
        %v10534 = vpop.permute.xlu0 %10533
        %10535 = vrot.lane.b32.xlu0 %v3770, 15
        %v10536 = vpop.permute.xlu0 %10535
        %10537 = vrot.lane.b32.xlu0 %v3772, 15
        %v10538 = vpop.permute.xlu0 %10537
        %10539 = vrot.lane.b32.xlu0 %v3774, 15
        %v10540 = vpop.permute.xlu0 %10539
        %10541 = vrot.lane.b32.xlu0 %v3776, 15
        %v10542 = vpop.permute.xlu0 %10541
        %10543 = vrot.lane.b32.xlu0 %v3778, 15
        %v10544 = vpop.permute.xlu0 %10543
        %10545 = vrot.lane.b32.xlu0 %v3780, 15
        %v10546 = vpop.permute.xlu0 %10545
        %10547 = vrot.lane.b32.xlu0 %v3782, 15
        %v10548 = vpop.permute.xlu0 %10547
        %10549 = vrot.lane.b32.xlu0 %v3784, 15
        %v10550 = vpop.permute.xlu0 %10549
        %10551 = vrot.lane.b32.xlu0 %v3786, 15
        %v10552 = vpop.permute.xlu0 %10551
        %10553 = vrot.lane.b32.xlu0 %v3788, 15
        %v10554 = vpop.permute.xlu0 %10553
        %10555 = vrot.lane.b32.xlu0 %v3790, 15
        %v10556 = vpop.permute.xlu0 %10555
        %10557 = vrot.lane.b32.xlu0 %v3792, 15
        %v10558 = vpop.permute.xlu0 %10557
        %10559 = vrot.lane.b32.xlu0 %v3794, 15
        %v10560 = vpop.permute.xlu0 %10559
        %10561 = vrot.lane.b32.xlu0 %v3796, 15
        %v10562 = vpop.permute.xlu0 %10561
        %10563 = vrot.lane.b32.xlu0 %v3798, 15
        %v10564 = vpop.permute.xlu0 %10563
        %10565 = vrot.lane.b32.xlu0 %v3800, 15
        %v10566 = vpop.permute.xlu0 %10565
        %10567 = vrot.lane.b32.xlu0 %v3802, 15
        %v10568 = vpop.permute.xlu0 %10567
        %10569 = vrot.lane.b32.xlu0 %v3804, 15
        %v10570 = vpop.permute.xlu0 %10569
        %10571 = vrot.lane.b32.xlu0 %v3806, 15
        %v10572 = vpop.permute.xlu0 %10571
        %10573 = vrot.lane.b32.xlu0 %v3808, 15
        %v10574 = vpop.permute.xlu0 %10573
        %10575 = vrot.lane.b32.xlu0 %v3810, 15
        %v10576 = vpop.permute.xlu0 %10575
        %10577 = vrot.lane.b32.xlu0 %v3812, 15
        %v10578 = vpop.permute.xlu0 %10577
        %10579 = vrot.lane.b32.xlu0 %v3814, 15
        %v10580 = vpop.permute.xlu0 %10579
        %10581 = vrot.lane.b32.xlu0 %v3816, 15
        %v10582 = vpop.permute.xlu0 %10581
        %v10615 = vsel %vm170, %v2794, %v8728
        %v10616 = vsel %vm170, %v2796, %v8730
        %v10617 = vsel %vm170, %v2798, %v8732
        %v10618 = vsel %vm170, %v2800, %v8734
        %v10619 = vsel %vm170, %v2802, %v8736
        %v10620 = vsel %vm170, %v2804, %v8738
        %v10621 = vsel %vm170, %v2806, %v8740
        %v10622 = vsel %vm170, %v2808, %v8742
        %v10623 = vsel %vm170, %v2810, %v8744
        %v10624 = vsel %vm170, %v2812, %v8746
        %v10625 = vsel %vm170, %v2814, %v8748
        %v10626 = vsel %vm170, %v2816, %v8750
        %v10627 = vsel %vm170, %v2818, %v8752
        %v10628 = vsel %vm170, %v2820, %v8754
        %v10629 = vsel %vm170, %v2822, %v8756
        %v10630 = vsel %vm170, %v2824, %v8758
        %v10631 = vsel %vm170, %v2826, %v8760
        %v10632 = vsel %vm170, %v2828, %v8762
        %v10633 = vsel %vm170, %v2830, %v8764
        %v10634 = vsel %vm170, %v2832, %v8766
        %v10635 = vsel %vm170, %v2834, %v8768
        %v10636 = vsel %vm170, %v2836, %v8770
        %v10637 = vsel %vm170, %v2838, %v8772
        %v10638 = vsel %vm170, %v2840, %v8774
        %v10639 = vsel %vm170, %v2842, %v8776
        %v10640 = vsel %vm170, %v2844, %v8778
        %v10641 = vsel %vm170, %v2846, %v8780
        %v10642 = vsel %vm170, %v2848, %v8782
        %v10643 = vsel %vm170, %v2850, %v8784
        %v10644 = vsel %vm170, %v2852, %v8786
        %v10645 = vsel %vm170, %v2854, %v8788
        %v10646 = vsel %vm170, %v2856, %v8790
        %v10647 = vsel %vm5833, %v10615, %v8856
        %v10648 = vsel %vm5833, %v10616, %v8858
        %v10649 = vsel %vm5833, %v10617, %v8860
        %v10650 = vsel %vm5833, %v10618, %v8862
        %v10651 = vsel %vm5833, %v10619, %v8864
        %v10652 = vsel %vm5833, %v10620, %v8866
        %v10653 = vsel %vm5833, %v10621, %v8868
        %v10654 = vsel %vm5833, %v10622, %v8870
        %v10655 = vsel %vm5833, %v10623, %v8872
        %v10656 = vsel %vm5833, %v10624, %v8874
        %v10657 = vsel %vm5833, %v10625, %v8876
        %v10658 = vsel %vm5833, %v10626, %v8878
        %v10659 = vsel %vm5833, %v10627, %v8880
        %v10660 = vsel %vm5833, %v10628, %v8882
        %v10661 = vsel %vm5833, %v10629, %v8884
        %v10662 = vsel %vm5833, %v10630, %v8886
        %v10663 = vsel %vm5833, %v10631, %v8888
        %v10664 = vsel %vm5833, %v10632, %v8890
        %v10665 = vsel %vm5833, %v10633, %v8892
        %v10666 = vsel %vm5833, %v10634, %v8894
        %v10667 = vsel %vm5833, %v10635, %v8896
        %v10668 = vsel %vm5833, %v10636, %v8898
        %v10669 = vsel %vm5833, %v10637, %v8900
        %v10670 = vsel %vm5833, %v10638, %v8902
        %v10671 = vsel %vm5833, %v10639, %v8904
        %v10672 = vsel %vm5833, %v10640, %v8906
        %v10673 = vsel %vm5833, %v10641, %v8908
        %v10674 = vsel %vm5833, %v10642, %v8910
        %v10675 = vsel %vm5833, %v10643, %v8912
        %v10676 = vsel %vm5833, %v10644, %v8914
        %v10677 = vsel %vm5833, %v10645, %v8916
        %v10678 = vsel %vm5833, %v10646, %v8918
        %v10679 = vsel %vm5866, %v10647, %v8984
        %v10680 = vsel %vm5866, %v10648, %v8986
        %v10681 = vsel %vm5866, %v10649, %v8988
        %v10682 = vsel %vm5866, %v10650, %v8990
        %v10683 = vsel %vm5866, %v10651, %v8992
        %v10684 = vsel %vm5866, %v10652, %v8994
        %v10685 = vsel %vm5866, %v10653, %v8996
        %v10686 = vsel %vm5866, %v10654, %v8998
        %v10687 = vsel %vm5866, %v10655, %v9000
        %v10688 = vsel %vm5866, %v10656, %v9002
        %v10689 = vsel %vm5866, %v10657, %v9004
        %v10690 = vsel %vm5866, %v10658, %v9006
        %v10691 = vsel %vm5866, %v10659, %v9008
        %v10692 = vsel %vm5866, %v10660, %v9010
        %v10693 = vsel %vm5866, %v10661, %v9012
        %v10694 = vsel %vm5866, %v10662, %v9014
        %v10695 = vsel %vm5866, %v10663, %v9016
        %v10696 = vsel %vm5866, %v10664, %v9018
        %v10697 = vsel %vm5866, %v10665, %v9020
        %v10698 = vsel %vm5866, %v10666, %v9022
        %v10699 = vsel %vm5866, %v10667, %v9024
        %v10700 = vsel %vm5866, %v10668, %v9026
        %v10701 = vsel %vm5866, %v10669, %v9028
        %v10702 = vsel %vm5866, %v10670, %v9030
        %v10703 = vsel %vm5866, %v10671, %v9032
        %v10704 = vsel %vm5866, %v10672, %v9034
        %v10705 = vsel %vm5866, %v10673, %v9036
        %v10706 = vsel %vm5866, %v10674, %v9038
        %v10707 = vsel %vm5866, %v10675, %v9040
        %v10708 = vsel %vm5866, %v10676, %v9042
        %v10709 = vsel %vm5866, %v10677, %v9044
        %v10710 = vsel %vm5866, %v10678, %v9046
        %v10711 = vsel %vm5899, %v10679, %v9112
        %v10712 = vsel %vm5899, %v10680, %v9114
        %v10713 = vsel %vm5899, %v10681, %v9116
        %v10714 = vsel %vm5899, %v10682, %v9118
        %v10715 = vsel %vm5899, %v10683, %v9120
        %v10716 = vsel %vm5899, %v10684, %v9122
        %v10717 = vsel %vm5899, %v10685, %v9124
        %v10718 = vsel %vm5899, %v10686, %v9126
        %v10719 = vsel %vm5899, %v10687, %v9128
        %v10720 = vsel %vm5899, %v10688, %v9130
        %v10721 = vsel %vm5899, %v10689, %v9132
        %v10722 = vsel %vm5899, %v10690, %v9134
        %v10723 = vsel %vm5899, %v10691, %v9136
        %v10724 = vsel %vm5899, %v10692, %v9138
        %v10725 = vsel %vm5899, %v10693, %v9140
        %v10726 = vsel %vm5899, %v10694, %v9142
        %v10727 = vsel %vm5899, %v10695, %v9144
        %v10728 = vsel %vm5899, %v10696, %v9146
        %v10729 = vsel %vm5899, %v10697, %v9148
        %v10730 = vsel %vm5899, %v10698, %v9150
        %v10731 = vsel %vm5899, %v10699, %v9152
        %v10732 = vsel %vm5899, %v10700, %v9154
        %v10733 = vsel %vm5899, %v10701, %v9156
        %v10734 = vsel %vm5899, %v10702, %v9158
        %v10735 = vsel %vm5899, %v10703, %v9160
        %v10736 = vsel %vm5899, %v10704, %v9162
        %v10737 = vsel %vm5899, %v10705, %v9164
        %v10738 = vsel %vm5899, %v10706, %v9166
        %v10739 = vsel %vm5899, %v10707, %v9168
        %v10740 = vsel %vm5899, %v10708, %v9170
        %v10741 = vsel %vm5899, %v10709, %v9172
        %v10742 = vsel %vm5899, %v10710, %v9174
        %v10743 = vsel %vm5932, %v10711, %v9240
        %v10744 = vsel %vm5932, %v10712, %v9242
        %v10745 = vsel %vm5932, %v10713, %v9244
        %v10746 = vsel %vm5932, %v10714, %v9246
        %v10747 = vsel %vm5932, %v10715, %v9248
        %v10748 = vsel %vm5932, %v10716, %v9250
        %v10749 = vsel %vm5932, %v10717, %v9252
        %v10750 = vsel %vm5932, %v10718, %v9254
        %v10751 = vsel %vm5932, %v10719, %v9256
        %v10752 = vsel %vm5932, %v10720, %v9258
        %v10753 = vsel %vm5932, %v10721, %v9260
        %v10754 = vsel %vm5932, %v10722, %v9262
        %v10755 = vsel %vm5932, %v10723, %v9264
        %v10756 = vsel %vm5932, %v10724, %v9266
        %v10757 = vsel %vm5932, %v10725, %v9268
        %v10758 = vsel %vm5932, %v10726, %v9270
        %v10759 = vsel %vm5932, %v10727, %v9272
        %v10760 = vsel %vm5932, %v10728, %v9274
        %v10761 = vsel %vm5932, %v10729, %v9276
        %v10762 = vsel %vm5932, %v10730, %v9278
        %v10763 = vsel %vm5932, %v10731, %v9280
        %v10764 = vsel %vm5932, %v10732, %v9282
        %v10765 = vsel %vm5932, %v10733, %v9284
        %v10766 = vsel %vm5932, %v10734, %v9286
        %v10767 = vsel %vm5932, %v10735, %v9288
        %v10768 = vsel %vm5932, %v10736, %v9290
        %v10769 = vsel %vm5932, %v10737, %v9292
        %v10770 = vsel %vm5932, %v10738, %v9294
        %v10771 = vsel %vm5932, %v10739, %v9296
        %v10772 = vsel %vm5932, %v10740, %v9298
        %v10773 = vsel %vm5932, %v10741, %v9300
        %v10774 = vsel %vm5932, %v10742, %v9302
        %v10775 = vsel %vm5965, %v10743, %v9368
        %v10776 = vsel %vm5965, %v10744, %v9370
        %v10777 = vsel %vm5965, %v10745, %v9372
        %v10778 = vsel %vm5965, %v10746, %v9374
        %v10779 = vsel %vm5965, %v10747, %v9376
        %v10780 = vsel %vm5965, %v10748, %v9378
        %v10781 = vsel %vm5965, %v10749, %v9380
        %v10782 = vsel %vm5965, %v10750, %v9382
        %v10783 = vsel %vm5965, %v10751, %v9384
        %v10784 = vsel %vm5965, %v10752, %v9386
        %v10785 = vsel %vm5965, %v10753, %v9388
        %v10786 = vsel %vm5965, %v10754, %v9390
        %v10787 = vsel %vm5965, %v10755, %v9392
        %v10788 = vsel %vm5965, %v10756, %v9394
        %v10789 = vsel %vm5965, %v10757, %v9396
        %v10790 = vsel %vm5965, %v10758, %v9398
        %v10791 = vsel %vm5965, %v10759, %v9400
        %v10792 = vsel %vm5965, %v10760, %v9402
        %v10793 = vsel %vm5965, %v10761, %v9404
        %v10794 = vsel %vm5965, %v10762, %v9406
        %v10795 = vsel %vm5965, %v10763, %v9408
        %v10796 = vsel %vm5965, %v10764, %v9410
        %v10797 = vsel %vm5965, %v10765, %v9412
        %v10798 = vsel %vm5965, %v10766, %v9414
        %v10799 = vsel %vm5965, %v10767, %v9416
        %v10800 = vsel %vm5965, %v10768, %v9418
        %v10801 = vsel %vm5965, %v10769, %v9420
        %v10802 = vsel %vm5965, %v10770, %v9422
        %v10803 = vsel %vm5965, %v10771, %v9424
        %v10804 = vsel %vm5965, %v10772, %v9426
        %v10805 = vsel %vm5965, %v10773, %v9428
        %v10806 = vsel %vm5965, %v10774, %v9430
        %v10807 = vsel %vm5998, %v10775, %v9496
        %v10808 = vsel %vm5998, %v10776, %v9498
        %v10809 = vsel %vm5998, %v10777, %v9500
        %v10810 = vsel %vm5998, %v10778, %v9502
        %v10811 = vsel %vm5998, %v10779, %v9504
        %v10812 = vsel %vm5998, %v10780, %v9506
        %v10813 = vsel %vm5998, %v10781, %v9508
        %v10814 = vsel %vm5998, %v10782, %v9510
        %v10815 = vsel %vm5998, %v10783, %v9512
        %v10816 = vsel %vm5998, %v10784, %v9514
        %v10817 = vsel %vm5998, %v10785, %v9516
        %v10818 = vsel %vm5998, %v10786, %v9518
        %v10819 = vsel %vm5998, %v10787, %v9520
        %v10820 = vsel %vm5998, %v10788, %v9522
        %v10821 = vsel %vm5998, %v10789, %v9524
        %v10822 = vsel %vm5998, %v10790, %v9526
        %v10823 = vsel %vm5998, %v10791, %v9528
        %v10824 = vsel %vm5998, %v10792, %v9530
        %v10825 = vsel %vm5998, %v10793, %v9532
        %v10826 = vsel %vm5998, %v10794, %v9534
        %v10827 = vsel %vm5998, %v10795, %v9536
        %v10828 = vsel %vm5998, %v10796, %v9538
        %v10829 = vsel %vm5998, %v10797, %v9540
        %v10830 = vsel %vm5998, %v10798, %v9542
        %v10831 = vsel %vm5998, %v10799, %v9544
        %v10832 = vsel %vm5998, %v10800, %v9546
        %v10833 = vsel %vm5998, %v10801, %v9548
        %v10834 = vsel %vm5998, %v10802, %v9550
        %v10835 = vsel %vm5998, %v10803, %v9552
        %v10836 = vsel %vm5998, %v10804, %v9554
        %v10837 = vsel %vm5998, %v10805, %v9556
        %v10838 = vsel %vm5998, %v10806, %v9558
        %v10839 = vsel %vm6031, %v10807, %v9624
        %v10840 = vsel %vm6031, %v10808, %v9626
        %v10841 = vsel %vm6031, %v10809, %v9628
        %v10842 = vsel %vm6031, %v10810, %v9630
        %v10843 = vsel %vm6031, %v10811, %v9632
        %v10844 = vsel %vm6031, %v10812, %v9634
        %v10845 = vsel %vm6031, %v10813, %v9636
        %v10846 = vsel %vm6031, %v10814, %v9638
        %v10847 = vsel %vm6031, %v10815, %v9640
        %v10848 = vsel %vm6031, %v10816, %v9642
        %v10849 = vsel %vm6031, %v10817, %v9644
        %v10850 = vsel %vm6031, %v10818, %v9646
        %v10851 = vsel %vm6031, %v10819, %v9648
        %v10852 = vsel %vm6031, %v10820, %v9650
        %v10853 = vsel %vm6031, %v10821, %v9652
        %v10854 = vsel %vm6031, %v10822, %v9654
        %v10855 = vsel %vm6031, %v10823, %v9656
        %v10856 = vsel %vm6031, %v10824, %v9658
        %v10857 = vsel %vm6031, %v10825, %v9660
        %v10858 = vsel %vm6031, %v10826, %v9662
        %v10859 = vsel %vm6031, %v10827, %v9664
        %v10860 = vsel %vm6031, %v10828, %v9666
        %v10861 = vsel %vm6031, %v10829, %v9668
        %v10862 = vsel %vm6031, %v10830, %v9670
        %v10863 = vsel %vm6031, %v10831, %v9672
        %v10864 = vsel %vm6031, %v10832, %v9674
        %v10865 = vsel %vm6031, %v10833, %v9676
        %v10866 = vsel %vm6031, %v10834, %v9678
        %v10867 = vsel %vm6031, %v10835, %v9680
        %v10868 = vsel %vm6031, %v10836, %v9682
        %v10869 = vsel %vm6031, %v10837, %v9684
        %v10870 = vsel %vm6031, %v10838, %v9686
        %v10871 = vsel %vm6064, %v10839, %v9752
        %v10872 = vsel %vm6064, %v10840, %v9754
        %v10873 = vsel %vm6064, %v10841, %v9756
        %v10874 = vsel %vm6064, %v10842, %v9758
        %v10875 = vsel %vm6064, %v10843, %v9760
        %v10876 = vsel %vm6064, %v10844, %v9762
        %v10877 = vsel %vm6064, %v10845, %v9764
        %v10878 = vsel %vm6064, %v10846, %v9766
        %v10879 = vsel %vm6064, %v10847, %v9768
        %v10880 = vsel %vm6064, %v10848, %v9770
        %v10881 = vsel %vm6064, %v10849, %v9772
        %v10882 = vsel %vm6064, %v10850, %v9774
        %v10883 = vsel %vm6064, %v10851, %v9776
        %v10884 = vsel %vm6064, %v10852, %v9778
        %v10885 = vsel %vm6064, %v10853, %v9780
        %v10886 = vsel %vm6064, %v10854, %v9782
        %v10887 = vsel %vm6064, %v10855, %v9784
        %v10888 = vsel %vm6064, %v10856, %v9786
        %v10889 = vsel %vm6064, %v10857, %v9788
        %v10890 = vsel %vm6064, %v10858, %v9790
        %v10891 = vsel %vm6064, %v10859, %v9792
        %v10892 = vsel %vm6064, %v10860, %v9794
        %v10893 = vsel %vm6064, %v10861, %v9796
        %v10894 = vsel %vm6064, %v10862, %v9798
        %v10895 = vsel %vm6064, %v10863, %v9800
        %v10896 = vsel %vm6064, %v10864, %v9802
        %v10897 = vsel %vm6064, %v10865, %v9804
        %v10898 = vsel %vm6064, %v10866, %v9806
        %v10899 = vsel %vm6064, %v10867, %v9808
        %v10900 = vsel %vm6064, %v10868, %v9810
        %v10901 = vsel %vm6064, %v10869, %v9812
        %v10902 = vsel %vm6064, %v10870, %v9814
        %v10903 = vsel %vm6097, %v10871, %v9880
        %v10904 = vsel %vm6097, %v10872, %v9882
        %v10905 = vsel %vm6097, %v10873, %v9884
        %v10906 = vsel %vm6097, %v10874, %v9886
        %v10907 = vsel %vm6097, %v10875, %v9888
        %v10908 = vsel %vm6097, %v10876, %v9890
        %v10909 = vsel %vm6097, %v10877, %v9892
        %v10910 = vsel %vm6097, %v10878, %v9894
        %v10911 = vsel %vm6097, %v10879, %v9896
        %v10912 = vsel %vm6097, %v10880, %v9898
        %v10913 = vsel %vm6097, %v10881, %v9900
        %v10914 = vsel %vm6097, %v10882, %v9902
        %v10915 = vsel %vm6097, %v10883, %v9904
        %v10916 = vsel %vm6097, %v10884, %v9906
        %v10917 = vsel %vm6097, %v10885, %v9908
        %v10918 = vsel %vm6097, %v10886, %v9910
        %v10919 = vsel %vm6097, %v10887, %v9912
        %v10920 = vsel %vm6097, %v10888, %v9914
        %v10921 = vsel %vm6097, %v10889, %v9916
        %v10922 = vsel %vm6097, %v10890, %v9918
        %v10923 = vsel %vm6097, %v10891, %v9920
        %v10924 = vsel %vm6097, %v10892, %v9922
        %v10925 = vsel %vm6097, %v10893, %v9924
        %v10926 = vsel %vm6097, %v10894, %v9926
        %v10927 = vsel %vm6097, %v10895, %v9928
        %v10928 = vsel %vm6097, %v10896, %v9930
        %v10929 = vsel %vm6097, %v10897, %v9932
        %v10930 = vsel %vm6097, %v10898, %v9934
        %v10931 = vsel %vm6097, %v10899, %v9936
        %v10932 = vsel %vm6097, %v10900, %v9938
        %v10933 = vsel %vm6097, %v10901, %v9940
        %v10934 = vsel %vm6097, %v10902, %v9942
        %v10935 = vsel %vm6130, %v10903, %v10008
        %v10936 = vsel %vm6130, %v10904, %v10010
        %v10937 = vsel %vm6130, %v10905, %v10012
        %v10938 = vsel %vm6130, %v10906, %v10014
        %v10939 = vsel %vm6130, %v10907, %v10016
        %v10940 = vsel %vm6130, %v10908, %v10018
        %v10941 = vsel %vm6130, %v10909, %v10020
        %v10942 = vsel %vm6130, %v10910, %v10022
        %v10943 = vsel %vm6130, %v10911, %v10024
        %v10944 = vsel %vm6130, %v10912, %v10026
        %v10945 = vsel %vm6130, %v10913, %v10028
        %v10946 = vsel %vm6130, %v10914, %v10030
        %v10947 = vsel %vm6130, %v10915, %v10032
        %v10948 = vsel %vm6130, %v10916, %v10034
        %v10949 = vsel %vm6130, %v10917, %v10036
        %v10950 = vsel %vm6130, %v10918, %v10038
        %v10951 = vsel %vm6130, %v10919, %v10040
        %v10952 = vsel %vm6130, %v10920, %v10042
        %v10953 = vsel %vm6130, %v10921, %v10044
        %v10954 = vsel %vm6130, %v10922, %v10046
        %v10955 = vsel %vm6130, %v10923, %v10048
        %v10956 = vsel %vm6130, %v10924, %v10050
        %v10957 = vsel %vm6130, %v10925, %v10052
        %v10958 = vsel %vm6130, %v10926, %v10054
        %v10959 = vsel %vm6130, %v10927, %v10056
        %v10960 = vsel %vm6130, %v10928, %v10058
        %v10961 = vsel %vm6130, %v10929, %v10060
        %v10962 = vsel %vm6130, %v10930, %v10062
        %v10963 = vsel %vm6130, %v10931, %v10064
        %v10964 = vsel %vm6130, %v10932, %v10066
        %v10965 = vsel %vm6130, %v10933, %v10068
        %v10966 = vsel %vm6130, %v10934, %v10070
        %v10967 = vsel %vm6163, %v10935, %v10136
        %v10968 = vsel %vm6163, %v10936, %v10138
        %v10969 = vsel %vm6163, %v10937, %v10140
        %v10970 = vsel %vm6163, %v10938, %v10142
        %v10971 = vsel %vm6163, %v10939, %v10144
        %v10972 = vsel %vm6163, %v10940, %v10146
        %v10973 = vsel %vm6163, %v10941, %v10148
        %v10974 = vsel %vm6163, %v10942, %v10150
        %v10975 = vsel %vm6163, %v10943, %v10152
        %v10976 = vsel %vm6163, %v10944, %v10154
        %v10977 = vsel %vm6163, %v10945, %v10156
        %v10978 = vsel %vm6163, %v10946, %v10158
        %v10979 = vsel %vm6163, %v10947, %v10160
        %v10980 = vsel %vm6163, %v10948, %v10162
        %v10981 = vsel %vm6163, %v10949, %v10164
        %v10982 = vsel %vm6163, %v10950, %v10166
        %v10983 = vsel %vm6163, %v10951, %v10168
        %v10984 = vsel %vm6163, %v10952, %v10170
        %v10985 = vsel %vm6163, %v10953, %v10172
        %v10986 = vsel %vm6163, %v10954, %v10174
        %v10987 = vsel %vm6163, %v10955, %v10176
        %v10988 = vsel %vm6163, %v10956, %v10178
        %v10989 = vsel %vm6163, %v10957, %v10180
        %v10990 = vsel %vm6163, %v10958, %v10182
        %v10991 = vsel %vm6163, %v10959, %v10184
        %v10992 = vsel %vm6163, %v10960, %v10186
        %v10993 = vsel %vm6163, %v10961, %v10188
        %v10994 = vsel %vm6163, %v10962, %v10190
        %v10995 = vsel %vm6163, %v10963, %v10192
        %v10996 = vsel %vm6163, %v10964, %v10194
        %v10997 = vsel %vm6163, %v10965, %v10196
        %v10998 = vsel %vm6163, %v10966, %v10198
        %v10999 = vsel %vm6196, %v10967, %v10264
        %v11000 = vsel %vm6196, %v10968, %v10266
        %v11001 = vsel %vm6196, %v10969, %v10268
        %v11002 = vsel %vm6196, %v10970, %v10270
        %v11003 = vsel %vm6196, %v10971, %v10272
        %v11004 = vsel %vm6196, %v10972, %v10274
        %v11005 = vsel %vm6196, %v10973, %v10276
        %v11006 = vsel %vm6196, %v10974, %v10278
        %v11007 = vsel %vm6196, %v10975, %v10280
        %v11008 = vsel %vm6196, %v10976, %v10282
        %v11009 = vsel %vm6196, %v10977, %v10284
        %v11010 = vsel %vm6196, %v10978, %v10286
        %v11011 = vsel %vm6196, %v10979, %v10288
        %v11012 = vsel %vm6196, %v10980, %v10290
        %v11013 = vsel %vm6196, %v10981, %v10292
        %v11014 = vsel %vm6196, %v10982, %v10294
        %v11015 = vsel %vm6196, %v10983, %v10296
        %v11016 = vsel %vm6196, %v10984, %v10298
        %v11017 = vsel %vm6196, %v10985, %v10300
        %v11018 = vsel %vm6196, %v10986, %v10302
        %v11019 = vsel %vm6196, %v10987, %v10304
        %v11020 = vsel %vm6196, %v10988, %v10306
        %v11021 = vsel %vm6196, %v10989, %v10308
        %v11022 = vsel %vm6196, %v10990, %v10310
        %v11023 = vsel %vm6196, %v10991, %v10312
        %v11024 = vsel %vm6196, %v10992, %v10314
        %v11025 = vsel %vm6196, %v10993, %v10316
        %v11026 = vsel %vm6196, %v10994, %v10318
        %v11027 = vsel %vm6196, %v10995, %v10320
        %v11028 = vsel %vm6196, %v10996, %v10322
        %v11029 = vsel %vm6196, %v10997, %v10324
        %v11030 = vsel %vm6196, %v10998, %v10326
        %v11031 = vsel %vm6229, %v10999, %v10392
        %v11032 = vsel %vm6229, %v11000, %v10394
        %v11033 = vsel %vm6229, %v11001, %v10396
        %v11034 = vsel %vm6229, %v11002, %v10398
        %v11035 = vsel %vm6229, %v11003, %v10400
        %v11036 = vsel %vm6229, %v11004, %v10402
        %v11037 = vsel %vm6229, %v11005, %v10404
        %v11038 = vsel %vm6229, %v11006, %v10406
        %v11039 = vsel %vm6229, %v11007, %v10408
        %v11040 = vsel %vm6229, %v11008, %v10410
        %v11041 = vsel %vm6229, %v11009, %v10412
        %v11042 = vsel %vm6229, %v11010, %v10414
        %v11043 = vsel %vm6229, %v11011, %v10416
        %v11044 = vsel %vm6229, %v11012, %v10418
        %v11045 = vsel %vm6229, %v11013, %v10420
        %v11046 = vsel %vm6229, %v11014, %v10422
        %v11047 = vsel %vm6229, %v11015, %v10424
        %v11048 = vsel %vm6229, %v11016, %v10426
        %v11049 = vsel %vm6229, %v11017, %v10428
        %v11050 = vsel %vm6229, %v11018, %v10430
        %v11051 = vsel %vm6229, %v11019, %v10432
        %v11052 = vsel %vm6229, %v11020, %v10434
        %v11053 = vsel %vm6229, %v11021, %v10436
        %v11054 = vsel %vm6229, %v11022, %v10438
        %v11055 = vsel %vm6229, %v11023, %v10440
        %v11056 = vsel %vm6229, %v11024, %v10442
        %v11057 = vsel %vm6229, %v11025, %v10444
        %v11058 = vsel %vm6229, %v11026, %v10446
        %v11059 = vsel %vm6229, %v11027, %v10448
        %v11060 = vsel %vm6229, %v11028, %v10450
        %v11061 = vsel %vm6229, %v11029, %v10452
        %v11062 = vsel %vm6229, %v11030, %v10454
        %v11063 = vsel %vm6262, %v11031, %v10520
        %v11064 = vsel %vm6262, %v11032, %v10522
        %v11065 = vsel %vm6262, %v11033, %v10524
        %v11066 = vsel %vm6262, %v11034, %v10526
        %v11067 = vsel %vm6262, %v11035, %v10528
        %v11068 = vsel %vm6262, %v11036, %v10530
        %v11069 = vsel %vm6262, %v11037, %v10532
        %v11070 = vsel %vm6262, %v11038, %v10534
        %v11071 = vsel %vm6262, %v11039, %v10536
        %v11072 = vsel %vm6262, %v11040, %v10538
        %v11073 = vsel %vm6262, %v11041, %v10540
        %v11074 = vsel %vm6262, %v11042, %v10542
        %v11075 = vsel %vm6262, %v11043, %v10544
        %v11076 = vsel %vm6262, %v11044, %v10546
        %v11077 = vsel %vm6262, %v11045, %v10548
        %v11078 = vsel %vm6262, %v11046, %v10550
        %v11079 = vsel %vm6262, %v11047, %v10552
        %v11080 = vsel %vm6262, %v11048, %v10554
        %v11081 = vsel %vm6262, %v11049, %v10556
        %v11082 = vsel %vm6262, %v11050, %v10558
        %v11083 = vsel %vm6262, %v11051, %v10560
        %v11084 = vsel %vm6262, %v11052, %v10562
        %v11085 = vsel %vm6262, %v11053, %v10564
        %v11086 = vsel %vm6262, %v11054, %v10566
        %v11087 = vsel %vm6262, %v11055, %v10568
        %v11088 = vsel %vm6262, %v11056, %v10570
        %v11089 = vsel %vm6262, %v11057, %v10572
        %v11090 = vsel %vm6262, %v11058, %v10574
        %v11091 = vsel %vm6262, %v11059, %v10576
        %v11092 = vsel %vm6262, %v11060, %v10578
        %v11093 = vsel %vm6262, %v11061, %v10580
        %v11094 = vsel %vm6262, %v11062, %v10582
        %11127 = vrot.lane.b32.xlu0 %v8663, 16
        %v11128 = vpop.permute.xlu0 %11127
        %11129 = vrot.lane.b32.xlu0 %v8664, 16
        %v11130 = vpop.permute.xlu0 %11129
        %11131 = vrot.lane.b32.xlu0 %v8665, 16
        %v11132 = vpop.permute.xlu0 %11131
        %11133 = vrot.lane.b32.xlu0 %v8666, 16
        %v11134 = vpop.permute.xlu0 %11133
        %11135 = vrot.lane.b32.xlu0 %v8667, 16
        %v11136 = vpop.permute.xlu0 %11135
        %11137 = vrot.lane.b32.xlu0 %v8668, 16
        %v11138 = vpop.permute.xlu0 %11137
        %11139 = vrot.lane.b32.xlu0 %v8669, 16
        %v11140 = vpop.permute.xlu0 %11139
        %11141 = vrot.lane.b32.xlu0 %v8670, 16
        %v11142 = vpop.permute.xlu0 %11141
        %11143 = vrot.lane.b32.xlu0 %v8671, 16
        %v11144 = vpop.permute.xlu0 %11143
        %11145 = vrot.lane.b32.xlu0 %v8672, 16
        %v11146 = vpop.permute.xlu0 %11145
        %11147 = vrot.lane.b32.xlu0 %v8673, 16
        %v11148 = vpop.permute.xlu0 %11147
        %11149 = vrot.lane.b32.xlu0 %v8674, 16
        %v11150 = vpop.permute.xlu0 %11149
        %11151 = vrot.lane.b32.xlu0 %v8675, 16
        %v11152 = vpop.permute.xlu0 %11151
        %11153 = vrot.lane.b32.xlu0 %v8676, 16
        %v11154 = vpop.permute.xlu0 %11153
        %11155 = vrot.lane.b32.xlu0 %v8677, 16
        %v11156 = vpop.permute.xlu0 %11155
        %11157 = vrot.lane.b32.xlu0 %v8678, 16
        %v11158 = vpop.permute.xlu0 %11157
        %11159 = vrot.lane.b32.xlu0 %v8679, 16
        %v11160 = vpop.permute.xlu0 %11159
        %11161 = vrot.lane.b32.xlu0 %v8680, 16
        %v11162 = vpop.permute.xlu0 %11161
        %11163 = vrot.lane.b32.xlu0 %v8681, 16
        %v11164 = vpop.permute.xlu0 %11163
        %11165 = vrot.lane.b32.xlu0 %v8682, 16
        %v11166 = vpop.permute.xlu0 %11165
        %11167 = vrot.lane.b32.xlu0 %v8683, 16
        %v11168 = vpop.permute.xlu0 %11167
        %11169 = vrot.lane.b32.xlu0 %v8684, 16
        %v11170 = vpop.permute.xlu0 %11169
        %11171 = vrot.lane.b32.xlu0 %v8685, 16
        %v11172 = vpop.permute.xlu0 %11171
        %11173 = vrot.lane.b32.xlu0 %v8686, 16
        %v11174 = vpop.permute.xlu0 %11173
        %11175 = vrot.lane.b32.xlu0 %v8687, 16
        %v11176 = vpop.permute.xlu0 %11175
        %11177 = vrot.lane.b32.xlu0 %v8688, 16
        %v11178 = vpop.permute.xlu0 %11177
        %11179 = vrot.lane.b32.xlu0 %v8689, 16
        %v11180 = vpop.permute.xlu0 %11179
        %11181 = vrot.lane.b32.xlu0 %v8690, 16
        %v11182 = vpop.permute.xlu0 %11181
        %11183 = vrot.lane.b32.xlu0 %v8691, 16
        %v11184 = vpop.permute.xlu0 %11183
        %11185 = vrot.lane.b32.xlu0 %v8692, 16
        %v11186 = vpop.permute.xlu0 %11185
        %11187 = vrot.lane.b32.xlu0 %v8693, 16
        %v11188 = vpop.permute.xlu0 %11187
        %11189 = vrot.lane.b32.xlu0 %v8694, 16
        %v11190 = vpop.permute.xlu0 %11189
        %11255 = vrot.lane.b32.xlu0 %v11063, 32
        %v11256 = vpop.permute.xlu0 %11255
        %11257 = vrot.lane.b32.xlu0 %v11064, 32
        %v11258 = vpop.permute.xlu0 %11257
        %11259 = vrot.lane.b32.xlu0 %v11065, 32
        %v11260 = vpop.permute.xlu0 %11259
        %11261 = vrot.lane.b32.xlu0 %v11066, 32
        %v11262 = vpop.permute.xlu0 %11261
        %11263 = vrot.lane.b32.xlu0 %v11067, 32
        %v11264 = vpop.permute.xlu0 %11263
        %11265 = vrot.lane.b32.xlu0 %v11068, 32
        %v11266 = vpop.permute.xlu0 %11265
        %11267 = vrot.lane.b32.xlu0 %v11069, 32
        %v11268 = vpop.permute.xlu0 %11267
        %11269 = vrot.lane.b32.xlu0 %v11070, 32
        %v11270 = vpop.permute.xlu0 %11269
        %11271 = vrot.lane.b32.xlu0 %v11071, 32
        %v11272 = vpop.permute.xlu0 %11271
        %11273 = vrot.lane.b32.xlu0 %v11072, 32
        %v11274 = vpop.permute.xlu0 %11273
        %11275 = vrot.lane.b32.xlu0 %v11073, 32
        %v11276 = vpop.permute.xlu0 %11275
        %11277 = vrot.lane.b32.xlu0 %v11074, 32
        %v11278 = vpop.permute.xlu0 %11277
        %11279 = vrot.lane.b32.xlu0 %v11075, 32
        %v11280 = vpop.permute.xlu0 %11279
        %11281 = vrot.lane.b32.xlu0 %v11076, 32
        %v11282 = vpop.permute.xlu0 %11281
        %11283 = vrot.lane.b32.xlu0 %v11077, 32
        %v11284 = vpop.permute.xlu0 %11283
        %11285 = vrot.lane.b32.xlu0 %v11078, 32
        %v11286 = vpop.permute.xlu0 %11285
        %11287 = vrot.lane.b32.xlu0 %v11079, 32
        %v11288 = vpop.permute.xlu0 %11287
        %11289 = vrot.lane.b32.xlu0 %v11080, 32
        %v11290 = vpop.permute.xlu0 %11289
        %11291 = vrot.lane.b32.xlu0 %v11081, 32
        %v11292 = vpop.permute.xlu0 %11291
        %11293 = vrot.lane.b32.xlu0 %v11082, 32
        %v11294 = vpop.permute.xlu0 %11293
        %11295 = vrot.lane.b32.xlu0 %v11083, 32
        %v11296 = vpop.permute.xlu0 %11295
        %11297 = vrot.lane.b32.xlu0 %v11084, 32
        %v11298 = vpop.permute.xlu0 %11297
        %11299 = vrot.lane.b32.xlu0 %v11085, 32
        %v11300 = vpop.permute.xlu0 %11299
        %11301 = vrot.lane.b32.xlu0 %v11086, 32
        %v11302 = vpop.permute.xlu0 %11301
        %11303 = vrot.lane.b32.xlu0 %v11087, 32
        %v11304 = vpop.permute.xlu0 %11303
        %11305 = vrot.lane.b32.xlu0 %v11088, 32
        %v11306 = vpop.permute.xlu0 %11305
        %11307 = vrot.lane.b32.xlu0 %v11089, 32
        %v11308 = vpop.permute.xlu0 %11307
        %11309 = vrot.lane.b32.xlu0 %v11090, 32
        %v11310 = vpop.permute.xlu0 %11309
        %11311 = vrot.lane.b32.xlu0 %v11091, 32
        %v11312 = vpop.permute.xlu0 %11311
        %11313 = vrot.lane.b32.xlu0 %v11092, 32
        %v11314 = vpop.permute.xlu0 %11313
        %11315 = vrot.lane.b32.xlu0 %v11093, 32
        %v11316 = vpop.permute.xlu0 %11315
        %11317 = vrot.lane.b32.xlu0 %v11094, 32
        %v11318 = vpop.permute.xlu0 %11317
        %11383 = vrot.lane.b32.xlu0 %v3818, 48
        %v11384 = vpop.permute.xlu0 %11383
        %11385 = vrot.lane.b32.xlu0 %v3820, 48
        %v11386 = vpop.permute.xlu0 %11385
        %11387 = vrot.lane.b32.xlu0 %v3822, 48
        %v11388 = vpop.permute.xlu0 %11387
        %11389 = vrot.lane.b32.xlu0 %v3824, 48
        %v11390 = vpop.permute.xlu0 %11389
        %11391 = vrot.lane.b32.xlu0 %v3826, 48
        %v11392 = vpop.permute.xlu0 %11391
        %11393 = vrot.lane.b32.xlu0 %v3828, 48
        %v11394 = vpop.permute.xlu0 %11393
        %11395 = vrot.lane.b32.xlu0 %v3830, 48
        %v11396 = vpop.permute.xlu0 %11395
        %11397 = vrot.lane.b32.xlu0 %v3832, 48
        %v11398 = vpop.permute.xlu0 %11397
        %11399 = vrot.lane.b32.xlu0 %v3834, 48
        %v11400 = vpop.permute.xlu0 %11399
        %11401 = vrot.lane.b32.xlu0 %v3836, 48
        %v11402 = vpop.permute.xlu0 %11401
        %11403 = vrot.lane.b32.xlu0 %v3838, 48
        %v11404 = vpop.permute.xlu0 %11403
        %11405 = vrot.lane.b32.xlu0 %v3840, 48
        %v11406 = vpop.permute.xlu0 %11405
        %11407 = vrot.lane.b32.xlu0 %v3842, 48
        %v11408 = vpop.permute.xlu0 %11407
        %11409 = vrot.lane.b32.xlu0 %v3844, 48
        %v11410 = vpop.permute.xlu0 %11409
        %11411 = vrot.lane.b32.xlu0 %v3846, 48
        %v11412 = vpop.permute.xlu0 %11411
        %11413 = vrot.lane.b32.xlu0 %v3848, 48
        %v11414 = vpop.permute.xlu0 %11413
        %11415 = vrot.lane.b32.xlu0 %v3850, 48
        %v11416 = vpop.permute.xlu0 %11415
        %11417 = vrot.lane.b32.xlu0 %v3852, 48
        %v11418 = vpop.permute.xlu0 %11417
        %11419 = vrot.lane.b32.xlu0 %v3854, 48
        %v11420 = vpop.permute.xlu0 %11419
        %11421 = vrot.lane.b32.xlu0 %v3856, 48
        %v11422 = vpop.permute.xlu0 %11421
        %11423 = vrot.lane.b32.xlu0 %v3858, 48
        %v11424 = vpop.permute.xlu0 %11423
        %11425 = vrot.lane.b32.xlu0 %v3860, 48
        %v11426 = vpop.permute.xlu0 %11425
        %11427 = vrot.lane.b32.xlu0 %v3862, 48
        %v11428 = vpop.permute.xlu0 %11427
        %11429 = vrot.lane.b32.xlu0 %v3864, 48
        %v11430 = vpop.permute.xlu0 %11429
        %11431 = vrot.lane.b32.xlu0 %v3866, 48
        %v11432 = vpop.permute.xlu0 %11431
        %11433 = vrot.lane.b32.xlu0 %v3868, 48
        %v11434 = vpop.permute.xlu0 %11433
        %11435 = vrot.lane.b32.xlu0 %v3870, 48
        %v11436 = vpop.permute.xlu0 %11435
        %11437 = vrot.lane.b32.xlu0 %v3872, 48
        %v11438 = vpop.permute.xlu0 %11437
        %11439 = vrot.lane.b32.xlu0 %v3874, 48
        %v11440 = vpop.permute.xlu0 %11439
        %11441 = vrot.lane.b32.xlu0 %v3876, 48
        %v11442 = vpop.permute.xlu0 %11441
        %11443 = vrot.lane.b32.xlu0 %v3878, 48
        %v11444 = vpop.permute.xlu0 %11443
        %11445 = vrot.lane.b32.xlu0 %v3880, 48
        %v11446 = vpop.permute.xlu0 %11445
        %vm11479 = vcmask 130048
        %v11480 = vsel %vm11479, %v6263, %v11128
        %v11481 = vsel %vm11479, %v6264, %v11130
        %v11482 = vsel %vm11479, %v6265, %v11132
        %v11483 = vsel %vm11479, %v6266, %v11134
        %v11484 = vsel %vm11479, %v6267, %v11136
        %v11485 = vsel %vm11479, %v6268, %v11138
        %v11486 = vsel %vm11479, %v6269, %v11140
        %v11487 = vsel %vm11479, %v6270, %v11142
        %v11488 = vsel %vm11479, %v6271, %v11144
        %v11489 = vsel %vm11479, %v6272, %v11146
        %v11490 = vsel %vm11479, %v6273, %v11148
        %v11491 = vsel %vm11479, %v6274, %v11150
        %v11492 = vsel %vm11479, %v6275, %v11152
        %v11493 = vsel %vm11479, %v6276, %v11154
        %v11494 = vsel %vm11479, %v6277, %v11156
        %v11495 = vsel %vm11479, %v6278, %v11158
        %v11496 = vsel %vm11479, %v6279, %v11160
        %v11497 = vsel %vm11479, %v6280, %v11162
        %v11498 = vsel %vm11479, %v6281, %v11164
        %v11499 = vsel %vm11479, %v6282, %v11166
        %v11500 = vsel %vm11479, %v6283, %v11168
        %v11501 = vsel %vm11479, %v6284, %v11170
        %v11502 = vsel %vm11479, %v6285, %v11172
        %v11503 = vsel %vm11479, %v6286, %v11174
        %v11504 = vsel %vm11479, %v6287, %v11176
        %v11505 = vsel %vm11479, %v6288, %v11178
        %v11506 = vsel %vm11479, %v6289, %v11180
        %v11507 = vsel %vm11479, %v6290, %v11182
        %v11508 = vsel %vm11479, %v6291, %v11184
        %v11509 = vsel %vm11479, %v6292, %v11186
        %v11510 = vsel %vm11479, %v6293, %v11188
        %v11511 = vsel %vm11479, %v6294, %v11190
        %vm11512 = vcmask 261120
        %v11513 = vsel %vm11512, %v11480, %v11256
        %v11514 = vsel %vm11512, %v11481, %v11258
        %v11515 = vsel %vm11512, %v11482, %v11260
        %v11516 = vsel %vm11512, %v11483, %v11262
        %v11517 = vsel %vm11512, %v11484, %v11264
        %v11518 = vsel %vm11512, %v11485, %v11266
        %v11519 = vsel %vm11512, %v11486, %v11268
        %v11520 = vsel %vm11512, %v11487, %v11270
        %v11521 = vsel %vm11512, %v11488, %v11272
        %v11522 = vsel %vm11512, %v11489, %v11274
        %v11523 = vsel %vm11512, %v11490, %v11276
        %v11524 = vsel %vm11512, %v11491, %v11278
        %v11525 = vsel %vm11512, %v11492, %v11280
        %v11526 = vsel %vm11512, %v11493, %v11282
        %v11527 = vsel %vm11512, %v11494, %v11284
        %v11528 = vsel %vm11512, %v11495, %v11286
        %v11529 = vsel %vm11512, %v11496, %v11288
        %v11530 = vsel %vm11512, %v11497, %v11290
        %v11531 = vsel %vm11512, %v11498, %v11292
        %v11532 = vsel %vm11512, %v11499, %v11294
        %v11533 = vsel %vm11512, %v11500, %v11296
        %v11534 = vsel %vm11512, %v11501, %v11298
        %v11535 = vsel %vm11512, %v11502, %v11300
        %v11536 = vsel %vm11512, %v11503, %v11302
        %v11537 = vsel %vm11512, %v11504, %v11304
        %v11538 = vsel %vm11512, %v11505, %v11306
        %v11539 = vsel %vm11512, %v11506, %v11308
        %v11540 = vsel %vm11512, %v11507, %v11310
        %v11541 = vsel %vm11512, %v11508, %v11312
        %v11542 = vsel %vm11512, %v11509, %v11314
        %v11543 = vsel %vm11512, %v11510, %v11316
        %v11544 = vsel %vm11512, %v11511, %v11318
        %vm11545 = vcmask 392192
        %v11546 = vsel %vm11545, %v11513, %v11384
        %v11547 = vsel %vm11545, %v11514, %v11386
        %v11548 = vsel %vm11545, %v11515, %v11388
        %v11549 = vsel %vm11545, %v11516, %v11390
        %v11550 = vsel %vm11545, %v11517, %v11392
        %v11551 = vsel %vm11545, %v11518, %v11394
        %v11552 = vsel %vm11545, %v11519, %v11396
        %v11553 = vsel %vm11545, %v11520, %v11398
        %v11554 = vsel %vm11545, %v11521, %v11400
        %v11555 = vsel %vm11545, %v11522, %v11402
        %v11556 = vsel %vm11545, %v11523, %v11404
        %v11557 = vsel %vm11545, %v11524, %v11406
        %v11558 = vsel %vm11545, %v11525, %v11408
        %v11559 = vsel %vm11545, %v11526, %v11410
        %v11560 = vsel %vm11545, %v11527, %v11412
        %v11561 = vsel %vm11545, %v11528, %v11414
        %v11562 = vsel %vm11545, %v11529, %v11416
        %v11563 = vsel %vm11545, %v11530, %v11418
        %v11564 = vsel %vm11545, %v11531, %v11420
        %v11565 = vsel %vm11545, %v11532, %v11422
        %v11566 = vsel %vm11545, %v11533, %v11424
        %v11567 = vsel %vm11545, %v11534, %v11426
        %v11568 = vsel %vm11545, %v11535, %v11428
        %v11569 = vsel %vm11545, %v11536, %v11430
        %v11570 = vsel %vm11545, %v11537, %v11432
        %v11571 = vsel %vm11545, %v11538, %v11434
        %v11572 = vsel %vm11545, %v11539, %v11436
        %v11573 = vsel %vm11545, %v11540, %v11438
        %v11574 = vsel %vm11545, %v11541, %v11440
        %v11575 = vsel %vm11545, %v11542, %v11442
        %v11576 = vsel %vm11545, %v11543, %v11444
        %v11577 = vsel %vm11545, %v11544, %v11446
        %v11578 = vpack.c.bf16 %v11547, %v11546
        %v11579 = vpack.c.bf16 %v11549, %v11548
        %v11580 = vpack.c.bf16 %v11551, %v11550
        %v11581 = vpack.c.bf16 %v11553, %v11552
        %v11582 = vpack.c.bf16 %v11555, %v11554
        %v11583 = vpack.c.bf16 %v11557, %v11556
        %v11584 = vpack.c.bf16 %v11559, %v11558
        %v11585 = vpack.c.bf16 %v11561, %v11560
        %v11586 = vpack.c.bf16 %v11563, %v11562
        %v11587 = vpack.c.bf16 %v11565, %v11564
        %v11588 = vpack.c.bf16 %v11567, %v11566
        %v11589 = vpack.c.bf16 %v11569, %v11568
        %v11590 = vpack.c.bf16 %v11571, %v11570
        %v11591 = vpack.c.bf16 %v11573, %v11572
        %v11592 = vpack.c.bf16 %v11575, %v11574
        %v11593 = vpack.c.bf16 %v11577, %v11576
        %v11594 = vld [vmem:[%s1] sm:$0xf]
        %v11595 = vld [vmem:[%s1 + $0x4] sm:$0xf]
        %v11596 = vld [vmem:[%s1 + $0x8] sm:$0xf]
        %v11597 = vld [vmem:[%s1 + $0xc] sm:$0xf]
        %v11598 = vld [vmem:[%s1 + $0x10] sm:$0xf]
        %v11599 = vld [vmem:[%s1 + $0x14] sm:$0xf]
        %v11600 = vld [vmem:[%s1 + $0x18] sm:$0x1]
        %v11601 = vld [vmem:[%s2] sm:$0x1]
        %v11603 = vlaneseq
        %v11604 = vshrl.u32 %v11603, 7
        %v11605 = vsub.s32 0, %v11604
        %v11606 = vrot.slane %v11601, %v11605
        %v11615 = vunpack.c.l.b16 %v11594
        %v11616 = vunpack.c.l.b16 %v11595
        %v11617 = vunpack.c.l.b16 %v11596
        %v11618 = vunpack.c.l.b16 %v11597
        %v11619 = vunpack.c.l.b16 %v11598
        %v11620 = vunpack.c.l.b16 %v11599
        %v11621 = vunpack.c.l.b16 %v11600
        %v11622 = vpack.c.b16 %v11616, %v11615
        %v11623 = vpack.c.b16 %v11618, %v11617
        %v11624 = vpack.c.b16 %v11620, %v11619
        %v11625 = vpack.c.b16 %v11621, %v11621
        %vm11629 = vcmask 400384
        %v11631 = vsel %vm11629, %v11578, 0
        %v11634 = vsel %vm11629, %v11579, 0
        %v11637 = vsel %vm11629, %v11580, 0
        %v11640 = vsel %vm11629, %v11581, 0
        %v11643 = vsel %vm11629, %v11582, 0
        %v11646 = vsel %vm11629, %v11583, 0
        %v11649 = vsel %vm11629, %v11584, 0
        %v11652 = vsel %vm11629, %v11585, 0
        %v11655 = vsel %vm11629, %v11586, 0
        %v11658 = vsel %vm11629, %v11587, 0
        %v11661 = vsel %vm11629, %v11588, 0
        %v11664 = vsel %vm11629, %v11589, 0
        %v11667 = vsel %vm11629, %v11590, 0
        %v11670 = vsel %vm11629, %v11591, 0
        %v11673 = vsel %vm11629, %v11592, 0
        %v11676 = vsel %vm11629, %v11593, 0
        %vm11678 = vcmask 1040384
        %v11679 = vsel 0, 4294967295, 65535
        %v11680 = vsel %vm11678, %v11679, 0
        %v11682 = vand.u32 %v11625, %v11680
        %11684 = vmatprep.subr.bf16.mxu0 0
        %11685 = vmatpush1.bf16.msra.mxu0 %v11622
        %11686 = vmatprep.subr.bf16.mxu0 0
        %11687 = vmatpush1.bf16.msra.mxu0 %v11623
        %11688 = vmatprep.subr.bf16.mxu0 0
        %11689 = vmatpush1.bf16.msra.mxu0 %v11624
        %11690 = vmatprep.subr.bf16.mxu0 0
        %11691 = vmatpush1.bf16.msra.mxu0 %v11682
        %11692 = vmatprep.subr.bf16.mxu0 0
        %11693 = vmatpush1.bf16.msra.mxu0 0
        %11694 = vmatprep.subr.bf16.mxu0 0
        %11695 = vmatpush1.bf16.msra.mxu0 0
        %11696 = vmatprep.subr.bf16.mxu0 0
        %11697 = vmatpush1.bf16.msra.mxu0 0
        %11698 = vmatprep.subr.bf16.mxu0 0
        %11699 = vmatpush1.bf16.msra.mxu0 0
        %11700 = vmatprep.subr.bf16.mxu0 0
        %11701 = vmatpush1.bf16.msra.mxu0 0
        %11702 = vmatprep.subr.bf16.mxu0 0
        %11703 = vmatpush1.bf16.msra.mxu0 0
        %11704 = vmatprep.subr.bf16.mxu0 0
        %11705 = vmatpush1.bf16.msra.mxu0 0
        %11706 = vmatprep.subr.bf16.mxu0 0
        %11707 = vmatpush1.bf16.msra.mxu0 0
        %11708 = vmatprep.subr.bf16.mxu0 0
        %11709 = vmatpush1.bf16.msra.mxu0 0
        %11710 = vmatprep.subr.bf16.mxu0 0
        %11711 = vmatpush1.bf16.msra.mxu0 0
        %11712 = vmatprep.subr.bf16.mxu0 0
        %11713 = vmatpush1.bf16.msra.mxu0 0
        %11714 = vmatprep.subr.bf16.mxu0 0
        %11715 = vmatpush1.bf16.msra.mxu0 0
        %11716 = vmatprep.mubr.bf16.mxu0 0
        %11717 = vmatmul.mubr.bf16.gmra.mrb[0].mxu0 %v11631
        %v11718 = vpop.f32.mrb[0].mxu0
        %v11719 = vadd.f32 %v11606, %v11718
        %v11720 = vpop.f32.mrb[0].mxu0
        %v11721 = vpop.f32.mrb[0].mxu0
        %v11722 = vadd.f32 %v11606, %v11721
        %v11723 = vpop.f32.mrb[0].mxu0
        %11724 = vmatprep.mubr.bf16.mxu0 0
        %11725 = vmatmul.mubr.bf16.gmra.mrb[0].mxu0 %v11634
        %v11726 = vpop.f32.mrb[0].mxu0
        %v11727 = vadd.f32 %v11606, %v11726
        %v11728 = vpop.f32.mrb[0].mxu0
        %v11729 = vpop.f32.mrb[0].mxu0
        %v11730 = vadd.f32 %v11606, %v11729
        %v11731 = vpop.f32.mrb[0].mxu0
        %11732 = vmatprep.mubr.bf16.mxu0 0
        %11733 = vmatmul.mubr.bf16.gmra.mrb[0].mxu0 %v11637
        %v11734 = vpop.f32.mrb[0].mxu0
        %v11735 = vadd.f32 %v11606, %v11734
        %v11736 = vpop.f32.mrb[0].mxu0
        %v11737 = vpop.f32.mrb[0].mxu0
        %v11738 = vadd.f32 %v11606, %v11737
        %v11739 = vpop.f32.mrb[0].mxu0
        %11740 = vmatprep.mubr.bf16.mxu0 0
        %11741 = vmatmul.mubr.bf16.gmra.mrb[0].mxu0 %v11640
        %v11742 = vpop.f32.mrb[0].mxu0
        %v11743 = vadd.f32 %v11606, %v11742
        %v11744 = vpop.f32.mrb[0].mxu0
        %v11745 = vpop.f32.mrb[0].mxu0
        %v11746 = vadd.f32 %v11606, %v11745
        %v11747 = vpop.f32.mrb[0].mxu0
        %11748 = vmatprep.mubr.bf16.mxu0 0
        %11749 = vmatmul.mubr.bf16.gmra.mrb[0].mxu0 %v11643
        %v11750 = vpop.f32.mrb[0].mxu0
        %v11751 = vadd.f32 %v11606, %v11750
        %v11752 = vpop.f32.mrb[0].mxu0
        %v11753 = vpop.f32.mrb[0].mxu0
        %v11754 = vadd.f32 %v11606, %v11753
        %v11755 = vpop.f32.mrb[0].mxu0
        %11756 = vmatprep.mubr.bf16.mxu0 0
        %11757 = vmatmul.mubr.bf16.gmra.mrb[0].mxu0 %v11646
        %v11758 = vpop.f32.mrb[0].mxu0
        %v11759 = vadd.f32 %v11606, %v11758
        %v11760 = vpop.f32.mrb[0].mxu0
        %v11761 = vpop.f32.mrb[0].mxu0
        %v11762 = vadd.f32 %v11606, %v11761
        %v11763 = vpop.f32.mrb[0].mxu0
        %11764 = vmatprep.mubr.bf16.mxu0 0
        %11765 = vmatmul.mubr.bf16.gmra.mrb[0].mxu0 %v11649
        %v11766 = vpop.f32.mrb[0].mxu0
        %v11767 = vadd.f32 %v11606, %v11766
        %v11768 = vpop.f32.mrb[0].mxu0
        %v11769 = vpop.f32.mrb[0].mxu0
        %v11770 = vadd.f32 %v11606, %v11769
        %v11771 = vpop.f32.mrb[0].mxu0
        %11772 = vmatprep.mubr.bf16.mxu0 0
        %11773 = vmatmul.mubr.bf16.gmra.mrb[0].mxu0 %v11652
        %v11774 = vpop.f32.mrb[0].mxu0
        %v11775 = vadd.f32 %v11606, %v11774
        %v11776 = vpop.f32.mrb[0].mxu0
        %v11777 = vpop.f32.mrb[0].mxu0
        %v11778 = vadd.f32 %v11606, %v11777
        %v11779 = vpop.f32.mrb[0].mxu0
        %11780 = vmatprep.mubr.bf16.mxu0 0
        %11781 = vmatmul.mubr.bf16.gmra.mrb[0].mxu0 %v11655
        %v11782 = vpop.f32.mrb[0].mxu0
        %v11783 = vadd.f32 %v11606, %v11782
        %v11784 = vpop.f32.mrb[0].mxu0
        %v11785 = vpop.f32.mrb[0].mxu0
        %v11786 = vadd.f32 %v11606, %v11785
        %v11787 = vpop.f32.mrb[0].mxu0
        %11788 = vmatprep.mubr.bf16.mxu0 0
        %11789 = vmatmul.mubr.bf16.gmra.mrb[0].mxu0 %v11658
        %v11790 = vpop.f32.mrb[0].mxu0
        %v11791 = vadd.f32 %v11606, %v11790
        %v11792 = vpop.f32.mrb[0].mxu0
        %v11793 = vpop.f32.mrb[0].mxu0
        %v11794 = vadd.f32 %v11606, %v11793
        %v11795 = vpop.f32.mrb[0].mxu0
        %11796 = vmatprep.mubr.bf16.mxu0 0
        %11797 = vmatmul.mubr.bf16.gmra.mrb[0].mxu0 %v11661
        %v11798 = vpop.f32.mrb[0].mxu0
        %v11799 = vadd.f32 %v11606, %v11798
        %v11800 = vpop.f32.mrb[0].mxu0
        %v11801 = vpop.f32.mrb[0].mxu0
        %v11802 = vadd.f32 %v11606, %v11801
        %v11803 = vpop.f32.mrb[0].mxu0
        %11804 = vmatprep.mubr.bf16.mxu0 0
        %11805 = vmatmul.mubr.bf16.gmra.mrb[0].mxu0 %v11664
        %v11806 = vpop.f32.mrb[0].mxu0
        %v11807 = vadd.f32 %v11606, %v11806
        %v11808 = vpop.f32.mrb[0].mxu0
        %v11809 = vpop.f32.mrb[0].mxu0
        %v11810 = vadd.f32 %v11606, %v11809
        %v11811 = vpop.f32.mrb[0].mxu0
        %11812 = vmatprep.mubr.bf16.mxu0 0
        %11813 = vmatmul.mubr.bf16.gmra.mrb[0].mxu0 %v11667
        %v11814 = vpop.f32.mrb[0].mxu0
        %v11815 = vadd.f32 %v11606, %v11814
        %v11816 = vpop.f32.mrb[0].mxu0
        %v11817 = vpop.f32.mrb[0].mxu0
        %v11818 = vadd.f32 %v11606, %v11817
        %v11819 = vpop.f32.mrb[0].mxu0
        %11820 = vmatprep.mubr.bf16.mxu0 0
        %11821 = vmatmul.mubr.bf16.gmra.mrb[0].mxu0 %v11670
        %v11822 = vpop.f32.mrb[0].mxu0
        %v11823 = vadd.f32 %v11606, %v11822
        %v11824 = vpop.f32.mrb[0].mxu0
        %v11825 = vpop.f32.mrb[0].mxu0
        %v11826 = vadd.f32 %v11606, %v11825
        %v11827 = vpop.f32.mrb[0].mxu0
        %11828 = vmatprep.mubr.bf16.mxu0 0
        %11829 = vmatmul.mubr.bf16.gmra.mrb[0].mxu0 %v11673
        %v11830 = vpop.f32.mrb[0].mxu0
        %v11831 = vadd.f32 %v11606, %v11830
        %v11832 = vpop.f32.mrb[0].mxu0
        %v11833 = vpop.f32.mrb[0].mxu0
        %v11834 = vadd.f32 %v11606, %v11833
        %v11835 = vpop.f32.mrb[0].mxu0
        %11836 = vmatprep.mubr.bf16.mxu0 0
        %11837 = vmatmul.mubr.bf16.gmra.mrb[0].mxu0 %v11676
        %v11838 = vpop.f32.mrb[0].mxu0
        %v11839 = vadd.f32 %v11606, %v11838
        %v11840 = vpop.f32.mrb[0].mxu0
        %v11841 = vpop.f32.mrb[0].mxu0
        %v11842 = vadd.f32 %v11606, %v11841
        %v11843 = vpop.f32.mrb[0].mxu0
        %11844 = vdwg.mxu0
        %v11845 = vmax.f32 %v11719, 0.0
        %v11846 = vmax.f32 %v11722, 0.0
        %v11847 = vmax.f32 %v11727, 0.0
        %v11848 = vmax.f32 %v11730, 0.0
        %v11849 = vmax.f32 %v11735, 0.0
        %v11850 = vmax.f32 %v11738, 0.0
        %v11851 = vmax.f32 %v11743, 0.0
        %v11852 = vmax.f32 %v11746, 0.0
        %v11853 = vmax.f32 %v11751, 0.0
        %v11854 = vmax.f32 %v11754, 0.0
        %v11855 = vmax.f32 %v11759, 0.0
        %v11856 = vmax.f32 %v11762, 0.0
        %v11857 = vmax.f32 %v11767, 0.0
        %v11858 = vmax.f32 %v11770, 0.0
        %v11859 = vmax.f32 %v11775, 0.0
        %v11860 = vmax.f32 %v11778, 0.0
        %v11861 = vmax.f32 %v11783, 0.0
        %v11862 = vmax.f32 %v11786, 0.0
        %v11863 = vmax.f32 %v11791, 0.0
        %v11864 = vmax.f32 %v11794, 0.0
        %v11865 = vmax.f32 %v11799, 0.0
        %v11866 = vmax.f32 %v11802, 0.0
        %v11867 = vmax.f32 %v11807, 0.0
        %v11868 = vmax.f32 %v11810, 0.0
        %v11869 = vmax.f32 %v11815, 0.0
        %v11870 = vmax.f32 %v11818, 0.0
        %v11871 = vmax.f32 %v11823, 0.0
        %v11872 = vmax.f32 %v11826, 0.0
        %v11873 = vmax.f32 %v11831, 0.0
        %v11874 = vmax.f32 %v11834, 0.0
        %v11875 = vmax.f32 %v11839, 0.0
        %v11876 = vmax.f32 %v11842, 0.0
        %vm11877 = vcmask 523264
        %11878 = vst.msk [vmem:[#allocation3] sm:$0xff] %vm11877, 0.0
        %11879 = vst.msk [vmem:[#allocation3 + $0x8] sm:$0xff] %vm11877, 0.0
        %vm11880 = vcmask 517120
        %11881 = vst.msk [vmem:[#allocation3 + $0x10] sm:$0x3] %vm11880, 0.0
        %11882 = vst.msk [vmem:[#allocation3 + $0x18] sm:$0xff] %vm11877, 0.0
        %11883 = vst.msk [vmem:[#allocation3 + $0x20] sm:$0xff] %vm11877, 0.0
        %11884 = vst.msk [vmem:[#allocation3 + $0x28] sm:$0x3] %vm11880, 0.0
        %11885 = vst.msk [vmem:[#allocation3 + $0x30] sm:$0xff] %vm11877, 0.0
        %11886 = vst.msk [vmem:[#allocation3 + $0x38] sm:$0xff] %vm11877, 0.0
        %11887 = vst.msk [vmem:[#allocation3 + $0x40] sm:$0x3] %vm11880, 0.0
        %11888 = vst.msk [vmem:[#allocation3 + $0x48] sm:$0xff] %vm11877, 0.0
        %11889 = vst.msk [vmem:[#allocation3 + $0x50] sm:$0xff] %vm11877, 0.0
        %11890 = vst.msk [vmem:[#allocation3 + $0x58] sm:$0x3] %vm11880, 0.0
        %11891 = vst.msk [vmem:[#allocation3 + $0x60] sm:$0xff] %vm11877, 0.0
        %11892 = vst.msk [vmem:[#allocation3 + $0x68] sm:$0xff] %vm11877, 0.0
        %11893 = vst.msk [vmem:[#allocation3 + $0x70] sm:$0x3] %vm11880, 0.0
        %11894 = vst.msk [vmem:[#allocation3 + $0x78] sm:$0xff] %vm11877, 0.0
        %11895 = vst.msk [vmem:[#allocation3 + $0x80] sm:$0xff] %vm11877, 0.0
        %11896 = vst.msk [vmem:[#allocation3 + $0x88] sm:$0x3] %vm11880, 0.0
        %11897 = vst.msk [vmem:[#allocation3 + $0x90] sm:$0xff] %vm11877, 0.0
        %11898 = vst.msk [vmem:[#allocation3 + $0x98] sm:$0xff] %vm11877, 0.0
        %11899 = vst.msk [vmem:[#allocation3 + $0xa0] sm:$0x3] %vm11880, 0.0
        %11900 = vst.msk [vmem:[#allocation3 + $0xa8] sm:$0xff] %vm11877, 0.0
        %11901 = vst.msk [vmem:[#allocation3 + $0xb0] sm:$0xff] %vm11877, 0.0
        %11902 = vst.msk [vmem:[#allocation3 + $0xb8] sm:$0x3] %vm11880, 0.0
        %11903 = vst.msk [vmem:[#allocation3 + $0xc0] sm:$0xff] %vm11877, 0.0
        %11904 = vst.msk [vmem:[#allocation3 + $0xc8] sm:$0xff] %vm11877, 0.0
        %11905 = vst.msk [vmem:[#allocation3 + $0xd0] sm:$0x3] %vm11880, 0.0
        %11906 = vst.msk [vmem:[#allocation3 + $0xd8] sm:$0xff] %vm11877, 0.0
        %11907 = vst.msk [vmem:[#allocation3 + $0xe0] sm:$0xff] %vm11877, 0.0
        %11908 = vst.msk [vmem:[#allocation3 + $0xe8] sm:$0x3] %vm11880, 0.0
        %11909 = vst.msk [vmem:[#allocation3 + $0xf0] sm:$0xff] %vm11877, 0.0
        %11910 = vst.msk [vmem:[#allocation3 + $0xf8] sm:$0xff] %vm11877, 0.0
        %11911 = vst.msk [vmem:[#allocation3 + $0x100] sm:$0x3] %vm11880, 0.0
        %11912 = vst.msk [vmem:[#allocation3 + $0x108] sm:$0xff] %vm11877, 0.0
        %11913 = vst.msk [vmem:[#allocation3 + $0x110] sm:$0xff] %vm11877, 0.0
        %11914 = vst.msk [vmem:[#allocation3 + $0x118] sm:$0x3] %vm11880, 0.0
        %11915 = vst.msk [vmem:[#allocation3 + $0x120] sm:$0xff] %vm11877, 0.0
        %11916 = vst.msk [vmem:[#allocation3 + $0x128] sm:$0xff] %vm11877, 0.0
        %11917 = vst.msk [vmem:[#allocation3 + $0x130] sm:$0x3] %vm11880, 0.0
        %11918 = vst.msk [vmem:[#allocation3 + $0x138] sm:$0xff] %vm11877, 0.0
        %11919 = vst.msk [vmem:[#allocation3 + $0x140] sm:$0xff] %vm11877, 0.0
        %11920 = vst.msk [vmem:[#allocation3 + $0x148] sm:$0x3] %vm11880, 0.0
        %11921 = vst.msk [vmem:[#allocation3 + $0x150] sm:$0xff] %vm11877, 0.0
        %11922 = vst.msk [vmem:[#allocation3 + $0x158] sm:$0xff] %vm11877, 0.0
        %11923 = vst.msk [vmem:[#allocation3 + $0x160] sm:$0x3] %vm11880, 0.0
        %11924 = vst.msk [vmem:[#allocation3 + $0x168] sm:$0xff] %vm11877, 0.0
        %11925 = vst.msk [vmem:[#allocation3 + $0x170] sm:$0xff] %vm11877, 0.0
        %11926 = vst.msk [vmem:[#allocation3 + $0x178] sm:$0x3] %vm11880, 0.0
        %11927 = vst.msk [vmem:[#allocation3 + $0x180] sm:$0xff] %vm11877, 0.0
        %11928 = vst.msk [vmem:[#allocation3 + $0x188] sm:$0xff] %vm11877, 0.0
        %11929 = vst.msk [vmem:[#allocation3 + $0x190] sm:$0x3] %vm11880, 0.0
        %11930 = vst.msk [vmem:[#allocation3 + $0x198] sm:$0xff] %vm11877, 0.0
        %11931 = vst.msk [vmem:[#allocation3 + $0x1a0] sm:$0xff] %vm11877, 0.0
        %11932 = vst.msk [vmem:[#allocation3 + $0x1a8] sm:$0x3] %vm11880, 0.0
        %s11933 = scalar_lea.vmem [#allocation3], 24
        %11934 = vst.msk [vmem:[%s11933 + $0x1] sm:$0xff] %vm11877, %v11845
        %11935 = vst.msk [vmem:[%s11933 + $0x9] sm:$0xff] %vm11877, %v11846
        %11936 = vst.msk [vmem:[%s11933 + $0x19] sm:$0xff] %vm11877, %v11847
        %11937 = vst.msk [vmem:[%s11933 + $0x21] sm:$0xff] %vm11877, %v11848
        %11938 = vst.msk [vmem:[%s11933 + $0x31] sm:$0xff] %vm11877, %v11849
        %11939 = vst.msk [vmem:[%s11933 + $0x39] sm:$0xff] %vm11877, %v11850
        %11940 = vst.msk [vmem:[%s11933 + $0x49] sm:$0xff] %vm11877, %v11851
        %11941 = vst.msk [vmem:[%s11933 + $0x51] sm:$0xff] %vm11877, %v11852
        %11942 = vst.msk [vmem:[%s11933 + $0x61] sm:$0xff] %vm11877, %v11853
        %11943 = vst.msk [vmem:[%s11933 + $0x69] sm:$0xff] %vm11877, %v11854
        %11944 = vst.msk [vmem:[%s11933 + $0x79] sm:$0xff] %vm11877, %v11855
        %11945 = vst.msk [vmem:[%s11933 + $0x81] sm:$0xff] %vm11877, %v11856
        %11946 = vst.msk [vmem:[%s11933 + $0x91] sm:$0xff] %vm11877, %v11857
        %11947 = vst.msk [vmem:[%s11933 + $0x99] sm:$0xff] %vm11877, %v11858
        %11948 = vst.msk [vmem:[%s11933 + $0xa9] sm:$0xff] %vm11877, %v11859
        %11949 = vst.msk [vmem:[%s11933 + $0xb1] sm:$0xff] %vm11877, %v11860
        %11950 = vst.msk [vmem:[%s11933 + $0xc1] sm:$0xff] %vm11877, %v11861
        %11951 = vst.msk [vmem:[%s11933 + $0xc9] sm:$0xff] %vm11877, %v11862
        %11952 = vst.msk [vmem:[%s11933 + $0xd9] sm:$0xff] %vm11877, %v11863
        %11953 = vst.msk [vmem:[%s11933 + $0xe1] sm:$0xff] %vm11877, %v11864
        %11954 = vst.msk [vmem:[%s11933 + $0xf1] sm:$0xff] %vm11877, %v11865
        %11955 = vst.msk [vmem:[%s11933 + $0xf9] sm:$0xff] %vm11877, %v11866
        %11956 = vst.msk [vmem:[%s11933 + $0x109] sm:$0xff] %vm11877, %v11867
        %11957 = vst.msk [vmem:[%s11933 + $0x111] sm:$0xff] %vm11877, %v11868
        %11958 = vst.msk [vmem:[%s11933 + $0x121] sm:$0xff] %vm11877, %v11869
        %11959 = vst.msk [vmem:[%s11933 + $0x129] sm:$0xff] %vm11877, %v11870
        %11960 = vst.msk [vmem:[%s11933 + $0x139] sm:$0xff] %vm11877, %v11871
        %11961 = vst.msk [vmem:[%s11933 + $0x141] sm:$0xff] %vm11877, %v11872
        %11962 = vst.msk [vmem:[%s11933 + $0x151] sm:$0xff] %vm11877, %v11873
        %11963 = vst.msk [vmem:[%s11933 + $0x159] sm:$0xff] %vm11877, %v11874
        %11964 = vst.msk [vmem:[%s11933 + $0x169] sm:$0xff] %vm11877, %v11875
        %11965 = vst.msk [vmem:[%s11933 + $0x171] sm:$0xff] %vm11877, %v11876
        %v11966 = vld [vmem:[#allocation3] ss:$2 sm:$0xff]
        %s11967 = scalar_lea.vmem [#allocation3], 48
        %v11968 = vld [vmem:[%s11967] ss:$2 sm:$0xff]
        %s11969 = scalar_lea.vmem [#allocation3], 96
        %v11970 = vld [vmem:[%s11969] ss:$2 sm:$0xff]
        %s11971 = scalar_lea.vmem [#allocation3], 144
        %v11972 = vld [vmem:[%s11971] ss:$2 sm:$0xff]
        %s11973 = scalar_lea.vmem [#allocation3], 192
        %v11974 = vld [vmem:[%s11973] ss:$2 sm:$0xff]
        %s11975 = scalar_lea.vmem [#allocation3], 240
        %v11976 = vld [vmem:[%s11975] ss:$2 sm:$0xff]
        %s11977 = scalar_lea.vmem [#allocation3], 288
        %v11978 = vld [vmem:[%s11977] ss:$2 sm:$0xff]
        %s11979 = scalar_lea.vmem [#allocation3], 336
        %v11980 = vld [vmem:[%s11979] ss:$2 sm:$0xff]
        %s11981 = scalar_lea.vmem [#allocation3], 1
        %v11982 = vld [vmem:[%s11981] ss:$2 sm:$0xff]
        %s11983 = scalar_lea.vmem [#allocation3], 49
        %v11984 = vld [vmem:[%s11983] ss:$2 sm:$0xff]
        %s11985 = scalar_lea.vmem [#allocation3], 97
        %v11986 = vld [vmem:[%s11985] ss:$2 sm:$0xff]
        %s11987 = scalar_lea.vmem [#allocation3], 145
        %v11988 = vld [vmem:[%s11987] ss:$2 sm:$0xff]
        %s11989 = scalar_lea.vmem [#allocation3], 193
        %v11990 = vld [vmem:[%s11989] ss:$2 sm:$0xff]
        %s11991 = scalar_lea.vmem [#allocation3], 241
        %v11992 = vld [vmem:[%s11991] ss:$2 sm:$0xff]
        %s11993 = scalar_lea.vmem [#allocation3], 289
        %v11994 = vld [vmem:[%s11993] ss:$2 sm:$0xff]
        %s11995 = scalar_lea.vmem [#allocation3], 337
        %v11996 = vld [vmem:[%s11995] ss:$2 sm:$0xff]
        %v11997 = vmax.f32 %v11966, %v11982
        %v11998 = vmax.f32 %v11968, %v11984
        %v11999 = vmax.f32 %v11970, %v11986
        %v12000 = vmax.f32 %v11972, %v11988
        %v12001 = vmax.f32 %v11974, %v11990
        %v12002 = vmax.f32 %v11976, %v11992
        %v12003 = vmax.f32 %v11978, %v11994
        %v12004 = vmax.f32 %v11980, %v11996
        %s12005 = scalar_lea.vmem [#allocation3], 2
        %v12006 = vld [vmem:[%s12005] ss:$2 sm:$0xff]
        %s12007 = scalar_lea.vmem [#allocation3], 50
        %v12008 = vld [vmem:[%s12007] ss:$2 sm:$0xff]
        %s12009 = scalar_lea.vmem [#allocation3], 98
        %v12010 = vld [vmem:[%s12009] ss:$2 sm:$0xff]
        %s12011 = scalar_lea.vmem [#allocation3], 146
        %v12012 = vld [vmem:[%s12011] ss:$2 sm:$0xff]
        %s12013 = scalar_lea.vmem [#allocation3], 194
        %v12014 = vld [vmem:[%s12013] ss:$2 sm:$0xff]
        %s12015 = scalar_lea.vmem [#allocation3], 242
        %v12016 = vld [vmem:[%s12015] ss:$2 sm:$0xff]
        %s12017 = scalar_lea.vmem [#allocation3], 290
        %v12018 = vld [vmem:[%s12017] ss:$2 sm:$0xff]
        %s12019 = scalar_lea.vmem [#allocation3], 338
        %v12020 = vld [vmem:[%s12019] ss:$2 sm:$0xff]
        %v12021 = vmax.f32 %v11997, %v12006
        %v12022 = vmax.f32 %v11998, %v12008
        %v12023 = vmax.f32 %v11999, %v12010
        %v12024 = vmax.f32 %v12000, %v12012
        %v12025 = vmax.f32 %v12001, %v12014
        %v12026 = vmax.f32 %v12002, %v12016
        %v12027 = vmax.f32 %v12003, %v12018
        %v12028 = vmax.f32 %v12004, %v12020
        %v12029 = vld [vmem:[%s11933] ss:$2 sm:$0xff]
        %s12030 = scalar_lea.vmem %s11933, 48 [#allocation3]
        %v12031 = vld [vmem:[%s12030] ss:$2 sm:$0xff]
        %s12032 = scalar_lea.vmem %s11933, 96 [#allocation3]
        %v12033 = vld [vmem:[%s12032] ss:$2 sm:$0xff]
        %s12034 = scalar_lea.vmem %s11933, 144 [#allocation3]
        %v12035 = vld [vmem:[%s12034] ss:$2 sm:$0xff]
        %s12036 = scalar_lea.vmem %s11933, 192 [#allocation3]
        %v12037 = vld [vmem:[%s12036] ss:$2 sm:$0xff]
        %s12038 = scalar_lea.vmem %s11933, 240 [#allocation3]
        %v12039 = vld [vmem:[%s12038] ss:$2 sm:$0xff]
        %s12040 = scalar_lea.vmem %s11933, 288 [#allocation3]
        %v12041 = vld [vmem:[%s12040] ss:$2 sm:$0xff]
        %s12042 = scalar_lea.vmem %s11933, 336 [#allocation3]
        %v12043 = vld [vmem:[%s12042] ss:$2 sm:$0xff]
        %v12044 = vmax.f32 %v12021, %v12029
        %v12045 = vmax.f32 %v12022, %v12031
        %v12046 = vmax.f32 %v12023, %v12033
        %v12047 = vmax.f32 %v12024, %v12035
        %v12048 = vmax.f32 %v12025, %v12037
        %v12049 = vmax.f32 %v12026, %v12039
        %v12050 = vmax.f32 %v12027, %v12041
        %v12051 = vmax.f32 %v12028, %v12043
        %s12052 = scalar_lea.vmem %s11933, 1 [#allocation3]
        %v12053 = vld [vmem:[%s12052] ss:$2 sm:$0xff]
        %s12054 = scalar_lea.vmem %s11933, 49 [#allocation3]
        %v12055 = vld [vmem:[%s12054] ss:$2 sm:$0xff]
        %s12056 = scalar_lea.vmem %s11933, 97 [#allocation3]
        %v12057 = vld [vmem:[%s12056] ss:$2 sm:$0xff]
        %s12058 = scalar_lea.vmem %s11933, 145 [#allocation3]
        %v12059 = vld [vmem:[%s12058] ss:$2 sm:$0xff]
        %s12060 = scalar_lea.vmem %s11933, 193 [#allocation3]
        %v12061 = vld [vmem:[%s12060] ss:$2 sm:$0xff]
        %s12062 = scalar_lea.vmem %s11933, 241 [#allocation3]
        %v12063 = vld [vmem:[%s12062] ss:$2 sm:$0xff]
        %s12064 = scalar_lea.vmem %s11933, 289 [#allocation3]
        %v12065 = vld [vmem:[%s12064] ss:$2 sm:$0xff]
        %s12066 = scalar_lea.vmem %s11933, 337 [#allocation3]
        %v12067 = vld [vmem:[%s12066] ss:$2 sm:$0xff]
        %v12068 = vmax.f32 %v12044, %v12053
        %v12069 = vmax.f32 %v12045, %v12055
        %v12070 = vmax.f32 %v12046, %v12057
        %v12071 = vmax.f32 %v12047, %v12059
        %v12072 = vmax.f32 %v12048, %v12061
        %v12073 = vmax.f32 %v12049, %v12063
        %v12074 = vmax.f32 %v12050, %v12065
        %v12075 = vmax.f32 %v12051, %v12067
        %s12076 = scalar_lea.vmem %s11933, 2 [#allocation3]
        %v12077 = vld [vmem:[%s12076] ss:$2 sm:$0xff]
        %s12078 = scalar_lea.vmem %s11933, 50 [#allocation3]
        %v12079 = vld [vmem:[%s12078] ss:$2 sm:$0xff]
        %s12080 = scalar_lea.vmem %s11933, 98 [#allocation3]
        %v12081 = vld [vmem:[%s12080] ss:$2 sm:$0xff]
        %s12082 = scalar_lea.vmem %s11933, 146 [#allocation3]
        %v12083 = vld [vmem:[%s12082] ss:$2 sm:$0xff]
        %s12084 = scalar_lea.vmem %s11933, 194 [#allocation3]
        %v12085 = vld [vmem:[%s12084] ss:$2 sm:$0xff]
        %s12086 = scalar_lea.vmem %s11933, 242 [#allocation3]
        %v12087 = vld [vmem:[%s12086] ss:$2 sm:$0xff]
        %s12088 = scalar_lea.vmem %s11933, 290 [#allocation3]
        %v12089 = vld [vmem:[%s12088] ss:$2 sm:$0xff]
        %s12090 = scalar_lea.vmem %s11933, 338 [#allocation3]
        %v12091 = vld [vmem:[%s12090] ss:$2 sm:$0xff]
        %v12092 = vmax.f32 %v12068, %v12077
        %v12093 = vmax.f32 %v12069, %v12079
        %v12094 = vmax.f32 %v12070, %v12081
        %v12095 = vmax.f32 %v12071, %v12083
        %v12096 = vmax.f32 %v12072, %v12085
        %v12097 = vmax.f32 %v12073, %v12087
        %v12098 = vmax.f32 %v12074, %v12089
        %v12099 = vmax.f32 %v12075, %v12091
        %s12100 = scalar_lea.vmem [#allocation3], 48
        %v12101 = vld [vmem:[%s12100] ss:$2 sm:$0xff]
        %s12102 = scalar_lea.vmem %s12100, 48 [#allocation3]
        %v12103 = vld [vmem:[%s12102] ss:$2 sm:$0xff]
        %s12104 = scalar_lea.vmem %s12100, 96 [#allocation3]
        %v12105 = vld [vmem:[%s12104] ss:$2 sm:$0xff]
        %s12106 = scalar_lea.vmem %s12100, 144 [#allocation3]
        %v12107 = vld [vmem:[%s12106] ss:$2 sm:$0xff]
        %s12108 = scalar_lea.vmem %s12100, 192 [#allocation3]
        %v12109 = vld [vmem:[%s12108] ss:$2 sm:$0xff]
        %s12110 = scalar_lea.vmem %s12100, 240 [#allocation3]
        %v12111 = vld [vmem:[%s12110] ss:$2 sm:$0xff]
        %s12112 = scalar_lea.vmem %s12100, 288 [#allocation3]
        %v12113 = vld [vmem:[%s12112] ss:$2 sm:$0xff]
        %s12114 = scalar_lea.vmem %s12100, 336 [#allocation3]
        %v12115 = vld [vmem:[%s12114] ss:$2 sm:$0xff]
        %v12116 = vmax.f32 %v12092, %v12101
        %v12117 = vmax.f32 %v12093, %v12103
        %v12118 = vmax.f32 %v12094, %v12105
        %v12119 = vmax.f32 %v12095, %v12107
        %v12120 = vmax.f32 %v12096, %v12109
        %v12121 = vmax.f32 %v12097, %v12111
        %v12122 = vmax.f32 %v12098, %v12113
        %v12123 = vmax.f32 %v12099, %v12115
        %s12124 = scalar_lea.vmem %s12100, 1 [#allocation3]
        %v12125 = vld [vmem:[%s12124] ss:$2 sm:$0xff]
        %s12126 = scalar_lea.vmem %s12100, 49 [#allocation3]
        %v12127 = vld [vmem:[%s12126] ss:$2 sm:$0xff]
        %s12128 = scalar_lea.vmem %s12100, 97 [#allocation3]
        %v12129 = vld [vmem:[%s12128] ss:$2 sm:$0xff]
        %s12130 = scalar_lea.vmem %s12100, 145 [#allocation3]
        %v12131 = vld [vmem:[%s12130] ss:$2 sm:$0xff]
        %s12132 = scalar_lea.vmem %s12100, 193 [#allocation3]
        %v12133 = vld [vmem:[%s12132] ss:$2 sm:$0xff]
        %s12134 = scalar_lea.vmem %s12100, 241 [#allocation3]
        %v12135 = vld [vmem:[%s12134] ss:$2 sm:$0xff]
        %s12136 = scalar_lea.vmem %s12100, 289 [#allocation3]
        %v12137 = vld [vmem:[%s12136] ss:$2 sm:$0xff]
        %s12138 = scalar_lea.vmem %s12100, 337 [#allocation3]
        %v12139 = vld [vmem:[%s12138] ss:$2 sm:$0xff]
        %v12140 = vmax.f32 %v12116, %v12125
        %v12141 = vmax.f32 %v12117, %v12127
        %v12142 = vmax.f32 %v12118, %v12129
        %v12143 = vmax.f32 %v12119, %v12131
        %v12144 = vmax.f32 %v12120, %v12133
        %v12145 = vmax.f32 %v12121, %v12135
        %v12146 = vmax.f32 %v12122, %v12137
        %v12147 = vmax.f32 %v12123, %v12139
        %s12148 = scalar_lea.vmem %s12100, 2 [#allocation3]
        %v12149 = vld [vmem:[%s12148] ss:$2 sm:$0xff]
        %s12150 = scalar_lea.vmem %s12100, 50 [#allocation3]
        %v12151 = vld [vmem:[%s12150] ss:$2 sm:$0xff]
        %s12152 = scalar_lea.vmem %s12100, 98 [#allocation3]
        %v12153 = vld [vmem:[%s12152] ss:$2 sm:$0xff]
        %s12154 = scalar_lea.vmem %s12100, 146 [#allocation3]
        %v12155 = vld [vmem:[%s12154] ss:$2 sm:$0xff]
        %s12156 = scalar_lea.vmem %s12100, 194 [#allocation3]
        %v12157 = vld [vmem:[%s12156] ss:$2 sm:$0xff]
        %s12158 = scalar_lea.vmem %s12100, 242 [#allocation3]
        %v12159 = vld [vmem:[%s12158] ss:$2 sm:$0xff]
        %s12160 = scalar_lea.vmem %s12100, 290 [#allocation3]
        %v12161 = vld [vmem:[%s12160] ss:$2 sm:$0xff]
        %s12162 = scalar_lea.vmem %s12100, 338 [#allocation3]
        %v12163 = vld [vmem:[%s12162] ss:$2 sm:$0xff]
        %v12164 = vmax.f32 %v12140, %v12149
        %v12165 = vmax.f32 %v12141, %v12151
        %v12166 = vmax.f32 %v12142, %v12153
        %v12167 = vmax.f32 %v12143, %v12155
        %v12168 = vmax.f32 %v12144, %v12157
        %v12169 = vmax.f32 %v12145, %v12159
        %v12170 = vmax.f32 %v12146, %v12161
        %v12171 = vmax.f32 %v12147, %v12163
        %v12172 = vpack.c.bf16 %v12164, %v12164
        %v12173 = vpack.c.bf16 %v12165, %v12165
        %v12174 = vpack.c.bf16 %v12166, %v12166
        %v12175 = vpack.c.bf16 %v12167, %v12167
        %v12176 = vpack.c.bf16 %v12168, %v12168
        %v12177 = vpack.c.bf16 %v12169, %v12169
        %v12178 = vpack.c.bf16 %v12170, %v12170
        %v12179 = vpack.c.bf16 %v12171, %v12171
        %vm12180 = vcmask 519168
        %12181 = vst.msk [vmem:[%s163] sm:$0xf] %vm12180, %v12172
        %12182 = vst.msk [vmem:[%s163 + $0x4] sm:$0xf] %vm12180, %v12173
        %12183 = vst.msk [vmem:[%s163 + $0x8] sm:$0xf] %vm12180, %v12174
        %12184 = vst.msk [vmem:[%s163 + $0xc] sm:$0xf] %vm12180, %v12175
        %12185 = vst.msk [vmem:[%s163 + $0x10] sm:$0xf] %vm12180, %v12176
        %12186 = vst.msk [vmem:[%s163 + $0x14] sm:$0xf] %vm12180, %v12177
        %12187 = vst.msk [vmem:[%s163 + $0x18] sm:$0xf] %vm12180, %v12178
        %12188 = vst.msk [vmem:[%s163 + $0x1c] sm:$0xf] %vm12180, %v12179
        %s12189 = sand.u32 %s93, 1
        %s12190 = scalar_lea.sflag [#allocation5], %s12189
        %s12191 = sand.u32 %s93, 1
        %s12192 = smul.addr %s12191, 32
        %s12193 = scalar_lea.vmem [#allocation4], %s12192
        // Predicated region
        $region33: #{tpu_custom_call.1} parent=31 // pred_check
          %p12194 = pneg %p103
        $region34: #{tpu_custom_call.1} parent=31 // pred_check_branch
          %12196 = sbr.rel (%p12194) target = $region36
        $region35: #{tpu_custom_call.1} parent=31 // pred_region
          %s12198 = ssub.s32 512, 512
          %12199 = vsyncadd %s12190, %s12198
          %s12200 = smul.addr %s17, 8
          %s12201 = smul.addr %s12200, 64
          %s12202 = scalar_lea.hbm %s3, %s12201
          %s12203 = sshll.u32 %s12193, 4
          %s12204 = int_to_ptr.vmem [resolvable:$true] %s12203
          %12209 = dma.vmem_to_hbm [thread:$0]  %s12204, 512, %s12202, %s12190, 64, 64, 4
        $region36: #{tpu_custom_call.1} parent=31 // pred_fallthru
          _
      $region32: #{tpu_custom_call.1} parent=5 // pred_fallthru
        _
      %p12210 = scmp.le.s32.totalorder 2, %s12
      // Predicated region
      $region37: #{tpu_custom_call.1} parent=5 // pred_check
        %p12211 = pneg %p12210
      $region38: #{tpu_custom_call.1} parent=5 // pred_check_branch
        %12213 = sbr.rel (%p12211) target = $region40
      $region39: #{tpu_custom_call.1} parent=5 // pred_region
        %s12214 = ssub.s32 %s12, 2
        // Predicated region
        $region41: #{tpu_custom_call.1} parent=39 // pred_check
          %p12215 = pneg %p109
        $region42: #{tpu_custom_call.1} parent=39 // pred_check_branch
          %12217 = sbr.rel (%p12215) target = $region44
        $region43: #{tpu_custom_call.1} parent=39 // pred_region
          %s12218 = sand.u32 %s94, 1
          %s12219 = scalar_lea.sflag [#allocation5], %s12218
          %s12220 = sand.u32 %s94, 1
          %s12221 = smul.addr %s12220, 32
          %s12222 = scalar_lea.vmem [#allocation4], %s12221
          %12223 = dma.done %s12219, 512
        $region44: #{tpu_custom_call.1} parent=39 // pred_fallthru
          _
      $region40: #{tpu_custom_call.1} parent=5 // pred_fallthru
        _
    $region6: #{tpu_custom_call.1} parent=1 // loop_footer
      %s16 = sadd.s32 1, %s12
    $region7: #{tpu_custom_call.1} parent=1 // loop_footer_branch
      %11 = sbr.rel target = $region3
    $region8: #{tpu_custom_call.1} parent=1 // loop_exit
      _
    %12224 = vsyncpa [#allocation5], 1
    %s12225 = scalar_lea.sflag [#allocation5], 1
    %12226 = vsyncpa %s12225, 1

</llo_original>
